<compile_context>
chip_gen: v6e
topology: v6e:2x2x1
jax: 0.10.0
libtpu: 0.0.40
codegen_flags: <defaults>
</compile_context>

<pallas_src>
import functools
import math

import jax
import jax.numpy as jnp
from jax.experimental import pallas as pl
from jax.experimental.pallas import tpu as pltpu

Z_SIZE = 32
HIDDEN = 256
NUM_MIX = 5
NUM_INPUTS = 3      # image channels
NUM_OUTPUTS = 2     # actor outputs; model_lstm input is 32 + 2
# action_map {0: 2, 1: 3}  ->  action = sample + 2 (done on-device, outside the kernel)


# ----------------------------------------------------------------------------
# Pallas kernels
# ----------------------------------------------------------------------------
def _matmul_bias_relu_kernel(x_ref, w_ref, b_ref, o_ref):
    y = jnp.dot(x_ref[...], w_ref[...], preferred_element_type=jnp.float32) + b_ref[...]
    o_ref[...] = jnp.maximum(y, 0.0).astype(o_ref.dtype)


def pallas_matmul_bias_relu(x, w, b):
    """x:(M,K) bf16 @ w:(K,N) bf16 + b:(1,N) f32 -> ReLU -> (M,N) bf16."""
    M, K = x.shape
    N = w.shape[1]
    spec = lambda shp: pl.BlockSpec(shp, lambda i: (0, 0))
    return pl.pallas_call(
        _matmul_bias_relu_kernel,
        out_shape=jax.ShapeDtypeStruct((M, N), jnp.bfloat16),
        grid=(1,),
        in_specs=[spec((M, K)), spec((K, N)), spec((1, N))],
        out_specs=spec((M, N)),
        compiler_params=pltpu.CompilerParams(dimension_semantics=("arbitrary",)),
    )(x, w, b)


def _fused_head_kernel(x_ref, st_ref, eps_ref, u_ref,
                       wenc_ref, benc_ref,
                       wbh_ref, wbz_ref, bpl_ref, bml_ref, woh_ref,
                       whd_ref, bhd_ref, wmdn_ref, bmdn_ref,
                       mu_ref, logvar_ref, z_ref,
                       hp_ref, cp_ref, hm_ref, cm_ref,
                       v_ref, prob_ref, logp_ref, ent_ref, samp_ref, lpa_ref,
                       vecs_ref,
                       *, hidden, z_size, num_actions):
    f32 = jnp.float32
    bf16 = jnp.bfloat16
    H = hidden

    st = st_ref[...]                              # (1, 4H) = [h_policy | h_model | c_policy | c_model]
    c_p = st[:, 2 * H:3 * H]
    c_m = st[:, 3 * H:4 * H]

    # ---- VAE encode head (merged mu|logvar matmul) + reparameterization ----
    enc = jnp.dot(x_ref[...], wenc_ref[...], preferred_element_type=f32) + benc_ref[...]
    mu = enc[:, 0:z_size]
    logvar = enc[:, z_size:2 * z_size]
    z = mu + eps_ref[...] * jnp.exp(0.5 * logvar)

    # ---- single merged recurrent matmul: [h_policy|h_model] and z drive BOTH LSTMs' gates ----
    rec = jnp.dot(st[:, 0:2 * H].astype(bf16), wbh_ref[...], preferred_element_type=f32)
    zc = jnp.dot(z.astype(bf16), wbz_ref[...], preferred_element_type=f32)
    pre = rec + zc                                 # (1, 8H) = [policy gates | model gates (partial)]

    # ---- policy LSTMCell (gate order i, f, g, o) ----
    gp = pre[:, 0:4 * H] + bpl_ref[...]
    i = jax.nn.sigmoid(gp[:, 0:H])
    f = jax.nn.sigmoid(gp[:, H:2 * H])
    g = jnp.tanh(gp[:, 2 * H:3 * H])
    o = jax.nn.sigmoid(gp[:, 3 * H:4 * H])
    c_p_new = f * c_p + i * g
    h_p_new = o * jnp.tanh(c_p_new)

    # ---- merged critic|actor head, log-softmax, entropy ----
    va = jnp.dot(h_p_new.astype(bf16), whd_ref[...], preferred_element_type=f32) + bhd_ref[...]
    v = va[:, 0:1]
    logit = va[:, 1:1 + num_actions]
    m = jnp.max(logit, axis=1, keepdims=True)
    sh = logit - m
    log_prob = sh - jnp.log(jnp.sum(jnp.exp(sh), axis=1, keepdims=True))
    prob = jnp.exp(log_prob)
    ent = -jnp.sum(log_prob * prob, axis=1, keepdims=True)

    # ---- inverse-CDF categorical sample (VPU adds/compares, no MXU) ----
    u = u_ref[...]
    cum = prob[:, 0:1]
    samp = jnp.zeros((1, 1), jnp.int32)
    for a in range(1, num_actions):
        samp = samp + (u >= cum).astype(jnp.int32)
        cum = cum + prob[:, a:a + 1]
    samp = jnp.minimum(samp, num_actions - 1)
    lane = jax.lax.broadcasted_iota(jnp.int32, (1, num_actions), 1)
    onehot = (lane == samp).astype(f32)
    lpa = jnp.sum(log_prob * onehot, axis=1, keepdims=True)

    # ---- model LSTMCell: one-hot action contribution as a VPU row blend ----
    woh = woh_ref[...]                             # (A, 4H) f32
    oh_contrib = onehot[:, 0:1] * woh[0:1, :]
    for a in range(1, num_actions):
        oh_contrib = oh_contrib + onehot[:, a:a + 1] * woh[a:a + 1, :]
    gm = pre[:, 4 * H:8 * H] + oh_contrib + bml_ref[...]
    im = jax.nn.sigmoid(gm[:, 0:H])
    fm = jax.nn.sigmoid(gm[:, H:2 * H])
    gg = jnp.tanh(gm[:, 2 * H:3 * H])
    om = jax.nn.sigmoid(gm[:, 3 * H:4 * H])
    c_m_new = fm * c_m + im * gg
    h_m_new = om * jnp.tanh(c_m_new)

    # ---- MDN linear ----
    vecs = jnp.dot(h_m_new.astype(bf16), wmdn_ref[...], preferred_element_type=f32) + bmdn_ref[...]

    # ---- outputs (full-block stores) ----
    mu_ref[...] = mu
    logvar_ref[...] = logvar
    z_ref[...] = z
    hp_ref[...] = h_p_new
    cp_ref[...] = c_p_new
    hm_ref[...] = h_m_new
    cm_ref[...] = c_m_new
    v_ref[...] = v
    prob_ref[...] = prob
    logp_ref[...] = log_prob
    ent_ref[...] = ent
    samp_ref[...] = samp
    lpa_ref[...] = lpa
    vecs_ref[...] = vecs


def pallas_fused_head(x_flat, state, eps, u, p):
    B = x_flat.shape[0]
    A = NUM_OUTPUTS
    nout = NUM_MIX * 3 * Z_SIZE
    f32 = jnp.float32
    spec = lambda a: pl.BlockSpec(a.shape, lambda i: (0, 0))
    sspec = lambda shp: pl.BlockSpec(shp, lambda i: (0, 0))

    ins = (x_flat, state, eps, u,
           p["enc_head_w"], p["enc_head_b"],
           p["w_big_h"], p["w_big_z"], p["b_plstm"], p["b_mlstm"], p["w_onehot"],
           p["head_w"], p["head_b"], p["mdn_w"], p["mdn_b"])

    out_shape = (
        jax.ShapeDtypeStruct((B, Z_SIZE), f32),    # mu
        jax.ShapeDtypeStruct((B, Z_SIZE), f32),    # logvar
        jax.ShapeDtypeStruct((B, Z_SIZE), f32),    # z
        jax.ShapeDtypeStruct((B, HIDDEN), f32),    # h_policy
        jax.ShapeDtypeStruct((B, HIDDEN), f32),    # c_policy
        jax.ShapeDtypeStruct((B, HIDDEN), f32),    # h_model
        jax.ShapeDtypeStruct((B, HIDDEN), f32),    # c_model
        jax.ShapeDtypeStruct((B, 1), f32),         # value
        jax.ShapeDtypeStruct((B, A), f32),         # prob
        jax.ShapeDtypeStruct((B, A), f32),         # log_prob
        jax.ShapeDtypeStruct((B, 1), f32),         # entropy
        jax.ShapeDtypeStruct((B, 1), jnp.int32),   # sample_num
        jax.ShapeDtypeStruct((B, 1), f32),         # log_prob_action
        jax.ShapeDtypeStruct((B, nout), f32),      # mdn vecs (pre-split)
    )
    out_specs = tuple(sspec(s.shape) for s in out_shape)

    return pl.pallas_call(
        functools.partial(_fused_head_kernel, hidden=HIDDEN, z_size=Z_SIZE, num_actions=A),
        out_shape=out_shape,
        grid=(1,),
        in_specs=[spec(a) for a in ins],
        out_specs=out_specs,
        compiler_params=pltpu.CompilerParams(dimension_semantics=("arbitrary",)),
    )(*ins)


def _mdn_coef_kernel(v_ref, lw_ref, mean_ref, lstd_ref, *, num_mix):
    v = v_ref[...]
    lw = v[:, 0:num_mix]
    mean = v[:, num_mix:2 * num_mix]
    lstd = v[:, 2 * num_mix:3 * num_mix]
    m = jnp.max(lw, axis=1, keepdims=True)
    lse = m + jnp.log(jnp.sum(jnp.exp(lw - m), axis=1, keepdims=True))
    lw_ref[...] = lw - lse
    mean_ref[...] = mean
    lstd_ref[...] = lstd


def pallas_mdn_coef(vecs, num_mix):
    R, C = vecs.shape   # (z_size, 3*num_mix)
    spec = lambda shp: pl.BlockSpec(shp, lambda i: (0, 0))
    return pl.pallas_call(
        functools.partial(_mdn_coef_kernel, num_mix=num_mix),
        out_shape=(jax.ShapeDtypeStruct((R, num_mix), jnp.float32),
                   jax.ShapeDtypeStruct((R, num_mix), jnp.float32),
                   jax.ShapeDtypeStruct((R, num_mix), jnp.float32)),
        grid=(1,),
        in_specs=[spec((R, C))],
        out_specs=(spec((R, num_mix)), spec((R, num_mix)), spec((R, num_mix))),
        compiler_params=pltpu.CompilerParams(dimension_semantics=("arbitrary",)),
    )(vecs)


# ----------------------------------------------------------------------------
# Plain-JAX glue (runs inside the single jit; XLA fuses the slicing/padding)
# ----------------------------------------------------------------------------
def im2col(x_nhwc, k, s):
    """Static-slice patch extraction. Returns ((N*Ho*Wo, k*k*C), Ho, Wo)."""
    N, H, W, C = x_nhwc.shape
    Ho = (H - k) // s + 1
    Wo = (W - k) // s + 1
    patches = []
    for i in range(k):
        for j in range(k):
            patches.append(x_nhwc[:, i:i + s * Ho:s, j:j + s * Wo:s, :])
    cols = jnp.concatenate(patches, axis=-1)             # (N, Ho, Wo, k*k*C)
    return cols.reshape(N * Ho * Wo, k * k * C), Ho, Wo


def conv_relu(x_nhwc, w, b, k, s):
    cols, Ho, Wo = im2col(x_nhwc, k, s)
    rows = cols.shape[0]
    rows_pad = ((rows + 7) // 8) * 8                      # sublane-align M
    if rows_pad != rows:
        cols = jnp.pad(cols, ((0, rows_pad - rows), (0, 0)))
    out = pallas_matmul_bias_relu(cols, w, b)             # (rows_pad, Cout) bf16
    return out[:rows].reshape(x_nhwc.shape[0], Ho, Wo, w.shape[1])


def _uniform(key, shape, fan_in):
    bound = 1.0 / math.sqrt(fan_in)
    return jax.random.uniform(key, shape, jnp.float32, minval=-bound, maxval=bound)


def init_params(key):
    keys = iter(jax.random.split(key, 40))
    bf16 = jnp.bfloat16
    p = {}
    # encoder convs: weight (kh*kw*Cin, Cout) bf16, bias (1, Cout) f32
    for name, k, cin, cout in [("enc1", 4, NUM_INPUTS, 32), ("enc2", 4, 32, 64),
                               ("enc3", 3, 64, 128), ("enc4", 2, 128, 256)]:
        fan = cin * k * k
        p[name + "_w"] = _uniform(next(keys), (fan, cout), fan).astype(bf16)
        p[name + "_b"] = _uniform(next(keys), (1, cout), fan)
    # VAE head merged along N: [mu | logvar]
    p["enc_head_w"] = _uniform(next(keys), (1024, 2 * Z_SIZE), 1024).astype(bf16)
    p["enc_head_b"] = _uniform(next(keys), (1, 2 * Z_SIZE), 1024)
    # merged recurrent weight: rows [h_policy(256); h_model(256)],
    # cols [policy gates(1024) | model gates(1024)]; h_policy does NOT feed the model LSTM.
    w_hh_p = _uniform(next(keys), (HIDDEN, 4 * HIDDEN), HIDDEN)     # h_policy -> policy gates
    w_ih_p_h = _uniform(next(keys), (HIDDEN, 4 * HIDDEN), HIDDEN)   # h_model  -> policy gates
    w_hh_m = _uniform(next(keys), (HIDDEN, 4 * HIDDEN), HIDDEN)     # h_model  -> model gates
    zeros_blk = jnp.zeros((HIDDEN, 4 * HIDDEN), jnp.float32)
    p["w_big_h"] = jnp.concatenate(
        [jnp.concatenate([w_hh_p, zeros_blk], axis=1),
         jnp.concatenate([w_ih_p_h, w_hh_m], axis=1)], axis=0).astype(bf16)   # (512, 2048)
    # z -> both LSTMs' gates
    w_ih_p_z = _uniform(next(keys), (Z_SIZE, 4 * HIDDEN), HIDDEN)
    w_ih_m_z = _uniform(next(keys), (Z_SIZE, 4 * HIDDEN), HIDDEN)
    p["w_big_z"] = jnp.concatenate([w_ih_p_z, w_ih_m_z], axis=1).astype(bf16)  # (32, 2048)
    # one-hot action rows of the model LSTM input weight (applied on the VPU), f32
    p["w_onehot"] = _uniform(next(keys), (NUM_OUTPUTS, 4 * HIDDEN), HIDDEN)
    # combined (b_ih + b_hh) biases, f32
    p["b_plstm"] = _uniform(next(keys), (1, 4 * HIDDEN), HIDDEN)
    p["b_mlstm"] = _uniform(next(keys), (1, 4 * HIDDEN), HIDDEN)
    # merged critic|actor head
    p["head_w"] = _uniform(next(keys), (HIDDEN, 1 + NUM_OUTPUTS), HIDDEN).astype(bf16)
    p["head_b"] = _uniform(next(keys), (1, 1 + NUM_OUTPUTS), HIDDEN)
    nout = NUM_MIX * 3 * Z_SIZE
    p["mdn_w"] = _uniform(next(keys), (HIDDEN, nout), HIDDEN).astype(bf16)
    p["mdn_b"] = _uniform(next(keys), (1, nout), HIDDEN)
    return p


def _forward(params, x_nchw, state, rng_key):
    """Model.forward (training branch). state = [h_policy|h_model|c_policy|c_model]."""
    B = x_nchw.shape[0]
    assert B == 1, "forward samples a single action (batch 1, as in reset_hidden_layer)"
    k_eps, k_u = jax.random.split(rng_key)

    # ---- encoder: NCHW -> NHWC bf16, im2col (XLA) + Pallas matmul/bias/ReLU ----
    h = jnp.transpose(x_nchw, (0, 2, 3, 1)).astype(jnp.bfloat16)
    for name, k, s in [("enc1", 4, 2), ("enc2", 4, 2), ("enc3", 3, 2), ("enc4", 2, 2)]:
        h = conv_relu(h, params[name + "_w"], params[name + "_b"], k, s)
    x_flat = h.reshape(B, -1)                               # (1, 1024) bf16, HWC-major flatten

    eps = jax.random.normal(k_eps, (B, Z_SIZE), jnp.float32)
    u = jax.random.uniform(k_u, (B, 1), jnp.float32)

    # ---- one fused kernel: VAE head + policy LSTM + policy head + model LSTM + MDN linear ----
    (mu, logvar, z, h_policy, c_policy, h_model, c_model,
     v, prob, log_prob, entropy, sample_num, log_prob_action, vecs) = \
        pallas_fused_head(x_flat, state, eps, u, params)

    # ---- MDN coefficient normalization ----
    logweight_mdn, mean_mdn, logstd_mdn = pallas_mdn_coef(
        vecs.reshape(-1, NUM_MIX * 3), NUM_MIX)

    state_out = jnp.concatenate([h_policy, h_model, c_policy, c_model], axis=1)
    action = sample_num + 2                                 # action_map {0: 2, 1: 3}, on device
    return dict(action=action, sample_num=sample_num, z=z, mu=mu, logvar=logvar,
                v=v, prob=prob, log_prob=log_prob, entropy=entropy,
                log_prob_action=log_prob_action,
                h_policy=h_policy, c_policy=c_policy, h_model=h_model, c_model=c_model,
                state=state_out,
                logweight_mdn=logweight_mdn, mean_mdn=mean_mdn, logstd_mdn=logstd_mdn)


forward = jax.jit(_forward)


if __name__ == "__main__":
    key = jax.random.PRNGKey(0)
    k_param, k_input, k_fwd = jax.random.split(key, 3)

    params = init_params(k_param)
    # input spatial 42x42 -> encoder output 2x2x256 = 1024, matching en_fc_mu / en_fc_log_var
    x = jax.random.normal(k_input, (1, NUM_INPUTS, 42, 42), jnp.float32)
    state0 = jnp.zeros((1, 4 * HIDDEN), jnp.float32)        # reset_hidden_layer equivalent

    aux = forward(params, x, state0, k_fwd)
    jax.block_until_ready(jax.tree_util.tree_leaves(aux))

    action = int(aux["action"][0, 0])                       # host readback outside the jitted path
    assert action in (2, 3)
    assert aux["z"].shape == (1, Z_SIZE)
    assert aux["prob"].shape == (1, NUM_OUTPUTS)
    assert aux["logweight_mdn"].shape == (Z_SIZE, NUM_MIX)
    print("KERNEL_OK")
</pallas_src>

<mosaic_0001>
module attributes {stable_mosaic.version = 11 : i64} {
  func.func @_matmul_bias_relu_kernel(%arg0: i32, %arg1: memref<400x48xbf16, #tpu.memory_space<vmem>>, %arg2: memref<48x32xbf16, #tpu.memory_space<vmem>>, %arg3: memref<1x32xf32, #tpu.memory_space<vmem>>, %arg4: memref<400x32xbf16, #tpu.memory_space<vmem>>) attributes {dimension_semantics = [#tpu.dimension_semantics<arbitrary>], iteration_bounds = array<i64: 1>, scalar_prefetch = 0 : i64, scratch_operands = 0 : i64, tpu.core_type = #tpu.core_type<tc>, window_params = [{pipeline_mode = #tpu.pipeline_mode<synchronous>, transform_indices = @transform_0, window_bounds = array<i64: 400, 48>}, {pipeline_mode = #tpu.pipeline_mode<synchronous>, transform_indices = @transform_1, window_bounds = array<i64: 48, 32>}, {pipeline_mode = #tpu.pipeline_mode<synchronous>, transform_indices = @transform_2, window_bounds = array<i64: 1, 32>}, {pipeline_mode = #tpu.pipeline_mode<synchronous>, transform_indices = @transform_3, window_bounds = array<i64: 400, 32>}]} {
    %c0 = arith.constant 0 : index
    %c0_0 = arith.constant 0 : index
    %0 = vector.load %arg1[%c0, %c0_0] : memref<400x48xbf16, #tpu.memory_space<vmem>>, vector<400x48xbf16>
    %c0_1 = arith.constant 0 : index
    %c0_2 = arith.constant 0 : index
    %1 = vector.load %arg2[%c0_1, %c0_2] : memref<48x32xbf16, #tpu.memory_space<vmem>>, vector<48x32xbf16>
    %cst = arith.constant dense<0.000000e+00> : vector<400x32xf32>
    %2 = tpu.matmul %0, %1, %cst {dimension_numbers = #tpu.dot_dimension_numbers<[1], [0], [0], [1], [0, 0, 1, 1], [], []>} : vector<400x48xbf16>, vector<48x32xbf16>, vector<400x32xf32> -> vector<400x32xf32>
    %c0_3 = arith.constant 0 : index
    %c0_4 = arith.constant 0 : index
    %3 = vector.load %arg3[%c0_3, %c0_4] : memref<1x32xf32, #tpu.memory_space<vmem>>, vector<1x32xf32>
    %4 = vector.broadcast %3 : vector<1x32xf32> to vector<400x32xf32>
    %5 = arith.addf %2, %4 : vector<400x32xf32>
    %cst_5 = arith.constant 0.000000e+00 : f32
    %6 = vector.broadcast %cst_5 : f32 to vector<400x32xf32>
    %7 = arith.maximumf %5, %6 : vector<400x32xf32>
    %8 = arith.truncf %7 : vector<400x32xf32> to vector<400x32xbf16>
    %c0_6 = arith.constant 0 : index
    %c0_7 = arith.constant 0 : index
    %9 = vector.load %arg4[%c0_6, %c0_7] : memref<400x32xbf16, #tpu.memory_space<vmem>>, vector<400x32xbf16>
    tpu.vector_store %arg4[%c0_6, %c0_7], %8 {strides = array<i32>} : memref<400x32xbf16, #tpu.memory_space<vmem>>, vector<400x32xbf16>,
    return
  }
  func.func @transform_0(%arg0: i32) -> (i32, i32) {
    %c0_i32 = arith.constant 0 : i32
    %c0_i32_0 = arith.constant 0 : i32
    %c0_i32_1 = arith.constant 0 : i32
    return %c0_i32, %c0_i32_0 : i32, i32
  }
  func.func @transform_1(%arg0: i32) -> (i32, i32) {
    %c0_i32 = arith.constant 0 : i32
    %c0_i32_0 = arith.constant 0 : i32
    %c0_i32_1 = arith.constant 0 : i32
    return %c0_i32, %c0_i32_0 : i32, i32
  }
  func.func @transform_2(%arg0: i32) -> (i32, i32) {
    %c0_i32 = arith.constant 0 : i32
    %c0_i32_0 = arith.constant 0 : i32
    %c0_i32_1 = arith.constant 0 : i32
    return %c0_i32, %c0_i32_0 : i32, i32
  }
  func.func @transform_3(%arg0: i32) -> (i32, i32) {
    %c0_i32 = arith.constant 0 : i32
    %c0_i32_0 = arith.constant 0 : i32
    %c0_i32_1 = arith.constant 0 : i32
    return %c0_i32, %c0_i32_0 : i32, i32
  }
}

module attributes {stable_mosaic.version = 11 : i64} {
  func.func @_matmul_bias_relu_kernel(%arg0: i32, %arg1: memref<88x512xbf16, #tpu.memory_space<vmem>>, %arg2: memref<512x64xbf16, #tpu.memory_space<vmem>>, %arg3: memref<1x64xf32, #tpu.memory_space<vmem>>, %arg4: memref<88x64xbf16, #tpu.memory_space<vmem>>) attributes {dimension_semantics = [#tpu.dimension_semantics<arbitrary>], iteration_bounds = array<i64: 1>, scalar_prefetch = 0 : i64, scratch_operands = 0 : i64, tpu.core_type = #tpu.core_type<tc>, window_params = [{pipeline_mode = #tpu.pipeline_mode<synchronous>, transform_indices = @transform_0, window_bounds = array<i64: 88, 512>}, {pipeline_mode = #tpu.pipeline_mode<synchronous>, transform_indices = @transform_1, window_bounds = array<i64: 512, 64>}, {pipeline_mode = #tpu.pipeline_mode<synchronous>, transform_indices = @transform_2, window_bounds = array<i64: 1, 64>}, {pipeline_mode = #tpu.pipeline_mode<synchronous>, transform_indices = @transform_3, window_bounds = array<i64: 88, 64>}]} {
    %c0 = arith.constant 0 : index
    %c0_0 = arith.constant 0 : index
    %0 = vector.load %arg1[%c0, %c0_0] : memref<88x512xbf16, #tpu.memory_space<vmem>>, vector<88x512xbf16>
    %c0_1 = arith.constant 0 : index
    %c0_2 = arith.constant 0 : index
    %1 = vector.load %arg2[%c0_1, %c0_2] : memref<512x64xbf16, #tpu.memory_space<vmem>>, vector<512x64xbf16>
    %cst = arith.constant dense<0.000000e+00> : vector<88x64xf32>
    %2 = tpu.matmul %0, %1, %cst {dimension_numbers = #tpu.dot_dimension_numbers<[1], [0], [0], [1], [0, 0, 1, 1], [], []>} : vector<88x512xbf16>, vector<512x64xbf16>, vector<88x64xf32> -> vector<88x64xf32>
    %c0_3 = arith.constant 0 : index
    %c0_4 = arith.constant 0 : index
    %3 = vector.load %arg3[%c0_3, %c0_4] : memref<1x64xf32, #tpu.memory_space<vmem>>, vector<1x64xf32>
    %4 = vector.broadcast %3 : vector<1x64xf32> to vector<88x64xf32>
    %5 = arith.addf %2, %4 : vector<88x64xf32>
    %cst_5 = arith.constant 0.000000e+00 : f32
    %6 = vector.broadcast %cst_5 : f32 to vector<88x64xf32>
    %7 = arith.maximumf %5, %6 : vector<88x64xf32>
    %8 = arith.truncf %7 : vector<88x64xf32> to vector<88x64xbf16>
    %c0_6 = arith.constant 0 : index
    %c0_7 = arith.constant 0 : index
    %9 = vector.load %arg4[%c0_6, %c0_7] : memref<88x64xbf16, #tpu.memory_space<vmem>>, vector<88x64xbf16>
    tpu.vector_store %arg4[%c0_6, %c0_7], %8 {strides = array<i32>} : memref<88x64xbf16, #tpu.memory_space<vmem>>, vector<88x64xbf16>,
    return
  }
  func.func @transform_0(%arg0: i32) -> (i32, i32) {
    %c0_i32 = arith.constant 0 : i32
    %c0_i32_0 = arith.constant 0 : i32
    %c0_i32_1 = arith.constant 0 : i32
    return %c0_i32, %c0_i32_0 : i32, i32
  }
  func.func @transform_1(%arg0: i32) -> (i32, i32) {
    %c0_i32 = arith.constant 0 : i32
    %c0_i32_0 = arith.constant 0 : i32
    %c0_i32_1 = arith.constant 0 : i32
    return %c0_i32, %c0_i32_0 : i32, i32
  }
  func.func @transform_2(%arg0: i32) -> (i32, i32) {
    %c0_i32 = arith.constant 0 : i32
    %c0_i32_0 = arith.constant 0 : i32
    %c0_i32_1 = arith.constant 0 : i32
    return %c0_i32, %c0_i32_0 : i32, i32
  }
  func.func @transform_3(%arg0: i32) -> (i32, i32) {
    %c0_i32 = arith.constant 0 : i32
    %c0_i32_0 = arith.constant 0 : i32
    %c0_i32_1 = arith.constant 0 : i32
    return %c0_i32, %c0_i32_0 : i32, i32
  }
}

module attributes {stable_mosaic.version = 11 : i64} {
  func.func @_matmul_bias_relu_kernel(%arg0: i32, %arg1: memref<8x512xbf16, #tpu.memory_space<vmem>>, %arg2: memref<512x256xbf16, #tpu.memory_space<vmem>>, %arg3: memref<1x256xf32, #tpu.memory_space<vmem>>, %arg4: memref<8x256xbf16, #tpu.memory_space<vmem>>) attributes {dimension_semantics = [#tpu.dimension_semantics<arbitrary>], iteration_bounds = array<i64: 1>, scalar_prefetch = 0 : i64, scratch_operands = 0 : i64, tpu.core_type = #tpu.core_type<tc>, window_params = [{pipeline_mode = #tpu.pipeline_mode<synchronous>, transform_indices = @transform_0, window_bounds = array<i64: 8, 512>}, {pipeline_mode = #tpu.pipeline_mode<synchronous>, transform_indices = @transform_1, window_bounds = array<i64: 512, 256>}, {pipeline_mode = #tpu.pipeline_mode<synchronous>, transform_indices = @transform_2, window_bounds = array<i64: 1, 256>}, {pipeline_mode = #tpu.pipeline_mode<synchronous>, transform_indices = @transform_3, window_bounds = array<i64: 8, 256>}]} {
    %c0 = arith.constant 0 : index
    %c0_0 = arith.constant 0 : index
    %0 = vector.load %arg1[%c0, %c0_0] : memref<8x512xbf16, #tpu.memory_space<vmem>>, vector<8x512xbf16>
    %c0_1 = arith.constant 0 : index
    %c0_2 = arith.constant 0 : index
    %1 = vector.load %arg2[%c0_1, %c0_2] : memref<512x256xbf16, #tpu.memory_space<vmem>>, vector<512x256xbf16>
    %cst = arith.constant dense<0.000000e+00> : vector<8x256xf32>
    %2 = tpu.matmul %0, %1, %cst {dimension_numbers = #tpu.dot_dimension_numbers<[1], [0], [0], [1], [0, 0, 1, 1], [], []>} : vector<8x512xbf16>, vector<512x256xbf16>, vector<8x256xf32> -> vector<8x256xf32>
    %c0_3 = arith.constant 0 : index
    %c0_4 = arith.constant 0 : index
    %3 = vector.load %arg3[%c0_3, %c0_4] : memref<1x256xf32, #tpu.memory_space<vmem>>, vector<1x256xf32>
    %4 = vector.broadcast %3 : vector<1x256xf32> to vector<8x256xf32>
    %5 = arith.addf %2, %4 : vector<8x256xf32>
    %cst_5 = arith.constant 0.000000e+00 : f32
    %6 = vector.broadcast %cst_5 : f32 to vector<8x256xf32>
    %7 = arith.maximumf %5, %6 : vector<8x256xf32>
    %8 = arith.truncf %7 : vector<8x256xf32> to vector<8x256xbf16>
    %c0_6 = arith.constant 0 : index
    %c0_7 = arith.constant 0 : index
    %9 = vector.load %arg4[%c0_6, %c0_7] : memref<8x256xbf16, #tpu.memory_space<vmem>>, vector<8x256xbf16>
    tpu.vector_store %arg4[%c0_6, %c0_7], %8 {strides = array<i32>} : memref<8x256xbf16, #tpu.memory_space<vmem>>, vector<8x256xbf16>,
    return
  }
  func.func @transform_0(%arg0: i32) -> (i32, i32) {
    %c0_i32 = arith.constant 0 : i32
    %c0_i32_0 = arith.constant 0 : i32
    %c0_i32_1 = arith.constant 0 : i32
    return %c0_i32, %c0_i32_0 : i32, i32
  }
  func.func @transform_1(%arg0: i32) -> (i32, i32) {
    %c0_i32 = arith.constant 0 : i32
    %c0_i32_0 = arith.constant 0 : i32
    %c0_i32_1 = arith.constant 0 : i32
    return %c0_i32, %c0_i32_0 : i32, i32
  }
  func.func @transform_2(%arg0: i32) -> (i32, i32) {
    %c0_i32 = arith.constant 0 : i32
    %c0_i32_0 = arith.constant 0 : i32
    %c0_i32_1 = arith.constant 0 : i32
    return %c0_i32, %c0_i32_0 : i32, i32
  }
  func.func @transform_3(%arg0: i32) -> (i32, i32) {
    %c0_i32 = arith.constant 0 : i32
    %c0_i32_0 = arith.constant 0 : i32
    %c0_i32_1 = arith.constant 0 : i32
    return %c0_i32, %c0_i32_0 : i32, i32
  }
}

module attributes {stable_mosaic.version = 11 : i64} {
  func.func @_matmul_bias_relu_kernel(%arg0: i32, %arg1: memref<16x576xbf16, #tpu.memory_space<vmem>>, %arg2: memref<576x128xbf16, #tpu.memory_space<vmem>>, %arg3: memref<1x128xf32, #tpu.memory_space<vmem>>, %arg4: memref<16x128xbf16, #tpu.memory_space<vmem>>) attributes {dimension_semantics = [#tpu.dimension_semantics<arbitrary>], iteration_bounds = array<i64: 1>, scalar_prefetch = 0 : i64, scratch_operands = 0 : i64, tpu.core_type = #tpu.core_type<tc>, window_params = [{pipeline_mode = #tpu.pipeline_mode<synchronous>, transform_indices = @transform_0, window_bounds = array<i64: 16, 576>}, {pipeline_mode = #tpu.pipeline_mode<synchronous>, transform_indices = @transform_1, window_bounds = array<i64: 576, 128>}, {pipeline_mode = #tpu.pipeline_mode<synchronous>, transform_indices = @transform_2, window_bounds = array<i64: 1, 128>}, {pipeline_mode = #tpu.pipeline_mode<synchronous>, transform_indices = @transform_3, window_bounds = array<i64: 16, 128>}]} {
    %c0 = arith.constant 0 : index
    %c0_0 = arith.constant 0 : index
    %0 = vector.load %arg1[%c0, %c0_0] : memref<16x576xbf16, #tpu.memory_space<vmem>>, vector<16x576xbf16>
    %c0_1 = arith.constant 0 : index
    %c0_2 = arith.constant 0 : index
    %1 = vector.load %arg2[%c0_1, %c0_2] : memref<576x128xbf16, #tpu.memory_space<vmem>>, vector<576x128xbf16>
    %cst = arith.constant dense<0.000000e+00> : vector<16x128xf32>
    %2 = tpu.matmul %0, %1, %cst {dimension_numbers = #tpu.dot_dimension_numbers<[1], [0], [0], [1], [0, 0, 1, 1], [], []>} : vector<16x576xbf16>, vector<576x128xbf16>, vector<16x128xf32> -> vector<16x128xf32>
    %c0_3 = arith.constant 0 : index
    %c0_4 = arith.constant 0 : index
    %3 = vector.load %arg3[%c0_3, %c0_4] : memref<1x128xf32, #tpu.memory_space<vmem>>, vector<1x128xf32>
    %4 = vector.broadcast %3 : vector<1x128xf32> to vector<16x128xf32>
    %5 = arith.addf %2, %4 : vector<16x128xf32>
    %cst_5 = arith.constant 0.000000e+00 : f32
    %6 = vector.broadcast %cst_5 : f32 to vector<16x128xf32>
    %7 = arith.maximumf %5, %6 : vector<16x128xf32>
    %8 = arith.truncf %7 : vector<16x128xf32> to vector<16x128xbf16>
    %c0_6 = arith.constant 0 : index
    %c0_7 = arith.constant 0 : index
    %9 = vector.load %arg4[%c0_6, %c0_7] : memref<16x128xbf16, #tpu.memory_space<vmem>>, vector<16x128xbf16>
    tpu.vector_store %arg4[%c0_6, %c0_7], %8 {strides = array<i32>} : memref<16x128xbf16, #tpu.memory_space<vmem>>, vector<16x128xbf16>,
    return
  }
  func.func @transform_0(%arg0: i32) -> (i32, i32) {
    %c0_i32 = arith.constant 0 : i32
    %c0_i32_0 = arith.constant 0 : i32
    %c0_i32_1 = arith.constant 0 : i32
    return %c0_i32, %c0_i32_0 : i32, i32
  }
  func.func @transform_1(%arg0: i32) -> (i32, i32) {
    %c0_i32 = arith.constant 0 : i32
    %c0_i32_0 = arith.constant 0 : i32
    %c0_i32_1 = arith.constant 0 : i32
    return %c0_i32, %c0_i32_0 : i32, i32
  }
  func.func @transform_2(%arg0: i32) -> (i32, i32) {
    %c0_i32 = arith.constant 0 : i32
    %c0_i32_0 = arith.constant 0 : i32
    %c0_i32_1 = arith.constant 0 : i32
    return %c0_i32, %c0_i32_0 : i32, i32
  }
  func.func @transform_3(%arg0: i32) -> (i32, i32) {
    %c0_i32 = arith.constant 0 : i32
    %c0_i32_0 = arith.constant 0 : i32
    %c0_i32_1 = arith.constant 0 : i32
    return %c0_i32, %c0_i32_0 : i32, i32
  }
}

module attributes {stable_mosaic.version = 11 : i64} {
  func.func @_fused_head_kernel(%arg0: i32, %arg1: memref<1x1024xbf16, #tpu.memory_space<vmem>>, %arg2: memref<1x1024xf32, #tpu.memory_space<vmem>>, %arg3: memref<1x32xf32, #tpu.memory_space<vmem>>, %arg4: memref<1x1xf32, #tpu.memory_space<vmem>>, %arg5: memref<1024x64xbf16, #tpu.memory_space<vmem>>, %arg6: memref<1x64xf32, #tpu.memory_space<vmem>>, %arg7: memref<512x2048xbf16, #tpu.memory_space<vmem>>, %arg8: memref<32x2048xbf16, #tpu.memory_space<vmem>>, %arg9: memref<1x1024xf32, #tpu.memory_space<vmem>>, %arg10: memref<1x1024xf32, #tpu.memory_space<vmem>>, %arg11: memref<2x1024xf32, #tpu.memory_space<vmem>>, %arg12: memref<256x3xbf16, #tpu.memory_space<vmem>>, %arg13: memref<1x3xf32, #tpu.memory_space<vmem>>, %arg14: memref<256x480xbf16, #tpu.memory_space<vmem>>, %arg15: memref<1x480xf32, #tpu.memory_space<vmem>>, %arg16: memref<1x32xf32, #tpu.memory_space<vmem>>, %arg17: memref<1x32xf32, #tpu.memory_space<vmem>>, %arg18: memref<1x32xf32, #tpu.memory_space<vmem>>, %arg19: memref<1x256xf32, #tpu.memory_space<vmem>>, %arg20: memref<1x256xf32, #tpu.memory_space<vmem>>, %arg21: memref<1x256xf32, #tpu.memory_space<vmem>>, %arg22: memref<1x256xf32, #tpu.memory_space<vmem>>, %arg23: memref<1x1xf32, #tpu.memory_space<vmem>>, %arg24: memref<1x2xf32, #tpu.memory_space<vmem>>, %arg25: memref<1x2xf32, #tpu.memory_space<vmem>>, %arg26: memref<1x1xf32, #tpu.memory_space<vmem>>, %arg27: memref<1x1xi32, #tpu.memory_space<vmem>>, %arg28: memref<1x1xf32, #tpu.memory_space<vmem>>, %arg29: memref<1x480xf32, #tpu.memory_space<vmem>>) attributes {dimension_semantics = [#tpu.dimension_semantics<arbitrary>], iteration_bounds = array<i64: 1>, scalar_prefetch = 0 : i64, scratch_operands = 0 : i64, tpu.core_type = #tpu.core_type<tc>, window_params = [{pipeline_mode = #tpu.pipeline_mode<synchronous>, transform_indices = @transform_0, window_bounds = array<i64: 1, 1024>}, {pipeline_mode = #tpu.pipeline_mode<synchronous>, transform_indices = @transform_1, window_bounds = array<i64: 1, 1024>}, {pipeline_mode = #tpu.pipeline_mode<synchronous>, transform_indices = @transform_2, window_bounds = array<i64: 1, 32>}, {pipeline_mode = #tpu.pipeline_mode<synchronous>, transform_indices = @transform_3, window_bounds = array<i64: 1, 1>}, {pipeline_mode = #tpu.pipeline_mode<synchronous>, transform_indices = @transform_4, window_bounds = array<i64: 1024, 64>}, {pipeline_mode = #tpu.pipeline_mode<synchronous>, transform_indices = @transform_5, window_bounds = array<i64: 1, 64>}, {pipeline_mode = #tpu.pipeline_mode<synchronous>, transform_indices = @transform_6, window_bounds = array<i64: 512, 2048>}, {pipeline_mode = #tpu.pipeline_mode<synchronous>, transform_indices = @transform_7, window_bounds = array<i64: 32, 2048>}, {pipeline_mode = #tpu.pipeline_mode<synchronous>, transform_indices = @transform_8, window_bounds = array<i64: 1, 1024>}, {pipeline_mode = #tpu.pipeline_mode<synchronous>, transform_indices = @transform_9, window_bounds = array<i64: 1, 1024>}, {pipeline_mode = #tpu.pipeline_mode<synchronous>, transform_indices = @transform_10, window_bounds = array<i64: 2, 1024>}, {pipeline_mode = #tpu.pipeline_mode<synchronous>, transform_indices = @transform_11, window_bounds = array<i64: 256, 3>}, {pipeline_mode = #tpu.pipeline_mode<synchronous>, transform_indices = @transform_12, window_bounds = array<i64: 1, 3>}, {pipeline_mode = #tpu.pipeline_mode<synchronous>, transform_indices = @transform_13, window_bounds = array<i64: 256, 480>}, {pipeline_mode = #tpu.pipeline_mode<synchronous>, transform_indices = @transform_14, window_bounds = array<i64: 1, 480>}, {pipeline_mode = #tpu.pipeline_mode<synchronous>, transform_indices = @transform_15, window_bounds = array<i64: 1, 32>}, {pipeline_mode = #tpu.pipeline_mode<synchronous>, transform_indices = @transform_16, window_bounds = array<i64: 1, 32>}, {pipeline_mode = #tpu.pipeline_mode<synchronous>, transform_indices = @transform_17, window_bounds = array<i64: 1, 32>}, {pipeline_mode = #tpu.pipeline_mode<synchronous>, transform_indices = @transform_18, window_bounds = array<i64: 1, 256>}, {pipeline_mode = #tpu.pipeline_mode<synchronous>, transform_indices = @transform_19, window_bounds = array<i64: 1, 256>}, {pipeline_mode = #tpu.pipeline_mode<synchronous>, transform_indices = @transform_20, window_bounds = array<i64: 1, 256>}, {pipeline_mode = #tpu.pipeline_mode<synchronous>, transform_indices = @transform_21, window_bounds = array<i64: 1, 256>}, {pipeline_mode = #tpu.pipeline_mode<synchronous>, transform_indices = @transform_22, window_bounds = array<i64: 1, 1>}, {pipeline_mode = #tpu.pipeline_mode<synchronous>, transform_indices = @transform_23, window_bounds = array<i64: 1, 2>}, {pipeline_mode = #tpu.pipeline_mode<synchronous>, transform_indices = @transform_24, window_bounds = array<i64: 1, 2>}, {pipeline_mode = #tpu.pipeline_mode<synchronous>, transform_indices = @transform_25, window_bounds = array<i64: 1, 1>}, {pipeline_mode = #tpu.pipeline_mode<synchronous>, transform_indices = @transform_26, window_bounds = array<i64: 1, 1>}, {pipeline_mode = #tpu.pipeline_mode<synchronous>, transform_indices = @transform_27, window_bounds = array<i64: 1, 1>}, {pipeline_mode = #tpu.pipeline_mode<synchronous>, transform_indices = @transform_28, window_bounds = array<i64: 1, 480>}]} {
    %c0 = arith.constant 0 : index
    %c0_0 = arith.constant 0 : index
    %0 = vector.load %arg2[%c0, %c0_0] : memref<1x1024xf32, #tpu.memory_space<vmem>>, vector<1x1024xf32>
    %1 = vector.extract_strided_slice %0 {offsets = [0, 512], sizes = [1, 256], strides = [1, 1]} : vector<1x1024xf32> to vector<1x256xf32>
    %2 = vector.extract_strided_slice %0 {offsets = [0, 768], sizes = [1, 256], strides = [1, 1]} : vector<1x1024xf32> to vector<1x256xf32>
    %c0_1 = arith.constant 0 : index
    %c0_2 = arith.constant 0 : index
    %3 = vector.load %arg1[%c0_1, %c0_2] : memref<1x1024xbf16, #tpu.memory_space<vmem>>, vector<1x1024xbf16>
    %c0_3 = arith.constant 0 : index
    %c0_4 = arith.constant 0 : index
    %4 = vector.load %arg5[%c0_3, %c0_4] : memref<1024x64xbf16, #tpu.memory_space<vmem>>, vector<1024x64xbf16>
    %cst = arith.constant dense<0.000000e+00> : vector<1x64xf32>
    %5 = tpu.matmul %3, %4, %cst {dimension_numbers = #tpu.dot_dimension_numbers<[1], [0], [0], [1], [0, 0, 1, 1], [], []>} : vector<1x1024xbf16>, vector<1024x64xbf16>, vector<1x64xf32> -> vector<1x64xf32>
    %c0_5 = arith.constant 0 : index
    %c0_6 = arith.constant 0 : index
    %6 = vector.load %arg6[%c0_5, %c0_6] : memref<1x64xf32, #tpu.memory_space<vmem>>, vector<1x64xf32>
    %7 = arith.addf %5, %6 : vector<1x64xf32>
    %8 = vector.extract_strided_slice %7 {offsets = [0, 0], sizes = [1, 32], strides = [1, 1]} : vector<1x64xf32> to vector<1x32xf32>
    %9 = vector.extract_strided_slice %7 {offsets = [0, 32], sizes = [1, 32], strides = [1, 1]} : vector<1x64xf32> to vector<1x32xf32>
    %c0_7 = arith.constant 0 : index
    %c0_8 = arith.constant 0 : index
    %10 = vector.load %arg3[%c0_7, %c0_8] : memref<1x32xf32, #tpu.memory_space<vmem>>, vector<1x32xf32>
    %cst_9 = arith.constant 5.000000e-01 : f32
    %11 = vector.broadcast %cst_9 : f32 to vector<1x32xf32>
    %12 = arith.mulf %11, %9 : vector<1x32xf32>
    %13 = math.exp %12 : vector<1x32xf32>
    %14 = arith.mulf %10, %13 : vector<1x32xf32>
    %15 = arith.addf %8, %14 : vector<1x32xf32>
    %16 = vector.extract_strided_slice %0 {offsets = [0, 0], sizes = [1, 512], strides = [1, 1]} : vector<1x1024xf32> to vector<1x512xf32>
    %17 = arith.truncf %16 : vector<1x512xf32> to vector<1x512xbf16>
    %c0_10 = arith.constant 0 : index
    %c0_11 = arith.constant 0 : index
    %18 = vector.load %arg7[%c0_10, %c0_11] : memref<512x2048xbf16, #tpu.memory_space<vmem>>, vector<512x2048xbf16>
    %cst_12 = arith.constant dense<0.000000e+00> : vector<1x2048xf32>
    %19 = tpu.matmul %17, %18, %cst_12 {dimension_numbers = #tpu.dot_dimension_numbers<[1], [0], [0], [1], [0, 0, 1, 1], [], []>} : vector<1x512xbf16>, vector<512x2048xbf16>, vector<1x2048xf32> -> vector<1x2048xf32>
    %20 = arith.truncf %15 : vector<1x32xf32> to vector<1x32xbf16>
    %c0_13 = arith.constant 0 : index
    %c0_14 = arith.constant 0 : index
    %21 = vector.load %arg8[%c0_13, %c0_14] : memref<32x2048xbf16, #tpu.memory_space<vmem>>, vector<32x2048xbf16>
    %cst_15 = arith.constant dense<0.000000e+00> : vector<1x2048xf32>
    %22 = tpu.matmul %20, %21, %cst_15 {dimension_numbers = #tpu.dot_dimension_numbers<[1], [0], [0], [1], [0, 0, 1, 1], [], []>} : vector<1x32xbf16>, vector<32x2048xbf16>, vector<1x2048xf32> -> vector<1x2048xf32>
    %23 = arith.addf %19, %22 : vector<1x2048xf32>
    %24 = vector.extract_strided_slice %23 {offsets = [0, 0], sizes = [1, 1024], strides = [1, 1]} : vector<1x2048xf32> to vector<1x1024xf32>
    %c0_16 = arith.constant 0 : index
    %c0_17 = arith.constant 0 : index
    %25 = vector.load %arg9[%c0_16, %c0_17] : memref<1x1024xf32, #tpu.memory_space<vmem>>, vector<1x1024xf32>
    %26 = arith.addf %24, %25 : vector<1x1024xf32>
    %27 = vector.extract_strided_slice %26 {offsets = [0, 0], sizes = [1, 256], strides = [1, 1]} : vector<1x1024xf32> to vector<1x256xf32>
    %28 = arith.negf %27 : vector<1x256xf32>
    %29 = math.exp %28 : vector<1x256xf32>
    %cst_18 = arith.constant 1.000000e+00 : f32
    %30 = vector.broadcast %cst_18 : f32 to vector<1x256xf32>
    %31 = arith.addf %30, %29 : vector<1x256xf32>
    %32 = arith.divf %30, %31 : vector<1x256xf32>
    %33 = vector.extract_strided_slice %26 {offsets = [0, 256], sizes = [1, 256], strides = [1, 1]} : vector<1x1024xf32> to vector<1x256xf32>
    %34 = arith.negf %33 : vector<1x256xf32>
    %35 = math.exp %34 : vector<1x256xf32>
    %cst_19 = arith.constant 1.000000e+00 : f32
    %36 = vector.broadcast %cst_19 : f32 to vector<1x256xf32>
    %37 = arith.addf %36, %35 : vector<1x256xf32>
    %38 = arith.divf %36, %37 : vector<1x256xf32>
    %39 = vector.extract_strided_slice %26 {offsets = [0, 512], sizes = [1, 256], strides = [1, 1]} : vector<1x1024xf32> to vector<1x256xf32>
    %40 = math.tanh %39 : vector<1x256xf32>
    %41 = vector.extract_strided_slice %26 {offsets = [0, 768], sizes = [1, 256], strides = [1, 1]} : vector<1x1024xf32> to vector<1x256xf32>
    %42 = arith.negf %41 : vector<1x256xf32>
    %43 = math.exp %42 : vector<1x256xf32>
    %cst_20 = arith.constant 1.000000e+00 : f32
    %44 = vector.broadcast %cst_20 : f32 to vector<1x256xf32>
    %45 = arith.addf %44, %43 : vector<1x256xf32>
    %46 = arith.divf %44, %45 : vector<1x256xf32>
    %47 = arith.mulf %38, %1 : vector<1x256xf32>
    %48 = arith.mulf %32, %40 : vector<1x256xf32>
    %49 = arith.addf %47, %48 : vector<1x256xf32>
    %50 = math.tanh %49 : vector<1x256xf32>
    %51 = arith.mulf %46, %50 : vector<1x256xf32>
    %52 = arith.truncf %51 : vector<1x256xf32> to vector<1x256xbf16>
    %c0_21 = arith.constant 0 : index
    %c0_22 = arith.constant 0 : index
    %53 = vector.load %arg12[%c0_21, %c0_22] : memref<256x3xbf16, #tpu.memory_space<vmem>>, vector<256x3xbf16>
    %cst_23 = arith.constant dense<0.000000e+00> : vector<1x3xf32>
    %54 = tpu.matmul %52, %53, %cst_23 {dimension_numbers = #tpu.dot_dimension_numbers<[1], [0], [0], [1], [0, 0, 1, 1], [], []>} : vector<1x256xbf16>, vector<256x3xbf16>, vector<1x3xf32> -> vector<1x3xf32>
    %c0_24 = arith.constant 0 : index
    %c0_25 = arith.constant 0 : index
    %55 = vector.load %arg13[%c0_24, %c0_25] : memref<1x3xf32, #tpu.memory_space<vmem>>, vector<1x3xf32>
    %56 = arith.addf %54, %55 : vector<1x3xf32>
    %57 = vector.extract_strided_slice %56 {offsets = [0, 0], sizes = [1, 1], strides = [1, 1]} : vector<1x3xf32> to vector<1x1xf32>
    %58 = vector.extract_strided_slice %56 {offsets = [0, 1], sizes = [1, 2], strides = [1, 1]} : vector<1x3xf32> to vector<1x2xf32>
    %cst_26 = arith.constant dense<0xFF800000> : vector<1xf32>
    %59 = vector.multi_reduction <maximumf>, %58, %cst_26 [1] : vector<1x2xf32> to vector<1xf32>
    %60 = vector.shape_cast %59 : vector<1xf32> to vector<1x1xf32>
    %61 = vector.broadcast %60 : vector<1x1xf32> to vector<1x2xf32>
    %62 = arith.subf %58, %61 : vector<1x2xf32>
    %63 = math.exp %62 : vector<1x2xf32>
    %cst_27 = arith.constant dense<0.000000e+00> : vector<1xf32>
    %64 = vector.multi_reduction <add>, %63, %cst_27 [1] : vector<1x2xf32> to vector<1xf32>
    %65 = vector.shape_cast %64 : vector<1xf32> to vector<1x1xf32>
    %66 = math.log %65 : vector<1x1xf32>
    %67 = vector.broadcast %66 : vector<1x1xf32> to vector<1x2xf32>
    %68 = arith.subf %62, %67 : vector<1x2xf32>
    %69 = math.exp %68 : vector<1x2xf32>
    %70 = arith.mulf %68, %69 : vector<1x2xf32>
    %cst_28 = arith.constant dense<0.000000e+00> : vector<1xf32>
    %71 = vector.multi_reduction <add>, %70, %cst_28 [1] : vector<1x2xf32> to vector<1xf32>
    %72 = vector.shape_cast %71 : vector<1xf32> to vector<1x1xf32>
    %cst_29 = arith.constant 0.000000e+00 : f32
    %73 = vector.broadcast %cst_29 : f32 to vector<1x1xf32>
    %74 = arith.subf %73, %72 : vector<1x1xf32>
    %c0_30 = arith.constant 0 : index
    %c0_31 = arith.constant 0 : index
    %75 = vector.load %arg4[%c0_30, %c0_31] : memref<1x1xf32, #tpu.memory_space<vmem>>, vector<1x1xf32>
    %76 = vector.extract_strided_slice %69 {offsets = [0, 0], sizes = [1, 1], strides = [1, 1]} : vector<1x2xf32> to vector<1x1xf32>
    %c0_i32 = arith.constant 0 : i32
    %77 = vector.broadcast %c0_i32 : i32 to vector<1x1xi32>
    %78 = arith.cmpf oge, %75, %76 : vector<1x1xf32>
    %79 = arith.extui %78 : vector<1x1xi1> to vector<1x1xi32>
    %80 = arith.addi %77, %79 : vector<1x1xi32>
    %c1_i32 = arith.constant 1 : i32
    %81 = vector.broadcast %c1_i32 : i32 to vector<1x1xi32>
    %82 = arith.minsi %80, %81 : vector<1x1xi32>
    %83 = tpu.iota {dimensions = array<i32: 1>} : vector<1x2xi32>
    %84 = vector.broadcast %82 : vector<1x1xi32> to vector<1x2xi32>
    %85 = arith.cmpi eq, %83, %84 : vector<1x2xi32>
    %86 = arith.extui %85 : vector<1x2xi1> to vector<1x2xi32>
    %87 = arith.sitofp %86 : vector<1x2xi32> to vector<1x2xf32>
    %88 = arith.mulf %68, %87 : vector<1x2xf32>
    %cst_32 = arith.constant dense<0.000000e+00> : vector<1xf32>
    %89 = vector.multi_reduction <add>, %88, %cst_32 [1] : vector<1x2xf32> to vector<1xf32>
    %90 = vector.shape_cast %89 : vector<1xf32> to vector<1x1xf32>
    %c0_33 = arith.constant 0 : index
    %c0_34 = arith.constant 0 : index
    %91 = vector.load %arg11[%c0_33, %c0_34] : memref<2x1024xf32, #tpu.memory_space<vmem>>, vector<2x1024xf32>
    %92 = vector.extract_strided_slice %87 {offsets = [0, 0], sizes = [1, 1], strides = [1, 1]} : vector<1x2xf32> to vector<1x1xf32>
    %93 = vector.extract_strided_slice %91 {offsets = [0, 0], sizes = [1, 1024], strides = [1, 1]} : vector<2x1024xf32> to vector<1x1024xf32>
    %94 = vector.broadcast %92 : vector<1x1xf32> to vector<1x1024xf32>
    %95 = arith.mulf %94, %93 : vector<1x1024xf32>
    %96 = vector.extract_strided_slice %87 {offsets = [0, 1], sizes = [1, 1], strides = [1, 1]} : vector<1x2xf32> to vector<1x1xf32>
    %97 = vector.extract_strided_slice %91 {offsets = [1, 0], sizes = [1, 1024], strides = [1, 1]} : vector<2x1024xf32> to vector<1x1024xf32>
    %98 = vector.broadcast %96 : vector<1x1xf32> to vector<1x1024xf32>
    %99 = arith.mulf %98, %97 : vector<1x1024xf32>
    %100 = arith.addf %95, %99 : vector<1x1024xf32>
    %101 = vector.extract_strided_slice %23 {offsets = [0, 1024], sizes = [1, 1024], strides = [1, 1]} : vector<1x2048xf32> to vector<1x1024xf32>
    %102 = arith.addf %101, %100 : vector<1x1024xf32>
    %c0_35 = arith.constant 0 : index
    %c0_36 = arith.constant 0 : index
    %103 = vector.load %arg10[%c0_35, %c0_36] : memref<1x1024xf32, #tpu.memory_space<vmem>>, vector<1x1024xf32>
    %104 = arith.addf %102, %103 : vector<1x1024xf32>
    %105 = vector.extract_strided_slice %104 {offsets = [0, 0], sizes = [1, 256], strides = [1, 1]} : vector<1x1024xf32> to vector<1x256xf32>
    %106 = arith.negf %105 : vector<1x256xf32>
    %107 = math.exp %106 : vector<1x256xf32>
    %cst_37 = arith.constant 1.000000e+00 : f32
    %108 = vector.broadcast %cst_37 : f32 to vector<1x256xf32>
    %109 = arith.addf %108, %107 : vector<1x256xf32>
    %110 = arith.divf %108, %109 : vector<1x256xf32>
    %111 = vector.extract_strided_slice %104 {offsets = [0, 256], sizes = [1, 256], strides = [1, 1]} : vector<1x1024xf32> to vector<1x256xf32>
    %112 = arith.negf %111 : vector<1x256xf32>
    %113 = math.exp %112 : vector<1x256xf32>
    %cst_38 = arith.constant 1.000000e+00 : f32
    %114 = vector.broadcast %cst_38 : f32 to vector<1x256xf32>
    %115 = arith.addf %114, %113 : vector<1x256xf32>
    %116 = arith.divf %114, %115 : vector<1x256xf32>
    %117 = vector.extract_strided_slice %104 {offsets = [0, 512], sizes = [1, 256], strides = [1, 1]} : vector<1x1024xf32> to vector<1x256xf32>
    %118 = math.tanh %117 : vector<1x256xf32>
    %119 = vector.extract_strided_slice %104 {offsets = [0, 768], sizes = [1, 256], strides = [1, 1]} : vector<1x1024xf32> to vector<1x256xf32>
    %120 = arith.negf %119 : vector<1x256xf32>
    %121 = math.exp %120 : vector<1x256xf32>
    %cst_39 = arith.constant 1.000000e+00 : f32
    %122 = vector.broadcast %cst_39 : f32 to vector<1x256xf32>
    %123 = arith.addf %122, %121 : vector<1x256xf32>
    %124 = arith.divf %122, %123 : vector<1x256xf32>
    %125 = arith.mulf %116, %2 : vector<1x256xf32>
    %126 = arith.mulf %110, %118 : vector<1x256xf32>
    %127 = arith.addf %125, %126 : vector<1x256xf32>
    %128 = math.tanh %127 : vector<1x256xf32>
    %129 = arith.mulf %124, %128 : vector<1x256xf32>
    %130 = arith.truncf %129 : vector<1x256xf32> to vector<1x256xbf16>
    %c0_40 = arith.constant 0 : index
    %c0_41 = arith.constant 0 : index
    %131 = vector.load %arg14[%c0_40, %c0_41] : memref<256x480xbf16, #tpu.memory_space<vmem>>, vector<256x480xbf16>
    %cst_42 = arith.constant dense<0.000000e+00> : vector<1x480xf32>
    %132 = tpu.matmul %130, %131, %cst_42 {dimension_numbers = #tpu.dot_dimension_numbers<[1], [0], [0], [1], [0, 0, 1, 1], [], []>} : vector<1x256xbf16>, vector<256x480xbf16>, vector<1x480xf32> -> vector<1x480xf32>
    %c0_43 = arith.constant 0 : index
    %c0_44 = arith.constant 0 : index
    %133 = vector.load %arg15[%c0_43, %c0_44] : memref<1x480xf32, #tpu.memory_space<vmem>>, vector<1x480xf32>
    %134 = arith.addf %132, %133 : vector<1x480xf32>
    %c0_45 = arith.constant 0 : index
    %c0_46 = arith.constant 0 : index
    %135 = vector.load %arg16[%c0_45, %c0_46] : memref<1x32xf32, #tpu.memory_space<vmem>>, vector<1x32xf32>
    tpu.vector_store %arg16[%c0_45, %c0_46], %8 {strides = array<i32>} : memref<1x32xf32, #tpu.memory_space<vmem>>, vector<1x32xf32>,
    %c0_47 = arith.constant 0 : index
    %c0_48 = arith.constant 0 : index
    %136 = vector.load %arg17[%c0_47, %c0_48] : memref<1x32xf32, #tpu.memory_space<vmem>>, vector<1x32xf32>
    tpu.vector_store %arg17[%c0_47, %c0_48], %9 {strides = array<i32>} : memref<1x32xf32, #tpu.memory_space<vmem>>, vector<1x32xf32>,
    %c0_49 = arith.constant 0 : index
    %c0_50 = arith.constant 0 : index
    %137 = vector.load %arg18[%c0_49, %c0_50] : memref<1x32xf32, #tpu.memory_space<vmem>>, vector<1x32xf32>
    tpu.vector_store %arg18[%c0_49, %c0_50], %15 {strides = array<i32>} : memref<1x32xf32, #tpu.memory_space<vmem>>, vector<1x32xf32>,
    %c0_51 = arith.constant 0 : index
    %c0_52 = arith.constant 0 : index
    %138 = vector.load %arg19[%c0_51, %c0_52] : memref<1x256xf32, #tpu.memory_space<vmem>>, vector<1x256xf32>
    tpu.vector_store %arg19[%c0_51, %c0_52], %51 {strides = array<i32>} : memref<1x256xf32, #tpu.memory_space<vmem>>, vector<1x256xf32>,
    %c0_53 = arith.constant 0 : index
    %c0_54 = arith.constant 0 : index
    %139 = vector.load %arg20[%c0_53, %c0_54] : memref<1x256xf32, #tpu.memory_space<vmem>>, vector<1x256xf32>
    tpu.vector_store %arg20[%c0_53, %c0_54], %49 {strides = array<i32>} : memref<1x256xf32, #tpu.memory_space<vmem>>, vector<1x256xf32>,
    %c0_55 = arith.constant 0 : index
    %c0_56 = arith.constant 0 : index
    %140 = vector.load %arg21[%c0_55, %c0_56] : memref<1x256xf32, #tpu.memory_space<vmem>>, vector<1x256xf32>
    tpu.vector_store %arg21[%c0_55, %c0_56], %129 {strides = array<i32>} : memref<1x256xf32, #tpu.memory_space<vmem>>, vector<1x256xf32>,
    %c0_57 = arith.constant 0 : index
    %c0_58 = arith.constant 0 : index
    %141 = vector.load %arg22[%c0_57, %c0_58] : memref<1x256xf32, #tpu.memory_space<vmem>>, vector<1x256xf32>
    tpu.vector_store %arg22[%c0_57, %c0_58], %127 {strides = array<i32>} : memref<1x256xf32, #tpu.memory_space<vmem>>, vector<1x256xf32>,
    %c0_59 = arith.constant 0 : index
    %c0_60 = arith.constant 0 : index
    %142 = vector.load %arg23[%c0_59, %c0_60] : memref<1x1xf32, #tpu.memory_space<vmem>>, vector<1x1xf32>
    tpu.vector_store %arg23[%c0_59, %c0_60], %57 {strides = array<i32>} : memref<1x1xf32, #tpu.memory_space<vmem>>, vector<1x1xf32>,
    %c0_61 = arith.constant 0 : index
    %c0_62 = arith.constant 0 : index
    %143 = vector.load %arg24[%c0_61, %c0_62] : memref<1x2xf32, #tpu.memory_space<vmem>>, vector<1x2xf32>
    tpu.vector_store %arg24[%c0_61, %c0_62], %69 {strides = array<i32>} : memref<1x2xf32, #tpu.memory_space<vmem>>, vector<1x2xf32>,
    %c0_63 = arith.constant 0 : index
    %c0_64 = arith.constant 0 : index
    %144 = vector.load %arg25[%c0_63, %c0_64] : memref<1x2xf32, #tpu.memory_space<vmem>>, vector<1x2xf32>
    tpu.vector_store %arg25[%c0_63, %c0_64], %68 {strides = array<i32>} : memref<1x2xf32, #tpu.memory_space<vmem>>, vector<1x2xf32>,
    %c0_65 = arith.constant 0 : index
    %c0_66 = arith.constant 0 : index
    %145 = vector.load %arg26[%c0_65, %c0_66] : memref<1x1xf32, #tpu.memory_space<vmem>>, vector<1x1xf32>
    tpu.vector_store %arg26[%c0_65, %c0_66], %74 {strides = array<i32>} : memref<1x1xf32, #tpu.memory_space<vmem>>, vector<1x1xf32>,
    %c0_67 = arith.constant 0 : index
    %c0_68 = arith.constant 0 : index
    %146 = vector.load %arg27[%c0_67, %c0_68] : memref<1x1xi32, #tpu.memory_space<vmem>>, vector<1x1xi32>
    tpu.vector_store %arg27[%c0_67, %c0_68], %82 {strides = array<i32>} : memref<1x1xi32, #tpu.memory_space<vmem>>, vector<1x1xi32>,
    %c0_69 = arith.constant 0 : index
    %c0_70 = arith.constant 0 : index
    %147 = vector.load %arg28[%c0_69, %c0_70] : memref<1x1xf32, #tpu.memory_space<vmem>>, vector<1x1xf32>
    tpu.vector_store %arg28[%c0_69, %c0_70], %90 {strides = array<i32>} : memref<1x1xf32, #tpu.memory_space<vmem>>, vector<1x1xf32>,
    %c0_71 = arith.constant 0 : index
    %c0_72 = arith.constant 0 : index
    %148 = vector.load %arg29[%c0_71, %c0_72] : memref<1x480xf32, #tpu.memory_space<vmem>>, vector<1x480xf32>
    tpu.vector_store %arg29[%c0_71, %c0_72], %134 {strides = array<i32>} : memref<1x480xf32, #tpu.memory_space<vmem>>, vector<1x480xf32>,
    return
  }
  func.func @transform_0(%arg0: i32) -> (i32, i32) {
    %c0_i32 = arith.constant 0 : i32
    %c0_i32_0 = arith.constant 0 : i32
    %c0_i32_1 = arith.constant 0 : i32
    return %c0_i32, %c0_i32_0 : i32, i32
  }
  func.func @transform_1(%arg0: i32) -> (i32, i32) {
    %c0_i32 = arith.constant 0 : i32
    %c0_i32_0 = arith.constant 0 : i32
    %c0_i32_1 = arith.constant 0 : i32
    return %c0_i32, %c0_i32_0 : i32, i32
  }
  func.func @transform_2(%arg0: i32) -> (i32, i32) {
    %c0_i32 = arith.constant 0 : i32
    %c0_i32_0 = arith.constant 0 : i32
    %c0_i32_1 = arith.constant 0 : i32
    return %c0_i32, %c0_i32_0 : i32, i32
  }
  func.func @transform_3(%arg0: i32) -> (i32, i32) {
    %c0_i32 = arith.constant 0 : i32
    %c0_i32_0 = arith.constant 0 : i32
    %c0_i32_1 = arith.constant 0 : i32
    return %c0_i32, %c0_i32_0 : i32, i32
  }
  func.func @transform_4(%arg0: i32) -> (i32, i32) {
    %c0_i32 = arith.constant 0 : i32
    %c0_i32_0 = arith.constant 0 : i32
    %c0_i32_1 = arith.constant 0 : i32
    return %c0_i32, %c0_i32_0 : i32, i32
  }
  func.func @transform_5(%arg0: i32) -> (i32, i32) {
    %c0_i32 = arith.constant 0 : i32
    %c0_i32_0 = arith.constant 0 : i32
    %c0_i32_1 = arith.constant 0 : i32
    return %c0_i32, %c0_i32_0 : i32, i32
  }
  func.func @transform_6(%arg0: i32) -> (i32, i32) {
    %c0_i32 = arith.constant 0 : i32
    %c0_i32_0 = arith.constant 0 : i32
    %c0_i32_1 = arith.constant 0 : i32
    return %c0_i32, %c0_i32_0 : i32, i32
  }
  func.func @transform_7(%arg0: i32) -> (i32, i32) {
    %c0_i32 = arith.constant 0 : i32
    %c0_i32_0 = arith.constant 0 : i32
    %c0_i32_1 = arith.constant 0 : i32
    return %c0_i32, %c0_i32_0 : i32, i32
  }
  func.func @transform_8(%arg0: i32) -> (i32, i32) {
    %c0_i32 = arith.constant 0 : i32
    %c0_i32_0 = arith.constant 0 : i32
    %c0_i32_1 = arith.constant 0 : i32
    return %c0_i32, %c0_i32_0 : i32, i32
  }
  func.func @transform_9(%arg0: i32) -> (i32, i32) {
    %c0_i32 = arith.constant 0 : i32
    %c0_i32_0 = arith.constant 0 : i32
    %c0_i32_1 = arith.constant 0 : i32
    return %c0_i32, %c0_i32_0 : i32, i32
  }
  func.func @transform_10(%arg0: i32) -> (i32, i32) {
    %c0_i32 = arith.constant 0 : i32
    %c0_i32_0 = arith.constant 0 : i32
    %c0_i32_1 = arith.constant 0 : i32
    return %c0_i32, %c0_i32_0 : i32, i32
  }
  func.func @transform_11(%arg0: i32) -> (i32, i32) {
    %c0_i32 = arith.constant 0 : i32
    %c0_i32_0 = arith.constant 0 : i32
    %c0_i32_1 = arith.constant 0 : i32
    return %c0_i32, %c0_i32_0 : i32, i32
  }
  func.func @transform_12(%arg0: i32) -> (i32, i32) {
    %c0_i32 = arith.constant 0 : i32
    %c0_i32_0 = arith.constant 0 : i32
    %c0_i32_1 = arith.constant 0 : i32
    return %c0_i32, %c0_i32_0 : i32, i32
  }
  func.func @transform_13(%arg0: i32) -> (i32, i32) {
    %c0_i32 = arith.constant 0 : i32
    %c0_i32_0 = arith.constant 0 : i32
    %c0_i32_1 = arith.constant 0 : i32
    return %c0_i32, %c0_i32_0 : i32, i32
  }
  func.func @transform_14(%arg0: i32) -> (i32, i32) {
    %c0_i32 = arith.constant 0 : i32
    %c0_i32_0 = arith.constant 0 : i32
    %c0_i32_1 = arith.constant 0 : i32
    return %c0_i32, %c0_i32_0 : i32, i32
  }
  func.func @transform_15(%arg0: i32) -> (i32, i32) {
    %c0_i32 = arith.constant 0 : i32
    %c0_i32_0 = arith.constant 0 : i32
    %c0_i32_1 = arith.constant 0 : i32
    return %c0_i32, %c0_i32_0 : i32, i32
  }
  func.func @transform_16(%arg0: i32) -> (i32, i32) {
    %c0_i32 = arith.constant 0 : i32
    %c0_i32_0 = arith.constant 0 : i32
    %c0_i32_1 = arith.constant 0 : i32
    return %c0_i32, %c0_i32_0 : i32, i32
  }
  func.func @transform_17(%arg0: i32) -> (i32, i32) {
    %c0_i32 = arith.constant 0 : i32
    %c0_i32_0 = arith.constant 0 : i32
    %c0_i32_1 = arith.constant 0 : i32
    return %c0_i32, %c0_i32_0 : i32, i32
  }
  func.func @transform_18(%arg0: i32) -> (i32, i32) {
    %c0_i32 = arith.constant 0 : i32
    %c0_i32_0 = arith.constant 0 : i32
    %c0_i32_1 = arith.constant 0 : i32
    return %c0_i32, %c0_i32_0 : i32, i32
  }
  func.func @transform_19(%arg0: i32) -> (i32, i32) {
    %c0_i32 = arith.constant 0 : i32
    %c0_i32_0 = arith.constant 0 : i32
    %c0_i32_1 = arith.constant 0 : i32
    return %c0_i32, %c0_i32_0 : i32, i32
  }
  func.func @transform_20(%arg0: i32) -> (i32, i32) {
    %c0_i32 = arith.constant 0 : i32
    %c0_i32_0 = arith.constant 0 : i32
    %c0_i32_1 = arith.constant 0 : i32
    return %c0_i32, %c0_i32_0 : i32, i32
  }
  func.func @transform_21(%arg0: i32) -> (i32, i32) {
    %c0_i32 = arith.constant 0 : i32
    %c0_i32_0 = arith.constant 0 : i32
    %c0_i32_1 = arith.constant 0 : i32
    return %c0_i32, %c0_i32_0 : i32, i32
  }
  func.func @transform_22(%arg0: i32) -> (i32, i32) {
    %c0_i32 = arith.constant 0 : i32
    %c0_i32_0 = arith.constant 0 : i32
    %c0_i32_1 = arith.constant 0 : i32
    return %c0_i32, %c0_i32_0 : i32, i32
  }
  func.func @transform_23(%arg0: i32) -> (i32, i32) {
    %c0_i32 = arith.constant 0 : i32
    %c0_i32_0 = arith.constant 0 : i32
    %c0_i32_1 = arith.constant 0 : i32
    return %c0_i32, %c0_i32_0 : i32, i32
  }
  func.func @transform_24(%arg0: i32) -> (i32, i32) {
    %c0_i32 = arith.constant 0 : i32
    %c0_i32_0 = arith.constant 0 : i32
    %c0_i32_1 = arith.constant 0 : i32
    return %c0_i32, %c0_i32_0 : i32, i32
  }
  func.func @transform_25(%arg0: i32) -> (i32, i32) {
    %c0_i32 = arith.constant 0 : i32
    %c0_i32_0 = arith.constant 0 : i32
    %c0_i32_1 = arith.constant 0 : i32
    return %c0_i32, %c0_i32_0 : i32, i32
  }
  func.func @transform_26(%arg0: i32) -> (i32, i32) {
    %c0_i32 = arith.constant 0 : i32
    %c0_i32_0 = arith.constant 0 : i32
    %c0_i32_1 = arith.constant 0 : i32
    return %c0_i32, %c0_i32_0 : i32, i32
  }
  func.func @transform_27(%arg0: i32) -> (i32, i32) {
    %c0_i32 = arith.constant 0 : i32
    %c0_i32_0 = arith.constant 0 : i32
    %c0_i32_1 = arith.constant 0 : i32
    return %c0_i32, %c0_i32_0 : i32, i32
  }
  func.func @transform_28(%arg0: i32) -> (i32, i32) {
    %c0_i32 = arith.constant 0 : i32
    %c0_i32_0 = arith.constant 0 : i32
    %c0_i32_1 = arith.constant 0 : i32
    return %c0_i32, %c0_i32_0 : i32, i32
  }
}

module attributes {stable_mosaic.version = 11 : i64} {
  func.func @_mdn_coef_kernel(%arg0: i32, %arg1: memref<32x15xf32, #tpu.memory_space<vmem>>, %arg2: memref<32x5xf32, #tpu.memory_space<vmem>>, %arg3: memref<32x5xf32, #tpu.memory_space<vmem>>, %arg4: memref<32x5xf32, #tpu.memory_space<vmem>>) attributes {dimension_semantics = [#tpu.dimension_semantics<arbitrary>], iteration_bounds = array<i64: 1>, scalar_prefetch = 0 : i64, scratch_operands = 0 : i64, tpu.core_type = #tpu.core_type<tc>, window_params = [{pipeline_mode = #tpu.pipeline_mode<synchronous>, transform_indices = @transform_0, window_bounds = array<i64: 32, 15>}, {pipeline_mode = #tpu.pipeline_mode<synchronous>, transform_indices = @transform_1, window_bounds = array<i64: 32, 5>}, {pipeline_mode = #tpu.pipeline_mode<synchronous>, transform_indices = @transform_2, window_bounds = array<i64: 32, 5>}, {pipeline_mode = #tpu.pipeline_mode<synchronous>, transform_indices = @transform_3, window_bounds = array<i64: 32, 5>}]} {
    %c0 = arith.constant 0 : index
    %c0_0 = arith.constant 0 : index
    %0 = vector.load %arg1[%c0, %c0_0] : memref<32x15xf32, #tpu.memory_space<vmem>>, vector<32x15xf32>
    %1 = vector.extract_strided_slice %0 {offsets = [0, 0], sizes = [32, 5], strides = [1, 1]} : vector<32x15xf32> to vector<32x5xf32>
    %2 = vector.extract_strided_slice %0 {offsets = [0, 5], sizes = [32, 5], strides = [1, 1]} : vector<32x15xf32> to vector<32x5xf32>
    %3 = vector.extract_strided_slice %0 {offsets = [0, 10], sizes = [32, 5], strides = [1, 1]} : vector<32x15xf32> to vector<32x5xf32>
    %cst = arith.constant dense<0xFF800000> : vector<32xf32>
    %4 = vector.multi_reduction <maximumf>, %1, %cst [1] : vector<32x5xf32> to vector<32xf32>
    %5 = vector.shape_cast %4 : vector<32xf32> to vector<32x1xf32>
    %6 = vector.broadcast %5 : vector<32x1xf32> to vector<32x5xf32>
    %7 = arith.subf %1, %6 : vector<32x5xf32>
    %8 = math.exp %7 : vector<32x5xf32>
    %cst_1 = arith.constant dense<0.000000e+00> : vector<32xf32>
    %9 = vector.multi_reduction <add>, %8, %cst_1 [1] : vector<32x5xf32> to vector<32xf32>
    %10 = vector.shape_cast %9 : vector<32xf32> to vector<32x1xf32>
    %11 = math.log %10 : vector<32x1xf32>
    %12 = arith.addf %5, %11 : vector<32x1xf32>
    %13 = vector.broadcast %12 : vector<32x1xf32> to vector<32x5xf32>
    %14 = arith.subf %1, %13 : vector<32x5xf32>
    %c0_2 = arith.constant 0 : index
    %c0_3 = arith.constant 0 : index
    %15 = vector.load %arg2[%c0_2, %c0_3] : memref<32x5xf32, #tpu.memory_space<vmem>>, vector<32x5xf32>
    tpu.vector_store %arg2[%c0_2, %c0_3], %14 {strides = array<i32>} : memref<32x5xf32, #tpu.memory_space<vmem>>, vector<32x5xf32>,
    %c0_4 = arith.constant 0 : index
    %c0_5 = arith.constant 0 : index
    %16 = vector.load %arg3[%c0_4, %c0_5] : memref<32x5xf32, #tpu.memory_space<vmem>>, vector<32x5xf32>
    tpu.vector_store %arg3[%c0_4, %c0_5], %2 {strides = array<i32>} : memref<32x5xf32, #tpu.memory_space<vmem>>, vector<32x5xf32>,
    %c0_6 = arith.constant 0 : index
    %c0_7 = arith.constant 0 : index
    %17 = vector.load %arg4[%c0_6, %c0_7] : memref<32x5xf32, #tpu.memory_space<vmem>>, vector<32x5xf32>
    tpu.vector_store %arg4[%c0_6, %c0_7], %3 {strides = array<i32>} : memref<32x5xf32, #tpu.memory_space<vmem>>, vector<32x5xf32>,
    return
  }
  func.func @transform_0(%arg0: i32) -> (i32, i32) {
    %c0_i32 = arith.constant 0 : i32
    %c0_i32_0 = arith.constant 0 : i32
    %c0_i32_1 = arith.constant 0 : i32
    return %c0_i32, %c0_i32_0 : i32, i32
  }
  func.func @transform_1(%arg0: i32) -> (i32, i32) {
    %c0_i32 = arith.constant 0 : i32
    %c0_i32_0 = arith.constant 0 : i32
    %c0_i32_1 = arith.constant 0 : i32
    return %c0_i32, %c0_i32_0 : i32, i32
  }
  func.func @transform_2(%arg0: i32) -> (i32, i32) {
    %c0_i32 = arith.constant 0 : i32
    %c0_i32_0 = arith.constant 0 : i32
    %c0_i32_1 = arith.constant 0 : i32
    return %c0_i32, %c0_i32_0 : i32, i32
  }
  func.func @transform_3(%arg0: i32) -> (i32, i32) {
    %c0_i32 = arith.constant 0 : i32
    %c0_i32_0 = arith.constant 0 : i32
    %c0_i32_1 = arith.constant 0 : i32
    return %c0_i32, %c0_i32_0 : i32, i32
  }
}

</mosaic_0001>

<llo_original>
// kernel: _forward.8
$region0: #{_forward.8}
  #allocation0 [shape = 'u32[]', space=smem, size = 0x4, offset = 0x4, fixed_abs, tag = 'smem constant byte address 0x4 - core index']
  #allocation1 [shape = 'u32[144,128]{1,0:T(1,128)}', space=vmem, size = 0x12000, scoped, tag = 'internal scratch']
  %s0 = inlined_call_operand.vmem [shape: bf16[400,48], index: 0, kind: input, shape index: {}]
  %s1 = inlined_call_operand.vmem [shape: bf16[48,32], index: 1, kind: input, shape index: {}]
  %s2 = inlined_call_operand.vmem [shape: f32[1,32], index: 2, kind: input, shape index: {}]
  %s3 = inlined_call_operand.vmem [shape: bf16[400,32], index: 3, kind: output, shape index: {}]
  %s4 = sld [smem:[#allocation0]]
  $region22: #{_forward.8} parent=0
    _
  %s6 = ssub.s32 1, %s4
  %s7 = scalar_select 0, %s6, %s4
  // Predicated region
  $region2: #{_forward.8} parent=0 // pred_check
    _
  $region3: #{_forward.8} parent=0 // pred_check_branch
    %9 = sbr.rel (0) target = $region5
  $region4: #{_forward.8} parent=0 // pred_region
    _
  $region5: #{_forward.8} parent=0 // pred_fallthru
    _
  // Predicated region
  $region6: #{_forward.8} parent=0 // pred_check
    _
  $region7: #{_forward.8} parent=0 // pred_check_branch
    %11 = sbr.rel (0) target = $region9
  $region8: #{_forward.8} parent=0 // pred_region
    _
  $region9: #{_forward.8} parent=0 // pred_fallthru
    _
  // Predicated region
  $region10: #{_forward.8} parent=0 // pred_check
    _
  $region11: #{_forward.8} parent=0 // pred_check_branch
    %13 = sbr.rel (0) target = $region13
  $region12: #{_forward.8} parent=0 // pred_region
    _
  $region13: #{_forward.8} parent=0 // pred_fallthru
    _
  %v15 = vld [vmem:[%s0] sm:$0xf]
  %v16 = vld [vmem:[%s0 + $0x4] sm:$0xf]
  %v17 = vld [vmem:[%s0 + $0x8] sm:$0xf]
  %v18 = vld [vmem:[%s0 + $0xc] sm:$0xf]
  %v19 = vld [vmem:[%s0 + $0x10] sm:$0xf]
  %v20 = vld [vmem:[%s0 + $0x14] sm:$0xf]
  %v21 = vld [vmem:[%s0 + $0x18] sm:$0xf]
  %v22 = vld [vmem:[%s0 + $0x1c] sm:$0xf]
  %v23 = vld [vmem:[%s0 + $0x20] sm:$0xf]
  %v24 = vld [vmem:[%s0 + $0x24] sm:$0xf]
  %v25 = vld [vmem:[%s0 + $0x28] sm:$0xf]
  %v26 = vld [vmem:[%s0 + $0x2c] sm:$0xf]
  %v27 = vld [vmem:[%s0 + $0x30] sm:$0xf]
  %v28 = vld [vmem:[%s0 + $0x34] sm:$0xf]
  %v29 = vld [vmem:[%s0 + $0x38] sm:$0xf]
  %v30 = vld [vmem:[%s0 + $0x3c] sm:$0xf]
  %v31 = vld [vmem:[%s0 + $0x40] sm:$0xf]
  %v32 = vld [vmem:[%s0 + $0x44] sm:$0xf]
  %v33 = vld [vmem:[%s0 + $0x48] sm:$0xf]
  %v34 = vld [vmem:[%s0 + $0x4c] sm:$0xf]
  %v35 = vld [vmem:[%s0 + $0x50] sm:$0xf]
  %v36 = vld [vmem:[%s0 + $0x54] sm:$0xf]
  %v37 = vld [vmem:[%s0 + $0x58] sm:$0xf]
  %v38 = vld [vmem:[%s0 + $0x5c] sm:$0xf]
  %v39 = vld [vmem:[%s0 + $0x60] sm:$0xf]
  %v40 = vld [vmem:[%s0 + $0x64] sm:$0xf]
  %v41 = vld [vmem:[%s0 + $0x68] sm:$0xf]
  %v42 = vld [vmem:[%s0 + $0x6c] sm:$0xf]
  %v43 = vld [vmem:[%s0 + $0x70] sm:$0xf]
  %v44 = vld [vmem:[%s0 + $0x74] sm:$0xf]
  %v45 = vld [vmem:[%s0 + $0x78] sm:$0xf]
  %v46 = vld [vmem:[%s0 + $0x7c] sm:$0xf]
  %v47 = vld [vmem:[%s0 + $0x80] sm:$0xf]
  %v48 = vld [vmem:[%s0 + $0x84] sm:$0xf]
  %v49 = vld [vmem:[%s0 + $0x88] sm:$0xf]
  %v50 = vld [vmem:[%s0 + $0x8c] sm:$0xf]
  %v51 = vld [vmem:[%s0 + $0x90] sm:$0xf]
  %v52 = vld [vmem:[%s0 + $0x94] sm:$0xf]
  %v53 = vld [vmem:[%s0 + $0x98] sm:$0xf]
  %v54 = vld [vmem:[%s0 + $0x9c] sm:$0xf]
  %v55 = vld [vmem:[%s0 + $0xa0] sm:$0xf]
  %v56 = vld [vmem:[%s0 + $0xa4] sm:$0xf]
  %v57 = vld [vmem:[%s0 + $0xa8] sm:$0xf]
  %v58 = vld [vmem:[%s0 + $0xac] sm:$0xf]
  %v59 = vld [vmem:[%s0 + $0xb0] sm:$0xf]
  %v60 = vld [vmem:[%s0 + $0xb4] sm:$0xf]
  %v61 = vld [vmem:[%s0 + $0xb8] sm:$0xf]
  %v62 = vld [vmem:[%s0 + $0xbc] sm:$0xf]
  %v63 = vld [vmem:[%s0 + $0xc0] sm:$0xf]
  %v64 = vld [vmem:[%s0 + $0xc4] sm:$0xf]
  %v65 = vld [vmem:[%s1] sm:$0xf]
  %v66 = vld [vmem:[%s1 + $0x4] sm:$0xf]
  %v67 = vld [vmem:[%s1 + $0x8] sm:$0xf]
  %v68 = vld [vmem:[%s1 + $0xc] sm:$0xf]
  %v69 = vld [vmem:[%s1 + $0x10] sm:$0xf]
  %v70 = vld [vmem:[%s1 + $0x14] sm:$0xf]
  %v71 = vld [vmem:[%s2] sm:$0x1]
  %v73 = vlaneseq
  %v74 = vshrl.u32 %v73, 7
  %v75 = vsub.s32 0, %v74
  %v76 = vrot.slane %v71, %v75
  %v128 = vunpack.c.l.b16 %v15
  %v129 = vunpack.c.l.b16 %v16
  %v130 = vunpack.c.l.b16 %v17
  %v131 = vunpack.c.l.b16 %v18
  %v132 = vunpack.c.l.b16 %v19
  %v133 = vunpack.c.l.b16 %v20
  %v134 = vunpack.c.l.b16 %v21
  %v135 = vunpack.c.l.b16 %v22
  %v136 = vunpack.c.l.b16 %v23
  %v137 = vunpack.c.l.b16 %v24
  %v138 = vunpack.c.l.b16 %v25
  %v139 = vunpack.c.l.b16 %v26
  %v140 = vunpack.c.l.b16 %v27
  %v141 = vunpack.c.l.b16 %v28
  %v142 = vunpack.c.l.b16 %v29
  %v143 = vunpack.c.l.b16 %v30
  %v144 = vunpack.c.l.b16 %v31
  %v145 = vunpack.c.l.b16 %v32
  %v146 = vunpack.c.l.b16 %v33
  %v147 = vunpack.c.l.b16 %v34
  %v148 = vunpack.c.l.b16 %v35
  %v149 = vunpack.c.l.b16 %v36
  %v150 = vunpack.c.l.b16 %v37
  %v151 = vunpack.c.l.b16 %v38
  %v152 = vunpack.c.l.b16 %v39
  %v153 = vunpack.c.l.b16 %v40
  %v154 = vunpack.c.l.b16 %v41
  %v155 = vunpack.c.l.b16 %v42
  %v156 = vunpack.c.l.b16 %v43
  %v157 = vunpack.c.l.b16 %v44
  %v158 = vunpack.c.l.b16 %v45
  %v159 = vunpack.c.l.b16 %v46
  %v160 = vunpack.c.l.b16 %v47
  %v161 = vunpack.c.l.b16 %v48
  %v162 = vunpack.c.l.b16 %v49
  %v163 = vunpack.c.l.b16 %v50
  %v164 = vunpack.c.l.b16 %v51
  %v165 = vunpack.c.l.b16 %v52
  %v166 = vunpack.c.l.b16 %v53
  %v167 = vunpack.c.l.b16 %v54
  %v168 = vunpack.c.l.b16 %v55
  %v169 = vunpack.c.l.b16 %v56
  %v170 = vunpack.c.l.b16 %v57
  %v171 = vunpack.c.l.b16 %v58
  %v172 = vunpack.c.l.b16 %v59
  %v173 = vunpack.c.l.b16 %v60
  %v174 = vunpack.c.l.b16 %v61
  %v175 = vunpack.c.l.b16 %v62
  %v176 = vunpack.c.l.b16 %v63
  %v177 = vunpack.c.l.b16 %v64
  %v178 = vpack.c.b16 %v129, %v128
  %v179 = vpack.c.b16 %v131, %v130
  %v180 = vpack.c.b16 %v133, %v132
  %v181 = vpack.c.b16 %v135, %v134
  %v182 = vpack.c.b16 %v137, %v136
  %v183 = vpack.c.b16 %v139, %v138
  %v184 = vpack.c.b16 %v141, %v140
  %v185 = vpack.c.b16 %v143, %v142
  %v186 = vpack.c.b16 %v145, %v144
  %v187 = vpack.c.b16 %v147, %v146
  %v188 = vpack.c.b16 %v149, %v148
  %v189 = vpack.c.b16 %v151, %v150
  %v190 = vpack.c.b16 %v153, %v152
  %v191 = vpack.c.b16 %v155, %v154
  %v192 = vpack.c.b16 %v157, %v156
  %v193 = vpack.c.b16 %v159, %v158
  %v194 = vpack.c.b16 %v161, %v160
  %v195 = vpack.c.b16 %v163, %v162
  %v196 = vpack.c.b16 %v165, %v164
  %v197 = vpack.c.b16 %v167, %v166
  %v198 = vpack.c.b16 %v169, %v168
  %v199 = vpack.c.b16 %v171, %v170
  %v200 = vpack.c.b16 %v173, %v172
  %v201 = vpack.c.b16 %v175, %v174
  %v202 = vpack.c.b16 %v177, %v176
  %v209 = vunpack.c.l.b16 %v65
  %v210 = vunpack.c.l.b16 %v66
  %v211 = vunpack.c.l.b16 %v67
  %v212 = vunpack.c.l.b16 %v68
  %v213 = vunpack.c.l.b16 %v69
  %v214 = vunpack.c.l.b16 %v70
  %v215 = vpack.c.b16 %v210, %v209
  %v216 = vpack.c.b16 %v212, %v211
  %v217 = vpack.c.b16 %v214, %v213
  %vm221 = vcmask 392192
  %v223 = vsel %vm221, %v178, 0
  %v226 = vsel %vm221, %v179, 0
  %v229 = vsel %vm221, %v180, 0
  %v232 = vsel %vm221, %v181, 0
  %v235 = vsel %vm221, %v182, 0
  %v238 = vsel %vm221, %v183, 0
  %v241 = vsel %vm221, %v184, 0
  %v244 = vsel %vm221, %v185, 0
  %v247 = vsel %vm221, %v186, 0
  %v250 = vsel %vm221, %v187, 0
  %v253 = vsel %vm221, %v188, 0
  %v256 = vsel %vm221, %v189, 0
  %v259 = vsel %vm221, %v190, 0
  %v262 = vsel %vm221, %v191, 0
  %v265 = vsel %vm221, %v192, 0
  %v268 = vsel %vm221, %v193, 0
  %v271 = vsel %vm221, %v194, 0
  %v274 = vsel %vm221, %v195, 0
  %v277 = vsel %vm221, %v196, 0
  %v280 = vsel %vm221, %v197, 0
  %v283 = vsel %vm221, %v198, 0
  %v286 = vsel %vm221, %v199, 0
  %v289 = vsel %vm221, %v200, 0
  %v292 = vsel %vm221, %v201, 0
  %v295 = vsel %vm221, %v202, 0
  %297 = vmatprep.subr.bf16.mxu0 0
  %298 = vmatpush1.bf16.msra.mxu0 0
  %299 = vmatprep.subr.bf16.mxu0 0
  %300 = vmatpush1.bf16.msra.mxu0 0
  %301 = vmatprep.subr.bf16.mxu0 0
  %302 = vmatpush1.bf16.msra.mxu0 0
  %303 = vmatprep.subr.bf16.mxu0 0
  %304 = vmatpush1.bf16.msra.mxu0 0
  %305 = vmatprep.subr.bf16.mxu0 0
  %306 = vmatpush1.bf16.msra.mxu0 0
  %307 = vmatprep.subr.bf16.mxu0 0
  %308 = vmatpush1.bf16.msra.mxu0 %v217
  %309 = vmatprep.subr.bf16.mxu0 0
  %310 = vmatpush1.bf16.msra.mxu0 %v216
  %311 = vmatprep.subr.bf16.mxu0 0
  %312 = vmatpush1.bf16.msra.mxu0 %v215
  %313 = vmatprep.subr.bf16.mxu0 0
  %314 = vmatpush2.bf16.msra.mxu0 0
  %315 = vmatprep.subr.bf16.mxu0 0
  %316 = vmatpush2.bf16.msra.mxu0 0
  %317 = vmatprep.subr.bf16.mxu0 0
  %318 = vmatpush2.bf16.msra.mxu0 0
  %319 = vmatprep.subr.bf16.mxu0 0
  %320 = vmatpush2.bf16.msra.mxu0 0
  %321 = vmatprep.subr.bf16.mxu0 0
  %322 = vmatpush2.bf16.msra.mxu0 0
  %323 = vmatprep.subr.bf16.mxu0 0
  %324 = vmatpush2.bf16.msra.mxu0 0
  %325 = vmatprep.subr.bf16.mxu0 0
  %326 = vmatpush2.bf16.msra.mxu0 0
  %327 = vmatprep.subr.bf16.mxu0 0
  %328 = vmatpush2.bf16.msra.mxu0 0
  %329 = vmatprep.mubr.bf16.mxu0 0
  %330 = vmatmul.mubr.bf16.gmra.mxu0 %v223
  %v331 = vpop.f32.mrf.mxu0
  %v332 = vadd.f32 %v76, %v331
  %v333 = vpop.f32.mrf.mxu0
  %v334 = vpop.f32.mrf.mxu0
  %v335 = vadd.f32 %v76, %v334
  %v336 = vpop.f32.mrf.mxu0
  %337 = vmatprep.mubr.bf16.mxu0 0
  %338 = vmatmul.mubr.bf16.gmra.mxu0 %v226
  %v339 = vpop.f32.mrf.mxu0
  %v340 = vadd.f32 %v76, %v339
  %v341 = vpop.f32.mrf.mxu0
  %v342 = vpop.f32.mrf.mxu0
  %v343 = vadd.f32 %v76, %v342
  %v344 = vpop.f32.mrf.mxu0
  %345 = vmatprep.mubr.bf16.mxu0 0
  %346 = vmatmul.mubr.bf16.gmra.mxu0 %v229
  %v347 = vpop.f32.mrf.mxu0
  %v348 = vadd.f32 %v76, %v347
  %v349 = vpop.f32.mrf.mxu0
  %v350 = vpop.f32.mrf.mxu0
  %v351 = vadd.f32 %v76, %v350
  %v352 = vpop.f32.mrf.mxu0
  %353 = vmatprep.mubr.bf16.mxu0 0
  %354 = vmatmul.mubr.bf16.gmra.mxu0 %v232
  %v355 = vpop.f32.mrf.mxu0
  %v356 = vadd.f32 %v76, %v355
  %v357 = vpop.f32.mrf.mxu0
  %v358 = vpop.f32.mrf.mxu0
  %v359 = vadd.f32 %v76, %v358
  %v360 = vpop.f32.mrf.mxu0
  %361 = vmatprep.mubr.bf16.mxu0 0
  %362 = vmatmul.mubr.bf16.gmra.mxu0 %v235
  %v363 = vpop.f32.mrf.mxu0
  %v364 = vadd.f32 %v76, %v363
  %v365 = vpop.f32.mrf.mxu0
  %v366 = vpop.f32.mrf.mxu0
  %v367 = vadd.f32 %v76, %v366
  %v368 = vpop.f32.mrf.mxu0
  %369 = vmatprep.mubr.bf16.mxu0 0
  %370 = vmatmul.mubr.bf16.gmra.mxu0 %v238
  %v371 = vpop.f32.mrf.mxu0
  %v372 = vadd.f32 %v76, %v371
  %v373 = vpop.f32.mrf.mxu0
  %v374 = vpop.f32.mrf.mxu0
  %v375 = vadd.f32 %v76, %v374
  %v376 = vpop.f32.mrf.mxu0
  %377 = vmatprep.mubr.bf16.mxu0 0
  %378 = vmatmul.mubr.bf16.gmra.mxu0 %v241
  %v379 = vpop.f32.mrf.mxu0
  %v380 = vadd.f32 %v76, %v379
  %v381 = vpop.f32.mrf.mxu0
  %v382 = vpop.f32.mrf.mxu0
  %v383 = vadd.f32 %v76, %v382
  %v384 = vpop.f32.mrf.mxu0
  %385 = vmatprep.mubr.bf16.mxu0 0
  %386 = vmatmul.mubr.bf16.gmra.mxu0 %v244
  %v387 = vpop.f32.mrf.mxu0
  %v388 = vadd.f32 %v76, %v387
  %v389 = vpop.f32.mrf.mxu0
  %v390 = vpop.f32.mrf.mxu0
  %v391 = vadd.f32 %v76, %v390
  %v392 = vpop.f32.mrf.mxu0
  %393 = vmatprep.mubr.bf16.mxu0 0
  %394 = vmatmul.mubr.bf16.gmra.mxu0 %v247
  %v395 = vpop.f32.mrf.mxu0
  %v396 = vadd.f32 %v76, %v395
  %v397 = vpop.f32.mrf.mxu0
  %v398 = vpop.f32.mrf.mxu0
  %v399 = vadd.f32 %v76, %v398
  %v400 = vpop.f32.mrf.mxu0
  %401 = vmatprep.mubr.bf16.mxu0 0
  %402 = vmatmul.mubr.bf16.gmra.mxu0 %v250
  %v403 = vpop.f32.mrf.mxu0
  %v404 = vadd.f32 %v76, %v403
  %v405 = vpop.f32.mrf.mxu0
  %v406 = vpop.f32.mrf.mxu0
  %v407 = vadd.f32 %v76, %v406
  %v408 = vpop.f32.mrf.mxu0
  %409 = vmatprep.mubr.bf16.mxu0 0
  %410 = vmatmul.mubr.bf16.gmra.mxu0 %v253
  %v411 = vpop.f32.mrf.mxu0
  %v412 = vadd.f32 %v76, %v411
  %v413 = vpop.f32.mrf.mxu0
  %v414 = vpop.f32.mrf.mxu0
  %v415 = vadd.f32 %v76, %v414
  %v416 = vpop.f32.mrf.mxu0
  %417 = vmatprep.mubr.bf16.mxu0 0
  %418 = vmatmul.mubr.bf16.gmra.mxu0 %v256
  %v419 = vpop.f32.mrf.mxu0
  %v420 = vadd.f32 %v76, %v419
  %v421 = vpop.f32.mrf.mxu0
  %v422 = vpop.f32.mrf.mxu0
  %v423 = vadd.f32 %v76, %v422
  %v424 = vpop.f32.mrf.mxu0
  %425 = vmatprep.mubr.bf16.mxu0 0
  %426 = vmatmul.mubr.bf16.gmra.mxu0 %v259
  %v427 = vpop.f32.mrf.mxu0
  %v428 = vadd.f32 %v76, %v427
  %v429 = vpop.f32.mrf.mxu0
  %v430 = vpop.f32.mrf.mxu0
  %v431 = vadd.f32 %v76, %v430
  %v432 = vpop.f32.mrf.mxu0
  %433 = vmatprep.mubr.bf16.mxu0 0
  %434 = vmatmul.mubr.bf16.gmra.mxu0 %v262
  %v435 = vpop.f32.mrf.mxu0
  %v436 = vadd.f32 %v76, %v435
  %v437 = vpop.f32.mrf.mxu0
  %v438 = vpop.f32.mrf.mxu0
  %v439 = vadd.f32 %v76, %v438
  %v440 = vpop.f32.mrf.mxu0
  %441 = vmatprep.mubr.bf16.mxu0 0
  %442 = vmatmul.mubr.bf16.gmra.mxu0 %v265
  %v443 = vpop.f32.mrf.mxu0
  %v444 = vadd.f32 %v76, %v443
  %v445 = vpop.f32.mrf.mxu0
  %v446 = vpop.f32.mrf.mxu0
  %v447 = vadd.f32 %v76, %v446
  %v448 = vpop.f32.mrf.mxu0
  %449 = vmatprep.mubr.bf16.mxu0 0
  %450 = vmatmul.mubr.bf16.gmra.mxu0 %v268
  %v451 = vpop.f32.mrf.mxu0
  %v452 = vadd.f32 %v76, %v451
  %v453 = vpop.f32.mrf.mxu0
  %v454 = vpop.f32.mrf.mxu0
  %v455 = vadd.f32 %v76, %v454
  %v456 = vpop.f32.mrf.mxu0
  %457 = vmatprep.mubr.bf16.mxu0 0
  %458 = vmatmul.mubr.bf16.gmra.mxu0 %v271
  %v459 = vpop.f32.mrf.mxu0
  %v460 = vadd.f32 %v76, %v459
  %v461 = vpop.f32.mrf.mxu0
  %v462 = vpop.f32.mrf.mxu0
  %v463 = vadd.f32 %v76, %v462
  %v464 = vpop.f32.mrf.mxu0
  %465 = vmatprep.mubr.bf16.mxu0 0
  %466 = vmatmul.mubr.bf16.gmra.mxu0 %v274
  %v467 = vpop.f32.mrf.mxu0
  %v468 = vadd.f32 %v76, %v467
  %v469 = vpop.f32.mrf.mxu0
  %v470 = vpop.f32.mrf.mxu0
  %v471 = vadd.f32 %v76, %v470
  %v472 = vpop.f32.mrf.mxu0
  %473 = vmatprep.mubr.bf16.mxu0 0
  %474 = vmatmul.mubr.bf16.gmra.mxu0 %v277
  %v475 = vpop.f32.mrf.mxu0
  %v476 = vadd.f32 %v76, %v475
  %v477 = vpop.f32.mrf.mxu0
  %v478 = vpop.f32.mrf.mxu0
  %v479 = vadd.f32 %v76, %v478
  %v480 = vpop.f32.mrf.mxu0
  %481 = vmatprep.mubr.bf16.mxu0 0
  %482 = vmatmul.mubr.bf16.gmra.mxu0 %v280
  %v483 = vpop.f32.mrf.mxu0
  %v484 = vadd.f32 %v76, %v483
  %v485 = vpop.f32.mrf.mxu0
  %v486 = vpop.f32.mrf.mxu0
  %v487 = vadd.f32 %v76, %v486
  %v488 = vpop.f32.mrf.mxu0
  %489 = vmatprep.mubr.bf16.mxu0 0
  %490 = vmatmul.mubr.bf16.gmra.mxu0 %v283
  %v491 = vpop.f32.mrf.mxu0
  %v492 = vadd.f32 %v76, %v491
  %v493 = vpop.f32.mrf.mxu0
  %v494 = vpop.f32.mrf.mxu0
  %v495 = vadd.f32 %v76, %v494
  %v496 = vpop.f32.mrf.mxu0
  %497 = vmatprep.mubr.bf16.mxu0 0
  %498 = vmatmul.mubr.bf16.gmra.mxu0 %v286
  %v499 = vpop.f32.mrf.mxu0
  %v500 = vadd.f32 %v76, %v499
  %v501 = vpop.f32.mrf.mxu0
  %v502 = vpop.f32.mrf.mxu0
  %v503 = vadd.f32 %v76, %v502
  %v504 = vpop.f32.mrf.mxu0
  %505 = vmatprep.mubr.bf16.mxu0 0
  %506 = vmatmul.mubr.bf16.gmra.mxu0 %v289
  %v507 = vpop.f32.mrf.mxu0
  %v508 = vadd.f32 %v76, %v507
  %v509 = vpop.f32.mrf.mxu0
  %v510 = vpop.f32.mrf.mxu0
  %v511 = vadd.f32 %v76, %v510
  %v512 = vpop.f32.mrf.mxu0
  %513 = vmatprep.mubr.bf16.mxu0 0
  %514 = vmatmul.mubr.bf16.gmra.mxu0 %v292
  %v515 = vpop.f32.mrf.mxu0
  %v516 = vadd.f32 %v76, %v515
  %v517 = vpop.f32.mrf.mxu0
  %v518 = vpop.f32.mrf.mxu0
  %v519 = vadd.f32 %v76, %v518
  %v520 = vpop.f32.mrf.mxu0
  %521 = vmatprep.mubr.bf16.mxu0 0
  %522 = vmatmul.mubr.bf16.gmra.mxu0 %v295
  %v523 = vpop.f32.mrf.mxu0
  %v524 = vadd.f32 %v76, %v523
  %v525 = vpop.f32.mrf.mxu0
  %v526 = vpop.f32.mrf.mxu0
  %v527 = vadd.f32 %v76, %v526
  %v528 = vpop.f32.mrf.mxu0
  %529 = vdwg.mxu0
  %v530 = vmax.f32 %v332, 0.0
  %v531 = vmax.f32 %v335, 0.0
  %v532 = vmax.f32 %v340, 0.0
  %v533 = vmax.f32 %v343, 0.0
  %v534 = vmax.f32 %v348, 0.0
  %v535 = vmax.f32 %v351, 0.0
  %v536 = vmax.f32 %v356, 0.0
  %v537 = vmax.f32 %v359, 0.0
  %v538 = vmax.f32 %v364, 0.0
  %v539 = vmax.f32 %v367, 0.0
  %v540 = vmax.f32 %v372, 0.0
  %v541 = vmax.f32 %v375, 0.0
  %v542 = vmax.f32 %v380, 0.0
  %v543 = vmax.f32 %v383, 0.0
  %v544 = vmax.f32 %v388, 0.0
  %v545 = vmax.f32 %v391, 0.0
  %v546 = vmax.f32 %v396, 0.0
  %v547 = vmax.f32 %v399, 0.0
  %v548 = vmax.f32 %v404, 0.0
  %v549 = vmax.f32 %v407, 0.0
  %v550 = vmax.f32 %v412, 0.0
  %v551 = vmax.f32 %v415, 0.0
  %v552 = vmax.f32 %v420, 0.0
  %v553 = vmax.f32 %v423, 0.0
  %v554 = vmax.f32 %v428, 0.0
  %v555 = vmax.f32 %v431, 0.0
  %v556 = vmax.f32 %v436, 0.0
  %v557 = vmax.f32 %v439, 0.0
  %v558 = vmax.f32 %v444, 0.0
  %v559 = vmax.f32 %v447, 0.0
  %v560 = vmax.f32 %v452, 0.0
  %v561 = vmax.f32 %v455, 0.0
  %v562 = vmax.f32 %v460, 0.0
  %v563 = vmax.f32 %v463, 0.0
  %v564 = vmax.f32 %v468, 0.0
  %v565 = vmax.f32 %v471, 0.0
  %v566 = vmax.f32 %v476, 0.0
  %v567 = vmax.f32 %v479, 0.0
  %v568 = vmax.f32 %v484, 0.0
  %v569 = vmax.f32 %v487, 0.0
  %v570 = vmax.f32 %v492, 0.0
  %v571 = vmax.f32 %v495, 0.0
  %v572 = vmax.f32 %v500, 0.0
  %v573 = vmax.f32 %v503, 0.0
  %v574 = vmax.f32 %v508, 0.0
  %v575 = vmax.f32 %v511, 0.0
  %v576 = vmax.f32 %v516, 0.0
  %v577 = vmax.f32 %v519, 0.0
  %v578 = vmax.f32 %v524, 0.0
  %v579 = vmax.f32 %v527, 0.0
  %v580 = vpack.c.bf16 %v531, %v530
  %v581 = vpack.c.bf16 %v533, %v532
  %v582 = vpack.c.bf16 %v535, %v534
  %v583 = vpack.c.bf16 %v537, %v536
  %v584 = vpack.c.bf16 %v539, %v538
  %v585 = vpack.c.bf16 %v541, %v540
  %v586 = vpack.c.bf16 %v543, %v542
  %v587 = vpack.c.bf16 %v545, %v544
  %v588 = vpack.c.bf16 %v547, %v546
  %v589 = vpack.c.bf16 %v549, %v548
  %v590 = vpack.c.bf16 %v551, %v550
  %v591 = vpack.c.bf16 %v553, %v552
  %v592 = vpack.c.bf16 %v555, %v554
  %v593 = vpack.c.bf16 %v557, %v556
  %v594 = vpack.c.bf16 %v559, %v558
  %v595 = vpack.c.bf16 %v561, %v560
  %v596 = vpack.c.bf16 %v563, %v562
  %v597 = vpack.c.bf16 %v565, %v564
  %v598 = vpack.c.bf16 %v567, %v566
  %v599 = vpack.c.bf16 %v569, %v568
  %v600 = vpack.c.bf16 %v571, %v570
  %v601 = vpack.c.bf16 %v573, %v572
  %v602 = vpack.c.bf16 %v575, %v574
  %v603 = vpack.c.bf16 %v577, %v576
  %v604 = vpack.c.bf16 %v579, %v578
  %v630 = vunpack.c.l.b16 %v580
  %v631 = vunpack.c.h.b16 %v580
  %v632 = vunpack.c.l.b16 %v581
  %v633 = vunpack.c.h.b16 %v581
  %v634 = vunpack.c.l.b16 %v582
  %v635 = vunpack.c.h.b16 %v582
  %v636 = vunpack.c.l.b16 %v583
  %v637 = vunpack.c.h.b16 %v583
  %v638 = vunpack.c.l.b16 %v584
  %v639 = vunpack.c.h.b16 %v584
  %v640 = vunpack.c.l.b16 %v585
  %v641 = vunpack.c.h.b16 %v585
  %v642 = vunpack.c.l.b16 %v586
  %v643 = vunpack.c.h.b16 %v586
  %v644 = vunpack.c.l.b16 %v587
  %v645 = vunpack.c.h.b16 %v587
  %v646 = vunpack.c.l.b16 %v588
  %v647 = vunpack.c.h.b16 %v588
  %v648 = vunpack.c.l.b16 %v589
  %v649 = vunpack.c.h.b16 %v589
  %v650 = vunpack.c.l.b16 %v590
  %v651 = vunpack.c.h.b16 %v590
  %v652 = vunpack.c.l.b16 %v591
  %v653 = vunpack.c.h.b16 %v591
  %v654 = vunpack.c.l.b16 %v592
  %v655 = vunpack.c.h.b16 %v592
  %v656 = vunpack.c.l.b16 %v593
  %v657 = vunpack.c.h.b16 %v593
  %v658 = vunpack.c.l.b16 %v594
  %v659 = vunpack.c.h.b16 %v594
  %v660 = vunpack.c.l.b16 %v595
  %v661 = vunpack.c.h.b16 %v595
  %v662 = vunpack.c.l.b16 %v596
  %v663 = vunpack.c.h.b16 %v596
  %v664 = vunpack.c.l.b16 %v597
  %v665 = vunpack.c.h.b16 %v597
  %v666 = vunpack.c.l.b16 %v598
  %v667 = vunpack.c.h.b16 %v598
  %v668 = vunpack.c.l.b16 %v599
  %v669 = vunpack.c.h.b16 %v599
  %v670 = vunpack.c.l.b16 %v600
  %v671 = vunpack.c.h.b16 %v600
  %v672 = vunpack.c.l.b16 %v601
  %v673 = vunpack.c.h.b16 %v601
  %v674 = vunpack.c.l.b16 %v602
  %v675 = vunpack.c.h.b16 %v602
  %v676 = vunpack.c.l.b16 %v603
  %v677 = vunpack.c.h.b16 %v603
  %v678 = vunpack.c.l.b16 %v604
  %v679 = vunpack.c.h.b16 %v604
  %v680 = vpack.c.b16 %v630, %v630
  %v681 = vpack.c.b16 %v631, %v631
  %v682 = vpack.c.b16 %v632, %v632
  %v683 = vpack.c.b16 %v633, %v633
  %v684 = vpack.c.b16 %v634, %v634
  %v685 = vpack.c.b16 %v635, %v635
  %v686 = vpack.c.b16 %v636, %v636
  %v687 = vpack.c.b16 %v637, %v637
  %v688 = vpack.c.b16 %v638, %v638
  %v689 = vpack.c.b16 %v639, %v639
  %v690 = vpack.c.b16 %v640, %v640
  %v691 = vpack.c.b16 %v641, %v641
  %v692 = vpack.c.b16 %v642, %v642
  %v693 = vpack.c.b16 %v643, %v643
  %v694 = vpack.c.b16 %v644, %v644
  %v695 = vpack.c.b16 %v645, %v645
  %v696 = vpack.c.b16 %v646, %v646
  %v697 = vpack.c.b16 %v647, %v647
  %v698 = vpack.c.b16 %v648, %v648
  %v699 = vpack.c.b16 %v649, %v649
  %v700 = vpack.c.b16 %v650, %v650
  %v701 = vpack.c.b16 %v651, %v651
  %v702 = vpack.c.b16 %v652, %v652
  %v703 = vpack.c.b16 %v653, %v653
  %v704 = vpack.c.b16 %v654, %v654
  %v705 = vpack.c.b16 %v655, %v655
  %v706 = vpack.c.b16 %v656, %v656
  %v707 = vpack.c.b16 %v657, %v657
  %v708 = vpack.c.b16 %v658, %v658
  %v709 = vpack.c.b16 %v659, %v659
  %v710 = vpack.c.b16 %v660, %v660
  %v711 = vpack.c.b16 %v661, %v661
  %v712 = vpack.c.b16 %v662, %v662
  %v713 = vpack.c.b16 %v663, %v663
  %v714 = vpack.c.b16 %v664, %v664
  %v715 = vpack.c.b16 %v665, %v665
  %v716 = vpack.c.b16 %v666, %v666
  %v717 = vpack.c.b16 %v667, %v667
  %v718 = vpack.c.b16 %v668, %v668
  %v719 = vpack.c.b16 %v669, %v669
  %v720 = vpack.c.b16 %v670, %v670
  %v721 = vpack.c.b16 %v671, %v671
  %v722 = vpack.c.b16 %v672, %v672
  %v723 = vpack.c.b16 %v673, %v673
  %v724 = vpack.c.b16 %v674, %v674
  %v725 = vpack.c.b16 %v675, %v675
  %v726 = vpack.c.b16 %v676, %v676
  %v727 = vpack.c.b16 %v677, %v677
  %v728 = vpack.c.b16 %v678, %v678
  %v729 = vpack.c.b16 %v679, %v679
  %vm780 = vcmask 257024
  %781 = vst.msk [vmem:[%s3] sm:$0xf] %vm780, %v680
  %782 = vst.msk [vmem:[%s3 + $0x4] sm:$0xf] %vm780, %v681
  %783 = vst.msk [vmem:[%s3 + $0x8] sm:$0xf] %vm780, %v682
  %784 = vst.msk [vmem:[%s3 + $0xc] sm:$0xf] %vm780, %v683
  %785 = vst.msk [vmem:[%s3 + $0x10] sm:$0xf] %vm780, %v684
  %786 = vst.msk [vmem:[%s3 + $0x14] sm:$0xf] %vm780, %v685
  %787 = vst.msk [vmem:[%s3 + $0x18] sm:$0xf] %vm780, %v686
  %788 = vst.msk [vmem:[%s3 + $0x1c] sm:$0xf] %vm780, %v687
  %789 = vst.msk [vmem:[%s3 + $0x20] sm:$0xf] %vm780, %v688
  %790 = vst.msk [vmem:[%s3 + $0x24] sm:$0xf] %vm780, %v689
  %791 = vst.msk [vmem:[%s3 + $0x28] sm:$0xf] %vm780, %v690
  %792 = vst.msk [vmem:[%s3 + $0x2c] sm:$0xf] %vm780, %v691
  %793 = vst.msk [vmem:[%s3 + $0x30] sm:$0xf] %vm780, %v692
  %794 = vst.msk [vmem:[%s3 + $0x34] sm:$0xf] %vm780, %v693
  %795 = vst.msk [vmem:[%s3 + $0x38] sm:$0xf] %vm780, %v694
  %796 = vst.msk [vmem:[%s3 + $0x3c] sm:$0xf] %vm780, %v695
  %797 = vst.msk [vmem:[%s3 + $0x40] sm:$0xf] %vm780, %v696
  %798 = vst.msk [vmem:[%s3 + $0x44] sm:$0xf] %vm780, %v697
  %799 = vst.msk [vmem:[%s3 + $0x48] sm:$0xf] %vm780, %v698
  %800 = vst.msk [vmem:[%s3 + $0x4c] sm:$0xf] %vm780, %v699
  %801 = vst.msk [vmem:[%s3 + $0x50] sm:$0xf] %vm780, %v700
  %802 = vst.msk [vmem:[%s3 + $0x54] sm:$0xf] %vm780, %v701
  %803 = vst.msk [vmem:[%s3 + $0x58] sm:$0xf] %vm780, %v702
  %804 = vst.msk [vmem:[%s3 + $0x5c] sm:$0xf] %vm780, %v703
  %805 = vst.msk [vmem:[%s3 + $0x60] sm:$0xf] %vm780, %v704
  %806 = vst.msk [vmem:[%s3 + $0x64] sm:$0xf] %vm780, %v705
  %807 = vst.msk [vmem:[%s3 + $0x68] sm:$0xf] %vm780, %v706
  %808 = vst.msk [vmem:[%s3 + $0x6c] sm:$0xf] %vm780, %v707
  %809 = vst.msk [vmem:[%s3 + $0x70] sm:$0xf] %vm780, %v708
  %810 = vst.msk [vmem:[%s3 + $0x74] sm:$0xf] %vm780, %v709
  %811 = vst.msk [vmem:[%s3 + $0x78] sm:$0xf] %vm780, %v710
  %812 = vst.msk [vmem:[%s3 + $0x7c] sm:$0xf] %vm780, %v711
  %813 = vst.msk [vmem:[%s3 + $0x80] sm:$0xf] %vm780, %v712
  %814 = vst.msk [vmem:[%s3 + $0x84] sm:$0xf] %vm780, %v713
  %815 = vst.msk [vmem:[%s3 + $0x88] sm:$0xf] %vm780, %v714
  %816 = vst.msk [vmem:[%s3 + $0x8c] sm:$0xf] %vm780, %v715
  %817 = vst.msk [vmem:[%s3 + $0x90] sm:$0xf] %vm780, %v716
  %818 = vst.msk [vmem:[%s3 + $0x94] sm:$0xf] %vm780, %v717
  %819 = vst.msk [vmem:[%s3 + $0x98] sm:$0xf] %vm780, %v718
  %820 = vst.msk [vmem:[%s3 + $0x9c] sm:$0xf] %vm780, %v719
  %821 = vst.msk [vmem:[%s3 + $0xa0] sm:$0xf] %vm780, %v720
  %822 = vst.msk [vmem:[%s3 + $0xa4] sm:$0xf] %vm780, %v721
  %823 = vst.msk [vmem:[%s3 + $0xa8] sm:$0xf] %vm780, %v722
  %824 = vst.msk [vmem:[%s3 + $0xac] sm:$0xf] %vm780, %v723
  %825 = vst.msk [vmem:[%s3 + $0xb0] sm:$0xf] %vm780, %v724
  %826 = vst.msk [vmem:[%s3 + $0xb4] sm:$0xf] %vm780, %v725
  %827 = vst.msk [vmem:[%s3 + $0xb8] sm:$0xf] %vm780, %v726
  %828 = vst.msk [vmem:[%s3 + $0xbc] sm:$0xf] %vm780, %v727
  %829 = vst.msk [vmem:[%s3 + $0xc0] sm:$0xf] %vm780, %v728
  %830 = vst.msk [vmem:[%s3 + $0xc4] sm:$0xf] %vm780, %v729
  // Predicated region
  $region14: #{_forward.8} parent=0 // pred_check
    _
  $region15: #{_forward.8} parent=0 // pred_check_branch
    %832 = sbr.rel (0) target = $region17
  $region16: #{_forward.8} parent=0 // pred_region
    _
  $region17: #{_forward.8} parent=0 // pred_fallthru
    _
  // Predicated region
  $region18: #{_forward.8} parent=0 // pred_check
    _
  $region19: #{_forward.8} parent=0 // pred_check_branch
    %834 = sbr.rel (0) target = $region21
  $region20: #{_forward.8} parent=0 // pred_region
    _
  $region21: #{_forward.8} parent=0 // pred_fallthru
    _

// kernel: _forward.9
$region0: #{_forward.9}
  #allocation0 [shape = 'u32[]', space=smem, size = 0x4, offset = 0x4, fixed_abs, tag = 'smem constant byte address 0x4 - core index']
  #allocation1 [shape = 'u32[144,128]{1,0:T(1,128)}', space=vmem, size = 0x12000, scoped, tag = 'internal scratch']
  %s0 = inlined_call_operand.vmem [shape: bf16[88,512], index: 0, kind: input, shape index: {}]
  %s1 = inlined_call_operand.vmem [shape: bf16[512,64], index: 1, kind: input, shape index: {}]
  %s2 = inlined_call_operand.vmem [shape: f32[1,64], index: 2, kind: input, shape index: {}]
  %s3 = inlined_call_operand.vmem [shape: bf16[88,64], index: 3, kind: output, shape index: {}]
  %s4 = sld [smem:[#allocation0]]
  $region22: #{_forward.9} parent=0
    _
  %s6 = ssub.s32 1, %s4
  %s7 = scalar_select 0, %s6, %s4
  // Predicated region
  $region2: #{_forward.9} parent=0 // pred_check
    _
  $region3: #{_forward.9} parent=0 // pred_check_branch
    %9 = sbr.rel (0) target = $region5
  $region4: #{_forward.9} parent=0 // pred_region
    _
  $region5: #{_forward.9} parent=0 // pred_fallthru
    _
  // Predicated region
  $region6: #{_forward.9} parent=0 // pred_check
    _
  $region7: #{_forward.9} parent=0 // pred_check_branch
    %11 = sbr.rel (0) target = $region9
  $region8: #{_forward.9} parent=0 // pred_region
    _
  $region9: #{_forward.9} parent=0 // pred_fallthru
    _
  // Predicated region
  $region10: #{_forward.9} parent=0 // pred_check
    _
  $region11: #{_forward.9} parent=0 // pred_check_branch
    %13 = sbr.rel (0) target = $region13
  $region12: #{_forward.9} parent=0 // pred_region
    _
  $region13: #{_forward.9} parent=0 // pred_fallthru
    _
  %v15 = vld [vmem:[%s0] sm:$0xff]
  %v16 = vld [vmem:[%s0 + $0x8] sm:$0xff]
  %v17 = vld [vmem:[%s0 + $0x10] sm:$0xff]
  %v18 = vld [vmem:[%s0 + $0x18] sm:$0xff]
  %v19 = vld [vmem:[%s0 + $0x20] sm:$0xff]
  %v20 = vld [vmem:[%s0 + $0x28] sm:$0xff]
  %v21 = vld [vmem:[%s0 + $0x30] sm:$0xff]
  %v22 = vld [vmem:[%s0 + $0x38] sm:$0xff]
  %v23 = vld [vmem:[%s0 + $0x40] sm:$0xff]
  %v24 = vld [vmem:[%s0 + $0x48] sm:$0xff]
  %v25 = vld [vmem:[%s0 + $0x50] sm:$0xff]
  %v26 = vld [vmem:[%s0 + $0x58] sm:$0xff]
  %v27 = vld [vmem:[%s0 + $0x60] sm:$0xff]
  %v28 = vld [vmem:[%s0 + $0x68] sm:$0xff]
  %v29 = vld [vmem:[%s0 + $0x70] sm:$0xff]
  %v30 = vld [vmem:[%s0 + $0x78] sm:$0xff]
  %v31 = vld [vmem:[%s0 + $0x80] sm:$0xff]
  %v32 = vld [vmem:[%s0 + $0x88] sm:$0xff]
  %v33 = vld [vmem:[%s0 + $0x90] sm:$0xff]
  %v34 = vld [vmem:[%s0 + $0x98] sm:$0xff]
  %v35 = vld [vmem:[%s0 + $0xa0] sm:$0xff]
  %v36 = vld [vmem:[%s0 + $0xa8] sm:$0xff]
  %v37 = vld [vmem:[%s1] sm:$0xf]
  %v38 = vld [vmem:[%s1 + $0x4] sm:$0xf]
  %v39 = vld [vmem:[%s1 + $0x8] sm:$0xf]
  %v40 = vld [vmem:[%s1 + $0xc] sm:$0xf]
  %v41 = vld [vmem:[%s1 + $0x10] sm:$0xf]
  %v42 = vld [vmem:[%s1 + $0x14] sm:$0xf]
  %v43 = vld [vmem:[%s1 + $0x18] sm:$0xf]
  %v44 = vld [vmem:[%s1 + $0x1c] sm:$0xf]
  %v45 = vld [vmem:[%s1 + $0x20] sm:$0xf]
  %v46 = vld [vmem:[%s1 + $0x24] sm:$0xf]
  %v47 = vld [vmem:[%s1 + $0x28] sm:$0xf]
  %v48 = vld [vmem:[%s1 + $0x2c] sm:$0xf]
  %v49 = vld [vmem:[%s1 + $0x30] sm:$0xf]
  %v50 = vld [vmem:[%s1 + $0x34] sm:$0xf]
  %v51 = vld [vmem:[%s1 + $0x38] sm:$0xf]
  %v52 = vld [vmem:[%s1 + $0x3c] sm:$0xf]
  %v53 = vld [vmem:[%s1 + $0x40] sm:$0xf]
  %v54 = vld [vmem:[%s1 + $0x44] sm:$0xf]
  %v55 = vld [vmem:[%s1 + $0x48] sm:$0xf]
  %v56 = vld [vmem:[%s1 + $0x4c] sm:$0xf]
  %v57 = vld [vmem:[%s1 + $0x50] sm:$0xf]
  %v58 = vld [vmem:[%s1 + $0x54] sm:$0xf]
  %v59 = vld [vmem:[%s1 + $0x58] sm:$0xf]
  %v60 = vld [vmem:[%s1 + $0x5c] sm:$0xf]
  %v61 = vld [vmem:[%s1 + $0x60] sm:$0xf]
  %v62 = vld [vmem:[%s1 + $0x64] sm:$0xf]
  %v63 = vld [vmem:[%s1 + $0x68] sm:$0xf]
  %v64 = vld [vmem:[%s1 + $0x6c] sm:$0xf]
  %v65 = vld [vmem:[%s1 + $0x70] sm:$0xf]
  %v66 = vld [vmem:[%s1 + $0x74] sm:$0xf]
  %v67 = vld [vmem:[%s1 + $0x78] sm:$0xf]
  %v68 = vld [vmem:[%s1 + $0x7c] sm:$0xf]
  %v69 = vld [vmem:[%s1 + $0x80] sm:$0xf]
  %v70 = vld [vmem:[%s1 + $0x84] sm:$0xf]
  %v71 = vld [vmem:[%s1 + $0x88] sm:$0xf]
  %v72 = vld [vmem:[%s1 + $0x8c] sm:$0xf]
  %v73 = vld [vmem:[%s1 + $0x90] sm:$0xf]
  %v74 = vld [vmem:[%s1 + $0x94] sm:$0xf]
  %v75 = vld [vmem:[%s1 + $0x98] sm:$0xf]
  %v76 = vld [vmem:[%s1 + $0x9c] sm:$0xf]
  %v77 = vld [vmem:[%s1 + $0xa0] sm:$0xf]
  %v78 = vld [vmem:[%s1 + $0xa4] sm:$0xf]
  %v79 = vld [vmem:[%s1 + $0xa8] sm:$0xf]
  %v80 = vld [vmem:[%s1 + $0xac] sm:$0xf]
  %v81 = vld [vmem:[%s1 + $0xb0] sm:$0xf]
  %v82 = vld [vmem:[%s1 + $0xb4] sm:$0xf]
  %v83 = vld [vmem:[%s1 + $0xb8] sm:$0xf]
  %v84 = vld [vmem:[%s1 + $0xbc] sm:$0xf]
  %v85 = vld [vmem:[%s1 + $0xc0] sm:$0xf]
  %v86 = vld [vmem:[%s1 + $0xc4] sm:$0xf]
  %v87 = vld [vmem:[%s1 + $0xc8] sm:$0xf]
  %v88 = vld [vmem:[%s1 + $0xcc] sm:$0xf]
  %v89 = vld [vmem:[%s1 + $0xd0] sm:$0xf]
  %v90 = vld [vmem:[%s1 + $0xd4] sm:$0xf]
  %v91 = vld [vmem:[%s1 + $0xd8] sm:$0xf]
  %v92 = vld [vmem:[%s1 + $0xdc] sm:$0xf]
  %v93 = vld [vmem:[%s1 + $0xe0] sm:$0xf]
  %v94 = vld [vmem:[%s1 + $0xe4] sm:$0xf]
  %v95 = vld [vmem:[%s1 + $0xe8] sm:$0xf]
  %v96 = vld [vmem:[%s1 + $0xec] sm:$0xf]
  %v97 = vld [vmem:[%s1 + $0xf0] sm:$0xf]
  %v98 = vld [vmem:[%s1 + $0xf4] sm:$0xf]
  %v99 = vld [vmem:[%s1 + $0xf8] sm:$0xf]
  %v100 = vld [vmem:[%s1 + $0xfc] sm:$0xf]
  %v101 = vld [vmem:[%s2] sm:$0x1]
  %v103 = vlaneseq
  %v104 = vshrl.u32 %v103, 7
  %v105 = vsub.s32 0, %v104
  %v106 = vrot.slane %v101, %v105
  %v130 = vunpack.c.l.b16 %v15
  %v131 = vunpack.c.h.b16 %v15
  %v132 = vunpack.c.l.b16 %v16
  %v133 = vunpack.c.h.b16 %v16
  %v134 = vunpack.c.l.b16 %v17
  %v135 = vunpack.c.h.b16 %v17
  %v136 = vunpack.c.l.b16 %v18
  %v137 = vunpack.c.h.b16 %v18
  %v138 = vunpack.c.l.b16 %v19
  %v139 = vunpack.c.h.b16 %v19
  %v140 = vunpack.c.l.b16 %v20
  %v141 = vunpack.c.h.b16 %v20
  %v142 = vunpack.c.l.b16 %v21
  %v143 = vunpack.c.h.b16 %v21
  %v144 = vunpack.c.l.b16 %v22
  %v145 = vunpack.c.h.b16 %v22
  %v146 = vunpack.c.l.b16 %v23
  %v147 = vunpack.c.h.b16 %v23
  %v148 = vunpack.c.l.b16 %v24
  %v149 = vunpack.c.h.b16 %v24
  %v150 = vunpack.c.l.b16 %v25
  %v151 = vunpack.c.h.b16 %v25
  %v152 = vunpack.c.l.b16 %v26
  %v153 = vunpack.c.h.b16 %v26
  %v154 = vunpack.c.l.b16 %v27
  %v155 = vunpack.c.h.b16 %v27
  %v156 = vunpack.c.l.b16 %v28
  %v157 = vunpack.c.h.b16 %v28
  %v158 = vunpack.c.l.b16 %v29
  %v159 = vunpack.c.h.b16 %v29
  %v160 = vunpack.c.l.b16 %v30
  %v161 = vunpack.c.h.b16 %v30
  %v162 = vunpack.c.l.b16 %v31
  %v163 = vunpack.c.h.b16 %v31
  %v164 = vunpack.c.l.b16 %v32
  %v165 = vunpack.c.h.b16 %v32
  %v166 = vunpack.c.l.b16 %v33
  %v167 = vunpack.c.h.b16 %v33
  %v168 = vunpack.c.l.b16 %v34
  %v169 = vunpack.c.h.b16 %v34
  %v170 = vunpack.c.l.b16 %v35
  %v171 = vunpack.c.h.b16 %v35
  %v172 = vunpack.c.l.b16 %v36
  %v173 = vunpack.c.h.b16 %v36
  %v174 = vpack.c.b16 %v134, %v130
  %v175 = vpack.c.b16 %v135, %v131
  %v176 = vpack.c.b16 %v136, %v132
  %v177 = vpack.c.b16 %v137, %v133
  %v178 = vpack.c.b16 %v142, %v138
  %v179 = vpack.c.b16 %v143, %v139
  %v180 = vpack.c.b16 %v144, %v140
  %v181 = vpack.c.b16 %v145, %v141
  %v182 = vpack.c.b16 %v150, %v146
  %v183 = vpack.c.b16 %v151, %v147
  %v184 = vpack.c.b16 %v152, %v148
  %v185 = vpack.c.b16 %v153, %v149
  %v186 = vpack.c.b16 %v158, %v154
  %v187 = vpack.c.b16 %v159, %v155
  %v188 = vpack.c.b16 %v160, %v156
  %v189 = vpack.c.b16 %v161, %v157
  %v190 = vpack.c.b16 %v166, %v162
  %v191 = vpack.c.b16 %v167, %v163
  %v192 = vpack.c.b16 %v168, %v164
  %v193 = vpack.c.b16 %v169, %v165
  %v194 = vpack.c.b16 %v170, %v170
  %v195 = vpack.c.b16 %v171, %v171
  %v196 = vpack.c.b16 %v172, %v172
  %v197 = vpack.c.b16 %v173, %v173
  %v286 = vunpack.c.l.b16 %v37
  %v287 = vunpack.c.l.b16 %v38
  %v288 = vunpack.c.l.b16 %v39
  %v289 = vunpack.c.l.b16 %v40
  %v290 = vunpack.c.l.b16 %v41
  %v291 = vunpack.c.l.b16 %v42
  %v292 = vunpack.c.l.b16 %v43
  %v293 = vunpack.c.l.b16 %v44
  %v294 = vunpack.c.l.b16 %v45
  %v295 = vunpack.c.l.b16 %v46
  %v296 = vunpack.c.l.b16 %v47
  %v297 = vunpack.c.l.b16 %v48
  %v298 = vunpack.c.l.b16 %v49
  %v299 = vunpack.c.l.b16 %v50
  %v300 = vunpack.c.l.b16 %v51
  %v301 = vunpack.c.l.b16 %v52
  %v302 = vunpack.c.l.b16 %v53
  %v303 = vunpack.c.l.b16 %v54
  %v304 = vunpack.c.l.b16 %v55
  %v305 = vunpack.c.l.b16 %v56
  %v306 = vunpack.c.l.b16 %v57
  %v307 = vunpack.c.l.b16 %v58
  %v308 = vunpack.c.l.b16 %v59
  %v309 = vunpack.c.l.b16 %v60
  %v310 = vunpack.c.l.b16 %v61
  %v311 = vunpack.c.l.b16 %v62
  %v312 = vunpack.c.l.b16 %v63
  %v313 = vunpack.c.l.b16 %v64
  %v314 = vunpack.c.l.b16 %v65
  %v315 = vunpack.c.l.b16 %v66
  %v316 = vunpack.c.l.b16 %v67
  %v317 = vunpack.c.l.b16 %v68
  %v318 = vunpack.c.l.b16 %v69
  %v319 = vunpack.c.l.b16 %v70
  %v320 = vunpack.c.l.b16 %v71
  %v321 = vunpack.c.l.b16 %v72
  %v322 = vunpack.c.l.b16 %v73
  %v323 = vunpack.c.l.b16 %v74
  %v324 = vunpack.c.l.b16 %v75
  %v325 = vunpack.c.l.b16 %v76
  %v326 = vunpack.c.l.b16 %v77
  %v327 = vunpack.c.l.b16 %v78
  %v328 = vunpack.c.l.b16 %v79
  %v329 = vunpack.c.l.b16 %v80
  %v330 = vunpack.c.l.b16 %v81
  %v331 = vunpack.c.l.b16 %v82
  %v332 = vunpack.c.l.b16 %v83
  %v333 = vunpack.c.l.b16 %v84
  %v334 = vunpack.c.l.b16 %v85
  %v335 = vunpack.c.l.b16 %v86
  %v336 = vunpack.c.l.b16 %v87
  %v337 = vunpack.c.l.b16 %v88
  %v338 = vunpack.c.l.b16 %v89
  %v339 = vunpack.c.l.b16 %v90
  %v340 = vunpack.c.l.b16 %v91
  %v341 = vunpack.c.l.b16 %v92
  %v342 = vunpack.c.l.b16 %v93
  %v343 = vunpack.c.l.b16 %v94
  %v344 = vunpack.c.l.b16 %v95
  %v345 = vunpack.c.l.b16 %v96
  %v346 = vunpack.c.l.b16 %v97
  %v347 = vunpack.c.l.b16 %v98
  %v348 = vunpack.c.l.b16 %v99
  %v349 = vunpack.c.l.b16 %v100
  %v350 = vpack.c.b16 %v287, %v286
  %v351 = vpack.c.b16 %v289, %v288
  %v352 = vpack.c.b16 %v291, %v290
  %v353 = vpack.c.b16 %v293, %v292
  %v354 = vpack.c.b16 %v295, %v294
  %v355 = vpack.c.b16 %v297, %v296
  %v356 = vpack.c.b16 %v299, %v298
  %v357 = vpack.c.b16 %v301, %v300
  %v358 = vpack.c.b16 %v303, %v302
  %v359 = vpack.c.b16 %v305, %v304
  %v360 = vpack.c.b16 %v307, %v306
  %v361 = vpack.c.b16 %v309, %v308
  %v362 = vpack.c.b16 %v311, %v310
  %v363 = vpack.c.b16 %v313, %v312
  %v364 = vpack.c.b16 %v315, %v314
  %v365 = vpack.c.b16 %v317, %v316
  %v366 = vpack.c.b16 %v319, %v318
  %v367 = vpack.c.b16 %v321, %v320
  %v368 = vpack.c.b16 %v323, %v322
  %v369 = vpack.c.b16 %v325, %v324
  %v370 = vpack.c.b16 %v327, %v326
  %v371 = vpack.c.b16 %v329, %v328
  %v372 = vpack.c.b16 %v331, %v330
  %v373 = vpack.c.b16 %v333, %v332
  %v374 = vpack.c.b16 %v335, %v334
  %v375 = vpack.c.b16 %v337, %v336
  %v376 = vpack.c.b16 %v339, %v338
  %v377 = vpack.c.b16 %v341, %v340
  %v378 = vpack.c.b16 %v343, %v342
  %v379 = vpack.c.b16 %v345, %v344
  %v380 = vpack.c.b16 %v347, %v346
  %v381 = vpack.c.b16 %v349, %v348
  %414 = vmatprep.subr.bf16.mxu0 0
  %415 = vmatpush1.bf16.msra.mxu0 %v357
  %416 = vmatprep.subr.bf16.mxu0 0
  %417 = vmatpush1.bf16.msra.mxu0 %v356
  %418 = vmatprep.subr.bf16.mxu0 0
  %419 = vmatpush1.bf16.msra.mxu0 %v355
  %420 = vmatprep.subr.bf16.mxu0 0
  %421 = vmatpush1.bf16.msra.mxu0 %v354
  %422 = vmatprep.subr.bf16.mxu0 0
  %423 = vmatpush1.bf16.msra.mxu0 %v353
  %424 = vmatprep.subr.bf16.mxu0 0
  %425 = vmatpush1.bf16.msra.mxu0 %v352
  %426 = vmatprep.subr.bf16.mxu0 0
  %427 = vmatpush1.bf16.msra.mxu0 %v351
  %428 = vmatprep.subr.bf16.mxu0 0
  %429 = vmatpush1.bf16.msra.mxu0 %v350
  %430 = vmatprep.subr.bf16.mxu0 0
  %431 = vmatpush2.bf16.msra.mxu0 %v365
  %432 = vmatprep.subr.bf16.mxu0 0
  %433 = vmatpush2.bf16.msra.mxu0 %v364
  %434 = vmatprep.subr.bf16.mxu0 0
  %435 = vmatpush2.bf16.msra.mxu0 %v363
  %436 = vmatprep.subr.bf16.mxu0 0
  %437 = vmatpush2.bf16.msra.mxu0 %v362
  %438 = vmatprep.subr.bf16.mxu0 0
  %439 = vmatpush2.bf16.msra.mxu0 %v361
  %440 = vmatprep.subr.bf16.mxu0 0
  %441 = vmatpush2.bf16.msra.mxu0 %v360
  %442 = vmatprep.subr.bf16.mxu0 0
  %443 = vmatpush2.bf16.msra.mxu0 %v359
  %444 = vmatprep.subr.bf16.mxu0 0
  %445 = vmatpush2.bf16.msra.mxu0 %v358
  %446 = vmatprep.mubr.bf16.mxu0 %v175
  %447 = vmatmul.mubr.bf16.gmra.mxu0 %v174
  %v448 = vpop.f32.mrf.mxu0
  %v449 = vadd.f32 %v106, %v448
  %v450 = vpop.f32.mrf.mxu0
  %v451 = vpop.f32.mrf.mxu0
  %v452 = vadd.f32 %v106, %v451
  %v453 = vpop.f32.mrf.mxu0
  %454 = vmatprep.mubr.bf16.mxu0 %v179
  %455 = vmatmul.mubr.bf16.gmra.mxu0 %v178
  %v456 = vpop.f32.mrf.mxu0
  %v457 = vadd.f32 %v106, %v456
  %v458 = vpop.f32.mrf.mxu0
  %v459 = vpop.f32.mrf.mxu0
  %v460 = vadd.f32 %v106, %v459
  %v461 = vpop.f32.mrf.mxu0
  %462 = vmatprep.mubr.bf16.mxu0 %v183
  %463 = vmatmul.mubr.bf16.gmra.mxu0 %v182
  %v464 = vpop.f32.mrf.mxu0
  %v465 = vadd.f32 %v106, %v464
  %v466 = vpop.f32.mrf.mxu0
  %v467 = vpop.f32.mrf.mxu0
  %v468 = vadd.f32 %v106, %v467
  %v469 = vpop.f32.mrf.mxu0
  %470 = vmatprep.mubr.bf16.mxu0 %v187
  %471 = vmatmul.mubr.bf16.gmra.mxu0 %v186
  %v472 = vpop.f32.mrf.mxu0
  %v473 = vadd.f32 %v106, %v472
  %v474 = vpop.f32.mrf.mxu0
  %v475 = vpop.f32.mrf.mxu0
  %v476 = vadd.f32 %v106, %v475
  %v477 = vpop.f32.mrf.mxu0
  %478 = vmatprep.mubr.bf16.mxu0 %v191
  %479 = vmatmul.mubr.bf16.gmra.mxu0 %v190
  %v480 = vpop.f32.mrf.mxu0
  %v481 = vadd.f32 %v106, %v480
  %v482 = vpop.f32.mrf.mxu0
  %v483 = vpop.f32.mrf.mxu0
  %v484 = vadd.f32 %v106, %v483
  %v485 = vpop.f32.mrf.mxu0
  %486 = vmatprep.mubr.bf16.mxu0 %v195
  %487 = vmatmul.mubr.bf16.gmra.mxu0 %v194
  %v488 = vpop.f32.mrf.mxu0
  %v489 = vadd.f32 %v106, %v488
  %v490 = vpop.f32.mrf.mxu0
  %v491 = vpop.f32.mrf.mxu0
  %v492 = vpop.f32.mrf.mxu0
  %493 = vdwg.mxu0
  %494 = vmatprep.subr.bf16.mxu0 0
  %495 = vmatpush1.bf16.msra.mxu0 %v373
  %496 = vmatprep.subr.bf16.mxu0 0
  %497 = vmatpush1.bf16.msra.mxu0 %v372
  %498 = vmatprep.subr.bf16.mxu0 0
  %499 = vmatpush1.bf16.msra.mxu0 %v371
  %500 = vmatprep.subr.bf16.mxu0 0
  %501 = vmatpush1.bf16.msra.mxu0 %v370
  %502 = vmatprep.subr.bf16.mxu0 0
  %503 = vmatpush1.bf16.msra.mxu0 %v369
  %504 = vmatprep.subr.bf16.mxu0 0
  %505 = vmatpush1.bf16.msra.mxu0 %v368
  %506 = vmatprep.subr.bf16.mxu0 0
  %507 = vmatpush1.bf16.msra.mxu0 %v367
  %508 = vmatprep.subr.bf16.mxu0 0
  %509 = vmatpush1.bf16.msra.mxu0 %v366
  %510 = vmatprep.subr.bf16.mxu0 0
  %511 = vmatpush2.bf16.msra.mxu0 %v381
  %512 = vmatprep.subr.bf16.mxu0 0
  %513 = vmatpush2.bf16.msra.mxu0 %v380
  %514 = vmatprep.subr.bf16.mxu0 0
  %515 = vmatpush2.bf16.msra.mxu0 %v379
  %516 = vmatprep.subr.bf16.mxu0 0
  %517 = vmatpush2.bf16.msra.mxu0 %v378
  %518 = vmatprep.subr.bf16.mxu0 0
  %519 = vmatpush2.bf16.msra.mxu0 %v377
  %520 = vmatprep.subr.bf16.mxu0 0
  %521 = vmatpush2.bf16.msra.mxu0 %v376
  %522 = vmatprep.subr.bf16.mxu0 0
  %523 = vmatpush2.bf16.msra.mxu0 %v375
  %524 = vmatprep.subr.bf16.mxu0 0
  %525 = vmatpush2.bf16.msra.mxu0 %v374
  %526 = vmatprep.mubr.bf16.mxu0 %v177
  %527 = vmatmul.mubr.bf16.gmra.mxu0 %v176
  %v528 = vpop.f32.mrf.mxu0
  %v529 = vadd.f32 %v449, %v528
  %v530 = vpop.f32.mrf.mxu0
  %v531 = vpop.f32.mrf.mxu0
  %v532 = vadd.f32 %v452, %v531
  %v533 = vpop.f32.mrf.mxu0
  %534 = vmatprep.mubr.bf16.mxu0 %v181
  %535 = vmatmul.mubr.bf16.gmra.mxu0 %v180
  %v536 = vpop.f32.mrf.mxu0
  %v537 = vadd.f32 %v457, %v536
  %v538 = vpop.f32.mrf.mxu0
  %v539 = vpop.f32.mrf.mxu0
  %v540 = vadd.f32 %v460, %v539
  %v541 = vpop.f32.mrf.mxu0
  %542 = vmatprep.mubr.bf16.mxu0 %v185
  %543 = vmatmul.mubr.bf16.gmra.mxu0 %v184
  %v544 = vpop.f32.mrf.mxu0
  %v545 = vadd.f32 %v465, %v544
  %v546 = vpop.f32.mrf.mxu0
  %v547 = vpop.f32.mrf.mxu0
  %v548 = vadd.f32 %v468, %v547
  %v549 = vpop.f32.mrf.mxu0
  %550 = vmatprep.mubr.bf16.mxu0 %v189
  %551 = vmatmul.mubr.bf16.gmra.mxu0 %v188
  %v552 = vpop.f32.mrf.mxu0
  %v553 = vadd.f32 %v473, %v552
  %v554 = vpop.f32.mrf.mxu0
  %v555 = vpop.f32.mrf.mxu0
  %v556 = vadd.f32 %v476, %v555
  %v557 = vpop.f32.mrf.mxu0
  %558 = vmatprep.mubr.bf16.mxu0 %v193
  %559 = vmatmul.mubr.bf16.gmra.mxu0 %v192
  %v560 = vpop.f32.mrf.mxu0
  %v561 = vadd.f32 %v481, %v560
  %v562 = vpop.f32.mrf.mxu0
  %v563 = vpop.f32.mrf.mxu0
  %v564 = vadd.f32 %v484, %v563
  %v565 = vpop.f32.mrf.mxu0
  %566 = vmatprep.mubr.bf16.mxu0 %v197
  %567 = vmatmul.mubr.bf16.gmra.mxu0 %v196
  %v568 = vpop.f32.mrf.mxu0
  %v569 = vadd.f32 %v489, %v568
  %v570 = vpop.f32.mrf.mxu0
  %v571 = vpop.f32.mrf.mxu0
  %v572 = vpop.f32.mrf.mxu0
  %573 = vdwg.mxu0
  %v574 = vmax.f32 %v529, 0.0
  %v575 = vmax.f32 %v532, 0.0
  %v576 = vmax.f32 %v537, 0.0
  %v577 = vmax.f32 %v540, 0.0
  %v578 = vmax.f32 %v545, 0.0
  %v579 = vmax.f32 %v548, 0.0
  %v580 = vmax.f32 %v553, 0.0
  %v581 = vmax.f32 %v556, 0.0
  %v582 = vmax.f32 %v561, 0.0
  %v583 = vmax.f32 %v564, 0.0
  %v584 = vmax.f32 %v569, 0.0
  %v585 = vpack.c.bf16 %v575, %v574
  %v586 = vpack.c.bf16 %v577, %v576
  %v587 = vpack.c.bf16 %v579, %v578
  %v588 = vpack.c.bf16 %v581, %v580
  %v589 = vpack.c.bf16 %v583, %v582
  %v590 = vpack.c.bf16 %v584, %v584
  %v597 = vunpack.c.l.b16 %v585
  %v598 = vunpack.c.h.b16 %v585
  %v599 = vunpack.c.l.b16 %v586
  %v600 = vunpack.c.h.b16 %v586
  %v601 = vunpack.c.l.b16 %v587
  %v602 = vunpack.c.h.b16 %v587
  %v603 = vunpack.c.l.b16 %v588
  %v604 = vunpack.c.h.b16 %v588
  %v605 = vunpack.c.l.b16 %v589
  %v606 = vunpack.c.h.b16 %v589
  %v607 = vunpack.c.l.b16 %v590
  %v608 = vpack.c.b16 %v597, %v597
  %v609 = vpack.c.b16 %v598, %v598
  %v610 = vpack.c.b16 %v599, %v599
  %v611 = vpack.c.b16 %v600, %v600
  %v612 = vpack.c.b16 %v601, %v601
  %v613 = vpack.c.b16 %v602, %v602
  %v614 = vpack.c.b16 %v603, %v603
  %v615 = vpack.c.b16 %v604, %v604
  %v616 = vpack.c.b16 %v605, %v605
  %v617 = vpack.c.b16 %v606, %v606
  %v618 = vpack.c.b16 %v607, %v607
  %vm630 = vcmask 519168
  %631 = vst.msk [vmem:[%s3] sm:$0xf] %vm630, %v608
  %632 = vst.msk [vmem:[%s3 + $0x4] sm:$0xf] %vm630, %v609
  %633 = vst.msk [vmem:[%s3 + $0x8] sm:$0xf] %vm630, %v610
  %634 = vst.msk [vmem:[%s3 + $0xc] sm:$0xf] %vm630, %v611
  %635 = vst.msk [vmem:[%s3 + $0x10] sm:$0xf] %vm630, %v612
  %636 = vst.msk [vmem:[%s3 + $0x14] sm:$0xf] %vm630, %v613
  %637 = vst.msk [vmem:[%s3 + $0x18] sm:$0xf] %vm630, %v614
  %638 = vst.msk [vmem:[%s3 + $0x1c] sm:$0xf] %vm630, %v615
  %639 = vst.msk [vmem:[%s3 + $0x20] sm:$0xf] %vm630, %v616
  %640 = vst.msk [vmem:[%s3 + $0x24] sm:$0xf] %vm630, %v617
  %641 = vst.msk [vmem:[%s3 + $0x28] sm:$0xf] %vm630, %v618
  // Predicated region
  $region14: #{_forward.9} parent=0 // pred_check
    _
  $region15: #{_forward.9} parent=0 // pred_check_branch
    %643 = sbr.rel (0) target = $region17
  $region16: #{_forward.9} parent=0 // pred_region
    _
  $region17: #{_forward.9} parent=0 // pred_fallthru
    _
  // Predicated region
  $region18: #{_forward.9} parent=0 // pred_check
    _
  $region19: #{_forward.9} parent=0 // pred_check_branch
    %645 = sbr.rel (0) target = $region21
  $region20: #{_forward.9} parent=0 // pred_region
    _
  $region21: #{_forward.9} parent=0 // pred_fallthru
    _

// kernel: _forward.10
$region0: #{_forward.10}
  #allocation0 [shape = 'u32[]', space=smem, size = 0x4, offset = 0x4, fixed_abs, tag = 'smem constant byte address 0x4 - core index']
  #allocation1 [shape = 'u32[144,128]{1,0:T(1,128)}', space=vmem, size = 0x12000, scoped, tag = 'internal scratch']
  %s0 = inlined_call_operand.vmem [shape: bf16[16,576], index: 0, kind: input, shape index: {}]
  %s1 = inlined_call_operand.vmem [shape: bf16[576,128], index: 1, kind: input, shape index: {}]
  %s2 = inlined_call_operand.vmem [shape: f32[1,128], index: 2, kind: input, shape index: {}]
  %s3 = inlined_call_operand.vmem [shape: bf16[16,128], index: 3, kind: output, shape index: {}]
  %s4 = sld [smem:[#allocation0]]
  $region22: #{_forward.10} parent=0
    _
  %s6 = ssub.s32 1, %s4
  %s7 = scalar_select 0, %s6, %s4
  // Predicated region
  $region2: #{_forward.10} parent=0 // pred_check
    _
  $region3: #{_forward.10} parent=0 // pred_check_branch
    %9 = sbr.rel (0) target = $region5
  $region4: #{_forward.10} parent=0 // pred_region
    _
  $region5: #{_forward.10} parent=0 // pred_fallthru
    _
  // Predicated region
  $region6: #{_forward.10} parent=0 // pred_check
    _
  $region7: #{_forward.10} parent=0 // pred_check_branch
    %11 = sbr.rel (0) target = $region9
  $region8: #{_forward.10} parent=0 // pred_region
    _
  $region9: #{_forward.10} parent=0 // pred_fallthru
    _
  // Predicated region
  $region10: #{_forward.10} parent=0 // pred_check
    _
  $region11: #{_forward.10} parent=0 // pred_check_branch
    %13 = sbr.rel (0) target = $region13
  $region12: #{_forward.10} parent=0 // pred_region
    _
  $region13: #{_forward.10} parent=0 // pred_fallthru
    _
  %v15 = vld [vmem:[%s0] sm:$0xff]
  %v16 = vld [vmem:[%s0 + $0x8] sm:$0xff]
  %v17 = vld [vmem:[%s0 + $0x10] sm:$0xf]
  %v18 = vld [vmem:[%s0 + $0x14] sm:$0xff]
  %v19 = vld [vmem:[%s0 + $0x1c] sm:$0xff]
  %v20 = vld [vmem:[%s0 + $0x24] sm:$0xf]
  %v21 = vld [vmem:[%s1] sm:$0xf]
  %v22 = vld [vmem:[%s1 + $0x4] sm:$0xf]
  %v23 = vld [vmem:[%s1 + $0x8] sm:$0xf]
  %v24 = vld [vmem:[%s1 + $0xc] sm:$0xf]
  %v25 = vld [vmem:[%s1 + $0x10] sm:$0xf]
  %v26 = vld [vmem:[%s1 + $0x14] sm:$0xf]
  %v27 = vld [vmem:[%s1 + $0x18] sm:$0xf]
  %v28 = vld [vmem:[%s1 + $0x1c] sm:$0xf]
  %v29 = vld [vmem:[%s1 + $0x20] sm:$0xf]
  %v30 = vld [vmem:[%s1 + $0x24] sm:$0xf]
  %v31 = vld [vmem:[%s1 + $0x28] sm:$0xf]
  %v32 = vld [vmem:[%s1 + $0x2c] sm:$0xf]
  %v33 = vld [vmem:[%s1 + $0x30] sm:$0xf]
  %v34 = vld [vmem:[%s1 + $0x34] sm:$0xf]
  %v35 = vld [vmem:[%s1 + $0x38] sm:$0xf]
  %v36 = vld [vmem:[%s1 + $0x3c] sm:$0xf]
  %v37 = vld [vmem:[%s1 + $0x40] sm:$0xf]
  %v38 = vld [vmem:[%s1 + $0x44] sm:$0xf]
  %v39 = vld [vmem:[%s1 + $0x48] sm:$0xf]
  %v40 = vld [vmem:[%s1 + $0x4c] sm:$0xf]
  %v41 = vld [vmem:[%s1 + $0x50] sm:$0xf]
  %v42 = vld [vmem:[%s1 + $0x54] sm:$0xf]
  %v43 = vld [vmem:[%s1 + $0x58] sm:$0xf]
  %v44 = vld [vmem:[%s1 + $0x5c] sm:$0xf]
  %v45 = vld [vmem:[%s1 + $0x60] sm:$0xf]
  %v46 = vld [vmem:[%s1 + $0x64] sm:$0xf]
  %v47 = vld [vmem:[%s1 + $0x68] sm:$0xf]
  %v48 = vld [vmem:[%s1 + $0x6c] sm:$0xf]
  %v49 = vld [vmem:[%s1 + $0x70] sm:$0xf]
  %v50 = vld [vmem:[%s1 + $0x74] sm:$0xf]
  %v51 = vld [vmem:[%s1 + $0x78] sm:$0xf]
  %v52 = vld [vmem:[%s1 + $0x7c] sm:$0xf]
  %v53 = vld [vmem:[%s1 + $0x80] sm:$0xf]
  %v54 = vld [vmem:[%s1 + $0x84] sm:$0xf]
  %v55 = vld [vmem:[%s1 + $0x88] sm:$0xf]
  %v56 = vld [vmem:[%s1 + $0x8c] sm:$0xf]
  %v57 = vld [vmem:[%s1 + $0x90] sm:$0xf]
  %v58 = vld [vmem:[%s1 + $0x94] sm:$0xf]
  %v59 = vld [vmem:[%s1 + $0x98] sm:$0xf]
  %v60 = vld [vmem:[%s1 + $0x9c] sm:$0xf]
  %v61 = vld [vmem:[%s1 + $0xa0] sm:$0xf]
  %v62 = vld [vmem:[%s1 + $0xa4] sm:$0xf]
  %v63 = vld [vmem:[%s1 + $0xa8] sm:$0xf]
  %v64 = vld [vmem:[%s1 + $0xac] sm:$0xf]
  %v65 = vld [vmem:[%s1 + $0xb0] sm:$0xf]
  %v66 = vld [vmem:[%s1 + $0xb4] sm:$0xf]
  %v67 = vld [vmem:[%s1 + $0xb8] sm:$0xf]
  %v68 = vld [vmem:[%s1 + $0xbc] sm:$0xf]
  %v69 = vld [vmem:[%s1 + $0xc0] sm:$0xf]
  %v70 = vld [vmem:[%s1 + $0xc4] sm:$0xf]
  %v71 = vld [vmem:[%s1 + $0xc8] sm:$0xf]
  %v72 = vld [vmem:[%s1 + $0xcc] sm:$0xf]
  %v73 = vld [vmem:[%s1 + $0xd0] sm:$0xf]
  %v74 = vld [vmem:[%s1 + $0xd4] sm:$0xf]
  %v75 = vld [vmem:[%s1 + $0xd8] sm:$0xf]
  %v76 = vld [vmem:[%s1 + $0xdc] sm:$0xf]
  %v77 = vld [vmem:[%s1 + $0xe0] sm:$0xf]
  %v78 = vld [vmem:[%s1 + $0xe4] sm:$0xf]
  %v79 = vld [vmem:[%s1 + $0xe8] sm:$0xf]
  %v80 = vld [vmem:[%s1 + $0xec] sm:$0xf]
  %v81 = vld [vmem:[%s1 + $0xf0] sm:$0xf]
  %v82 = vld [vmem:[%s1 + $0xf4] sm:$0xf]
  %v83 = vld [vmem:[%s1 + $0xf8] sm:$0xf]
  %v84 = vld [vmem:[%s1 + $0xfc] sm:$0xf]
  %v85 = vld [vmem:[%s1 + $0x100] sm:$0xf]
  %v86 = vld [vmem:[%s1 + $0x104] sm:$0xf]
  %v87 = vld [vmem:[%s1 + $0x108] sm:$0xf]
  %v88 = vld [vmem:[%s1 + $0x10c] sm:$0xf]
  %v89 = vld [vmem:[%s1 + $0x110] sm:$0xf]
  %v90 = vld [vmem:[%s1 + $0x114] sm:$0xf]
  %v91 = vld [vmem:[%s1 + $0x118] sm:$0xf]
  %v92 = vld [vmem:[%s1 + $0x11c] sm:$0xf]
  %v93 = vld [vmem:[%s2] sm:$0x1]
  %v95 = vlaneseq
  %v96 = vshrl.u32 %v95, 7
  %v97 = vsub.s32 0, %v96
  %v98 = vrot.slane %v93, %v97
  %v106 = vunpack.c.l.b16 %v15
  %v107 = vunpack.c.h.b16 %v15
  %v108 = vunpack.c.l.b16 %v16
  %v109 = vunpack.c.h.b16 %v16
  %v110 = vunpack.c.l.b16 %v17
  %v111 = vunpack.c.l.b16 %v18
  %v112 = vunpack.c.h.b16 %v18
  %v113 = vunpack.c.l.b16 %v19
  %v114 = vunpack.c.h.b16 %v19
  %v115 = vunpack.c.l.b16 %v20
  %v116 = vpack.c.b16 %v111, %v106
  %v117 = vpack.c.b16 %v112, %v107
  %v118 = vpack.c.b16 %v113, %v108
  %v119 = vpack.c.b16 %v114, %v109
  %v120 = vpack.c.b16 %v115, %v110
  %v197 = vunpack.c.l.b16 %v21
  %v198 = vunpack.c.l.b16 %v22
  %v199 = vunpack.c.l.b16 %v23
  %v200 = vunpack.c.l.b16 %v24
  %v201 = vunpack.c.l.b16 %v25
  %v202 = vunpack.c.l.b16 %v26
  %v203 = vunpack.c.l.b16 %v27
  %v204 = vunpack.c.l.b16 %v28
  %v205 = vunpack.c.l.b16 %v29
  %v206 = vunpack.c.l.b16 %v30
  %v207 = vunpack.c.l.b16 %v31
  %v208 = vunpack.c.l.b16 %v32
  %v209 = vunpack.c.l.b16 %v33
  %v210 = vunpack.c.l.b16 %v34
  %v211 = vunpack.c.l.b16 %v35
  %v212 = vunpack.c.l.b16 %v36
  %v213 = vunpack.c.l.b16 %v37
  %v214 = vunpack.c.l.b16 %v38
  %v215 = vunpack.c.l.b16 %v39
  %v216 = vunpack.c.l.b16 %v40
  %v217 = vunpack.c.l.b16 %v41
  %v218 = vunpack.c.l.b16 %v42
  %v219 = vunpack.c.l.b16 %v43
  %v220 = vunpack.c.l.b16 %v44
  %v221 = vunpack.c.l.b16 %v45
  %v222 = vunpack.c.l.b16 %v46
  %v223 = vunpack.c.l.b16 %v47
  %v224 = vunpack.c.l.b16 %v48
  %v225 = vunpack.c.l.b16 %v49
  %v226 = vunpack.c.l.b16 %v50
  %v227 = vunpack.c.l.b16 %v51
  %v228 = vunpack.c.l.b16 %v52
  %v229 = vunpack.c.l.b16 %v53
  %v230 = vunpack.c.l.b16 %v54
  %v231 = vunpack.c.l.b16 %v55
  %v232 = vunpack.c.l.b16 %v56
  %v233 = vunpack.c.l.b16 %v57
  %v234 = vunpack.c.l.b16 %v58
  %v235 = vunpack.c.l.b16 %v59
  %v236 = vunpack.c.l.b16 %v60
  %v237 = vunpack.c.l.b16 %v61
  %v238 = vunpack.c.l.b16 %v62
  %v239 = vunpack.c.l.b16 %v63
  %v240 = vunpack.c.l.b16 %v64
  %v241 = vunpack.c.l.b16 %v65
  %v242 = vunpack.c.l.b16 %v66
  %v243 = vunpack.c.l.b16 %v67
  %v244 = vunpack.c.l.b16 %v68
  %v245 = vunpack.c.l.b16 %v69
  %v246 = vunpack.c.l.b16 %v70
  %v247 = vunpack.c.l.b16 %v71
  %v248 = vunpack.c.l.b16 %v72
  %v249 = vunpack.c.l.b16 %v73
  %v250 = vunpack.c.l.b16 %v74
  %v251 = vunpack.c.l.b16 %v75
  %v252 = vunpack.c.l.b16 %v76
  %v253 = vunpack.c.l.b16 %v77
  %v254 = vunpack.c.l.b16 %v78
  %v255 = vunpack.c.l.b16 %v79
  %v256 = vunpack.c.l.b16 %v80
  %v257 = vunpack.c.l.b16 %v81
  %v258 = vunpack.c.l.b16 %v82
  %v259 = vunpack.c.l.b16 %v83
  %v260 = vunpack.c.l.b16 %v84
  %v261 = vunpack.c.l.b16 %v85
  %v262 = vunpack.c.l.b16 %v86
  %v263 = vunpack.c.l.b16 %v87
  %v264 = vunpack.c.l.b16 %v88
  %v265 = vunpack.c.l.b16 %v89
  %v266 = vunpack.c.l.b16 %v90
  %v267 = vunpack.c.l.b16 %v91
  %v268 = vunpack.c.l.b16 %v92
  %v269 = vpack.c.b16 %v198, %v197
  %v270 = vpack.c.b16 %v200, %v199
  %v271 = vpack.c.b16 %v202, %v201
  %v272 = vpack.c.b16 %v204, %v203
  %v273 = vpack.c.b16 %v206, %v205
  %v274 = vpack.c.b16 %v208, %v207
  %v275 = vpack.c.b16 %v210, %v209
  %v276 = vpack.c.b16 %v212, %v211
  %v277 = vpack.c.b16 %v214, %v213
  %v278 = vpack.c.b16 %v216, %v215
  %v279 = vpack.c.b16 %v218, %v217
  %v280 = vpack.c.b16 %v220, %v219
  %v281 = vpack.c.b16 %v222, %v221
  %v282 = vpack.c.b16 %v224, %v223
  %v283 = vpack.c.b16 %v226, %v225
  %v284 = vpack.c.b16 %v228, %v227
  %v285 = vpack.c.b16 %v230, %v229
  %v286 = vpack.c.b16 %v232, %v231
  %v287 = vpack.c.b16 %v234, %v233
  %v288 = vpack.c.b16 %v236, %v235
  %v289 = vpack.c.b16 %v238, %v237
  %v290 = vpack.c.b16 %v240, %v239
  %v291 = vpack.c.b16 %v242, %v241
  %v292 = vpack.c.b16 %v244, %v243
  %v293 = vpack.c.b16 %v246, %v245
  %v294 = vpack.c.b16 %v248, %v247
  %v295 = vpack.c.b16 %v250, %v249
  %v296 = vpack.c.b16 %v252, %v251
  %v297 = vpack.c.b16 %v254, %v253
  %v298 = vpack.c.b16 %v256, %v255
  %v299 = vpack.c.b16 %v258, %v257
  %v300 = vpack.c.b16 %v260, %v259
  %v301 = vpack.c.b16 %v262, %v261
  %v302 = vpack.c.b16 %v264, %v263
  %v303 = vpack.c.b16 %v266, %v265
  %v304 = vpack.c.b16 %v268, %v267
  %vm341 = vcmask 523264
  %v343 = vsel %vm341, %v120, 0
  %345 = vmatprep.subr.bf16.mxu0 0
  %346 = vmatpush1.bf16.msra.mxu0 %v276
  %347 = vmatprep.subr.bf16.mxu0 0
  %348 = vmatpush1.bf16.msra.mxu0 %v275
  %349 = vmatprep.subr.bf16.mxu0 0
  %350 = vmatpush1.bf16.msra.mxu0 %v274
  %351 = vmatprep.subr.bf16.mxu0 0
  %352 = vmatpush1.bf16.msra.mxu0 %v273
  %353 = vmatprep.subr.bf16.mxu0 0
  %354 = vmatpush1.bf16.msra.mxu0 %v272
  %355 = vmatprep.subr.bf16.mxu0 0
  %356 = vmatpush1.bf16.msra.mxu0 %v271
  %357 = vmatprep.subr.bf16.mxu0 0
  %358 = vmatpush1.bf16.msra.mxu0 %v270
  %359 = vmatprep.subr.bf16.mxu0 0
  %360 = vmatpush1.bf16.msra.mxu0 %v269
  %361 = vmatprep.subr.bf16.mxu0 0
  %362 = vmatpush2.bf16.msra.mxu0 %v284
  %363 = vmatprep.subr.bf16.mxu0 0
  %364 = vmatpush2.bf16.msra.mxu0 %v283
  %365 = vmatprep.subr.bf16.mxu0 0
  %366 = vmatpush2.bf16.msra.mxu0 %v282
  %367 = vmatprep.subr.bf16.mxu0 0
  %368 = vmatpush2.bf16.msra.mxu0 %v281
  %369 = vmatprep.subr.bf16.mxu0 0
  %370 = vmatpush2.bf16.msra.mxu0 %v280
  %371 = vmatprep.subr.bf16.mxu0 0
  %372 = vmatpush2.bf16.msra.mxu0 %v279
  %373 = vmatprep.subr.bf16.mxu0 0
  %374 = vmatpush2.bf16.msra.mxu0 %v278
  %375 = vmatprep.subr.bf16.mxu0 0
  %376 = vmatpush2.bf16.msra.mxu0 %v277
  %377 = vmatprep.mubr.bf16.mxu0 %v117
  %378 = vmatmul.mubr.bf16.gmra.mxu0 %v116
  %v379 = vpop.f32.mrf.mxu0
  %v380 = vadd.f32 %v98, %v379
  %v381 = vpop.f32.mrf.mxu0
  %v382 = vpop.f32.mrf.mxu0
  %v383 = vadd.f32 %v98, %v382
  %v384 = vpop.f32.mrf.mxu0
  %385 = vdwg.mxu0
  %386 = vmatprep.subr.bf16.mxu0 0
  %387 = vmatpush1.bf16.msra.mxu0 %v292
  %388 = vmatprep.subr.bf16.mxu0 0
  %389 = vmatpush1.bf16.msra.mxu0 %v291
  %390 = vmatprep.subr.bf16.mxu0 0
  %391 = vmatpush1.bf16.msra.mxu0 %v290
  %392 = vmatprep.subr.bf16.mxu0 0
  %393 = vmatpush1.bf16.msra.mxu0 %v289
  %394 = vmatprep.subr.bf16.mxu0 0
  %395 = vmatpush1.bf16.msra.mxu0 %v288
  %396 = vmatprep.subr.bf16.mxu0 0
  %397 = vmatpush1.bf16.msra.mxu0 %v287
  %398 = vmatprep.subr.bf16.mxu0 0
  %399 = vmatpush1.bf16.msra.mxu0 %v286
  %400 = vmatprep.subr.bf16.mxu0 0
  %401 = vmatpush1.bf16.msra.mxu0 %v285
  %402 = vmatprep.subr.bf16.mxu0 0
  %403 = vmatpush2.bf16.msra.mxu0 %v300
  %404 = vmatprep.subr.bf16.mxu0 0
  %405 = vmatpush2.bf16.msra.mxu0 %v299
  %406 = vmatprep.subr.bf16.mxu0 0
  %407 = vmatpush2.bf16.msra.mxu0 %v298
  %408 = vmatprep.subr.bf16.mxu0 0
  %409 = vmatpush2.bf16.msra.mxu0 %v297
  %410 = vmatprep.subr.bf16.mxu0 0
  %411 = vmatpush2.bf16.msra.mxu0 %v296
  %412 = vmatprep.subr.bf16.mxu0 0
  %413 = vmatpush2.bf16.msra.mxu0 %v295
  %414 = vmatprep.subr.bf16.mxu0 0
  %415 = vmatpush2.bf16.msra.mxu0 %v294
  %416 = vmatprep.subr.bf16.mxu0 0
  %417 = vmatpush2.bf16.msra.mxu0 %v293
  %418 = vmatprep.mubr.bf16.mxu0 %v119
  %419 = vmatmul.mubr.bf16.gmra.mxu0 %v118
  %v420 = vpop.f32.mrf.mxu0
  %v421 = vadd.f32 %v380, %v420
  %v422 = vpop.f32.mrf.mxu0
  %v423 = vpop.f32.mrf.mxu0
  %v424 = vadd.f32 %v383, %v423
  %v425 = vpop.f32.mrf.mxu0
  %426 = vdwg.mxu0
  %427 = vmatprep.subr.bf16.mxu0 0
  %428 = vmatpush1.bf16.msra.mxu0 0
  %429 = vmatprep.subr.bf16.mxu0 0
  %430 = vmatpush1.bf16.msra.mxu0 0
  %431 = vmatprep.subr.bf16.mxu0 0
  %432 = vmatpush1.bf16.msra.mxu0 0
  %433 = vmatprep.subr.bf16.mxu0 0
  %434 = vmatpush1.bf16.msra.mxu0 0
  %435 = vmatprep.subr.bf16.mxu0 0
  %436 = vmatpush1.bf16.msra.mxu0 %v304
  %437 = vmatprep.subr.bf16.mxu0 0
  %438 = vmatpush1.bf16.msra.mxu0 %v303
  %439 = vmatprep.subr.bf16.mxu0 0
  %440 = vmatpush1.bf16.msra.mxu0 %v302
  %441 = vmatprep.subr.bf16.mxu0 0
  %442 = vmatpush1.bf16.msra.mxu0 %v301
  %443 = vmatprep.subr.bf16.mxu0 0
  %444 = vmatpush2.bf16.msra.mxu0 0
  %445 = vmatprep.subr.bf16.mxu0 0
  %446 = vmatpush2.bf16.msra.mxu0 0
  %447 = vmatprep.subr.bf16.mxu0 0
  %448 = vmatpush2.bf16.msra.mxu0 0
  %449 = vmatprep.subr.bf16.mxu0 0
  %450 = vmatpush2.bf16.msra.mxu0 0
  %451 = vmatprep.subr.bf16.mxu0 0
  %452 = vmatpush2.bf16.msra.mxu0 0
  %453 = vmatprep.subr.bf16.mxu0 0
  %454 = vmatpush2.bf16.msra.mxu0 0
  %455 = vmatprep.subr.bf16.mxu0 0
  %456 = vmatpush2.bf16.msra.mxu0 0
  %457 = vmatprep.subr.bf16.mxu0 0
  %458 = vmatpush2.bf16.msra.mxu0 0
  %459 = vmatprep.mubr.bf16.mxu0 0
  %460 = vmatmul.mubr.bf16.gmra.mxu0 %v343
  %v461 = vpop.f32.mrf.mxu0
  %v462 = vadd.f32 %v421, %v461
  %v463 = vpop.f32.mrf.mxu0
  %v464 = vpop.f32.mrf.mxu0
  %v465 = vadd.f32 %v424, %v464
  %v466 = vpop.f32.mrf.mxu0
  %467 = vdwg.mxu0
  %v468 = vmax.f32 %v462, 0.0
  %v469 = vmax.f32 %v465, 0.0
  %v470 = vpack.c.bf16 %v469, %v468
  %v472 = vunpack.c.l.b16 %v470
  %v473 = vunpack.c.h.b16 %v470
  %v474 = vpack.c.b16 %v472, %v472
  %v475 = vpack.c.b16 %v473, %v473
  %478 = vst [vmem:[%s3] sm:$0xf] %v474
  %479 = vst [vmem:[%s3 + $0x4] sm:$0xf] %v475
  // Predicated region
  $region14: #{_forward.10} parent=0 // pred_check
    _
  $region15: #{_forward.10} parent=0 // pred_check_branch
    %481 = sbr.rel (0) target = $region17
  $region16: #{_forward.10} parent=0 // pred_region
    _
  $region17: #{_forward.10} parent=0 // pred_fallthru
    _
  // Predicated region
  $region18: #{_forward.10} parent=0 // pred_check
    _
  $region19: #{_forward.10} parent=0 // pred_check_branch
    %483 = sbr.rel (0) target = $region21
  $region20: #{_forward.10} parent=0 // pred_region
    _
  $region21: #{_forward.10} parent=0 // pred_fallthru
    _

// kernel: _forward.11
$region0: #{_forward.11}
  #allocation0 [shape = 'u32[]', space=smem, size = 0x4, offset = 0x4, fixed_abs, tag = 'smem constant byte address 0x4 - core index']
  #allocation1 [shape = 'u32[144,128]{1,0:T(1,128)}', space=vmem, size = 0x12000, scoped, tag = 'internal scratch']
  %s0 = inlined_call_operand.vmem [shape: bf16[8,512], index: 0, kind: input, shape index: {}]
  %s1 = inlined_call_operand.vmem [shape: bf16[512,256], index: 1, kind: input, shape index: {}]
  %s2 = inlined_call_operand.vmem [shape: f32[1,256], index: 2, kind: input, shape index: {}]
  %s3 = inlined_call_operand.vmem [shape: bf16[8,256], index: 3, kind: output, shape index: {}]
  %s4 = sld [smem:[#allocation0]]
  $region22: #{_forward.11} parent=0
    _
  %s6 = ssub.s32 1, %s4
  %s7 = scalar_select 0, %s6, %s4
  // Predicated region
  $region2: #{_forward.11} parent=0 // pred_check
    _
  $region3: #{_forward.11} parent=0 // pred_check_branch
    %9 = sbr.rel (0) target = $region5
  $region4: #{_forward.11} parent=0 // pred_region
    _
  $region5: #{_forward.11} parent=0 // pred_fallthru
    _
  // Predicated region
  $region6: #{_forward.11} parent=0 // pred_check
    _
  $region7: #{_forward.11} parent=0 // pred_check_branch
    %11 = sbr.rel (0) target = $region9
  $region8: #{_forward.11} parent=0 // pred_region
    _
  $region9: #{_forward.11} parent=0 // pred_fallthru
    _
  // Predicated region
  $region10: #{_forward.11} parent=0 // pred_check
    _
  $region11: #{_forward.11} parent=0 // pred_check_branch
    %13 = sbr.rel (0) target = $region13
  $region12: #{_forward.11} parent=0 // pred_region
    _
  $region13: #{_forward.11} parent=0 // pred_fallthru
    _
  %v14 = vld [vmem:[%s0] sm:$0xff]
  %v15 = vld [vmem:[%s0 + $0x8] sm:$0xff]
  %v16 = vld [vmem:[%s1] sm:$0xff]
  %v17 = vld [vmem:[%s1 + $0x8] sm:$0xff]
  %v18 = vld [vmem:[%s1 + $0x10] sm:$0xff]
  %v19 = vld [vmem:[%s1 + $0x18] sm:$0xff]
  %v20 = vld [vmem:[%s1 + $0x20] sm:$0xff]
  %v21 = vld [vmem:[%s1 + $0x28] sm:$0xff]
  %v22 = vld [vmem:[%s1 + $0x30] sm:$0xff]
  %v23 = vld [vmem:[%s1 + $0x38] sm:$0xff]
  %v24 = vld [vmem:[%s1 + $0x40] sm:$0xff]
  %v25 = vld [vmem:[%s1 + $0x48] sm:$0xff]
  %v26 = vld [vmem:[%s1 + $0x50] sm:$0xff]
  %v27 = vld [vmem:[%s1 + $0x58] sm:$0xff]
  %v28 = vld [vmem:[%s1 + $0x60] sm:$0xff]
  %v29 = vld [vmem:[%s1 + $0x68] sm:$0xff]
  %v30 = vld [vmem:[%s1 + $0x70] sm:$0xff]
  %v31 = vld [vmem:[%s1 + $0x78] sm:$0xff]
  %v32 = vld [vmem:[%s1 + $0x80] sm:$0xff]
  %v33 = vld [vmem:[%s1 + $0x88] sm:$0xff]
  %v34 = vld [vmem:[%s1 + $0x90] sm:$0xff]
  %v35 = vld [vmem:[%s1 + $0x98] sm:$0xff]
  %v36 = vld [vmem:[%s1 + $0xa0] sm:$0xff]
  %v37 = vld [vmem:[%s1 + $0xa8] sm:$0xff]
  %v38 = vld [vmem:[%s1 + $0xb0] sm:$0xff]
  %v39 = vld [vmem:[%s1 + $0xb8] sm:$0xff]
  %v40 = vld [vmem:[%s1 + $0xc0] sm:$0xff]
  %v41 = vld [vmem:[%s1 + $0xc8] sm:$0xff]
  %v42 = vld [vmem:[%s1 + $0xd0] sm:$0xff]
  %v43 = vld [vmem:[%s1 + $0xd8] sm:$0xff]
  %v44 = vld [vmem:[%s1 + $0xe0] sm:$0xff]
  %v45 = vld [vmem:[%s1 + $0xe8] sm:$0xff]
  %v46 = vld [vmem:[%s1 + $0xf0] sm:$0xff]
  %v47 = vld [vmem:[%s1 + $0xf8] sm:$0xff]
  %v48 = vld [vmem:[%s1 + $0x100] sm:$0xff]
  %v49 = vld [vmem:[%s1 + $0x108] sm:$0xff]
  %v50 = vld [vmem:[%s1 + $0x110] sm:$0xff]
  %v51 = vld [vmem:[%s1 + $0x118] sm:$0xff]
  %v52 = vld [vmem:[%s1 + $0x120] sm:$0xff]
  %v53 = vld [vmem:[%s1 + $0x128] sm:$0xff]
  %v54 = vld [vmem:[%s1 + $0x130] sm:$0xff]
  %v55 = vld [vmem:[%s1 + $0x138] sm:$0xff]
  %v56 = vld [vmem:[%s1 + $0x140] sm:$0xff]
  %v57 = vld [vmem:[%s1 + $0x148] sm:$0xff]
  %v58 = vld [vmem:[%s1 + $0x150] sm:$0xff]
  %v59 = vld [vmem:[%s1 + $0x158] sm:$0xff]
  %v60 = vld [vmem:[%s1 + $0x160] sm:$0xff]
  %v61 = vld [vmem:[%s1 + $0x168] sm:$0xff]
  %v62 = vld [vmem:[%s1 + $0x170] sm:$0xff]
  %v63 = vld [vmem:[%s1 + $0x178] sm:$0xff]
  %v64 = vld [vmem:[%s1 + $0x180] sm:$0xff]
  %v65 = vld [vmem:[%s1 + $0x188] sm:$0xff]
  %v66 = vld [vmem:[%s1 + $0x190] sm:$0xff]
  %v67 = vld [vmem:[%s1 + $0x198] sm:$0xff]
  %v68 = vld [vmem:[%s1 + $0x1a0] sm:$0xff]
  %v69 = vld [vmem:[%s1 + $0x1a8] sm:$0xff]
  %v70 = vld [vmem:[%s1 + $0x1b0] sm:$0xff]
  %v71 = vld [vmem:[%s1 + $0x1b8] sm:$0xff]
  %v72 = vld [vmem:[%s1 + $0x1c0] sm:$0xff]
  %v73 = vld [vmem:[%s1 + $0x1c8] sm:$0xff]
  %v74 = vld [vmem:[%s1 + $0x1d0] sm:$0xff]
  %v75 = vld [vmem:[%s1 + $0x1d8] sm:$0xff]
  %v76 = vld [vmem:[%s1 + $0x1e0] sm:$0xff]
  %v77 = vld [vmem:[%s1 + $0x1e8] sm:$0xff]
  %v78 = vld [vmem:[%s1 + $0x1f0] sm:$0xff]
  %v79 = vld [vmem:[%s1 + $0x1f8] sm:$0xff]
  %v80 = vld [vmem:[%s2] sm:$0x3]
  %v82 = vlaneseq
  %v83 = vshrl.u32 %v82, 7
  %v84 = vsub.s32 0, %v83
  %v85 = vrot.slane %v80, %v84
  %v86 = vlaneseq
  %v87 = vshrl.u32 %v86, 7
  %v88 = vsub.s32 1, %v87
  %v89 = vrot.slane %v80, %v88
  %v94 = vunpack.c.l.b16 %v14
  %v95 = vunpack.c.h.b16 %v14
  %v96 = vunpack.c.l.b16 %v15
  %v97 = vunpack.c.h.b16 %v15
  %v98 = vpack.c.b16 %v94, %v94
  %v99 = vpack.c.b16 %v95, %v95
  %v100 = vpack.c.b16 %v96, %v96
  %v101 = vpack.c.b16 %v97, %v97
  %v170 = vunpack.c.l.b16 %v16
  %v171 = vunpack.c.h.b16 %v16
  %v172 = vunpack.c.l.b16 %v17
  %v173 = vunpack.c.h.b16 %v17
  %v174 = vunpack.c.l.b16 %v18
  %v175 = vunpack.c.h.b16 %v18
  %v176 = vunpack.c.l.b16 %v19
  %v177 = vunpack.c.h.b16 %v19
  %v178 = vunpack.c.l.b16 %v20
  %v179 = vunpack.c.h.b16 %v20
  %v180 = vunpack.c.l.b16 %v21
  %v181 = vunpack.c.h.b16 %v21
  %v182 = vunpack.c.l.b16 %v22
  %v183 = vunpack.c.h.b16 %v22
  %v184 = vunpack.c.l.b16 %v23
  %v185 = vunpack.c.h.b16 %v23
  %v186 = vunpack.c.l.b16 %v24
  %v187 = vunpack.c.h.b16 %v24
  %v188 = vunpack.c.l.b16 %v25
  %v189 = vunpack.c.h.b16 %v25
  %v190 = vunpack.c.l.b16 %v26
  %v191 = vunpack.c.h.b16 %v26
  %v192 = vunpack.c.l.b16 %v27
  %v193 = vunpack.c.h.b16 %v27
  %v194 = vunpack.c.l.b16 %v28
  %v195 = vunpack.c.h.b16 %v28
  %v196 = vunpack.c.l.b16 %v29
  %v197 = vunpack.c.h.b16 %v29
  %v198 = vunpack.c.l.b16 %v30
  %v199 = vunpack.c.h.b16 %v30
  %v200 = vunpack.c.l.b16 %v31
  %v201 = vunpack.c.h.b16 %v31
  %v202 = vunpack.c.l.b16 %v32
  %v203 = vunpack.c.h.b16 %v32
  %v204 = vunpack.c.l.b16 %v33
  %v205 = vunpack.c.h.b16 %v33
  %v206 = vunpack.c.l.b16 %v34
  %v207 = vunpack.c.h.b16 %v34
  %v208 = vunpack.c.l.b16 %v35
  %v209 = vunpack.c.h.b16 %v35
  %v210 = vunpack.c.l.b16 %v36
  %v211 = vunpack.c.h.b16 %v36
  %v212 = vunpack.c.l.b16 %v37
  %v213 = vunpack.c.h.b16 %v37
  %v214 = vunpack.c.l.b16 %v38
  %v215 = vunpack.c.h.b16 %v38
  %v216 = vunpack.c.l.b16 %v39
  %v217 = vunpack.c.h.b16 %v39
  %v218 = vunpack.c.l.b16 %v40
  %v219 = vunpack.c.h.b16 %v40
  %v220 = vunpack.c.l.b16 %v41
  %v221 = vunpack.c.h.b16 %v41
  %v222 = vunpack.c.l.b16 %v42
  %v223 = vunpack.c.h.b16 %v42
  %v224 = vunpack.c.l.b16 %v43
  %v225 = vunpack.c.h.b16 %v43
  %v226 = vunpack.c.l.b16 %v44
  %v227 = vunpack.c.h.b16 %v44
  %v228 = vunpack.c.l.b16 %v45
  %v229 = vunpack.c.h.b16 %v45
  %v230 = vunpack.c.l.b16 %v46
  %v231 = vunpack.c.h.b16 %v46
  %v232 = vunpack.c.l.b16 %v47
  %v233 = vunpack.c.h.b16 %v47
  %v234 = vunpack.c.l.b16 %v48
  %v235 = vunpack.c.h.b16 %v48
  %v236 = vunpack.c.l.b16 %v49
  %v237 = vunpack.c.h.b16 %v49
  %v238 = vunpack.c.l.b16 %v50
  %v239 = vunpack.c.h.b16 %v50
  %v240 = vunpack.c.l.b16 %v51
  %v241 = vunpack.c.h.b16 %v51
  %v242 = vunpack.c.l.b16 %v52
  %v243 = vunpack.c.h.b16 %v52
  %v244 = vunpack.c.l.b16 %v53
  %v245 = vunpack.c.h.b16 %v53
  %v246 = vunpack.c.l.b16 %v54
  %v247 = vunpack.c.h.b16 %v54
  %v248 = vunpack.c.l.b16 %v55
  %v249 = vunpack.c.h.b16 %v55
  %v250 = vunpack.c.l.b16 %v56
  %v251 = vunpack.c.h.b16 %v56
  %v252 = vunpack.c.l.b16 %v57
  %v253 = vunpack.c.h.b16 %v57
  %v254 = vunpack.c.l.b16 %v58
  %v255 = vunpack.c.h.b16 %v58
  %v256 = vunpack.c.l.b16 %v59
  %v257 = vunpack.c.h.b16 %v59
  %v258 = vunpack.c.l.b16 %v60
  %v259 = vunpack.c.h.b16 %v60
  %v260 = vunpack.c.l.b16 %v61
  %v261 = vunpack.c.h.b16 %v61
  %v262 = vunpack.c.l.b16 %v62
  %v263 = vunpack.c.h.b16 %v62
  %v264 = vunpack.c.l.b16 %v63
  %v265 = vunpack.c.h.b16 %v63
  %v266 = vunpack.c.l.b16 %v64
  %v267 = vunpack.c.h.b16 %v64
  %v268 = vunpack.c.l.b16 %v65
  %v269 = vunpack.c.h.b16 %v65
  %v270 = vunpack.c.l.b16 %v66
  %v271 = vunpack.c.h.b16 %v66
  %v272 = vunpack.c.l.b16 %v67
  %v273 = vunpack.c.h.b16 %v67
  %v274 = vunpack.c.l.b16 %v68
  %v275 = vunpack.c.h.b16 %v68
  %v276 = vunpack.c.l.b16 %v69
  %v277 = vunpack.c.h.b16 %v69
  %v278 = vunpack.c.l.b16 %v70
  %v279 = vunpack.c.h.b16 %v70
  %v280 = vunpack.c.l.b16 %v71
  %v281 = vunpack.c.h.b16 %v71
  %v282 = vunpack.c.l.b16 %v72
  %v283 = vunpack.c.h.b16 %v72
  %v284 = vunpack.c.l.b16 %v73
  %v285 = vunpack.c.h.b16 %v73
  %v286 = vunpack.c.l.b16 %v74
  %v287 = vunpack.c.h.b16 %v74
  %v288 = vunpack.c.l.b16 %v75
  %v289 = vunpack.c.h.b16 %v75
  %v290 = vunpack.c.l.b16 %v76
  %v291 = vunpack.c.h.b16 %v76
  %v292 = vunpack.c.l.b16 %v77
  %v293 = vunpack.c.h.b16 %v77
  %v294 = vunpack.c.l.b16 %v78
  %v295 = vunpack.c.h.b16 %v78
  %v296 = vunpack.c.l.b16 %v79
  %v297 = vunpack.c.h.b16 %v79
  %v298 = vpack.c.b16 %v172, %v170
  %v299 = vpack.c.b16 %v173, %v171
  %v300 = vpack.c.b16 %v176, %v174
  %v301 = vpack.c.b16 %v177, %v175
  %v302 = vpack.c.b16 %v180, %v178
  %v303 = vpack.c.b16 %v181, %v179
  %v304 = vpack.c.b16 %v184, %v182
  %v305 = vpack.c.b16 %v185, %v183
  %v306 = vpack.c.b16 %v188, %v186
  %v307 = vpack.c.b16 %v189, %v187
  %v308 = vpack.c.b16 %v192, %v190
  %v309 = vpack.c.b16 %v193, %v191
  %v310 = vpack.c.b16 %v196, %v194
  %v311 = vpack.c.b16 %v197, %v195
  %v312 = vpack.c.b16 %v200, %v198
  %v313 = vpack.c.b16 %v201, %v199
  %v314 = vpack.c.b16 %v204, %v202
  %v315 = vpack.c.b16 %v205, %v203
  %v316 = vpack.c.b16 %v208, %v206
  %v317 = vpack.c.b16 %v209, %v207
  %v318 = vpack.c.b16 %v212, %v210
  %v319 = vpack.c.b16 %v213, %v211
  %v320 = vpack.c.b16 %v216, %v214
  %v321 = vpack.c.b16 %v217, %v215
  %v322 = vpack.c.b16 %v220, %v218
  %v323 = vpack.c.b16 %v221, %v219
  %v324 = vpack.c.b16 %v224, %v222
  %v325 = vpack.c.b16 %v225, %v223
  %v326 = vpack.c.b16 %v228, %v226
  %v327 = vpack.c.b16 %v229, %v227
  %v328 = vpack.c.b16 %v232, %v230
  %v329 = vpack.c.b16 %v233, %v231
  %v330 = vpack.c.b16 %v236, %v234
  %v331 = vpack.c.b16 %v237, %v235
  %v332 = vpack.c.b16 %v240, %v238
  %v333 = vpack.c.b16 %v241, %v239
  %v334 = vpack.c.b16 %v244, %v242
  %v335 = vpack.c.b16 %v245, %v243
  %v336 = vpack.c.b16 %v248, %v246
  %v337 = vpack.c.b16 %v249, %v247
  %v338 = vpack.c.b16 %v252, %v250
  %v339 = vpack.c.b16 %v253, %v251
  %v340 = vpack.c.b16 %v256, %v254
  %v341 = vpack.c.b16 %v257, %v255
  %v342 = vpack.c.b16 %v260, %v258
  %v343 = vpack.c.b16 %v261, %v259
  %v344 = vpack.c.b16 %v264, %v262
  %v345 = vpack.c.b16 %v265, %v263
  %v346 = vpack.c.b16 %v268, %v266
  %v347 = vpack.c.b16 %v269, %v267
  %v348 = vpack.c.b16 %v272, %v270
  %v349 = vpack.c.b16 %v273, %v271
  %v350 = vpack.c.b16 %v276, %v274
  %v351 = vpack.c.b16 %v277, %v275
  %v352 = vpack.c.b16 %v280, %v278
  %v353 = vpack.c.b16 %v281, %v279
  %v354 = vpack.c.b16 %v284, %v282
  %v355 = vpack.c.b16 %v285, %v283
  %v356 = vpack.c.b16 %v288, %v286
  %v357 = vpack.c.b16 %v289, %v287
  %v358 = vpack.c.b16 %v292, %v290
  %v359 = vpack.c.b16 %v293, %v291
  %v360 = vpack.c.b16 %v296, %v294
  %v361 = vpack.c.b16 %v297, %v295
  %426 = vmatprep.subr.bf16.mxu0 %v313
  %427 = vmatpush1.bf16.msra.mxu0 %v312
  %428 = vmatprep.subr.bf16.mxu0 %v311
  %429 = vmatpush1.bf16.msra.mxu0 %v310
  %430 = vmatprep.subr.bf16.mxu0 %v309
  %431 = vmatpush1.bf16.msra.mxu0 %v308
  %432 = vmatprep.subr.bf16.mxu0 %v307
  %433 = vmatpush1.bf16.msra.mxu0 %v306
  %434 = vmatprep.subr.bf16.mxu0 %v305
  %435 = vmatpush1.bf16.msra.mxu0 %v304
  %436 = vmatprep.subr.bf16.mxu0 %v303
  %437 = vmatpush1.bf16.msra.mxu0 %v302
  %438 = vmatprep.subr.bf16.mxu0 %v301
  %439 = vmatpush1.bf16.msra.mxu0 %v300
  %440 = vmatprep.subr.bf16.mxu0 %v299
  %441 = vmatpush1.bf16.msra.mxu0 %v298
  %442 = vmatprep.subr.bf16.mxu0 %v329
  %443 = vmatpush2.bf16.msra.mxu0 %v328
  %444 = vmatprep.subr.bf16.mxu0 %v327
  %445 = vmatpush2.bf16.msra.mxu0 %v326
  %446 = vmatprep.subr.bf16.mxu0 %v325
  %447 = vmatpush2.bf16.msra.mxu0 %v324
  %448 = vmatprep.subr.bf16.mxu0 %v323
  %449 = vmatpush2.bf16.msra.mxu0 %v322
  %450 = vmatprep.subr.bf16.mxu0 %v321
  %451 = vmatpush2.bf16.msra.mxu0 %v320
  %452 = vmatprep.subr.bf16.mxu0 %v319
  %453 = vmatpush2.bf16.msra.mxu0 %v318
  %454 = vmatprep.subr.bf16.mxu0 %v317
  %455 = vmatpush2.bf16.msra.mxu0 %v316
  %456 = vmatprep.subr.bf16.mxu0 %v315
  %457 = vmatpush2.bf16.msra.mxu0 %v314
  %458 = vmatprep.mubr.bf16.mxu0 %v99
  %459 = vmatmul.mubr.bf16.gmra.mxu0 %v98
  %v460 = vpop.f32.mrf.mxu0
  %v461 = vadd.f32 %v85, %v460
  %v462 = vpop.f32.mrf.mxu0
  %v463 = vadd.f32 %v89, %v462
  %v464 = vpop.f32.mrf.mxu0
  %v465 = vpop.f32.mrf.mxu0
  %466 = vdwg.mxu0
  %467 = vmatprep.subr.bf16.mxu0 %v345
  %468 = vmatpush1.bf16.msra.mxu0 %v344
  %469 = vmatprep.subr.bf16.mxu0 %v343
  %470 = vmatpush1.bf16.msra.mxu0 %v342
  %471 = vmatprep.subr.bf16.mxu0 %v341
  %472 = vmatpush1.bf16.msra.mxu0 %v340
  %473 = vmatprep.subr.bf16.mxu0 %v339
  %474 = vmatpush1.bf16.msra.mxu0 %v338
  %475 = vmatprep.subr.bf16.mxu0 %v337
  %476 = vmatpush1.bf16.msra.mxu0 %v336
  %477 = vmatprep.subr.bf16.mxu0 %v335
  %478 = vmatpush1.bf16.msra.mxu0 %v334
  %479 = vmatprep.subr.bf16.mxu0 %v333
  %480 = vmatpush1.bf16.msra.mxu0 %v332
  %481 = vmatprep.subr.bf16.mxu0 %v331
  %482 = vmatpush1.bf16.msra.mxu0 %v330
  %483 = vmatprep.subr.bf16.mxu0 %v361
  %484 = vmatpush2.bf16.msra.mxu0 %v360
  %485 = vmatprep.subr.bf16.mxu0 %v359
  %486 = vmatpush2.bf16.msra.mxu0 %v358
  %487 = vmatprep.subr.bf16.mxu0 %v357
  %488 = vmatpush2.bf16.msra.mxu0 %v356
  %489 = vmatprep.subr.bf16.mxu0 %v355
  %490 = vmatpush2.bf16.msra.mxu0 %v354
  %491 = vmatprep.subr.bf16.mxu0 %v353
  %492 = vmatpush2.bf16.msra.mxu0 %v352
  %493 = vmatprep.subr.bf16.mxu0 %v351
  %494 = vmatpush2.bf16.msra.mxu0 %v350
  %495 = vmatprep.subr.bf16.mxu0 %v349
  %496 = vmatpush2.bf16.msra.mxu0 %v348
  %497 = vmatprep.subr.bf16.mxu0 %v347
  %498 = vmatpush2.bf16.msra.mxu0 %v346
  %499 = vmatprep.mubr.bf16.mxu0 %v101
  %500 = vmatmul.mubr.bf16.gmra.mxu0 %v100
  %v501 = vpop.f32.mrf.mxu0
  %v502 = vadd.f32 %v461, %v501
  %v503 = vpop.f32.mrf.mxu0
  %v504 = vadd.f32 %v463, %v503
  %v505 = vpop.f32.mrf.mxu0
  %v506 = vpop.f32.mrf.mxu0
  %507 = vdwg.mxu0
  %v508 = vmax.f32 %v502, 0.0
  %v509 = vmax.f32 %v504, 0.0
  %v510 = vpack.c.bf16 %v508, %v508
  %v511 = vpack.c.bf16 %v509, %v509
  %v514 = vunpack.c.l.b16 %v510
  %v515 = vunpack.c.l.b16 %v511
  %v516 = vpack.c.b16 %v515, %v514
  %518 = vst [vmem:[%s3] sm:$0xff] %v516
  // Predicated region
  $region14: #{_forward.11} parent=0 // pred_check
    _
  $region15: #{_forward.11} parent=0 // pred_check_branch
    %520 = sbr.rel (0) target = $region17
  $region16: #{_forward.11} parent=0 // pred_region
    _
  $region17: #{_forward.11} parent=0 // pred_fallthru
    _
  // Predicated region
  $region18: #{_forward.11} parent=0 // pred_check
    _
  $region19: #{_forward.11} parent=0 // pred_check_branch
    %522 = sbr.rel (0) target = $region21
  $region20: #{_forward.11} parent=0 // pred_region
    _
  $region21: #{_forward.11} parent=0 // pred_fallthru
    _

// kernel: _forward.13
$region0: #{_forward.13}
  #allocation0 [shape = 'u32[]', space=smem, size = 0x4, offset = 0x4, fixed_abs, tag = 'smem constant byte address 0x4 - core index']
  #allocation1 [shape = 'u32[144,128]{1,0:T(1,128)}', space=vmem, size = 0x12000, scoped, tag = 'internal scratch']
  %s0 = inlined_call_operand.vmem [shape: f32[32,15], index: 0, kind: input, shape index: {}]
  %s1 = inlined_call_operand.vmem [shape: f32[32,5], index: 1, kind: output, shape index: {0}]
  %s2 = inlined_call_operand.vmem [shape: f32[32,5], index: 2, kind: output, shape index: {1}]
  %s3 = inlined_call_operand.vmem [shape: f32[32,5], index: 3, kind: output, shape index: {2}]
  %4 = xla_tuple %s1, %s2, %s3
  %s5 = sld [smem:[#allocation0]]
  $region30: #{_forward.13} parent=0
    _
  %s7 = ssub.s32 1, %s5
  %s8 = scalar_select 0, %s7, %s5
  // Predicated region
  $region2: #{_forward.13} parent=0 // pred_check
    _
  $region3: #{_forward.13} parent=0 // pred_check_branch
    %10 = sbr.rel (0) target = $region5
  $region4: #{_forward.13} parent=0 // pred_region
    _
  $region5: #{_forward.13} parent=0 // pred_fallthru
    _
  %v11 = vld [vmem:[%s0] sm:$0xff]
  %v12 = vld [vmem:[%s0 + $0x8] sm:$0xff]
  %v13 = vld [vmem:[%s0 + $0x10] sm:$0xff]
  %v14 = vld [vmem:[%s0 + $0x18] sm:$0xff]
  %vm15 = vcmask 39936
  %v16 = vsel %vm15, %v11, -inf
  %17 = vmax.xlane.f32.xlu0 %v16
  %v18 = vpop.xlane.xlu0 %17
  %v19 = vsel %vm15, %v12, -inf
  %20 = vmax.xlane.f32.xlu0 %v19
  %v21 = vpop.xlane.xlu0 %20
  %v22 = vsel %vm15, %v13, -inf
  %23 = vmax.xlane.f32.xlu0 %v22
  %v24 = vpop.xlane.xlu0 %23
  %v25 = vsel %vm15, %v14, -inf
  %26 = vmax.xlane.f32.xlu0 %v25
  %v27 = vpop.xlane.xlu0 %26
  %v28 = vsub.f32 %v11, %v18
  %v29 = vsub.f32 %v12, %v21
  %v30 = vsub.f32 %v13, %v24
  %v31 = vsub.f32 %v14, %v27
  %v32 = vmul.f32 %v28, 1.442695
  %v33 = vpow.pop %v32
  %v34 = vmul.f32 %v29, 1.442695
  %v35 = vpow.pop %v34
  %v36 = vmul.f32 %v30, 1.442695
  %v37 = vpow.pop %v36
  %v38 = vmul.f32 %v31, 1.442695
  %v39 = vpow.pop %v38
  %v40 = vsel %vm15, %v33, 0.0
  %41 = vadd.xlane.f32.xlu0 %v40
  %v42 = vpop.xlane.xlu0 %41
  %v43 = vsel %vm15, %v35, 0.0
  %44 = vadd.xlane.f32.xlu0 %v43
  %v45 = vpop.xlane.xlu0 %44
  %v46 = vsel %vm15, %v37, 0.0
  %47 = vadd.xlane.f32.xlu0 %v46
  %v48 = vpop.xlane.xlu0 %47
  %v49 = vsel %vm15, %v39, 0.0
  %50 = vadd.xlane.f32.xlu0 %v49
  %v51 = vpop.xlane.xlu0 %50
  %v52 = vlog2.pop %v42
  %v53 = vmul.f32 %v52, 0.6931472
  %v54 = vlog2.pop %v45
  %v55 = vmul.f32 %v54, 0.6931472
  %v56 = vlog2.pop %v48
  %v57 = vmul.f32 %v56, 0.6931472
  %v58 = vlog2.pop %v51
  %v59 = vmul.f32 %v58, 0.6931472
  %v60 = vadd.f32 %v18, %v53
  %v61 = vadd.f32 %v21, %v55
  %v62 = vadd.f32 %v24, %v57
  %v63 = vadd.f32 %v27, %v59
  %v64 = vsub.f32 %v11, %v60
  %v65 = vsub.f32 %v12, %v61
  %v66 = vsub.f32 %v13, %v62
  %v67 = vsub.f32 %v14, %v63
  %68 = vst.msk [vmem:[%s1] sm:$0xff] %vm15, %v64
  %69 = vst.msk [vmem:[%s1 + $0x8] sm:$0xff] %vm15, %v65
  %70 = vst.msk [vmem:[%s1 + $0x10] sm:$0xff] %vm15, %v66
  %71 = vst.msk [vmem:[%s1 + $0x18] sm:$0xff] %vm15, %v67
  %76 = vrot.lane.b32.xlu0 %v11, 123
  %v77 = vpop.permute.xlu0 %76
  %78 = vrot.lane.b32.xlu0 %v12, 123
  %v79 = vpop.permute.xlu0 %78
  %80 = vrot.lane.b32.xlu0 %v13, 123
  %v81 = vpop.permute.xlu0 %80
  %82 = vrot.lane.b32.xlu0 %v14, 123
  %v83 = vpop.permute.xlu0 %82
  %88 = vst.msk [vmem:[%s2] sm:$0xff] %vm15, %v77
  %89 = vst.msk [vmem:[%s2 + $0x8] sm:$0xff] %vm15, %v79
  %90 = vst.msk [vmem:[%s2 + $0x10] sm:$0xff] %vm15, %v81
  %91 = vst.msk [vmem:[%s2 + $0x18] sm:$0xff] %vm15, %v83
  %92 = vrot.lane.b32.xlu0 %v11, 118
  %v93 = vpop.permute.xlu0 %92
  %94 = vrot.lane.b32.xlu0 %v12, 118
  %v95 = vpop.permute.xlu0 %94
  %96 = vrot.lane.b32.xlu0 %v13, 118
  %v97 = vpop.permute.xlu0 %96
  %98 = vrot.lane.b32.xlu0 %v14, 118
  %v99 = vpop.permute.xlu0 %98
  %104 = vst.msk [vmem:[%s3] sm:$0xff] %vm15, %v93
  %105 = vst.msk [vmem:[%s3 + $0x8] sm:$0xff] %vm15, %v95
  %106 = vst.msk [vmem:[%s3 + $0x10] sm:$0xff] %vm15, %v97
  %107 = vst.msk [vmem:[%s3 + $0x18] sm:$0xff] %vm15, %v99
  // Predicated region
  $region6: #{_forward.13} parent=0 // pred_check
    _
  $region7: #{_forward.13} parent=0 // pred_check_branch
    %109 = sbr.rel (0) target = $region9
  $region8: #{_forward.13} parent=0 // pred_region
    _
  $region9: #{_forward.13} parent=0 // pred_fallthru
    _
  // Predicated region
  $region10: #{_forward.13} parent=0 // pred_check
    _
  $region11: #{_forward.13} parent=0 // pred_check_branch
    %111 = sbr.rel (0) target = $region13
  $region12: #{_forward.13} parent=0 // pred_region
    _
  $region13: #{_forward.13} parent=0 // pred_fallthru
    _
  // Predicated region
  $region14: #{_forward.13} parent=0 // pred_check
    _
  $region15: #{_forward.13} parent=0 // pred_check_branch
    %113 = sbr.rel (0) target = $region17
  $region16: #{_forward.13} parent=0 // pred_region
    _
  $region17: #{_forward.13} parent=0 // pred_fallthru
    _
  // Predicated region
  $region18: #{_forward.13} parent=0 // pred_check
    _
  $region19: #{_forward.13} parent=0 // pred_check_branch
    %115 = sbr.rel (0) target = $region21
  $region20: #{_forward.13} parent=0 // pred_region
    _
  $region21: #{_forward.13} parent=0 // pred_fallthru
    _
  // Predicated region
  $region22: #{_forward.13} parent=0 // pred_check
    _
  $region23: #{_forward.13} parent=0 // pred_check_branch
    %117 = sbr.rel (0) target = $region25
  $region24: #{_forward.13} parent=0 // pred_region
    _
  $region25: #{_forward.13} parent=0 // pred_fallthru
    _
  // Predicated region
  $region26: #{_forward.13} parent=0 // pred_check
    _
  $region27: #{_forward.13} parent=0 // pred_check_branch
    %119 = sbr.rel (0) target = $region29
  $region28: #{_forward.13} parent=0 // pred_region
    _
  $region29: #{_forward.13} parent=0 // pred_fallthru
    _

// kernel: _forward.12
$region0: #{_forward.12}
  #allocation0 [shape = 'u32[]', space=smem, size = 0x4, offset = 0x4, fixed_abs, tag = 'smem constant byte address 0x4 - core index']
  #allocation1 [shape = 'u32[144,128]{1,0:T(1,128)}', space=vmem, size = 0x12000, scoped, tag = 'internal scratch']
  #allocation2 [shape = 'f32[1,1]{1,0:T(1,128)S(1)}', space=vmem, size = 0x200, scoped, tag = 'scoped memory for _forward.12']
  %s0 = inlined_call_operand.vmem [shape: bf16[1,1024], index: 0, kind: input, shape index: {}]
  %s1 = inlined_call_operand.vmem [shape: f32[1,1024], index: 1, kind: input, shape index: {}]
  %s2 = inlined_call_operand.vmem [shape: f32[1,32], index: 2, kind: input, shape index: {}]
  %s3 = inlined_call_operand.<no memory space> [shape: f32[1,1], index: 3, kind: input, shape index: {}]
  %s4 = inlined_call_operand.vmem [shape: bf16[1024,64], index: 4, kind: input, shape index: {}]
  %s5 = inlined_call_operand.vmem [shape: f32[1,64], index: 5, kind: input, shape index: {}]
  %s6 = inlined_call_operand.vmem [shape: bf16[512,2048], index: 6, kind: input, shape index: {}]
  %s7 = inlined_call_operand.vmem [shape: bf16[32,2048], index: 7, kind: input, shape index: {}]
  %s8 = inlined_call_operand.vmem [shape: f32[1,1024], index: 8, kind: input, shape index: {}]
  %s9 = inlined_call_operand.vmem [shape: f32[1,1024], index: 9, kind: input, shape index: {}]
  %s10 = inlined_call_operand.vmem [shape: f32[2,1024], index: 10, kind: input, shape index: {}]
  %s11 = inlined_call_operand.vmem [shape: bf16[256,3], index: 11, kind: input, shape index: {}]
  %s12 = inlined_call_operand.vmem [shape: f32[1,3], index: 12, kind: input, shape index: {}]
  %s13 = inlined_call_operand.vmem [shape: bf16[256,480], index: 13, kind: input, shape index: {}]
  %s14 = inlined_call_operand.vmem [shape: f32[1,480], index: 14, kind: input, shape index: {}]
  %s15 = inlined_call_operand.hbm [shape: f32[1,32], index: 15, kind: output, shape index: {0}]
  %s16 = inlined_call_operand.hbm [shape: f32[1,32], index: 16, kind: output, shape index: {1}]
  %s17 = inlined_call_operand.hbm [shape: f32[1,32], index: 17, kind: output, shape index: {2}]
  %s18 = inlined_call_operand.vmem [shape: f32[1,256], index: 18, kind: output, shape index: {3}]
  %s19 = inlined_call_operand.vmem [shape: f32[1,256], index: 19, kind: output, shape index: {4}]
  %s20 = inlined_call_operand.vmem [shape: f32[1,256], index: 20, kind: output, shape index: {5}]
  %s21 = inlined_call_operand.vmem [shape: f32[1,256], index: 21, kind: output, shape index: {6}]
  %s22 = inlined_call_operand.hbm [shape: f32[1,1], index: 22, kind: output, shape index: {7}]
  %s23 = inlined_call_operand.hbm [shape: f32[1,2], index: 23, kind: output, shape index: {8}]
  %s24 = inlined_call_operand.hbm [shape: f32[1,2], index: 24, kind: output, shape index: {9}]
  %s25 = inlined_call_operand.hbm [shape: f32[1,1], index: 25, kind: output, shape index: {10}]
  %s26 = inlined_call_operand.hbm [shape: s32[1,1], index: 26, kind: output, shape index: {11}]
  %s27 = inlined_call_operand.hbm [shape: f32[1,1], index: 27, kind: output, shape index: {12}]
  %s28 = inlined_call_operand.vmem [shape: f32[1,480], index: 28, kind: output, shape index: {13}]
  %29 = xla_tuple %s15, %s16, %s17, %s18, %s19, %s20, %s21, %s22, %s23, %s24, %s25, %s26, %s27, %s28
  %s30 = sld [smem:[#allocation0]]
  $region174: #{_forward.12} parent=0
    _
  %s32 = ssub.s32 1, %s30
  %s33 = scalar_select 0, %s32, %s30
  %v34 = vstv %s3
  %35 = vst [vmem:[#allocation2] sm:$0x1] %v34
  $region1: #{_forward.12} parent=0
    #allocation3 [shape = 'u8[512]{0}', space=vmem, size = 0x400, scoped, tag = 'output window, operand 0, single buffered']
    #allocation4 [shape = 's32[1]{0}', space=sflag, size = 0x4, scoped, tag = 'scoped memory for _forward.12']
    #allocation5 [shape = 'u8[512]{0}', space=vmem, size = 0x400, scoped, tag = 'output window, operand 1, single buffered']
    #allocation6 [shape = 's32[1]{0}', space=sflag, size = 0x4, scoped, tag = 'scoped memory for _forward.12']
    #allocation7 [shape = 'u8[512]{0}', space=vmem, size = 0x400, scoped, tag = 'output window, operand 2, single buffered']
    #allocation8 [shape = 'u8[512]{0}', space=vmem, size = 0x400, scoped, tag = 'output window, operand 7, single buffered']
    #allocation9 [shape = 's32[1]{0}', space=sflag, size = 0x4, scoped, tag = 'scoped memory for _forward.12']
    #allocation10 [shape = 'u8[512]{0}', space=vmem, size = 0x400, scoped, tag = 'output window, operand 8, single buffered']
    #allocation11 [shape = 'u8[512]{0}', space=vmem, size = 0x400, scoped, tag = 'output window, operand 9, single buffered']
    #allocation12 [shape = 's32[1]{0}', space=sflag, size = 0x4, scoped, tag = 'scoped memory for _forward.12']
    #allocation13 [shape = 'u8[512]{0}', space=vmem, size = 0x400, scoped, tag = 'output window, operand 10, single buffered']
    #allocation14 [shape = 'u8[512]{0}', space=vmem, size = 0x400, scoped, tag = 'output window, operand 11, single buffered']
    #allocation15 [shape = 's32[1]{0}', space=sflag, size = 0x4, scoped, tag = 'scoped memory for _forward.12']
    #allocation16 [shape = 'u8[512]{0}', space=vmem, size = 0x400, scoped, tag = 'output window, operand 12, single buffered']
    %36 = vsyncpa [#allocation4], 0
    %37 = vsyncpa [#allocation6], 0
    %38 = vsyncpa [#allocation9], 0
    %39 = vsyncpa [#allocation12], 0
    %40 = vsyncpa [#allocation15], 0
    // Predicated region
    $region2: #{_forward.12} parent=1 // pred_check
      _
    $region3: #{_forward.12} parent=1 // pred_check_branch
      %42 = sbr.rel (0) target = $region5
    $region4: #{_forward.12} parent=1 // pred_region
      _
    $region5: #{_forward.12} parent=1 // pred_fallthru
      _
    // Predicated region
    $region6: #{_forward.12} parent=1 // pred_check
      _
    $region7: #{_forward.12} parent=1 // pred_check_branch
      %44 = sbr.rel (0) target = $region9
    $region8: #{_forward.12} parent=1 // pred_region
      _
    $region9: #{_forward.12} parent=1 // pred_fallthru
      _
    // Predicated region
    $region10: #{_forward.12} parent=1 // pred_check
      _
    $region11: #{_forward.12} parent=1 // pred_check_branch
      %46 = sbr.rel (0) target = $region13
    $region12: #{_forward.12} parent=1 // pred_region
      _
    $region13: #{_forward.12} parent=1 // pred_fallthru
      _
    // Predicated region
    $region14: #{_forward.12} parent=1 // pred_check
      _
    $region15: #{_forward.12} parent=1 // pred_check_branch
      %48 = sbr.rel (0) target = $region17
    $region16: #{_forward.12} parent=1 // pred_region
      _
    $region17: #{_forward.12} parent=1 // pred_fallthru
      _
    // Predicated region
    $region18: #{_forward.12} parent=1 // pred_check
      _
    $region19: #{_forward.12} parent=1 // pred_check_branch
      %50 = sbr.rel (0) target = $region21
    $region20: #{_forward.12} parent=1 // pred_region
      _
    $region21: #{_forward.12} parent=1 // pred_fallthru
      _
    // Predicated region
    $region22: #{_forward.12} parent=1 // pred_check
      _
    $region23: #{_forward.12} parent=1 // pred_check_branch
      %52 = sbr.rel (0) target = $region25
    $region24: #{_forward.12} parent=1 // pred_region
      _
    $region25: #{_forward.12} parent=1 // pred_fallthru
      _
    // Predicated region
    $region26: #{_forward.12} parent=1 // pred_check
      _
    $region27: #{_forward.12} parent=1 // pred_check_branch
      %54 = sbr.rel (0) target = $region29
    $region28: #{_forward.12} parent=1 // pred_region
      _
    $region29: #{_forward.12} parent=1 // pred_fallthru
      _
    // Predicated region
    $region30: #{_forward.12} parent=1 // pred_check
      _
    $region31: #{_forward.12} parent=1 // pred_check_branch
      %56 = sbr.rel (0) target = $region33
    $region32: #{_forward.12} parent=1 // pred_region
      _
    $region33: #{_forward.12} parent=1 // pred_fallthru
      _
    // Predicated region
    $region34: #{_forward.12} parent=1 // pred_check
      _
    $region35: #{_forward.12} parent=1 // pred_check_branch
      %58 = sbr.rel (0) target = $region37
    $region36: #{_forward.12} parent=1 // pred_region
      _
    $region37: #{_forward.12} parent=1 // pred_fallthru
      _
    // Predicated region
    $region38: #{_forward.12} parent=1 // pred_check
      _
    $region39: #{_forward.12} parent=1 // pred_check_branch
      %60 = sbr.rel (0) target = $region41
    $region40: #{_forward.12} parent=1 // pred_region
      _
    $region41: #{_forward.12} parent=1 // pred_fallthru
      _
    // Predicated region
    $region42: #{_forward.12} parent=1 // pred_check
      _
    $region43: #{_forward.12} parent=1 // pred_check_branch
      %62 = sbr.rel (0) target = $region45
    $region44: #{_forward.12} parent=1 // pred_region
      _
    $region45: #{_forward.12} parent=1 // pred_fallthru
      _
    // Predicated region
    $region46: #{_forward.12} parent=1 // pred_check
      _
    $region47: #{_forward.12} parent=1 // pred_check_branch
      %64 = sbr.rel (0) target = $region49
    $region48: #{_forward.12} parent=1 // pred_region
      _
    $region49: #{_forward.12} parent=1 // pred_fallthru
      _
    // Predicated region
    $region50: #{_forward.12} parent=1 // pred_check
      _
    $region51: #{_forward.12} parent=1 // pred_check_branch
      %66 = sbr.rel (0) target = $region53
    $region52: #{_forward.12} parent=1 // pred_region
      _
    $region53: #{_forward.12} parent=1 // pred_fallthru
      _
    // Predicated region
    $region54: #{_forward.12} parent=1 // pred_check
      _
    $region55: #{_forward.12} parent=1 // pred_check_branch
      %68 = sbr.rel (0) target = $region57
    $region56: #{_forward.12} parent=1 // pred_region
      _
    $region57: #{_forward.12} parent=1 // pred_fallthru
      _
    // Predicated region
    $region58: #{_forward.12} parent=1 // pred_check
      _
    $region59: #{_forward.12} parent=1 // pred_check_branch
      %70 = sbr.rel (0) target = $region61
    $region60: #{_forward.12} parent=1 // pred_region
      _
    $region61: #{_forward.12} parent=1 // pred_fallthru
      _
    %v72 = vld [vmem:[%s1] sm:$0xff]
    %v73 = vld [vmem:[%s0] sm:$0xff]
    %v74 = vld [vmem:[%s4] sm:$0xf]
    %v75 = vld [vmem:[%s4 + $0x4] sm:$0xf]
    %v76 = vld [vmem:[%s4 + $0x8] sm:$0xf]
    %v77 = vld [vmem:[%s4 + $0xc] sm:$0xf]
    %v78 = vld [vmem:[%s4 + $0x10] sm:$0xf]
    %v79 = vld [vmem:[%s4 + $0x14] sm:$0xf]
    %v80 = vld [vmem:[%s4 + $0x18] sm:$0xf]
    %v81 = vld [vmem:[%s4 + $0x1c] sm:$0xf]
    %v82 = vld [vmem:[%s4 + $0x20] sm:$0xf]
    %v83 = vld [vmem:[%s4 + $0x24] sm:$0xf]
    %v84 = vld [vmem:[%s4 + $0x28] sm:$0xf]
    %v85 = vld [vmem:[%s4 + $0x2c] sm:$0xf]
    %v86 = vld [vmem:[%s4 + $0x30] sm:$0xf]
    %v87 = vld [vmem:[%s4 + $0x34] sm:$0xf]
    %v88 = vld [vmem:[%s4 + $0x38] sm:$0xf]
    %v89 = vld [vmem:[%s4 + $0x3c] sm:$0xf]
    %v90 = vld [vmem:[%s4 + $0x40] sm:$0xf]
    %v91 = vld [vmem:[%s4 + $0x44] sm:$0xf]
    %v92 = vld [vmem:[%s4 + $0x48] sm:$0xf]
    %v93 = vld [vmem:[%s4 + $0x4c] sm:$0xf]
    %v94 = vld [vmem:[%s4 + $0x50] sm:$0xf]
    %v95 = vld [vmem:[%s4 + $0x54] sm:$0xf]
    %v96 = vld [vmem:[%s4 + $0x58] sm:$0xf]
    %v97 = vld [vmem:[%s4 + $0x5c] sm:$0xf]
    %v98 = vld [vmem:[%s4 + $0x60] sm:$0xf]
    %v99 = vld [vmem:[%s4 + $0x64] sm:$0xf]
    %v100 = vld [vmem:[%s4 + $0x68] sm:$0xf]
    %v101 = vld [vmem:[%s4 + $0x6c] sm:$0xf]
    %v102 = vld [vmem:[%s4 + $0x70] sm:$0xf]
    %v103 = vld [vmem:[%s4 + $0x74] sm:$0xf]
    %v104 = vld [vmem:[%s4 + $0x78] sm:$0xf]
    %v105 = vld [vmem:[%s4 + $0x7c] sm:$0xf]
    %v106 = vld [vmem:[%s4 + $0x80] sm:$0xf]
    %v107 = vld [vmem:[%s4 + $0x84] sm:$0xf]
    %v108 = vld [vmem:[%s4 + $0x88] sm:$0xf]
    %v109 = vld [vmem:[%s4 + $0x8c] sm:$0xf]
    %v110 = vld [vmem:[%s4 + $0x90] sm:$0xf]
    %v111 = vld [vmem:[%s4 + $0x94] sm:$0xf]
    %v112 = vld [vmem:[%s4 + $0x98] sm:$0xf]
    %v113 = vld [vmem:[%s4 + $0x9c] sm:$0xf]
    %v114 = vld [vmem:[%s4 + $0xa0] sm:$0xf]
    %v115 = vld [vmem:[%s4 + $0xa4] sm:$0xf]
    %v116 = vld [vmem:[%s4 + $0xa8] sm:$0xf]
    %v117 = vld [vmem:[%s4 + $0xac] sm:$0xf]
    %v118 = vld [vmem:[%s4 + $0xb0] sm:$0xf]
    %v119 = vld [vmem:[%s4 + $0xb4] sm:$0xf]
    %v120 = vld [vmem:[%s4 + $0xb8] sm:$0xf]
    %v121 = vld [vmem:[%s4 + $0xbc] sm:$0xf]
    %v122 = vld [vmem:[%s4 + $0xc0] sm:$0xf]
    %v123 = vld [vmem:[%s4 + $0xc4] sm:$0xf]
    %v124 = vld [vmem:[%s4 + $0xc8] sm:$0xf]
    %v125 = vld [vmem:[%s4 + $0xcc] sm:$0xf]
    %v126 = vld [vmem:[%s4 + $0xd0] sm:$0xf]
    %v127 = vld [vmem:[%s4 + $0xd4] sm:$0xf]
    %v128 = vld [vmem:[%s4 + $0xd8] sm:$0xf]
    %v129 = vld [vmem:[%s4 + $0xdc] sm:$0xf]
    %v130 = vld [vmem:[%s4 + $0xe0] sm:$0xf]
    %v131 = vld [vmem:[%s4 + $0xe4] sm:$0xf]
    %v132 = vld [vmem:[%s4 + $0xe8] sm:$0xf]
    %v133 = vld [vmem:[%s4 + $0xec] sm:$0xf]
    %v134 = vld [vmem:[%s4 + $0xf0] sm:$0xf]
    %v135 = vld [vmem:[%s4 + $0xf4] sm:$0xf]
    %v136 = vld [vmem:[%s4 + $0xf8] sm:$0xf]
    %v137 = vld [vmem:[%s4 + $0xfc] sm:$0xf]
    %v138 = vld [vmem:[%s4 + $0x100] sm:$0xf]
    %v139 = vld [vmem:[%s4 + $0x104] sm:$0xf]
    %v140 = vld [vmem:[%s4 + $0x108] sm:$0xf]
    %v141 = vld [vmem:[%s4 + $0x10c] sm:$0xf]
    %v142 = vld [vmem:[%s4 + $0x110] sm:$0xf]
    %v143 = vld [vmem:[%s4 + $0x114] sm:$0xf]
    %v144 = vld [vmem:[%s4 + $0x118] sm:$0xf]
    %v145 = vld [vmem:[%s4 + $0x11c] sm:$0xf]
    %v146 = vld [vmem:[%s4 + $0x120] sm:$0xf]
    %v147 = vld [vmem:[%s4 + $0x124] sm:$0xf]
    %v148 = vld [vmem:[%s4 + $0x128] sm:$0xf]
    %v149 = vld [vmem:[%s4 + $0x12c] sm:$0xf]
    %v150 = vld [vmem:[%s4 + $0x130] sm:$0xf]
    %v151 = vld [vmem:[%s4 + $0x134] sm:$0xf]
    %v152 = vld [vmem:[%s4 + $0x138] sm:$0xf]
    %v153 = vld [vmem:[%s4 + $0x13c] sm:$0xf]
    %v154 = vld [vmem:[%s4 + $0x140] sm:$0xf]
    %v155 = vld [vmem:[%s4 + $0x144] sm:$0xf]
    %v156 = vld [vmem:[%s4 + $0x148] sm:$0xf]
    %v157 = vld [vmem:[%s4 + $0x14c] sm:$0xf]
    %v158 = vld [vmem:[%s4 + $0x150] sm:$0xf]
    %v159 = vld [vmem:[%s4 + $0x154] sm:$0xf]
    %v160 = vld [vmem:[%s4 + $0x158] sm:$0xf]
    %v161 = vld [vmem:[%s4 + $0x15c] sm:$0xf]
    %v162 = vld [vmem:[%s4 + $0x160] sm:$0xf]
    %v163 = vld [vmem:[%s4 + $0x164] sm:$0xf]
    %v164 = vld [vmem:[%s4 + $0x168] sm:$0xf]
    %v165 = vld [vmem:[%s4 + $0x16c] sm:$0xf]
    %v166 = vld [vmem:[%s4 + $0x170] sm:$0xf]
    %v167 = vld [vmem:[%s4 + $0x174] sm:$0xf]
    %v168 = vld [vmem:[%s4 + $0x178] sm:$0xf]
    %v169 = vld [vmem:[%s4 + $0x17c] sm:$0xf]
    %v170 = vld [vmem:[%s4 + $0x180] sm:$0xf]
    %v171 = vld [vmem:[%s4 + $0x184] sm:$0xf]
    %v172 = vld [vmem:[%s4 + $0x188] sm:$0xf]
    %v173 = vld [vmem:[%s4 + $0x18c] sm:$0xf]
    %v174 = vld [vmem:[%s4 + $0x190] sm:$0xf]
    %v175 = vld [vmem:[%s4 + $0x194] sm:$0xf]
    %v176 = vld [vmem:[%s4 + $0x198] sm:$0xf]
    %v177 = vld [vmem:[%s4 + $0x19c] sm:$0xf]
    %v178 = vld [vmem:[%s4 + $0x1a0] sm:$0xf]
    %v179 = vld [vmem:[%s4 + $0x1a4] sm:$0xf]
    %v180 = vld [vmem:[%s4 + $0x1a8] sm:$0xf]
    %v181 = vld [vmem:[%s4 + $0x1ac] sm:$0xf]
    %v182 = vld [vmem:[%s4 + $0x1b0] sm:$0xf]
    %v183 = vld [vmem:[%s4 + $0x1b4] sm:$0xf]
    %v184 = vld [vmem:[%s4 + $0x1b8] sm:$0xf]
    %v185 = vld [vmem:[%s4 + $0x1bc] sm:$0xf]
    %v186 = vld [vmem:[%s4 + $0x1c0] sm:$0xf]
    %v187 = vld [vmem:[%s4 + $0x1c4] sm:$0xf]
    %v188 = vld [vmem:[%s4 + $0x1c8] sm:$0xf]
    %v189 = vld [vmem:[%s4 + $0x1cc] sm:$0xf]
    %v190 = vld [vmem:[%s4 + $0x1d0] sm:$0xf]
    %v191 = vld [vmem:[%s4 + $0x1d4] sm:$0xf]
    %v192 = vld [vmem:[%s4 + $0x1d8] sm:$0xf]
    %v193 = vld [vmem:[%s4 + $0x1dc] sm:$0xf]
    %v194 = vld [vmem:[%s4 + $0x1e0] sm:$0xf]
    %v195 = vld [vmem:[%s4 + $0x1e4] sm:$0xf]
    %v196 = vld [vmem:[%s4 + $0x1e8] sm:$0xf]
    %v197 = vld [vmem:[%s4 + $0x1ec] sm:$0xf]
    %v198 = vld [vmem:[%s4 + $0x1f0] sm:$0xf]
    %v199 = vld [vmem:[%s4 + $0x1f4] sm:$0xf]
    %v200 = vld [vmem:[%s4 + $0x1f8] sm:$0xf]
    %v201 = vld [vmem:[%s4 + $0x1fc] sm:$0xf]
    %v202 = vld [vmem:[%s5] sm:$0x1]
    %v204 = vcombine.high %v73, %v73
    %v206 = vunpack.c.l.s4 1966171168
    %v207 = vunpack.c.0.s8 %v206
    %v208 = vlaneseq
    %v209 = vshrl.u32 %v208, 7
    %v210 = vsub.s32 %v207, %v209
    %v211 = vrot.slane %v73, %v210
    %v213 = vunpack.c.l.s4 1966171168
    %v214 = vunpack.c.0.s8 %v213
    %v215 = vlaneseq
    %v216 = vshrl.u32 %v215, 7
    %v217 = vsub.s32 %v214, %v216
    %v218 = vrot.slane %v204, %v217
    %v219 = vcombine.high %v211, %v211
    %v220 = vcombine.high %v218, %v218
    %v222 = vunpack.c.l.s4 1966171168
    %v223 = vunpack.c.0.s8 %v222
    %v224 = vlaneseq
    %v225 = vshrl.u32 %v224, 7
    %v226 = vsub.s32 %v223, %v225
    %v227 = vrot.slane %v211, %v226
    %v229 = vunpack.c.l.s4 1966171168
    %v230 = vunpack.c.0.s8 %v229
    %v231 = vlaneseq
    %v232 = vshrl.u32 %v231, 7
    %v233 = vsub.s32 %v230, %v232
    %v234 = vrot.slane %v218, %v233
    %v236 = vunpack.c.l.s4 1966171168
    %v237 = vunpack.c.0.s8 %v236
    %v238 = vlaneseq
    %v239 = vshrl.u32 %v238, 7
    %v240 = vsub.s32 %v237, %v239
    %v241 = vrot.slane %v219, %v240
    %v243 = vunpack.c.l.s4 1966171168
    %v244 = vunpack.c.0.s8 %v243
    %v245 = vlaneseq
    %v246 = vshrl.u32 %v245, 7
    %v247 = vsub.s32 %v244, %v246
    %v248 = vrot.slane %v220, %v247
    %v249 = vcombine.high %v227, %v227
    %v250 = vcombine.high %v234, %v234
    %v251 = vcombine.high %v241, %v241
    %v252 = vcombine.high %v248, %v248
    %v389 = vunpack.c.l.b16 %v74
    %v390 = vunpack.c.l.b16 %v75
    %v391 = vunpack.c.l.b16 %v76
    %v392 = vunpack.c.l.b16 %v77
    %v393 = vunpack.c.l.b16 %v78
    %v394 = vunpack.c.l.b16 %v79
    %v395 = vunpack.c.l.b16 %v80
    %v396 = vunpack.c.l.b16 %v81
    %v397 = vunpack.c.l.b16 %v82
    %v398 = vunpack.c.l.b16 %v83
    %v399 = vunpack.c.l.b16 %v84
    %v400 = vunpack.c.l.b16 %v85
    %v401 = vunpack.c.l.b16 %v86
    %v402 = vunpack.c.l.b16 %v87
    %v403 = vunpack.c.l.b16 %v88
    %v404 = vunpack.c.l.b16 %v89
    %v405 = vunpack.c.l.b16 %v90
    %v406 = vunpack.c.l.b16 %v91
    %v407 = vunpack.c.l.b16 %v92
    %v408 = vunpack.c.l.b16 %v93
    %v409 = vunpack.c.l.b16 %v94
    %v410 = vunpack.c.l.b16 %v95
    %v411 = vunpack.c.l.b16 %v96
    %v412 = vunpack.c.l.b16 %v97
    %v413 = vunpack.c.l.b16 %v98
    %v414 = vunpack.c.l.b16 %v99
    %v415 = vunpack.c.l.b16 %v100
    %v416 = vunpack.c.l.b16 %v101
    %v417 = vunpack.c.l.b16 %v102
    %v418 = vunpack.c.l.b16 %v103
    %v419 = vunpack.c.l.b16 %v104
    %v420 = vunpack.c.l.b16 %v105
    %v421 = vunpack.c.l.b16 %v106
    %v422 = vunpack.c.l.b16 %v107
    %v423 = vunpack.c.l.b16 %v108
    %v424 = vunpack.c.l.b16 %v109
    %v425 = vunpack.c.l.b16 %v110
    %v426 = vunpack.c.l.b16 %v111
    %v427 = vunpack.c.l.b16 %v112
    %v428 = vunpack.c.l.b16 %v113
    %v429 = vunpack.c.l.b16 %v114
    %v430 = vunpack.c.l.b16 %v115
    %v431 = vunpack.c.l.b16 %v116
    %v432 = vunpack.c.l.b16 %v117
    %v433 = vunpack.c.l.b16 %v118
    %v434 = vunpack.c.l.b16 %v119
    %v435 = vunpack.c.l.b16 %v120
    %v436 = vunpack.c.l.b16 %v121
    %v437 = vunpack.c.l.b16 %v122
    %v438 = vunpack.c.l.b16 %v123
    %v439 = vunpack.c.l.b16 %v124
    %v440 = vunpack.c.l.b16 %v125
    %v441 = vunpack.c.l.b16 %v126
    %v442 = vunpack.c.l.b16 %v127
    %v443 = vunpack.c.l.b16 %v128
    %v444 = vunpack.c.l.b16 %v129
    %v445 = vunpack.c.l.b16 %v130
    %v446 = vunpack.c.l.b16 %v131
    %v447 = vunpack.c.l.b16 %v132
    %v448 = vunpack.c.l.b16 %v133
    %v449 = vunpack.c.l.b16 %v134
    %v450 = vunpack.c.l.b16 %v135
    %v451 = vunpack.c.l.b16 %v136
    %v452 = vunpack.c.l.b16 %v137
    %v453 = vunpack.c.l.b16 %v138
    %v454 = vunpack.c.l.b16 %v139
    %v455 = vunpack.c.l.b16 %v140
    %v456 = vunpack.c.l.b16 %v141
    %v457 = vunpack.c.l.b16 %v142
    %v458 = vunpack.c.l.b16 %v143
    %v459 = vunpack.c.l.b16 %v144
    %v460 = vunpack.c.l.b16 %v145
    %v461 = vunpack.c.l.b16 %v146
    %v462 = vunpack.c.l.b16 %v147
    %v463 = vunpack.c.l.b16 %v148
    %v464 = vunpack.c.l.b16 %v149
    %v465 = vunpack.c.l.b16 %v150
    %v466 = vunpack.c.l.b16 %v151
    %v467 = vunpack.c.l.b16 %v152
    %v468 = vunpack.c.l.b16 %v153
    %v469 = vunpack.c.l.b16 %v154
    %v470 = vunpack.c.l.b16 %v155
    %v471 = vunpack.c.l.b16 %v156
    %v472 = vunpack.c.l.b16 %v157
    %v473 = vunpack.c.l.b16 %v158
    %v474 = vunpack.c.l.b16 %v159
    %v475 = vunpack.c.l.b16 %v160
    %v476 = vunpack.c.l.b16 %v161
    %v477 = vunpack.c.l.b16 %v162
    %v478 = vunpack.c.l.b16 %v163
    %v479 = vunpack.c.l.b16 %v164
    %v480 = vunpack.c.l.b16 %v165
    %v481 = vunpack.c.l.b16 %v166
    %v482 = vunpack.c.l.b16 %v167
    %v483 = vunpack.c.l.b16 %v168
    %v484 = vunpack.c.l.b16 %v169
    %v485 = vunpack.c.l.b16 %v170
    %v486 = vunpack.c.l.b16 %v171
    %v487 = vunpack.c.l.b16 %v172
    %v488 = vunpack.c.l.b16 %v173
    %v489 = vunpack.c.l.b16 %v174
    %v490 = vunpack.c.l.b16 %v175
    %v491 = vunpack.c.l.b16 %v176
    %v492 = vunpack.c.l.b16 %v177
    %v493 = vunpack.c.l.b16 %v178
    %v494 = vunpack.c.l.b16 %v179
    %v495 = vunpack.c.l.b16 %v180
    %v496 = vunpack.c.l.b16 %v181
    %v497 = vunpack.c.l.b16 %v182
    %v498 = vunpack.c.l.b16 %v183
    %v499 = vunpack.c.l.b16 %v184
    %v500 = vunpack.c.l.b16 %v185
    %v501 = vunpack.c.l.b16 %v186
    %v502 = vunpack.c.l.b16 %v187
    %v503 = vunpack.c.l.b16 %v188
    %v504 = vunpack.c.l.b16 %v189
    %v505 = vunpack.c.l.b16 %v190
    %v506 = vunpack.c.l.b16 %v191
    %v507 = vunpack.c.l.b16 %v192
    %v508 = vunpack.c.l.b16 %v193
    %v509 = vunpack.c.l.b16 %v194
    %v510 = vunpack.c.l.b16 %v195
    %v511 = vunpack.c.l.b16 %v196
    %v512 = vunpack.c.l.b16 %v197
    %v513 = vunpack.c.l.b16 %v198
    %v514 = vunpack.c.l.b16 %v199
    %v515 = vunpack.c.l.b16 %v200
    %v516 = vunpack.c.l.b16 %v201
    %v517 = vpack.c.b16 %v390, %v389
    %v518 = vpack.c.b16 %v392, %v391
    %v519 = vpack.c.b16 %v394, %v393
    %v520 = vpack.c.b16 %v396, %v395
    %v521 = vpack.c.b16 %v398, %v397
    %v522 = vpack.c.b16 %v400, %v399
    %v523 = vpack.c.b16 %v402, %v401
    %v524 = vpack.c.b16 %v404, %v403
    %v525 = vpack.c.b16 %v406, %v405
    %v526 = vpack.c.b16 %v408, %v407
    %v527 = vpack.c.b16 %v410, %v409
    %v528 = vpack.c.b16 %v412, %v411
    %v529 = vpack.c.b16 %v414, %v413
    %v530 = vpack.c.b16 %v416, %v415
    %v531 = vpack.c.b16 %v418, %v417
    %v532 = vpack.c.b16 %v420, %v419
    %v533 = vpack.c.b16 %v422, %v421
    %v534 = vpack.c.b16 %v424, %v423
    %v535 = vpack.c.b16 %v426, %v425
    %v536 = vpack.c.b16 %v428, %v427
    %v537 = vpack.c.b16 %v430, %v429
    %v538 = vpack.c.b16 %v432, %v431
    %v539 = vpack.c.b16 %v434, %v433
    %v540 = vpack.c.b16 %v436, %v435
    %v541 = vpack.c.b16 %v438, %v437
    %v542 = vpack.c.b16 %v440, %v439
    %v543 = vpack.c.b16 %v442, %v441
    %v544 = vpack.c.b16 %v444, %v443
    %v545 = vpack.c.b16 %v446, %v445
    %v546 = vpack.c.b16 %v448, %v447
    %v547 = vpack.c.b16 %v450, %v449
    %v548 = vpack.c.b16 %v452, %v451
    %v549 = vpack.c.b16 %v454, %v453
    %v550 = vpack.c.b16 %v456, %v455
    %v551 = vpack.c.b16 %v458, %v457
    %v552 = vpack.c.b16 %v460, %v459
    %v553 = vpack.c.b16 %v462, %v461
    %v554 = vpack.c.b16 %v464, %v463
    %v555 = vpack.c.b16 %v466, %v465
    %v556 = vpack.c.b16 %v468, %v467
    %v557 = vpack.c.b16 %v470, %v469
    %v558 = vpack.c.b16 %v472, %v471
    %v559 = vpack.c.b16 %v474, %v473
    %v560 = vpack.c.b16 %v476, %v475
    %v561 = vpack.c.b16 %v478, %v477
    %v562 = vpack.c.b16 %v480, %v479
    %v563 = vpack.c.b16 %v482, %v481
    %v564 = vpack.c.b16 %v484, %v483
    %v565 = vpack.c.b16 %v486, %v485
    %v566 = vpack.c.b16 %v488, %v487
    %v567 = vpack.c.b16 %v490, %v489
    %v568 = vpack.c.b16 %v492, %v491
    %v569 = vpack.c.b16 %v494, %v493
    %v570 = vpack.c.b16 %v496, %v495
    %v571 = vpack.c.b16 %v498, %v497
    %v572 = vpack.c.b16 %v500, %v499
    %v573 = vpack.c.b16 %v502, %v501
    %v574 = vpack.c.b16 %v504, %v503
    %v575 = vpack.c.b16 %v506, %v505
    %v576 = vpack.c.b16 %v508, %v507
    %v577 = vpack.c.b16 %v510, %v509
    %v578 = vpack.c.b16 %v512, %v511
    %v579 = vpack.c.b16 %v514, %v513
    %v580 = vpack.c.b16 %v516, %v515
    %645 = vmatprep.subr.bf16.mxu0 0
    %646 = vmatpush1.bf16.msra.mxu0 %v524
    %647 = vmatprep.subr.bf16.mxu0 0
    %648 = vmatpush1.bf16.msra.mxu0 %v523
    %649 = vmatprep.subr.bf16.mxu0 0
    %650 = vmatpush1.bf16.msra.mxu0 %v522
    %651 = vmatprep.subr.bf16.mxu0 0
    %652 = vmatpush1.bf16.msra.mxu0 %v521
    %653 = vmatprep.subr.bf16.mxu0 0
    %654 = vmatpush1.bf16.msra.mxu0 %v520
    %655 = vmatprep.subr.bf16.mxu0 0
    %656 = vmatpush1.bf16.msra.mxu0 %v519
    %657 = vmatprep.subr.bf16.mxu0 0
    %658 = vmatpush1.bf16.msra.mxu0 %v518
    %659 = vmatprep.subr.bf16.mxu0 0
    %660 = vmatpush1.bf16.msra.mxu0 %v517
    %661 = vmatprep.subr.bf16.mxu0 0
    %662 = vmatpush2.bf16.msra.mxu0 %v532
    %663 = vmatprep.subr.bf16.mxu0 0
    %664 = vmatpush2.bf16.msra.mxu0 %v531
    %665 = vmatprep.subr.bf16.mxu0 0
    %666 = vmatpush2.bf16.msra.mxu0 %v530
    %667 = vmatprep.subr.bf16.mxu0 0
    %668 = vmatpush2.bf16.msra.mxu0 %v529
    %669 = vmatprep.subr.bf16.mxu0 0
    %670 = vmatpush2.bf16.msra.mxu0 %v528
    %671 = vmatprep.subr.bf16.mxu0 0
    %672 = vmatpush2.bf16.msra.mxu0 %v527
    %673 = vmatprep.subr.bf16.mxu0 0
    %674 = vmatpush2.bf16.msra.mxu0 %v526
    %675 = vmatprep.subr.bf16.mxu0 0
    %676 = vmatpush2.bf16.msra.mxu0 %v525
    %677 = vmatprep.mubr.bf16.mxu0 %v241
    %678 = vmatmul.mubr.bf16.gmra.mxu0 %v227
    %v679 = vpop.f32.mrf.mxu0
    %v680 = vadd.f32 %v202, %v679
    %v681 = vpop.f32.mrf.mxu0
    %v682 = vpop.f32.mrf.mxu0
    %v683 = vpop.f32.mrf.mxu0
    %684 = vdwg.mxu0
    %685 = vmatprep.subr.bf16.mxu0 0
    %686 = vmatpush1.bf16.msra.mxu0 %v540
    %687 = vmatprep.subr.bf16.mxu0 0
    %688 = vmatpush1.bf16.msra.mxu0 %v539
    %689 = vmatprep.subr.bf16.mxu0 0
    %690 = vmatpush1.bf16.msra.mxu0 %v538
    %691 = vmatprep.subr.bf16.mxu0 0
    %692 = vmatpush1.bf16.msra.mxu0 %v537
    %693 = vmatprep.subr.bf16.mxu0 0
    %694 = vmatpush1.bf16.msra.mxu0 %v536
    %695 = vmatprep.subr.bf16.mxu0 0
    %696 = vmatpush1.bf16.msra.mxu0 %v535
    %697 = vmatprep.subr.bf16.mxu0 0
    %698 = vmatpush1.bf16.msra.mxu0 %v534
    %699 = vmatprep.subr.bf16.mxu0 0
    %700 = vmatpush1.bf16.msra.mxu0 %v533
    %701 = vmatprep.subr.bf16.mxu0 0
    %702 = vmatpush2.bf16.msra.mxu0 %v548
    %703 = vmatprep.subr.bf16.mxu0 0
    %704 = vmatpush2.bf16.msra.mxu0 %v547
    %705 = vmatprep.subr.bf16.mxu0 0
    %706 = vmatpush2.bf16.msra.mxu0 %v546
    %707 = vmatprep.subr.bf16.mxu0 0
    %708 = vmatpush2.bf16.msra.mxu0 %v545
    %709 = vmatprep.subr.bf16.mxu0 0
    %710 = vmatpush2.bf16.msra.mxu0 %v544
    %711 = vmatprep.subr.bf16.mxu0 0
    %712 = vmatpush2.bf16.msra.mxu0 %v543
    %713 = vmatprep.subr.bf16.mxu0 0
    %714 = vmatpush2.bf16.msra.mxu0 %v542
    %715 = vmatprep.subr.bf16.mxu0 0
    %716 = vmatpush2.bf16.msra.mxu0 %v541
    %717 = vmatprep.mubr.bf16.mxu0 %v251
    %718 = vmatmul.mubr.bf16.gmra.mxu0 %v249
    %v719 = vpop.f32.mrf.mxu0
    %v720 = vadd.f32 %v680, %v719
    %v721 = vpop.f32.mrf.mxu0
    %v722 = vpop.f32.mrf.mxu0
    %v723 = vpop.f32.mrf.mxu0
    %724 = vdwg.mxu0
    %725 = vmatprep.subr.bf16.mxu0 0
    %726 = vmatpush1.bf16.msra.mxu0 %v556
    %727 = vmatprep.subr.bf16.mxu0 0
    %728 = vmatpush1.bf16.msra.mxu0 %v555
    %729 = vmatprep.subr.bf16.mxu0 0
    %730 = vmatpush1.bf16.msra.mxu0 %v554
    %731 = vmatprep.subr.bf16.mxu0 0
    %732 = vmatpush1.bf16.msra.mxu0 %v553
    %733 = vmatprep.subr.bf16.mxu0 0
    %734 = vmatpush1.bf16.msra.mxu0 %v552
    %735 = vmatprep.subr.bf16.mxu0 0
    %736 = vmatpush1.bf16.msra.mxu0 %v551
    %737 = vmatprep.subr.bf16.mxu0 0
    %738 = vmatpush1.bf16.msra.mxu0 %v550
    %739 = vmatprep.subr.bf16.mxu0 0
    %740 = vmatpush1.bf16.msra.mxu0 %v549
    %741 = vmatprep.subr.bf16.mxu0 0
    %742 = vmatpush2.bf16.msra.mxu0 %v564
    %743 = vmatprep.subr.bf16.mxu0 0
    %744 = vmatpush2.bf16.msra.mxu0 %v563
    %745 = vmatprep.subr.bf16.mxu0 0
    %746 = vmatpush2.bf16.msra.mxu0 %v562
    %747 = vmatprep.subr.bf16.mxu0 0
    %748 = vmatpush2.bf16.msra.mxu0 %v561
    %749 = vmatprep.subr.bf16.mxu0 0
    %750 = vmatpush2.bf16.msra.mxu0 %v560
    %751 = vmatprep.subr.bf16.mxu0 0
    %752 = vmatpush2.bf16.msra.mxu0 %v559
    %753 = vmatprep.subr.bf16.mxu0 0
    %754 = vmatpush2.bf16.msra.mxu0 %v558
    %755 = vmatprep.subr.bf16.mxu0 0
    %756 = vmatpush2.bf16.msra.mxu0 %v557
    %757 = vmatprep.mubr.bf16.mxu0 %v248
    %758 = vmatmul.mubr.bf16.gmra.mxu0 %v234
    %v759 = vpop.f32.mrf.mxu0
    %v760 = vadd.f32 %v720, %v759
    %v761 = vpop.f32.mrf.mxu0
    %v762 = vpop.f32.mrf.mxu0
    %v763 = vpop.f32.mrf.mxu0
    %764 = vdwg.mxu0
    %765 = vmatprep.subr.bf16.mxu0 0
    %766 = vmatpush1.bf16.msra.mxu0 %v572
    %767 = vmatprep.subr.bf16.mxu0 0
    %768 = vmatpush1.bf16.msra.mxu0 %v571
    %769 = vmatprep.subr.bf16.mxu0 0
    %770 = vmatpush1.bf16.msra.mxu0 %v570
    %771 = vmatprep.subr.bf16.mxu0 0
    %772 = vmatpush1.bf16.msra.mxu0 %v569
    %773 = vmatprep.subr.bf16.mxu0 0
    %774 = vmatpush1.bf16.msra.mxu0 %v568
    %775 = vmatprep.subr.bf16.mxu0 0
    %776 = vmatpush1.bf16.msra.mxu0 %v567
    %777 = vmatprep.subr.bf16.mxu0 0
    %778 = vmatpush1.bf16.msra.mxu0 %v566
    %779 = vmatprep.subr.bf16.mxu0 0
    %780 = vmatpush1.bf16.msra.mxu0 %v565
    %781 = vmatprep.subr.bf16.mxu0 0
    %782 = vmatpush2.bf16.msra.mxu0 %v580
    %783 = vmatprep.subr.bf16.mxu0 0
    %784 = vmatpush2.bf16.msra.mxu0 %v579
    %785 = vmatprep.subr.bf16.mxu0 0
    %786 = vmatpush2.bf16.msra.mxu0 %v578
    %787 = vmatprep.subr.bf16.mxu0 0
    %788 = vmatpush2.bf16.msra.mxu0 %v577
    %789 = vmatprep.subr.bf16.mxu0 0
    %790 = vmatpush2.bf16.msra.mxu0 %v576
    %791 = vmatprep.subr.bf16.mxu0 0
    %792 = vmatpush2.bf16.msra.mxu0 %v575
    %793 = vmatprep.subr.bf16.mxu0 0
    %794 = vmatpush2.bf16.msra.mxu0 %v574
    %795 = vmatprep.subr.bf16.mxu0 0
    %796 = vmatpush2.bf16.msra.mxu0 %v573
    %797 = vmatprep.mubr.bf16.mxu0 %v252
    %798 = vmatmul.mubr.bf16.gmra.mxu0 %v250
    %v799 = vpop.f32.mrf.mxu0
    %v800 = vadd.f32 %v760, %v799
    %v801 = vpop.f32.mrf.mxu0
    %v802 = vpop.f32.mrf.mxu0
    %v803 = vpop.f32.mrf.mxu0
    %804 = vdwg.mxu0
    %v805 = vld [vmem:[%s2] sm:$0x1]
    %v806 = vmul.f32 %v800, 0.5
    %v807 = vmul.f32 %v806, 1.442695
    %v808 = vpow.pop %v807
    %v811 = vunpack.c.l.s4 1966171168
    %v812 = vunpack.c.0.s8 %v811
    %v813 = vlaneseq
    %v814 = vshrl.u32 %v813, 7
    %v815 = vsub.s32 %v812, %v814
    %v816 = vrot.slane %v808, %v815
    %v818 = vunpack.c.l.s4 1966171168
    %v819 = vunpack.c.0.s8 %v818
    %v820 = vlaneseq
    %v821 = vshrl.u32 %v820, 7
    %v822 = vsub.s32 %v819, %v821
    %v823 = vrot.slane %v816, %v822
    %824 = vrot.lane.b32.xlu0 %v823, 96
    %v825 = vpop.permute.xlu0 %824
    %v827 = vmul.f32 %v805, %v825
    %v828 = vadd.f32 %v800, %v827
    %v830 = vlaneseq
    %v831 = vshrl.u32 %v830, 7
    %v832 = vsub.s32 0, %v831
    %v833 = vrot.slane %v72, %v832
    %v834 = vlaneseq
    %v835 = vshrl.u32 %v834, 7
    %v836 = vsub.s32 1, %v835
    %v837 = vrot.slane %v72, %v836
    %v838 = vlaneseq
    %v839 = vshrl.u32 %v838, 7
    %v840 = vsub.s32 2, %v839
    %v841 = vrot.slane %v72, %v840
    %v842 = vlaneseq
    %v843 = vshrl.u32 %v842, 7
    %v844 = vsub.s32 3, %v843
    %v845 = vrot.slane %v72, %v844
    %v850 = vpack.c.bf16 %v833, %v833
    %v851 = vpack.c.bf16 %v837, %v837
    %v852 = vpack.c.bf16 %v841, %v841
    %v853 = vpack.c.bf16 %v845, %v845
    %v854 = vld [vmem:[%s6] sm:$0xff]
    %v855 = vld [vmem:[%s6 + $0x8] sm:$0xff]
    %v856 = vld [vmem:[%s6 + $0x10] sm:$0xff]
    %v857 = vld [vmem:[%s6 + $0x18] sm:$0xff]
    %v858 = vld [vmem:[%s6 + $0x20] sm:$0xff]
    %v859 = vld [vmem:[%s6 + $0x28] sm:$0xff]
    %v860 = vld [vmem:[%s6 + $0x30] sm:$0xff]
    %v861 = vld [vmem:[%s6 + $0x38] sm:$0xff]
    %v862 = vld [vmem:[%s6 + $0x40] sm:$0xff]
    %v863 = vld [vmem:[%s6 + $0x48] sm:$0xff]
    %v864 = vld [vmem:[%s6 + $0x50] sm:$0xff]
    %v865 = vld [vmem:[%s6 + $0x58] sm:$0xff]
    %v866 = vld [vmem:[%s6 + $0x60] sm:$0xff]
    %v867 = vld [vmem:[%s6 + $0x68] sm:$0xff]
    %v868 = vld [vmem:[%s6 + $0x70] sm:$0xff]
    %v869 = vld [vmem:[%s6 + $0x78] sm:$0xff]
    %v870 = vld [vmem:[%s6 + $0x80] sm:$0xff]
    %v871 = vld [vmem:[%s6 + $0x88] sm:$0xff]
    %v872 = vld [vmem:[%s6 + $0x90] sm:$0xff]
    %v873 = vld [vmem:[%s6 + $0x98] sm:$0xff]
    %v874 = vld [vmem:[%s6 + $0xa0] sm:$0xff]
    %v875 = vld [vmem:[%s6 + $0xa8] sm:$0xff]
    %v876 = vld [vmem:[%s6 + $0xb0] sm:$0xff]
    %v877 = vld [vmem:[%s6 + $0xb8] sm:$0xff]
    %v878 = vld [vmem:[%s6 + $0xc0] sm:$0xff]
    %v879 = vld [vmem:[%s6 + $0xc8] sm:$0xff]
    %v880 = vld [vmem:[%s6 + $0xd0] sm:$0xff]
    %v881 = vld [vmem:[%s6 + $0xd8] sm:$0xff]
    %v882 = vld [vmem:[%s6 + $0xe0] sm:$0xff]
    %v883 = vld [vmem:[%s6 + $0xe8] sm:$0xff]
    %v884 = vld [vmem:[%s6 + $0xf0] sm:$0xff]
    %v885 = vld [vmem:[%s6 + $0xf8] sm:$0xff]
    %v886 = vld [vmem:[%s6 + $0x100] sm:$0xff]
    %v887 = vld [vmem:[%s6 + $0x108] sm:$0xff]
    %v888 = vld [vmem:[%s6 + $0x110] sm:$0xff]
    %v889 = vld [vmem:[%s6 + $0x118] sm:$0xff]
    %v890 = vld [vmem:[%s6 + $0x120] sm:$0xff]
    %v891 = vld [vmem:[%s6 + $0x128] sm:$0xff]
    %v892 = vld [vmem:[%s6 + $0x130] sm:$0xff]
    %v893 = vld [vmem:[%s6 + $0x138] sm:$0xff]
    %v894 = vld [vmem:[%s6 + $0x140] sm:$0xff]
    %v895 = vld [vmem:[%s6 + $0x148] sm:$0xff]
    %v896 = vld [vmem:[%s6 + $0x150] sm:$0xff]
    %v897 = vld [vmem:[%s6 + $0x158] sm:$0xff]
    %v898 = vld [vmem:[%s6 + $0x160] sm:$0xff]
    %v899 = vld [vmem:[%s6 + $0x168] sm:$0xff]
    %v900 = vld [vmem:[%s6 + $0x170] sm:$0xff]
    %v901 = vld [vmem:[%s6 + $0x178] sm:$0xff]
    %v902 = vld [vmem:[%s6 + $0x180] sm:$0xff]
    %v903 = vld [vmem:[%s6 + $0x188] sm:$0xff]
    %v904 = vld [vmem:[%s6 + $0x190] sm:$0xff]
    %v905 = vld [vmem:[%s6 + $0x198] sm:$0xff]
    %v906 = vld [vmem:[%s6 + $0x1a0] sm:$0xff]
    %v907 = vld [vmem:[%s6 + $0x1a8] sm:$0xff]
    %v908 = vld [vmem:[%s6 + $0x1b0] sm:$0xff]
    %v909 = vld [vmem:[%s6 + $0x1b8] sm:$0xff]
    %v910 = vld [vmem:[%s6 + $0x1c0] sm:$0xff]
    %v911 = vld [vmem:[%s6 + $0x1c8] sm:$0xff]
    %v912 = vld [vmem:[%s6 + $0x1d0] sm:$0xff]
    %v913 = vld [vmem:[%s6 + $0x1d8] sm:$0xff]
    %v914 = vld [vmem:[%s6 + $0x1e0] sm:$0xff]
    %v915 = vld [vmem:[%s6 + $0x1e8] sm:$0xff]
    %v916 = vld [vmem:[%s6 + $0x1f0] sm:$0xff]
    %v917 = vld [vmem:[%s6 + $0x1f8] sm:$0xff]
    %v918 = vld [vmem:[%s6 + $0x200] sm:$0xff]
    %v919 = vld [vmem:[%s6 + $0x208] sm:$0xff]
    %v920 = vld [vmem:[%s6 + $0x210] sm:$0xff]
    %v921 = vld [vmem:[%s6 + $0x218] sm:$0xff]
    %v922 = vld [vmem:[%s6 + $0x220] sm:$0xff]
    %v923 = vld [vmem:[%s6 + $0x228] sm:$0xff]
    %v924 = vld [vmem:[%s6 + $0x230] sm:$0xff]
    %v925 = vld [vmem:[%s6 + $0x238] sm:$0xff]
    %v926 = vld [vmem:[%s6 + $0x240] sm:$0xff]
    %v927 = vld [vmem:[%s6 + $0x248] sm:$0xff]
    %v928 = vld [vmem:[%s6 + $0x250] sm:$0xff]
    %v929 = vld [vmem:[%s6 + $0x258] sm:$0xff]
    %v930 = vld [vmem:[%s6 + $0x260] sm:$0xff]
    %v931 = vld [vmem:[%s6 + $0x268] sm:$0xff]
    %v932 = vld [vmem:[%s6 + $0x270] sm:$0xff]
    %v933 = vld [vmem:[%s6 + $0x278] sm:$0xff]
    %v934 = vld [vmem:[%s6 + $0x280] sm:$0xff]
    %v935 = vld [vmem:[%s6 + $0x288] sm:$0xff]
    %v936 = vld [vmem:[%s6 + $0x290] sm:$0xff]
    %v937 = vld [vmem:[%s6 + $0x298] sm:$0xff]
    %v938 = vld [vmem:[%s6 + $0x2a0] sm:$0xff]
    %v939 = vld [vmem:[%s6 + $0x2a8] sm:$0xff]
    %v940 = vld [vmem:[%s6 + $0x2b0] sm:$0xff]
    %v941 = vld [vmem:[%s6 + $0x2b8] sm:$0xff]
    %v942 = vld [vmem:[%s6 + $0x2c0] sm:$0xff]
    %v943 = vld [vmem:[%s6 + $0x2c8] sm:$0xff]
    %v944 = vld [vmem:[%s6 + $0x2d0] sm:$0xff]
    %v945 = vld [vmem:[%s6 + $0x2d8] sm:$0xff]
    %v946 = vld [vmem:[%s6 + $0x2e0] sm:$0xff]
    %v947 = vld [vmem:[%s6 + $0x2e8] sm:$0xff]
    %v948 = vld [vmem:[%s6 + $0x2f0] sm:$0xff]
    %v949 = vld [vmem:[%s6 + $0x2f8] sm:$0xff]
    %v950 = vld [vmem:[%s6 + $0x300] sm:$0xff]
    %v951 = vld [vmem:[%s6 + $0x308] sm:$0xff]
    %v952 = vld [vmem:[%s6 + $0x310] sm:$0xff]
    %v953 = vld [vmem:[%s6 + $0x318] sm:$0xff]
    %v954 = vld [vmem:[%s6 + $0x320] sm:$0xff]
    %v955 = vld [vmem:[%s6 + $0x328] sm:$0xff]
    %v956 = vld [vmem:[%s6 + $0x330] sm:$0xff]
    %v957 = vld [vmem:[%s6 + $0x338] sm:$0xff]
    %v958 = vld [vmem:[%s6 + $0x340] sm:$0xff]
    %v959 = vld [vmem:[%s6 + $0x348] sm:$0xff]
    %v960 = vld [vmem:[%s6 + $0x350] sm:$0xff]
    %v961 = vld [vmem:[%s6 + $0x358] sm:$0xff]
    %v962 = vld [vmem:[%s6 + $0x360] sm:$0xff]
    %v963 = vld [vmem:[%s6 + $0x368] sm:$0xff]
    %v964 = vld [vmem:[%s6 + $0x370] sm:$0xff]
    %v965 = vld [vmem:[%s6 + $0x378] sm:$0xff]
    %v966 = vld [vmem:[%s6 + $0x380] sm:$0xff]
    %v967 = vld [vmem:[%s6 + $0x388] sm:$0xff]
    %v968 = vld [vmem:[%s6 + $0x390] sm:$0xff]
    %v969 = vld [vmem:[%s6 + $0x398] sm:$0xff]
    %v970 = vld [vmem:[%s6 + $0x3a0] sm:$0xff]
    %v971 = vld [vmem:[%s6 + $0x3a8] sm:$0xff]
    %v972 = vld [vmem:[%s6 + $0x3b0] sm:$0xff]
    %v973 = vld [vmem:[%s6 + $0x3b8] sm:$0xff]
    %v974 = vld [vmem:[%s6 + $0x3c0] sm:$0xff]
    %v975 = vld [vmem:[%s6 + $0x3c8] sm:$0xff]
    %v976 = vld [vmem:[%s6 + $0x3d0] sm:$0xff]
    %v977 = vld [vmem:[%s6 + $0x3d8] sm:$0xff]
    %v978 = vld [vmem:[%s6 + $0x3e0] sm:$0xff]
    %v979 = vld [vmem:[%s6 + $0x3e8] sm:$0xff]
    %v980 = vld [vmem:[%s6 + $0x3f0] sm:$0xff]
    %v981 = vld [vmem:[%s6 + $0x3f8] sm:$0xff]
    %v982 = vld [vmem:[%s6 + $0x400] sm:$0xff]
    %v983 = vld [vmem:[%s6 + $0x408] sm:$0xff]
    %v984 = vld [vmem:[%s6 + $0x410] sm:$0xff]
    %v985 = vld [vmem:[%s6 + $0x418] sm:$0xff]
    %v986 = vld [vmem:[%s6 + $0x420] sm:$0xff]
    %v987 = vld [vmem:[%s6 + $0x428] sm:$0xff]
    %v988 = vld [vmem:[%s6 + $0x430] sm:$0xff]
    %v989 = vld [vmem:[%s6 + $0x438] sm:$0xff]
    %v990 = vld [vmem:[%s6 + $0x440] sm:$0xff]
    %v991 = vld [vmem:[%s6 + $0x448] sm:$0xff]
    %v992 = vld [vmem:[%s6 + $0x450] sm:$0xff]
    %v993 = vld [vmem:[%s6 + $0x458] sm:$0xff]
    %v994 = vld [vmem:[%s6 + $0x460] sm:$0xff]
    %v995 = vld [vmem:[%s6 + $0x468] sm:$0xff]
    %v996 = vld [vmem:[%s6 + $0x470] sm:$0xff]
    %v997 = vld [vmem:[%s6 + $0x478] sm:$0xff]
    %v998 = vld [vmem:[%s6 + $0x480] sm:$0xff]
    %v999 = vld [vmem:[%s6 + $0x488] sm:$0xff]
    %v1000 = vld [vmem:[%s6 + $0x490] sm:$0xff]
    %v1001 = vld [vmem:[%s6 + $0x498] sm:$0xff]
    %v1002 = vld [vmem:[%s6 + $0x4a0] sm:$0xff]
    %v1003 = vld [vmem:[%s6 + $0x4a8] sm:$0xff]
    %v1004 = vld [vmem:[%s6 + $0x4b0] sm:$0xff]
    %v1005 = vld [vmem:[%s6 + $0x4b8] sm:$0xff]
    %v1006 = vld [vmem:[%s6 + $0x4c0] sm:$0xff]
    %v1007 = vld [vmem:[%s6 + $0x4c8] sm:$0xff]
    %v1008 = vld [vmem:[%s6 + $0x4d0] sm:$0xff]
    %v1009 = vld [vmem:[%s6 + $0x4d8] sm:$0xff]
    %v1010 = vld [vmem:[%s6 + $0x4e0] sm:$0xff]
    %v1011 = vld [vmem:[%s6 + $0x4e8] sm:$0xff]
    %v1012 = vld [vmem:[%s6 + $0x4f0] sm:$0xff]
    %v1013 = vld [vmem:[%s6 + $0x4f8] sm:$0xff]
    %v1014 = vld [vmem:[%s6 + $0x500] sm:$0xff]
    %v1015 = vld [vmem:[%s6 + $0x508] sm:$0xff]
    %v1016 = vld [vmem:[%s6 + $0x510] sm:$0xff]
    %v1017 = vld [vmem:[%s6 + $0x518] sm:$0xff]
    %v1018 = vld [vmem:[%s6 + $0x520] sm:$0xff]
    %v1019 = vld [vmem:[%s6 + $0x528] sm:$0xff]
    %v1020 = vld [vmem:[%s6 + $0x530] sm:$0xff]
    %v1021 = vld [vmem:[%s6 + $0x538] sm:$0xff]
    %v1022 = vld [vmem:[%s6 + $0x540] sm:$0xff]
    %v1023 = vld [vmem:[%s6 + $0x548] sm:$0xff]
    %v1024 = vld [vmem:[%s6 + $0x550] sm:$0xff]
    %v1025 = vld [vmem:[%s6 + $0x558] sm:$0xff]
    %v1026 = vld [vmem:[%s6 + $0x560] sm:$0xff]
    %v1027 = vld [vmem:[%s6 + $0x568] sm:$0xff]
    %v1028 = vld [vmem:[%s6 + $0x570] sm:$0xff]
    %v1029 = vld [vmem:[%s6 + $0x578] sm:$0xff]
    %v1030 = vld [vmem:[%s6 + $0x580] sm:$0xff]
    %v1031 = vld [vmem:[%s6 + $0x588] sm:$0xff]
    %v1032 = vld [vmem:[%s6 + $0x590] sm:$0xff]
    %v1033 = vld [vmem:[%s6 + $0x598] sm:$0xff]
    %v1034 = vld [vmem:[%s6 + $0x5a0] sm:$0xff]
    %v1035 = vld [vmem:[%s6 + $0x5a8] sm:$0xff]
    %v1036 = vld [vmem:[%s6 + $0x5b0] sm:$0xff]
    %v1037 = vld [vmem:[%s6 + $0x5b8] sm:$0xff]
    %v1038 = vld [vmem:[%s6 + $0x5c0] sm:$0xff]
    %v1039 = vld [vmem:[%s6 + $0x5c8] sm:$0xff]
    %v1040 = vld [vmem:[%s6 + $0x5d0] sm:$0xff]
    %v1041 = vld [vmem:[%s6 + $0x5d8] sm:$0xff]
    %v1042 = vld [vmem:[%s6 + $0x5e0] sm:$0xff]
    %v1043 = vld [vmem:[%s6 + $0x5e8] sm:$0xff]
    %v1044 = vld [vmem:[%s6 + $0x5f0] sm:$0xff]
    %v1045 = vld [vmem:[%s6 + $0x5f8] sm:$0xff]
    %v1046 = vld [vmem:[%s6 + $0x600] sm:$0xff]
    %v1047 = vld [vmem:[%s6 + $0x608] sm:$0xff]
    %v1048 = vld [vmem:[%s6 + $0x610] sm:$0xff]
    %v1049 = vld [vmem:[%s6 + $0x618] sm:$0xff]
    %v1050 = vld [vmem:[%s6 + $0x620] sm:$0xff]
    %v1051 = vld [vmem:[%s6 + $0x628] sm:$0xff]
    %v1052 = vld [vmem:[%s6 + $0x630] sm:$0xff]
    %v1053 = vld [vmem:[%s6 + $0x638] sm:$0xff]
    %v1054 = vld [vmem:[%s6 + $0x640] sm:$0xff]
    %v1055 = vld [vmem:[%s6 + $0x648] sm:$0xff]
    %v1056 = vld [vmem:[%s6 + $0x650] sm:$0xff]
    %v1057 = vld [vmem:[%s6 + $0x658] sm:$0xff]
    %v1058 = vld [vmem:[%s6 + $0x660] sm:$0xff]
    %v1059 = vld [vmem:[%s6 + $0x668] sm:$0xff]
    %v1060 = vld [vmem:[%s6 + $0x670] sm:$0xff]
    %v1061 = vld [vmem:[%s6 + $0x678] sm:$0xff]
    %v1062 = vld [vmem:[%s6 + $0x680] sm:$0xff]
    %v1063 = vld [vmem:[%s6 + $0x688] sm:$0xff]
    %v1064 = vld [vmem:[%s6 + $0x690] sm:$0xff]
    %v1065 = vld [vmem:[%s6 + $0x698] sm:$0xff]
    %v1066 = vld [vmem:[%s6 + $0x6a0] sm:$0xff]
    %v1067 = vld [vmem:[%s6 + $0x6a8] sm:$0xff]
    %v1068 = vld [vmem:[%s6 + $0x6b0] sm:$0xff]
    %v1069 = vld [vmem:[%s6 + $0x6b8] sm:$0xff]
    %v1070 = vld [vmem:[%s6 + $0x6c0] sm:$0xff]
    %v1071 = vld [vmem:[%s6 + $0x6c8] sm:$0xff]
    %v1072 = vld [vmem:[%s6 + $0x6d0] sm:$0xff]
    %v1073 = vld [vmem:[%s6 + $0x6d8] sm:$0xff]
    %v1074 = vld [vmem:[%s6 + $0x6e0] sm:$0xff]
    %v1075 = vld [vmem:[%s6 + $0x6e8] sm:$0xff]
    %v1076 = vld [vmem:[%s6 + $0x6f0] sm:$0xff]
    %v1077 = vld [vmem:[%s6 + $0x6f8] sm:$0xff]
    %v1078 = vld [vmem:[%s6 + $0x700] sm:$0xff]
    %v1079 = vld [vmem:[%s6 + $0x708] sm:$0xff]
    %v1080 = vld [vmem:[%s6 + $0x710] sm:$0xff]
    %v1081 = vld [vmem:[%s6 + $0x718] sm:$0xff]
    %v1082 = vld [vmem:[%s6 + $0x720] sm:$0xff]
    %v1083 = vld [vmem:[%s6 + $0x728] sm:$0xff]
    %v1084 = vld [vmem:[%s6 + $0x730] sm:$0xff]
    %v1085 = vld [vmem:[%s6 + $0x738] sm:$0xff]
    %v1086 = vld [vmem:[%s6 + $0x740] sm:$0xff]
    %v1087 = vld [vmem:[%s6 + $0x748] sm:$0xff]
    %v1088 = vld [vmem:[%s6 + $0x750] sm:$0xff]
    %v1089 = vld [vmem:[%s6 + $0x758] sm:$0xff]
    %v1090 = vld [vmem:[%s6 + $0x760] sm:$0xff]
    %v1091 = vld [vmem:[%s6 + $0x768] sm:$0xff]
    %v1092 = vld [vmem:[%s6 + $0x770] sm:$0xff]
    %v1093 = vld [vmem:[%s6 + $0x778] sm:$0xff]
    %v1094 = vld [vmem:[%s6 + $0x780] sm:$0xff]
    %v1095 = vld [vmem:[%s6 + $0x788] sm:$0xff]
    %v1096 = vld [vmem:[%s6 + $0x790] sm:$0xff]
    %v1097 = vld [vmem:[%s6 + $0x798] sm:$0xff]
    %v1098 = vld [vmem:[%s6 + $0x7a0] sm:$0xff]
    %v1099 = vld [vmem:[%s6 + $0x7a8] sm:$0xff]
    %v1100 = vld [vmem:[%s6 + $0x7b0] sm:$0xff]
    %v1101 = vld [vmem:[%s6 + $0x7b8] sm:$0xff]
    %v1102 = vld [vmem:[%s6 + $0x7c0] sm:$0xff]
    %v1103 = vld [vmem:[%s6 + $0x7c8] sm:$0xff]
    %v1104 = vld [vmem:[%s6 + $0x7d0] sm:$0xff]
    %v1105 = vld [vmem:[%s6 + $0x7d8] sm:$0xff]
    %v1106 = vld [vmem:[%s6 + $0x7e0] sm:$0xff]
    %v1107 = vld [vmem:[%s6 + $0x7e8] sm:$0xff]
    %v1108 = vld [vmem:[%s6 + $0x7f0] sm:$0xff]
    %v1109 = vld [vmem:[%s6 + $0x7f8] sm:$0xff]
    %v1110 = vld [vmem:[%s6 + $0x800] sm:$0xff]
    %v1111 = vld [vmem:[%s6 + $0x808] sm:$0xff]
    %v1112 = vld [vmem:[%s6 + $0x810] sm:$0xff]
    %v1113 = vld [vmem:[%s6 + $0x818] sm:$0xff]
    %v1114 = vld [vmem:[%s6 + $0x820] sm:$0xff]
    %v1115 = vld [vmem:[%s6 + $0x828] sm:$0xff]
    %v1116 = vld [vmem:[%s6 + $0x830] sm:$0xff]
    %v1117 = vld [vmem:[%s6 + $0x838] sm:$0xff]
    %v1118 = vld [vmem:[%s6 + $0x840] sm:$0xff]
    %v1119 = vld [vmem:[%s6 + $0x848] sm:$0xff]
    %v1120 = vld [vmem:[%s6 + $0x850] sm:$0xff]
    %v1121 = vld [vmem:[%s6 + $0x858] sm:$0xff]
    %v1122 = vld [vmem:[%s6 + $0x860] sm:$0xff]
    %v1123 = vld [vmem:[%s6 + $0x868] sm:$0xff]
    %v1124 = vld [vmem:[%s6 + $0x870] sm:$0xff]
    %v1125 = vld [vmem:[%s6 + $0x878] sm:$0xff]
    %v1126 = vld [vmem:[%s6 + $0x880] sm:$0xff]
    %v1127 = vld [vmem:[%s6 + $0x888] sm:$0xff]
    %v1128 = vld [vmem:[%s6 + $0x890] sm:$0xff]
    %v1129 = vld [vmem:[%s6 + $0x898] sm:$0xff]
    %v1130 = vld [vmem:[%s6 + $0x8a0] sm:$0xff]
    %v1131 = vld [vmem:[%s6 + $0x8a8] sm:$0xff]
    %v1132 = vld [vmem:[%s6 + $0x8b0] sm:$0xff]
    %v1133 = vld [vmem:[%s6 + $0x8b8] sm:$0xff]
    %v1134 = vld [vmem:[%s6 + $0x8c0] sm:$0xff]
    %v1135 = vld [vmem:[%s6 + $0x8c8] sm:$0xff]
    %v1136 = vld [vmem:[%s6 + $0x8d0] sm:$0xff]
    %v1137 = vld [vmem:[%s6 + $0x8d8] sm:$0xff]
    %v1138 = vld [vmem:[%s6 + $0x8e0] sm:$0xff]
    %v1139 = vld [vmem:[%s6 + $0x8e8] sm:$0xff]
    %v1140 = vld [vmem:[%s6 + $0x8f0] sm:$0xff]
    %v1141 = vld [vmem:[%s6 + $0x8f8] sm:$0xff]
    %v1142 = vld [vmem:[%s6 + $0x900] sm:$0xff]
    %v1143 = vld [vmem:[%s6 + $0x908] sm:$0xff]
    %v1144 = vld [vmem:[%s6 + $0x910] sm:$0xff]
    %v1145 = vld [vmem:[%s6 + $0x918] sm:$0xff]
    %v1146 = vld [vmem:[%s6 + $0x920] sm:$0xff]
    %v1147 = vld [vmem:[%s6 + $0x928] sm:$0xff]
    %v1148 = vld [vmem:[%s6 + $0x930] sm:$0xff]
    %v1149 = vld [vmem:[%s6 + $0x938] sm:$0xff]
    %v1150 = vld [vmem:[%s6 + $0x940] sm:$0xff]
    %v1151 = vld [vmem:[%s6 + $0x948] sm:$0xff]
    %v1152 = vld [vmem:[%s6 + $0x950] sm:$0xff]
    %v1153 = vld [vmem:[%s6 + $0x958] sm:$0xff]
    %v1154 = vld [vmem:[%s6 + $0x960] sm:$0xff]
    %v1155 = vld [vmem:[%s6 + $0x968] sm:$0xff]
    %v1156 = vld [vmem:[%s6 + $0x970] sm:$0xff]
    %v1157 = vld [vmem:[%s6 + $0x978] sm:$0xff]
    %v1158 = vld [vmem:[%s6 + $0x980] sm:$0xff]
    %v1159 = vld [vmem:[%s6 + $0x988] sm:$0xff]
    %v1160 = vld [vmem:[%s6 + $0x990] sm:$0xff]
    %v1161 = vld [vmem:[%s6 + $0x998] sm:$0xff]
    %v1162 = vld [vmem:[%s6 + $0x9a0] sm:$0xff]
    %v1163 = vld [vmem:[%s6 + $0x9a8] sm:$0xff]
    %v1164 = vld [vmem:[%s6 + $0x9b0] sm:$0xff]
    %v1165 = vld [vmem:[%s6 + $0x9b8] sm:$0xff]
    %v1166 = vld [vmem:[%s6 + $0x9c0] sm:$0xff]
    %v1167 = vld [vmem:[%s6 + $0x9c8] sm:$0xff]
    %v1168 = vld [vmem:[%s6 + $0x9d0] sm:$0xff]
    %v1169 = vld [vmem:[%s6 + $0x9d8] sm:$0xff]
    %v1170 = vld [vmem:[%s6 + $0x9e0] sm:$0xff]
    %v1171 = vld [vmem:[%s6 + $0x9e8] sm:$0xff]
    %v1172 = vld [vmem:[%s6 + $0x9f0] sm:$0xff]
    %v1173 = vld [vmem:[%s6 + $0x9f8] sm:$0xff]
    %v1174 = vld [vmem:[%s6 + $0xa00] sm:$0xff]
    %v1175 = vld [vmem:[%s6 + $0xa08] sm:$0xff]
    %v1176 = vld [vmem:[%s6 + $0xa10] sm:$0xff]
    %v1177 = vld [vmem:[%s6 + $0xa18] sm:$0xff]
    %v1178 = vld [vmem:[%s6 + $0xa20] sm:$0xff]
    %v1179 = vld [vmem:[%s6 + $0xa28] sm:$0xff]
    %v1180 = vld [vmem:[%s6 + $0xa30] sm:$0xff]
    %v1181 = vld [vmem:[%s6 + $0xa38] sm:$0xff]
    %v1182 = vld [vmem:[%s6 + $0xa40] sm:$0xff]
    %v1183 = vld [vmem:[%s6 + $0xa48] sm:$0xff]
    %v1184 = vld [vmem:[%s6 + $0xa50] sm:$0xff]
    %v1185 = vld [vmem:[%s6 + $0xa58] sm:$0xff]
    %v1186 = vld [vmem:[%s6 + $0xa60] sm:$0xff]
    %v1187 = vld [vmem:[%s6 + $0xa68] sm:$0xff]
    %v1188 = vld [vmem:[%s6 + $0xa70] sm:$0xff]
    %v1189 = vld [vmem:[%s6 + $0xa78] sm:$0xff]
    %v1190 = vld [vmem:[%s6 + $0xa80] sm:$0xff]
    %v1191 = vld [vmem:[%s6 + $0xa88] sm:$0xff]
    %v1192 = vld [vmem:[%s6 + $0xa90] sm:$0xff]
    %v1193 = vld [vmem:[%s6 + $0xa98] sm:$0xff]
    %v1194 = vld [vmem:[%s6 + $0xaa0] sm:$0xff]
    %v1195 = vld [vmem:[%s6 + $0xaa8] sm:$0xff]
    %v1196 = vld [vmem:[%s6 + $0xab0] sm:$0xff]
    %v1197 = vld [vmem:[%s6 + $0xab8] sm:$0xff]
    %v1198 = vld [vmem:[%s6 + $0xac0] sm:$0xff]
    %v1199 = vld [vmem:[%s6 + $0xac8] sm:$0xff]
    %v1200 = vld [vmem:[%s6 + $0xad0] sm:$0xff]
    %v1201 = vld [vmem:[%s6 + $0xad8] sm:$0xff]
    %v1202 = vld [vmem:[%s6 + $0xae0] sm:$0xff]
    %v1203 = vld [vmem:[%s6 + $0xae8] sm:$0xff]
    %v1204 = vld [vmem:[%s6 + $0xaf0] sm:$0xff]
    %v1205 = vld [vmem:[%s6 + $0xaf8] sm:$0xff]
    %v1206 = vld [vmem:[%s6 + $0xb00] sm:$0xff]
    %v1207 = vld [vmem:[%s6 + $0xb08] sm:$0xff]
    %v1208 = vld [vmem:[%s6 + $0xb10] sm:$0xff]
    %v1209 = vld [vmem:[%s6 + $0xb18] sm:$0xff]
    %v1210 = vld [vmem:[%s6 + $0xb20] sm:$0xff]
    %v1211 = vld [vmem:[%s6 + $0xb28] sm:$0xff]
    %v1212 = vld [vmem:[%s6 + $0xb30] sm:$0xff]
    %v1213 = vld [vmem:[%s6 + $0xb38] sm:$0xff]
    %v1214 = vld [vmem:[%s6 + $0xb40] sm:$0xff]
    %v1215 = vld [vmem:[%s6 + $0xb48] sm:$0xff]
    %v1216 = vld [vmem:[%s6 + $0xb50] sm:$0xff]
    %v1217 = vld [vmem:[%s6 + $0xb58] sm:$0xff]
    %v1218 = vld [vmem:[%s6 + $0xb60] sm:$0xff]
    %v1219 = vld [vmem:[%s6 + $0xb68] sm:$0xff]
    %v1220 = vld [vmem:[%s6 + $0xb70] sm:$0xff]
    %v1221 = vld [vmem:[%s6 + $0xb78] sm:$0xff]
    %v1222 = vld [vmem:[%s6 + $0xb80] sm:$0xff]
    %v1223 = vld [vmem:[%s6 + $0xb88] sm:$0xff]
    %v1224 = vld [vmem:[%s6 + $0xb90] sm:$0xff]
    %v1225 = vld [vmem:[%s6 + $0xb98] sm:$0xff]
    %v1226 = vld [vmem:[%s6 + $0xba0] sm:$0xff]
    %v1227 = vld [vmem:[%s6 + $0xba8] sm:$0xff]
    %v1228 = vld [vmem:[%s6 + $0xbb0] sm:$0xff]
    %v1229 = vld [vmem:[%s6 + $0xbb8] sm:$0xff]
    %v1230 = vld [vmem:[%s6 + $0xbc0] sm:$0xff]
    %v1231 = vld [vmem:[%s6 + $0xbc8] sm:$0xff]
    %v1232 = vld [vmem:[%s6 + $0xbd0] sm:$0xff]
    %v1233 = vld [vmem:[%s6 + $0xbd8] sm:$0xff]
    %v1234 = vld [vmem:[%s6 + $0xbe0] sm:$0xff]
    %v1235 = vld [vmem:[%s6 + $0xbe8] sm:$0xff]
    %v1236 = vld [vmem:[%s6 + $0xbf0] sm:$0xff]
    %v1237 = vld [vmem:[%s6 + $0xbf8] sm:$0xff]
    %v1238 = vld [vmem:[%s6 + $0xc00] sm:$0xff]
    %v1239 = vld [vmem:[%s6 + $0xc08] sm:$0xff]
    %v1240 = vld [vmem:[%s6 + $0xc10] sm:$0xff]
    %v1241 = vld [vmem:[%s6 + $0xc18] sm:$0xff]
    %v1242 = vld [vmem:[%s6 + $0xc20] sm:$0xff]
    %v1243 = vld [vmem:[%s6 + $0xc28] sm:$0xff]
    %v1244 = vld [vmem:[%s6 + $0xc30] sm:$0xff]
    %v1245 = vld [vmem:[%s6 + $0xc38] sm:$0xff]
    %v1246 = vld [vmem:[%s6 + $0xc40] sm:$0xff]
    %v1247 = vld [vmem:[%s6 + $0xc48] sm:$0xff]
    %v1248 = vld [vmem:[%s6 + $0xc50] sm:$0xff]
    %v1249 = vld [vmem:[%s6 + $0xc58] sm:$0xff]
    %v1250 = vld [vmem:[%s6 + $0xc60] sm:$0xff]
    %v1251 = vld [vmem:[%s6 + $0xc68] sm:$0xff]
    %v1252 = vld [vmem:[%s6 + $0xc70] sm:$0xff]
    %v1253 = vld [vmem:[%s6 + $0xc78] sm:$0xff]
    %v1254 = vld [vmem:[%s6 + $0xc80] sm:$0xff]
    %v1255 = vld [vmem:[%s6 + $0xc88] sm:$0xff]
    %v1256 = vld [vmem:[%s6 + $0xc90] sm:$0xff]
    %v1257 = vld [vmem:[%s6 + $0xc98] sm:$0xff]
    %v1258 = vld [vmem:[%s6 + $0xca0] sm:$0xff]
    %v1259 = vld [vmem:[%s6 + $0xca8] sm:$0xff]
    %v1260 = vld [vmem:[%s6 + $0xcb0] sm:$0xff]
    %v1261 = vld [vmem:[%s6 + $0xcb8] sm:$0xff]
    %v1262 = vld [vmem:[%s6 + $0xcc0] sm:$0xff]
    %v1263 = vld [vmem:[%s6 + $0xcc8] sm:$0xff]
    %v1264 = vld [vmem:[%s6 + $0xcd0] sm:$0xff]
    %v1265 = vld [vmem:[%s6 + $0xcd8] sm:$0xff]
    %v1266 = vld [vmem:[%s6 + $0xce0] sm:$0xff]
    %v1267 = vld [vmem:[%s6 + $0xce8] sm:$0xff]
    %v1268 = vld [vmem:[%s6 + $0xcf0] sm:$0xff]
    %v1269 = vld [vmem:[%s6 + $0xcf8] sm:$0xff]
    %v1270 = vld [vmem:[%s6 + $0xd00] sm:$0xff]
    %v1271 = vld [vmem:[%s6 + $0xd08] sm:$0xff]
    %v1272 = vld [vmem:[%s6 + $0xd10] sm:$0xff]
    %v1273 = vld [vmem:[%s6 + $0xd18] sm:$0xff]
    %v1274 = vld [vmem:[%s6 + $0xd20] sm:$0xff]
    %v1275 = vld [vmem:[%s6 + $0xd28] sm:$0xff]
    %v1276 = vld [vmem:[%s6 + $0xd30] sm:$0xff]
    %v1277 = vld [vmem:[%s6 + $0xd38] sm:$0xff]
    %v1278 = vld [vmem:[%s6 + $0xd40] sm:$0xff]
    %v1279 = vld [vmem:[%s6 + $0xd48] sm:$0xff]
    %v1280 = vld [vmem:[%s6 + $0xd50] sm:$0xff]
    %v1281 = vld [vmem:[%s6 + $0xd58] sm:$0xff]
    %v1282 = vld [vmem:[%s6 + $0xd60] sm:$0xff]
    %v1283 = vld [vmem:[%s6 + $0xd68] sm:$0xff]
    %v1284 = vld [vmem:[%s6 + $0xd70] sm:$0xff]
    %v1285 = vld [vmem:[%s6 + $0xd78] sm:$0xff]
    %v1286 = vld [vmem:[%s6 + $0xd80] sm:$0xff]
    %v1287 = vld [vmem:[%s6 + $0xd88] sm:$0xff]
    %v1288 = vld [vmem:[%s6 + $0xd90] sm:$0xff]
    %v1289 = vld [vmem:[%s6 + $0xd98] sm:$0xff]
    %v1290 = vld [vmem:[%s6 + $0xda0] sm:$0xff]
    %v1291 = vld [vmem:[%s6 + $0xda8] sm:$0xff]
    %v1292 = vld [vmem:[%s6 + $0xdb0] sm:$0xff]
    %v1293 = vld [vmem:[%s6 + $0xdb8] sm:$0xff]
    %v1294 = vld [vmem:[%s6 + $0xdc0] sm:$0xff]
    %v1295 = vld [vmem:[%s6 + $0xdc8] sm:$0xff]
    %v1296 = vld [vmem:[%s6 + $0xdd0] sm:$0xff]
    %v1297 = vld [vmem:[%s6 + $0xdd8] sm:$0xff]
    %v1298 = vld [vmem:[%s6 + $0xde0] sm:$0xff]
    %v1299 = vld [vmem:[%s6 + $0xde8] sm:$0xff]
    %v1300 = vld [vmem:[%s6 + $0xdf0] sm:$0xff]
    %v1301 = vld [vmem:[%s6 + $0xdf8] sm:$0xff]
    %v1302 = vld [vmem:[%s6 + $0xe00] sm:$0xff]
    %v1303 = vld [vmem:[%s6 + $0xe08] sm:$0xff]
    %v1304 = vld [vmem:[%s6 + $0xe10] sm:$0xff]
    %v1305 = vld [vmem:[%s6 + $0xe18] sm:$0xff]
    %v1306 = vld [vmem:[%s6 + $0xe20] sm:$0xff]
    %v1307 = vld [vmem:[%s6 + $0xe28] sm:$0xff]
    %v1308 = vld [vmem:[%s6 + $0xe30] sm:$0xff]
    %v1309 = vld [vmem:[%s6 + $0xe38] sm:$0xff]
    %v1310 = vld [vmem:[%s6 + $0xe40] sm:$0xff]
    %v1311 = vld [vmem:[%s6 + $0xe48] sm:$0xff]
    %v1312 = vld [vmem:[%s6 + $0xe50] sm:$0xff]
    %v1313 = vld [vmem:[%s6 + $0xe58] sm:$0xff]
    %v1314 = vld [vmem:[%s6 + $0xe60] sm:$0xff]
    %v1315 = vld [vmem:[%s6 + $0xe68] sm:$0xff]
    %v1316 = vld [vmem:[%s6 + $0xe70] sm:$0xff]
    %v1317 = vld [vmem:[%s6 + $0xe78] sm:$0xff]
    %v1318 = vld [vmem:[%s6 + $0xe80] sm:$0xff]
    %v1319 = vld [vmem:[%s6 + $0xe88] sm:$0xff]
    %v1320 = vld [vmem:[%s6 + $0xe90] sm:$0xff]
    %v1321 = vld [vmem:[%s6 + $0xe98] sm:$0xff]
    %v1322 = vld [vmem:[%s6 + $0xea0] sm:$0xff]
    %v1323 = vld [vmem:[%s6 + $0xea8] sm:$0xff]
    %v1324 = vld [vmem:[%s6 + $0xeb0] sm:$0xff]
    %v1325 = vld [vmem:[%s6 + $0xeb8] sm:$0xff]
    %v1326 = vld [vmem:[%s6 + $0xec0] sm:$0xff]
    %v1327 = vld [vmem:[%s6 + $0xec8] sm:$0xff]
    %v1328 = vld [vmem:[%s6 + $0xed0] sm:$0xff]
    %v1329 = vld [vmem:[%s6 + $0xed8] sm:$0xff]
    %v1330 = vld [vmem:[%s6 + $0xee0] sm:$0xff]
    %v1331 = vld [vmem:[%s6 + $0xee8] sm:$0xff]
    %v1332 = vld [vmem:[%s6 + $0xef0] sm:$0xff]
    %v1333 = vld [vmem:[%s6 + $0xef8] sm:$0xff]
    %v1334 = vld [vmem:[%s6 + $0xf00] sm:$0xff]
    %v1335 = vld [vmem:[%s6 + $0xf08] sm:$0xff]
    %v1336 = vld [vmem:[%s6 + $0xf10] sm:$0xff]
    %v1337 = vld [vmem:[%s6 + $0xf18] sm:$0xff]
    %v1338 = vld [vmem:[%s6 + $0xf20] sm:$0xff]
    %v1339 = vld [vmem:[%s6 + $0xf28] sm:$0xff]
    %v1340 = vld [vmem:[%s6 + $0xf30] sm:$0xff]
    %v1341 = vld [vmem:[%s6 + $0xf38] sm:$0xff]
    %v1342 = vld [vmem:[%s6 + $0xf40] sm:$0xff]
    %v1343 = vld [vmem:[%s6 + $0xf48] sm:$0xff]
    %v1344 = vld [vmem:[%s6 + $0xf50] sm:$0xff]
    %v1345 = vld [vmem:[%s6 + $0xf58] sm:$0xff]
    %v1346 = vld [vmem:[%s6 + $0xf60] sm:$0xff]
    %v1347 = vld [vmem:[%s6 + $0xf68] sm:$0xff]
    %v1348 = vld [vmem:[%s6 + $0xf70] sm:$0xff]
    %v1349 = vld [vmem:[%s6 + $0xf78] sm:$0xff]
    %v1350 = vld [vmem:[%s6 + $0xf80] sm:$0xff]
    %v1351 = vld [vmem:[%s6 + $0xf88] sm:$0xff]
    %v1352 = vld [vmem:[%s6 + $0xf90] sm:$0xff]
    %v1353 = vld [vmem:[%s6 + $0xf98] sm:$0xff]
    %v1354 = vld [vmem:[%s6 + $0xfa0] sm:$0xff]
    %v1355 = vld [vmem:[%s6 + $0xfa8] sm:$0xff]
    %v1356 = vld [vmem:[%s6 + $0xfb0] sm:$0xff]
    %v1357 = vld [vmem:[%s6 + $0xfb8] sm:$0xff]
    %v1358 = vld [vmem:[%s6 + $0xfc0] sm:$0xff]
    %v1359 = vld [vmem:[%s6 + $0xfc8] sm:$0xff]
    %v1360 = vld [vmem:[%s6 + $0xfd0] sm:$0xff]
    %v1361 = vld [vmem:[%s6 + $0xfd8] sm:$0xff]
    %v1362 = vld [vmem:[%s6 + $0xfe0] sm:$0xff]
    %v1363 = vld [vmem:[%s6 + $0xfe8] sm:$0xff]
    %v1364 = vld [vmem:[%s6 + $0xff0] sm:$0xff]
    %v1365 = vld [vmem:[%s6 + $0xff8] sm:$0xff]
    %v1366 = vpack.c.bf16 %v828, %v828
    %v1367 = vld [vmem:[%s7] sm:$0xff]
    %v1368 = vld [vmem:[%s7 + $0x8] sm:$0xff]
    %v1369 = vld [vmem:[%s7 + $0x10] sm:$0xff]
    %v1370 = vld [vmem:[%s7 + $0x18] sm:$0xff]
    %v1371 = vld [vmem:[%s7 + $0x20] sm:$0xff]
    %v1372 = vld [vmem:[%s7 + $0x28] sm:$0xff]
    %v1373 = vld [vmem:[%s7 + $0x30] sm:$0xff]
    %v1374 = vld [vmem:[%s7 + $0x38] sm:$0xff]
    %v1375 = vld [vmem:[%s7 + $0x40] sm:$0xff]
    %v1376 = vld [vmem:[%s7 + $0x48] sm:$0xff]
    %v1377 = vld [vmem:[%s7 + $0x50] sm:$0xff]
    %v1378 = vld [vmem:[%s7 + $0x58] sm:$0xff]
    %v1379 = vld [vmem:[%s7 + $0x60] sm:$0xff]
    %v1380 = vld [vmem:[%s7 + $0x68] sm:$0xff]
    %v1381 = vld [vmem:[%s7 + $0x70] sm:$0xff]
    %v1382 = vld [vmem:[%s7 + $0x78] sm:$0xff]
    %v1383 = vld [vmem:[%s7 + $0x80] sm:$0xff]
    %v1384 = vld [vmem:[%s7 + $0x88] sm:$0xff]
    %v1385 = vld [vmem:[%s7 + $0x90] sm:$0xff]
    %v1386 = vld [vmem:[%s7 + $0x98] sm:$0xff]
    %v1387 = vld [vmem:[%s7 + $0xa0] sm:$0xff]
    %v1388 = vld [vmem:[%s7 + $0xa8] sm:$0xff]
    %v1389 = vld [vmem:[%s7 + $0xb0] sm:$0xff]
    %v1390 = vld [vmem:[%s7 + $0xb8] sm:$0xff]
    %v1391 = vld [vmem:[%s7 + $0xc0] sm:$0xff]
    %v1392 = vld [vmem:[%s7 + $0xc8] sm:$0xff]
    %v1393 = vld [vmem:[%s7 + $0xd0] sm:$0xff]
    %v1394 = vld [vmem:[%s7 + $0xd8] sm:$0xff]
    %v1395 = vld [vmem:[%s7 + $0xe0] sm:$0xff]
    %v1396 = vld [vmem:[%s7 + $0xe8] sm:$0xff]
    %v1397 = vld [vmem:[%s7 + $0xf0] sm:$0xff]
    %v1398 = vld [vmem:[%s7 + $0xf8] sm:$0xff]
    %v1431 = vunpack.c.l.b16 %v1367
    %v1432 = vunpack.c.h.b16 %v1367
    %v1433 = vunpack.c.l.b16 %v1368
    %v1434 = vunpack.c.h.b16 %v1368
    %v1435 = vunpack.c.l.b16 %v1369
    %v1436 = vunpack.c.h.b16 %v1369
    %v1437 = vunpack.c.l.b16 %v1370
    %v1438 = vunpack.c.h.b16 %v1370
    %v1439 = vunpack.c.l.b16 %v1371
    %v1440 = vunpack.c.h.b16 %v1371
    %v1441 = vunpack.c.l.b16 %v1372
    %v1442 = vunpack.c.h.b16 %v1372
    %v1443 = vunpack.c.l.b16 %v1373
    %v1444 = vunpack.c.h.b16 %v1373
    %v1445 = vunpack.c.l.b16 %v1374
    %v1446 = vunpack.c.h.b16 %v1374
    %v1447 = vunpack.c.l.b16 %v1375
    %v1448 = vunpack.c.h.b16 %v1375
    %v1449 = vunpack.c.l.b16 %v1376
    %v1450 = vunpack.c.h.b16 %v1376
    %v1451 = vunpack.c.l.b16 %v1377
    %v1452 = vunpack.c.h.b16 %v1377
    %v1453 = vunpack.c.l.b16 %v1378
    %v1454 = vunpack.c.h.b16 %v1378
    %v1455 = vunpack.c.l.b16 %v1379
    %v1456 = vunpack.c.h.b16 %v1379
    %v1457 = vunpack.c.l.b16 %v1380
    %v1458 = vunpack.c.h.b16 %v1380
    %v1459 = vunpack.c.l.b16 %v1381
    %v1460 = vunpack.c.h.b16 %v1381
    %v1461 = vunpack.c.l.b16 %v1382
    %v1462 = vunpack.c.h.b16 %v1382
    %v1463 = vunpack.c.l.b16 %v1383
    %v1464 = vunpack.c.h.b16 %v1383
    %v1465 = vunpack.c.l.b16 %v1384
    %v1466 = vunpack.c.h.b16 %v1384
    %v1467 = vunpack.c.l.b16 %v1385
    %v1468 = vunpack.c.h.b16 %v1385
    %v1469 = vunpack.c.l.b16 %v1386
    %v1470 = vunpack.c.h.b16 %v1386
    %v1471 = vunpack.c.l.b16 %v1387
    %v1472 = vunpack.c.h.b16 %v1387
    %v1473 = vunpack.c.l.b16 %v1388
    %v1474 = vunpack.c.h.b16 %v1388
    %v1475 = vunpack.c.l.b16 %v1389
    %v1476 = vunpack.c.h.b16 %v1389
    %v1477 = vunpack.c.l.b16 %v1390
    %v1478 = vunpack.c.h.b16 %v1390
    %v1479 = vunpack.c.l.b16 %v1391
    %v1480 = vunpack.c.h.b16 %v1391
    %v1481 = vunpack.c.l.b16 %v1392
    %v1482 = vunpack.c.h.b16 %v1392
    %v1483 = vunpack.c.l.b16 %v1393
    %v1484 = vunpack.c.h.b16 %v1393
    %v1485 = vunpack.c.l.b16 %v1394
    %v1486 = vunpack.c.h.b16 %v1394
    %v1487 = vunpack.c.l.b16 %v1395
    %v1488 = vunpack.c.h.b16 %v1395
    %v1489 = vunpack.c.l.b16 %v1396
    %v1490 = vunpack.c.h.b16 %v1396
    %v1491 = vunpack.c.l.b16 %v1397
    %v1492 = vunpack.c.h.b16 %v1397
    %v1493 = vunpack.c.l.b16 %v1398
    %v1494 = vunpack.c.h.b16 %v1398
    %v1495 = vpack.c.b16 %v1447, %v1431
    %v1496 = vpack.c.b16 %v1448, %v1432
    %v1497 = vpack.c.b16 %v1449, %v1433
    %v1498 = vpack.c.b16 %v1450, %v1434
    %v1499 = vpack.c.b16 %v1451, %v1435
    %v1500 = vpack.c.b16 %v1452, %v1436
    %v1501 = vpack.c.b16 %v1453, %v1437
    %v1502 = vpack.c.b16 %v1454, %v1438
    %v1503 = vpack.c.b16 %v1455, %v1439
    %v1504 = vpack.c.b16 %v1456, %v1440
    %v1505 = vpack.c.b16 %v1457, %v1441
    %v1506 = vpack.c.b16 %v1458, %v1442
    %v1507 = vpack.c.b16 %v1459, %v1443
    %v1508 = vpack.c.b16 %v1460, %v1444
    %v1509 = vpack.c.b16 %v1461, %v1445
    %v1510 = vpack.c.b16 %v1462, %v1446
    %v1511 = vpack.c.b16 %v1479, %v1463
    %v1512 = vpack.c.b16 %v1480, %v1464
    %v1513 = vpack.c.b16 %v1481, %v1465
    %v1514 = vpack.c.b16 %v1482, %v1466
    %v1515 = vpack.c.b16 %v1483, %v1467
    %v1516 = vpack.c.b16 %v1484, %v1468
    %v1517 = vpack.c.b16 %v1485, %v1469
    %v1518 = vpack.c.b16 %v1486, %v1470
    %v1519 = vpack.c.b16 %v1487, %v1471
    %v1520 = vpack.c.b16 %v1488, %v1472
    %v1521 = vpack.c.b16 %v1489, %v1473
    %v1522 = vpack.c.b16 %v1490, %v1474
    %v1523 = vpack.c.b16 %v1491, %v1475
    %v1524 = vpack.c.b16 %v1492, %v1476
    %v1525 = vpack.c.b16 %v1493, %v1477
    %v1526 = vpack.c.b16 %v1494, %v1478
    %vm1559 = vcmask 261120
    %v1561 = vsel %vm1559, %v1366, 0
    %1563 = vmatprep.subr.bf16.mxu0 0
    %1564 = vmatpush1.bf16.msra.mxu0 0
    %1565 = vmatprep.subr.bf16.mxu0 0
    %1566 = vmatpush1.bf16.msra.mxu0 0
    %1567 = vmatprep.subr.bf16.mxu0 0
    %1568 = vmatpush1.bf16.msra.mxu0 0
    %1569 = vmatprep.subr.bf16.mxu0 0
    %1570 = vmatpush1.bf16.msra.mxu0 0
    %1571 = vmatprep.subr.bf16.mxu0 0
    %1572 = vmatpush1.bf16.msra.mxu0 0
    %1573 = vmatprep.subr.bf16.mxu0 0
    %1574 = vmatpush1.bf16.msra.mxu0 0
    %1575 = vmatprep.subr.bf16.mxu0 %v1512
    %1576 = vmatpush1.bf16.msra.mxu0 %v1511
    %1577 = vmatprep.subr.bf16.mxu0 %v1496
    %1578 = vmatpush1.bf16.msra.mxu0 %v1495
    %1579 = vmatprep.subr.bf16.mxu0 0
    %1580 = vmatpush2.bf16.msra.mxu0 0
    %1581 = vmatprep.subr.bf16.mxu0 0
    %1582 = vmatpush2.bf16.msra.mxu0 0
    %1583 = vmatprep.subr.bf16.mxu0 0
    %1584 = vmatpush2.bf16.msra.mxu0 0
    %1585 = vmatprep.subr.bf16.mxu0 0
    %1586 = vmatpush2.bf16.msra.mxu0 0
    %1587 = vmatprep.subr.bf16.mxu0 0
    %1588 = vmatpush2.bf16.msra.mxu0 0
    %1589 = vmatprep.subr.bf16.mxu0 0
    %1590 = vmatpush2.bf16.msra.mxu0 0
    %1591 = vmatprep.subr.bf16.mxu0 0
    %1592 = vmatpush2.bf16.msra.mxu0 0
    %1593 = vmatprep.subr.bf16.mxu0 0
    %1594 = vmatpush2.bf16.msra.mxu0 0
    %1595 = vmatprep.mubr.bf16.mxu0 0
    %1596 = vmatmul.mubr.bf16.gmra.mxu0 %v1561
    %v1597 = vpop.f32.mrf.mxu0
    %v1598 = vadd.f32 0.0, %v1597
    %v1599 = vpop.f32.mrf.mxu0
    %v1600 = vadd.f32 0.0, %v1599
    %v1601 = vpop.f32.mrf.mxu0
    %v1602 = vpop.f32.mrf.mxu0
    %1603 = vdwg.mxu0
    %1604 = vmatprep.subr.bf16.mxu0 0
    %1605 = vmatpush1.bf16.msra.mxu0 0
    %1606 = vmatprep.subr.bf16.mxu0 0
    %1607 = vmatpush1.bf16.msra.mxu0 0
    %1608 = vmatprep.subr.bf16.mxu0 0
    %1609 = vmatpush1.bf16.msra.mxu0 0
    %1610 = vmatprep.subr.bf16.mxu0 0
    %1611 = vmatpush1.bf16.msra.mxu0 0
    %1612 = vmatprep.subr.bf16.mxu0 0
    %1613 = vmatpush1.bf16.msra.mxu0 0
    %1614 = vmatprep.subr.bf16.mxu0 0
    %1615 = vmatpush1.bf16.msra.mxu0 0
    %1616 = vmatprep.subr.bf16.mxu0 %v1514
    %1617 = vmatpush1.bf16.msra.mxu0 %v1513
    %1618 = vmatprep.subr.bf16.mxu0 %v1498
    %1619 = vmatpush1.bf16.msra.mxu0 %v1497
    %1620 = vmatprep.subr.bf16.mxu0 0
    %1621 = vmatpush2.bf16.msra.mxu0 0
    %1622 = vmatprep.subr.bf16.mxu0 0
    %1623 = vmatpush2.bf16.msra.mxu0 0
    %1624 = vmatprep.subr.bf16.mxu0 0
    %1625 = vmatpush2.bf16.msra.mxu0 0
    %1626 = vmatprep.subr.bf16.mxu0 0
    %1627 = vmatpush2.bf16.msra.mxu0 0
    %1628 = vmatprep.subr.bf16.mxu0 0
    %1629 = vmatpush2.bf16.msra.mxu0 0
    %1630 = vmatprep.subr.bf16.mxu0 0
    %1631 = vmatpush2.bf16.msra.mxu0 0
    %1632 = vmatprep.subr.bf16.mxu0 0
    %1633 = vmatpush2.bf16.msra.mxu0 0
    %1634 = vmatprep.subr.bf16.mxu0 0
    %1635 = vmatpush2.bf16.msra.mxu0 0
    %1636 = vmatprep.mubr.bf16.mxu0 0
    %1637 = vmatmul.mubr.bf16.gmra.mxu0 %v1561
    %v1638 = vpop.f32.mrf.mxu0
    %v1639 = vadd.f32 0.0, %v1638
    %v1640 = vpop.f32.mrf.mxu0
    %v1641 = vadd.f32 0.0, %v1640
    %v1642 = vpop.f32.mrf.mxu0
    %v1643 = vpop.f32.mrf.mxu0
    %1644 = vdwg.mxu0
    %1645 = vmatprep.subr.bf16.mxu0 0
    %1646 = vmatpush1.bf16.msra.mxu0 0
    %1647 = vmatprep.subr.bf16.mxu0 0
    %1648 = vmatpush1.bf16.msra.mxu0 0
    %1649 = vmatprep.subr.bf16.mxu0 0
    %1650 = vmatpush1.bf16.msra.mxu0 0
    %1651 = vmatprep.subr.bf16.mxu0 0
    %1652 = vmatpush1.bf16.msra.mxu0 0
    %1653 = vmatprep.subr.bf16.mxu0 0
    %1654 = vmatpush1.bf16.msra.mxu0 0
    %1655 = vmatprep.subr.bf16.mxu0 0
    %1656 = vmatpush1.bf16.msra.mxu0 0
    %1657 = vmatprep.subr.bf16.mxu0 %v1516
    %1658 = vmatpush1.bf16.msra.mxu0 %v1515
    %1659 = vmatprep.subr.bf16.mxu0 %v1500
    %1660 = vmatpush1.bf16.msra.mxu0 %v1499
    %1661 = vmatprep.subr.bf16.mxu0 0
    %1662 = vmatpush2.bf16.msra.mxu0 0
    %1663 = vmatprep.subr.bf16.mxu0 0
    %1664 = vmatpush2.bf16.msra.mxu0 0
    %1665 = vmatprep.subr.bf16.mxu0 0
    %1666 = vmatpush2.bf16.msra.mxu0 0
    %1667 = vmatprep.subr.bf16.mxu0 0
    %1668 = vmatpush2.bf16.msra.mxu0 0
    %1669 = vmatprep.subr.bf16.mxu0 0
    %1670 = vmatpush2.bf16.msra.mxu0 0
    %1671 = vmatprep.subr.bf16.mxu0 0
    %1672 = vmatpush2.bf16.msra.mxu0 0
    %1673 = vmatprep.subr.bf16.mxu0 0
    %1674 = vmatpush2.bf16.msra.mxu0 0
    %1675 = vmatprep.subr.bf16.mxu0 0
    %1676 = vmatpush2.bf16.msra.mxu0 0
    %1677 = vmatprep.mubr.bf16.mxu0 0
    %1678 = vmatmul.mubr.bf16.gmra.mxu0 %v1561
    %v1679 = vpop.f32.mrf.mxu0
    %v1680 = vadd.f32 0.0, %v1679
    %v1681 = vpop.f32.mrf.mxu0
    %v1682 = vadd.f32 0.0, %v1681
    %v1683 = vpop.f32.mrf.mxu0
    %v1684 = vpop.f32.mrf.mxu0
    %1685 = vdwg.mxu0
    %1686 = vmatprep.subr.bf16.mxu0 0
    %1687 = vmatpush1.bf16.msra.mxu0 0
    %1688 = vmatprep.subr.bf16.mxu0 0
    %1689 = vmatpush1.bf16.msra.mxu0 0
    %1690 = vmatprep.subr.bf16.mxu0 0
    %1691 = vmatpush1.bf16.msra.mxu0 0
    %1692 = vmatprep.subr.bf16.mxu0 0
    %1693 = vmatpush1.bf16.msra.mxu0 0
    %1694 = vmatprep.subr.bf16.mxu0 0
    %1695 = vmatpush1.bf16.msra.mxu0 0
    %1696 = vmatprep.subr.bf16.mxu0 0
    %1697 = vmatpush1.bf16.msra.mxu0 0
    %1698 = vmatprep.subr.bf16.mxu0 %v1518
    %1699 = vmatpush1.bf16.msra.mxu0 %v1517
    %1700 = vmatprep.subr.bf16.mxu0 %v1502
    %1701 = vmatpush1.bf16.msra.mxu0 %v1501
    %1702 = vmatprep.subr.bf16.mxu0 0
    %1703 = vmatpush2.bf16.msra.mxu0 0
    %1704 = vmatprep.subr.bf16.mxu0 0
    %1705 = vmatpush2.bf16.msra.mxu0 0
    %1706 = vmatprep.subr.bf16.mxu0 0
    %1707 = vmatpush2.bf16.msra.mxu0 0
    %1708 = vmatprep.subr.bf16.mxu0 0
    %1709 = vmatpush2.bf16.msra.mxu0 0
    %1710 = vmatprep.subr.bf16.mxu0 0
    %1711 = vmatpush2.bf16.msra.mxu0 0
    %1712 = vmatprep.subr.bf16.mxu0 0
    %1713 = vmatpush2.bf16.msra.mxu0 0
    %1714 = vmatprep.subr.bf16.mxu0 0
    %1715 = vmatpush2.bf16.msra.mxu0 0
    %1716 = vmatprep.subr.bf16.mxu0 0
    %1717 = vmatpush2.bf16.msra.mxu0 0
    %1718 = vmatprep.mubr.bf16.mxu0 0
    %1719 = vmatmul.mubr.bf16.gmra.mxu0 %v1561
    %v1720 = vpop.f32.mrf.mxu0
    %v1721 = vadd.f32 0.0, %v1720
    %v1722 = vpop.f32.mrf.mxu0
    %v1723 = vadd.f32 0.0, %v1722
    %v1724 = vpop.f32.mrf.mxu0
    %v1725 = vpop.f32.mrf.mxu0
    %1726 = vdwg.mxu0
    %1727 = vmatprep.subr.bf16.mxu0 0
    %1728 = vmatpush1.bf16.msra.mxu0 0
    %1729 = vmatprep.subr.bf16.mxu0 0
    %1730 = vmatpush1.bf16.msra.mxu0 0
    %1731 = vmatprep.subr.bf16.mxu0 0
    %1732 = vmatpush1.bf16.msra.mxu0 0
    %1733 = vmatprep.subr.bf16.mxu0 0
    %1734 = vmatpush1.bf16.msra.mxu0 0
    %1735 = vmatprep.subr.bf16.mxu0 0
    %1736 = vmatpush1.bf16.msra.mxu0 0
    %1737 = vmatprep.subr.bf16.mxu0 0
    %1738 = vmatpush1.bf16.msra.mxu0 0
    %1739 = vmatprep.subr.bf16.mxu0 %v1520
    %1740 = vmatpush1.bf16.msra.mxu0 %v1519
    %1741 = vmatprep.subr.bf16.mxu0 %v1504
    %1742 = vmatpush1.bf16.msra.mxu0 %v1503
    %1743 = vmatprep.subr.bf16.mxu0 0
    %1744 = vmatpush2.bf16.msra.mxu0 0
    %1745 = vmatprep.subr.bf16.mxu0 0
    %1746 = vmatpush2.bf16.msra.mxu0 0
    %1747 = vmatprep.subr.bf16.mxu0 0
    %1748 = vmatpush2.bf16.msra.mxu0 0
    %1749 = vmatprep.subr.bf16.mxu0 0
    %1750 = vmatpush2.bf16.msra.mxu0 0
    %1751 = vmatprep.subr.bf16.mxu0 0
    %1752 = vmatpush2.bf16.msra.mxu0 0
    %1753 = vmatprep.subr.bf16.mxu0 0
    %1754 = vmatpush2.bf16.msra.mxu0 0
    %1755 = vmatprep.subr.bf16.mxu0 0
    %1756 = vmatpush2.bf16.msra.mxu0 0
    %1757 = vmatprep.subr.bf16.mxu0 0
    %1758 = vmatpush2.bf16.msra.mxu0 0
    %1759 = vmatprep.mubr.bf16.mxu0 0
    %1760 = vmatmul.mubr.bf16.gmra.mxu0 %v1561
    %v1761 = vpop.f32.mrf.mxu0
    %v1762 = vadd.f32 0.0, %v1761
    %v1763 = vpop.f32.mrf.mxu0
    %v1764 = vadd.f32 0.0, %v1763
    %v1765 = vpop.f32.mrf.mxu0
    %v1766 = vpop.f32.mrf.mxu0
    %1767 = vdwg.mxu0
    %1768 = vmatprep.subr.bf16.mxu0 0
    %1769 = vmatpush1.bf16.msra.mxu0 0
    %1770 = vmatprep.subr.bf16.mxu0 0
    %1771 = vmatpush1.bf16.msra.mxu0 0
    %1772 = vmatprep.subr.bf16.mxu0 0
    %1773 = vmatpush1.bf16.msra.mxu0 0
    %1774 = vmatprep.subr.bf16.mxu0 0
    %1775 = vmatpush1.bf16.msra.mxu0 0
    %1776 = vmatprep.subr.bf16.mxu0 0
    %1777 = vmatpush1.bf16.msra.mxu0 0
    %1778 = vmatprep.subr.bf16.mxu0 0
    %1779 = vmatpush1.bf16.msra.mxu0 0
    %1780 = vmatprep.subr.bf16.mxu0 %v1522
    %1781 = vmatpush1.bf16.msra.mxu0 %v1521
    %1782 = vmatprep.subr.bf16.mxu0 %v1506
    %1783 = vmatpush1.bf16.msra.mxu0 %v1505
    %1784 = vmatprep.subr.bf16.mxu0 0
    %1785 = vmatpush2.bf16.msra.mxu0 0
    %1786 = vmatprep.subr.bf16.mxu0 0
    %1787 = vmatpush2.bf16.msra.mxu0 0
    %1788 = vmatprep.subr.bf16.mxu0 0
    %1789 = vmatpush2.bf16.msra.mxu0 0
    %1790 = vmatprep.subr.bf16.mxu0 0
    %1791 = vmatpush2.bf16.msra.mxu0 0
    %1792 = vmatprep.subr.bf16.mxu0 0
    %1793 = vmatpush2.bf16.msra.mxu0 0
    %1794 = vmatprep.subr.bf16.mxu0 0
    %1795 = vmatpush2.bf16.msra.mxu0 0
    %1796 = vmatprep.subr.bf16.mxu0 0
    %1797 = vmatpush2.bf16.msra.mxu0 0
    %1798 = vmatprep.subr.bf16.mxu0 0
    %1799 = vmatpush2.bf16.msra.mxu0 0
    %1800 = vmatprep.mubr.bf16.mxu0 0
    %1801 = vmatmul.mubr.bf16.gmra.mxu0 %v1561
    %v1802 = vpop.f32.mrf.mxu0
    %v1803 = vadd.f32 0.0, %v1802
    %v1804 = vpop.f32.mrf.mxu0
    %v1805 = vadd.f32 0.0, %v1804
    %v1806 = vpop.f32.mrf.mxu0
    %v1807 = vpop.f32.mrf.mxu0
    %1808 = vdwg.mxu0
    %1809 = vmatprep.subr.bf16.mxu0 0
    %1810 = vmatpush1.bf16.msra.mxu0 0
    %1811 = vmatprep.subr.bf16.mxu0 0
    %1812 = vmatpush1.bf16.msra.mxu0 0
    %1813 = vmatprep.subr.bf16.mxu0 0
    %1814 = vmatpush1.bf16.msra.mxu0 0
    %1815 = vmatprep.subr.bf16.mxu0 0
    %1816 = vmatpush1.bf16.msra.mxu0 0
    %1817 = vmatprep.subr.bf16.mxu0 0
    %1818 = vmatpush1.bf16.msra.mxu0 0
    %1819 = vmatprep.subr.bf16.mxu0 0
    %1820 = vmatpush1.bf16.msra.mxu0 0
    %1821 = vmatprep.subr.bf16.mxu0 %v1524
    %1822 = vmatpush1.bf16.msra.mxu0 %v1523
    %1823 = vmatprep.subr.bf16.mxu0 %v1508
    %1824 = vmatpush1.bf16.msra.mxu0 %v1507
    %1825 = vmatprep.subr.bf16.mxu0 0
    %1826 = vmatpush2.bf16.msra.mxu0 0
    %1827 = vmatprep.subr.bf16.mxu0 0
    %1828 = vmatpush2.bf16.msra.mxu0 0
    %1829 = vmatprep.subr.bf16.mxu0 0
    %1830 = vmatpush2.bf16.msra.mxu0 0
    %1831 = vmatprep.subr.bf16.mxu0 0
    %1832 = vmatpush2.bf16.msra.mxu0 0
    %1833 = vmatprep.subr.bf16.mxu0 0
    %1834 = vmatpush2.bf16.msra.mxu0 0
    %1835 = vmatprep.subr.bf16.mxu0 0
    %1836 = vmatpush2.bf16.msra.mxu0 0
    %1837 = vmatprep.subr.bf16.mxu0 0
    %1838 = vmatpush2.bf16.msra.mxu0 0
    %1839 = vmatprep.subr.bf16.mxu0 0
    %1840 = vmatpush2.bf16.msra.mxu0 0
    %1841 = vmatprep.mubr.bf16.mxu0 0
    %1842 = vmatmul.mubr.bf16.gmra.mxu0 %v1561
    %v1843 = vpop.f32.mrf.mxu0
    %v1844 = vadd.f32 0.0, %v1843
    %v1845 = vpop.f32.mrf.mxu0
    %v1846 = vadd.f32 0.0, %v1845
    %v1847 = vpop.f32.mrf.mxu0
    %v1848 = vpop.f32.mrf.mxu0
    %1849 = vdwg.mxu0
    %1850 = vmatprep.subr.bf16.mxu0 0
    %1851 = vmatpush1.bf16.msra.mxu0 0
    %1852 = vmatprep.subr.bf16.mxu0 0
    %1853 = vmatpush1.bf16.msra.mxu0 0
    %1854 = vmatprep.subr.bf16.mxu0 0
    %1855 = vmatpush1.bf16.msra.mxu0 0
    %1856 = vmatprep.subr.bf16.mxu0 0
    %1857 = vmatpush1.bf16.msra.mxu0 0
    %1858 = vmatprep.subr.bf16.mxu0 0
    %1859 = vmatpush1.bf16.msra.mxu0 0
    %1860 = vmatprep.subr.bf16.mxu0 0
    %1861 = vmatpush1.bf16.msra.mxu0 0
    %1862 = vmatprep.subr.bf16.mxu0 %v1526
    %1863 = vmatpush1.bf16.msra.mxu0 %v1525
    %1864 = vmatprep.subr.bf16.mxu0 %v1510
    %1865 = vmatpush1.bf16.msra.mxu0 %v1509
    %1866 = vmatprep.subr.bf16.mxu0 0
    %1867 = vmatpush2.bf16.msra.mxu0 0
    %1868 = vmatprep.subr.bf16.mxu0 0
    %1869 = vmatpush2.bf16.msra.mxu0 0
    %1870 = vmatprep.subr.bf16.mxu0 0
    %1871 = vmatpush2.bf16.msra.mxu0 0
    %1872 = vmatprep.subr.bf16.mxu0 0
    %1873 = vmatpush2.bf16.msra.mxu0 0
    %1874 = vmatprep.subr.bf16.mxu0 0
    %1875 = vmatpush2.bf16.msra.mxu0 0
    %1876 = vmatprep.subr.bf16.mxu0 0
    %1877 = vmatpush2.bf16.msra.mxu0 0
    %1878 = vmatprep.subr.bf16.mxu0 0
    %1879 = vmatpush2.bf16.msra.mxu0 0
    %1880 = vmatprep.subr.bf16.mxu0 0
    %1881 = vmatpush2.bf16.msra.mxu0 0
    %1882 = vmatprep.mubr.bf16.mxu0 0
    %1883 = vmatmul.mubr.bf16.gmra.mxu0 %v1561
    %v1884 = vpop.f32.mrf.mxu0
    %v1885 = vadd.f32 0.0, %v1884
    %v1886 = vpop.f32.mrf.mxu0
    %v1887 = vadd.f32 0.0, %v1886
    %v1888 = vpop.f32.mrf.mxu0
    %v1889 = vpop.f32.mrf.mxu0
    %1890 = vdwg.mxu0
    %v2403 = vunpack.c.l.b16 %v854
    %v2404 = vunpack.c.h.b16 %v854
    %v2405 = vunpack.c.l.b16 %v855
    %v2406 = vunpack.c.h.b16 %v855
    %v2407 = vunpack.c.l.b16 %v856
    %v2408 = vunpack.c.h.b16 %v856
    %v2409 = vunpack.c.l.b16 %v857
    %v2410 = vunpack.c.h.b16 %v857
    %v2411 = vunpack.c.l.b16 %v858
    %v2412 = vunpack.c.h.b16 %v858
    %v2413 = vunpack.c.l.b16 %v859
    %v2414 = vunpack.c.h.b16 %v859
    %v2415 = vunpack.c.l.b16 %v860
    %v2416 = vunpack.c.h.b16 %v860
    %v2417 = vunpack.c.l.b16 %v861
    %v2418 = vunpack.c.h.b16 %v861
    %v2419 = vunpack.c.l.b16 %v862
    %v2420 = vunpack.c.h.b16 %v862
    %v2421 = vunpack.c.l.b16 %v863
    %v2422 = vunpack.c.h.b16 %v863
    %v2423 = vunpack.c.l.b16 %v864
    %v2424 = vunpack.c.h.b16 %v864
    %v2425 = vunpack.c.l.b16 %v865
    %v2426 = vunpack.c.h.b16 %v865
    %v2427 = vunpack.c.l.b16 %v866
    %v2428 = vunpack.c.h.b16 %v866
    %v2429 = vunpack.c.l.b16 %v867
    %v2430 = vunpack.c.h.b16 %v867
    %v2431 = vunpack.c.l.b16 %v868
    %v2432 = vunpack.c.h.b16 %v868
    %v2433 = vunpack.c.l.b16 %v869
    %v2434 = vunpack.c.h.b16 %v869
    %v2435 = vunpack.c.l.b16 %v870
    %v2436 = vunpack.c.h.b16 %v870
    %v2437 = vunpack.c.l.b16 %v871
    %v2438 = vunpack.c.h.b16 %v871
    %v2439 = vunpack.c.l.b16 %v872
    %v2440 = vunpack.c.h.b16 %v872
    %v2441 = vunpack.c.l.b16 %v873
    %v2442 = vunpack.c.h.b16 %v873
    %v2443 = vunpack.c.l.b16 %v874
    %v2444 = vunpack.c.h.b16 %v874
    %v2445 = vunpack.c.l.b16 %v875
    %v2446 = vunpack.c.h.b16 %v875
    %v2447 = vunpack.c.l.b16 %v876
    %v2448 = vunpack.c.h.b16 %v876
    %v2449 = vunpack.c.l.b16 %v877
    %v2450 = vunpack.c.h.b16 %v877
    %v2451 = vunpack.c.l.b16 %v878
    %v2452 = vunpack.c.h.b16 %v878
    %v2453 = vunpack.c.l.b16 %v879
    %v2454 = vunpack.c.h.b16 %v879
    %v2455 = vunpack.c.l.b16 %v880
    %v2456 = vunpack.c.h.b16 %v880
    %v2457 = vunpack.c.l.b16 %v881
    %v2458 = vunpack.c.h.b16 %v881
    %v2459 = vunpack.c.l.b16 %v882
    %v2460 = vunpack.c.h.b16 %v882
    %v2461 = vunpack.c.l.b16 %v883
    %v2462 = vunpack.c.h.b16 %v883
    %v2463 = vunpack.c.l.b16 %v884
    %v2464 = vunpack.c.h.b16 %v884
    %v2465 = vunpack.c.l.b16 %v885
    %v2466 = vunpack.c.h.b16 %v885
    %v2467 = vunpack.c.l.b16 %v886
    %v2468 = vunpack.c.h.b16 %v886
    %v2469 = vunpack.c.l.b16 %v887
    %v2470 = vunpack.c.h.b16 %v887
    %v2471 = vunpack.c.l.b16 %v888
    %v2472 = vunpack.c.h.b16 %v888
    %v2473 = vunpack.c.l.b16 %v889
    %v2474 = vunpack.c.h.b16 %v889
    %v2475 = vunpack.c.l.b16 %v890
    %v2476 = vunpack.c.h.b16 %v890
    %v2477 = vunpack.c.l.b16 %v891
    %v2478 = vunpack.c.h.b16 %v891
    %v2479 = vunpack.c.l.b16 %v892
    %v2480 = vunpack.c.h.b16 %v892
    %v2481 = vunpack.c.l.b16 %v893
    %v2482 = vunpack.c.h.b16 %v893
    %v2483 = vunpack.c.l.b16 %v894
    %v2484 = vunpack.c.h.b16 %v894
    %v2485 = vunpack.c.l.b16 %v895
    %v2486 = vunpack.c.h.b16 %v895
    %v2487 = vunpack.c.l.b16 %v896
    %v2488 = vunpack.c.h.b16 %v896
    %v2489 = vunpack.c.l.b16 %v897
    %v2490 = vunpack.c.h.b16 %v897
    %v2491 = vunpack.c.l.b16 %v898
    %v2492 = vunpack.c.h.b16 %v898
    %v2493 = vunpack.c.l.b16 %v899
    %v2494 = vunpack.c.h.b16 %v899
    %v2495 = vunpack.c.l.b16 %v900
    %v2496 = vunpack.c.h.b16 %v900
    %v2497 = vunpack.c.l.b16 %v901
    %v2498 = vunpack.c.h.b16 %v901
    %v2499 = vunpack.c.l.b16 %v902
    %v2500 = vunpack.c.h.b16 %v902
    %v2501 = vunpack.c.l.b16 %v903
    %v2502 = vunpack.c.h.b16 %v903
    %v2503 = vunpack.c.l.b16 %v904
    %v2504 = vunpack.c.h.b16 %v904
    %v2505 = vunpack.c.l.b16 %v905
    %v2506 = vunpack.c.h.b16 %v905
    %v2507 = vunpack.c.l.b16 %v906
    %v2508 = vunpack.c.h.b16 %v906
    %v2509 = vunpack.c.l.b16 %v907
    %v2510 = vunpack.c.h.b16 %v907
    %v2511 = vunpack.c.l.b16 %v908
    %v2512 = vunpack.c.h.b16 %v908
    %v2513 = vunpack.c.l.b16 %v909
    %v2514 = vunpack.c.h.b16 %v909
    %v2515 = vunpack.c.l.b16 %v910
    %v2516 = vunpack.c.h.b16 %v910
    %v2517 = vunpack.c.l.b16 %v911
    %v2518 = vunpack.c.h.b16 %v911
    %v2519 = vunpack.c.l.b16 %v912
    %v2520 = vunpack.c.h.b16 %v912
    %v2521 = vunpack.c.l.b16 %v913
    %v2522 = vunpack.c.h.b16 %v913
    %v2523 = vunpack.c.l.b16 %v914
    %v2524 = vunpack.c.h.b16 %v914
    %v2525 = vunpack.c.l.b16 %v915
    %v2526 = vunpack.c.h.b16 %v915
    %v2527 = vunpack.c.l.b16 %v916
    %v2528 = vunpack.c.h.b16 %v916
    %v2529 = vunpack.c.l.b16 %v917
    %v2530 = vunpack.c.h.b16 %v917
    %v2531 = vunpack.c.l.b16 %v918
    %v2532 = vunpack.c.h.b16 %v918
    %v2533 = vunpack.c.l.b16 %v919
    %v2534 = vunpack.c.h.b16 %v919
    %v2535 = vunpack.c.l.b16 %v920
    %v2536 = vunpack.c.h.b16 %v920
    %v2537 = vunpack.c.l.b16 %v921
    %v2538 = vunpack.c.h.b16 %v921
    %v2539 = vunpack.c.l.b16 %v922
    %v2540 = vunpack.c.h.b16 %v922
    %v2541 = vunpack.c.l.b16 %v923
    %v2542 = vunpack.c.h.b16 %v923
    %v2543 = vunpack.c.l.b16 %v924
    %v2544 = vunpack.c.h.b16 %v924
    %v2545 = vunpack.c.l.b16 %v925
    %v2546 = vunpack.c.h.b16 %v925
    %v2547 = vunpack.c.l.b16 %v926
    %v2548 = vunpack.c.h.b16 %v926
    %v2549 = vunpack.c.l.b16 %v927
    %v2550 = vunpack.c.h.b16 %v927
    %v2551 = vunpack.c.l.b16 %v928
    %v2552 = vunpack.c.h.b16 %v928
    %v2553 = vunpack.c.l.b16 %v929
    %v2554 = vunpack.c.h.b16 %v929
    %v2555 = vunpack.c.l.b16 %v930
    %v2556 = vunpack.c.h.b16 %v930
    %v2557 = vunpack.c.l.b16 %v931
    %v2558 = vunpack.c.h.b16 %v931
    %v2559 = vunpack.c.l.b16 %v932
    %v2560 = vunpack.c.h.b16 %v932
    %v2561 = vunpack.c.l.b16 %v933
    %v2562 = vunpack.c.h.b16 %v933
    %v2563 = vunpack.c.l.b16 %v934
    %v2564 = vunpack.c.h.b16 %v934
    %v2565 = vunpack.c.l.b16 %v935
    %v2566 = vunpack.c.h.b16 %v935
    %v2567 = vunpack.c.l.b16 %v936
    %v2568 = vunpack.c.h.b16 %v936
    %v2569 = vunpack.c.l.b16 %v937
    %v2570 = vunpack.c.h.b16 %v937
    %v2571 = vunpack.c.l.b16 %v938
    %v2572 = vunpack.c.h.b16 %v938
    %v2573 = vunpack.c.l.b16 %v939
    %v2574 = vunpack.c.h.b16 %v939
    %v2575 = vunpack.c.l.b16 %v940
    %v2576 = vunpack.c.h.b16 %v940
    %v2577 = vunpack.c.l.b16 %v941
    %v2578 = vunpack.c.h.b16 %v941
    %v2579 = vunpack.c.l.b16 %v942
    %v2580 = vunpack.c.h.b16 %v942
    %v2581 = vunpack.c.l.b16 %v943
    %v2582 = vunpack.c.h.b16 %v943
    %v2583 = vunpack.c.l.b16 %v944
    %v2584 = vunpack.c.h.b16 %v944
    %v2585 = vunpack.c.l.b16 %v945
    %v2586 = vunpack.c.h.b16 %v945
    %v2587 = vunpack.c.l.b16 %v946
    %v2588 = vunpack.c.h.b16 %v946
    %v2589 = vunpack.c.l.b16 %v947
    %v2590 = vunpack.c.h.b16 %v947
    %v2591 = vunpack.c.l.b16 %v948
    %v2592 = vunpack.c.h.b16 %v948
    %v2593 = vunpack.c.l.b16 %v949
    %v2594 = vunpack.c.h.b16 %v949
    %v2595 = vunpack.c.l.b16 %v950
    %v2596 = vunpack.c.h.b16 %v950
    %v2597 = vunpack.c.l.b16 %v951
    %v2598 = vunpack.c.h.b16 %v951
    %v2599 = vunpack.c.l.b16 %v952
    %v2600 = vunpack.c.h.b16 %v952
    %v2601 = vunpack.c.l.b16 %v953
    %v2602 = vunpack.c.h.b16 %v953
    %v2603 = vunpack.c.l.b16 %v954
    %v2604 = vunpack.c.h.b16 %v954
    %v2605 = vunpack.c.l.b16 %v955
    %v2606 = vunpack.c.h.b16 %v955
    %v2607 = vunpack.c.l.b16 %v956
    %v2608 = vunpack.c.h.b16 %v956
    %v2609 = vunpack.c.l.b16 %v957
    %v2610 = vunpack.c.h.b16 %v957
    %v2611 = vunpack.c.l.b16 %v958
    %v2612 = vunpack.c.h.b16 %v958
    %v2613 = vunpack.c.l.b16 %v959
    %v2614 = vunpack.c.h.b16 %v959
    %v2615 = vunpack.c.l.b16 %v960
    %v2616 = vunpack.c.h.b16 %v960
    %v2617 = vunpack.c.l.b16 %v961
    %v2618 = vunpack.c.h.b16 %v961
    %v2619 = vunpack.c.l.b16 %v962
    %v2620 = vunpack.c.h.b16 %v962
    %v2621 = vunpack.c.l.b16 %v963
    %v2622 = vunpack.c.h.b16 %v963
    %v2623 = vunpack.c.l.b16 %v964
    %v2624 = vunpack.c.h.b16 %v964
    %v2625 = vunpack.c.l.b16 %v965
    %v2626 = vunpack.c.h.b16 %v965
    %v2627 = vunpack.c.l.b16 %v966
    %v2628 = vunpack.c.h.b16 %v966
    %v2629 = vunpack.c.l.b16 %v967
    %v2630 = vunpack.c.h.b16 %v967
    %v2631 = vunpack.c.l.b16 %v968
    %v2632 = vunpack.c.h.b16 %v968
    %v2633 = vunpack.c.l.b16 %v969
    %v2634 = vunpack.c.h.b16 %v969
    %v2635 = vunpack.c.l.b16 %v970
    %v2636 = vunpack.c.h.b16 %v970
    %v2637 = vunpack.c.l.b16 %v971
    %v2638 = vunpack.c.h.b16 %v971
    %v2639 = vunpack.c.l.b16 %v972
    %v2640 = vunpack.c.h.b16 %v972
    %v2641 = vunpack.c.l.b16 %v973
    %v2642 = vunpack.c.h.b16 %v973
    %v2643 = vunpack.c.l.b16 %v974
    %v2644 = vunpack.c.h.b16 %v974
    %v2645 = vunpack.c.l.b16 %v975
    %v2646 = vunpack.c.h.b16 %v975
    %v2647 = vunpack.c.l.b16 %v976
    %v2648 = vunpack.c.h.b16 %v976
    %v2649 = vunpack.c.l.b16 %v977
    %v2650 = vunpack.c.h.b16 %v977
    %v2651 = vunpack.c.l.b16 %v978
    %v2652 = vunpack.c.h.b16 %v978
    %v2653 = vunpack.c.l.b16 %v979
    %v2654 = vunpack.c.h.b16 %v979
    %v2655 = vunpack.c.l.b16 %v980
    %v2656 = vunpack.c.h.b16 %v980
    %v2657 = vunpack.c.l.b16 %v981
    %v2658 = vunpack.c.h.b16 %v981
    %v2659 = vunpack.c.l.b16 %v982
    %v2660 = vunpack.c.h.b16 %v982
    %v2661 = vunpack.c.l.b16 %v983
    %v2662 = vunpack.c.h.b16 %v983
    %v2663 = vunpack.c.l.b16 %v984
    %v2664 = vunpack.c.h.b16 %v984
    %v2665 = vunpack.c.l.b16 %v985
    %v2666 = vunpack.c.h.b16 %v985
    %v2667 = vunpack.c.l.b16 %v986
    %v2668 = vunpack.c.h.b16 %v986
    %v2669 = vunpack.c.l.b16 %v987
    %v2670 = vunpack.c.h.b16 %v987
    %v2671 = vunpack.c.l.b16 %v988
    %v2672 = vunpack.c.h.b16 %v988
    %v2673 = vunpack.c.l.b16 %v989
    %v2674 = vunpack.c.h.b16 %v989
    %v2675 = vunpack.c.l.b16 %v990
    %v2676 = vunpack.c.h.b16 %v990
    %v2677 = vunpack.c.l.b16 %v991
    %v2678 = vunpack.c.h.b16 %v991
    %v2679 = vunpack.c.l.b16 %v992
    %v2680 = vunpack.c.h.b16 %v992
    %v2681 = vunpack.c.l.b16 %v993
    %v2682 = vunpack.c.h.b16 %v993
    %v2683 = vunpack.c.l.b16 %v994
    %v2684 = vunpack.c.h.b16 %v994
    %v2685 = vunpack.c.l.b16 %v995
    %v2686 = vunpack.c.h.b16 %v995
    %v2687 = vunpack.c.l.b16 %v996
    %v2688 = vunpack.c.h.b16 %v996
    %v2689 = vunpack.c.l.b16 %v997
    %v2690 = vunpack.c.h.b16 %v997
    %v2691 = vunpack.c.l.b16 %v998
    %v2692 = vunpack.c.h.b16 %v998
    %v2693 = vunpack.c.l.b16 %v999
    %v2694 = vunpack.c.h.b16 %v999
    %v2695 = vunpack.c.l.b16 %v1000
    %v2696 = vunpack.c.h.b16 %v1000
    %v2697 = vunpack.c.l.b16 %v1001
    %v2698 = vunpack.c.h.b16 %v1001
    %v2699 = vunpack.c.l.b16 %v1002
    %v2700 = vunpack.c.h.b16 %v1002
    %v2701 = vunpack.c.l.b16 %v1003
    %v2702 = vunpack.c.h.b16 %v1003
    %v2703 = vunpack.c.l.b16 %v1004
    %v2704 = vunpack.c.h.b16 %v1004
    %v2705 = vunpack.c.l.b16 %v1005
    %v2706 = vunpack.c.h.b16 %v1005
    %v2707 = vunpack.c.l.b16 %v1006
    %v2708 = vunpack.c.h.b16 %v1006
    %v2709 = vunpack.c.l.b16 %v1007
    %v2710 = vunpack.c.h.b16 %v1007
    %v2711 = vunpack.c.l.b16 %v1008
    %v2712 = vunpack.c.h.b16 %v1008
    %v2713 = vunpack.c.l.b16 %v1009
    %v2714 = vunpack.c.h.b16 %v1009
    %v2715 = vunpack.c.l.b16 %v1010
    %v2716 = vunpack.c.h.b16 %v1010
    %v2717 = vunpack.c.l.b16 %v1011
    %v2718 = vunpack.c.h.b16 %v1011
    %v2719 = vunpack.c.l.b16 %v1012
    %v2720 = vunpack.c.h.b16 %v1012
    %v2721 = vunpack.c.l.b16 %v1013
    %v2722 = vunpack.c.h.b16 %v1013
    %v2723 = vunpack.c.l.b16 %v1014
    %v2724 = vunpack.c.h.b16 %v1014
    %v2725 = vunpack.c.l.b16 %v1015
    %v2726 = vunpack.c.h.b16 %v1015
    %v2727 = vunpack.c.l.b16 %v1016
    %v2728 = vunpack.c.h.b16 %v1016
    %v2729 = vunpack.c.l.b16 %v1017
    %v2730 = vunpack.c.h.b16 %v1017
    %v2731 = vunpack.c.l.b16 %v1018
    %v2732 = vunpack.c.h.b16 %v1018
    %v2733 = vunpack.c.l.b16 %v1019
    %v2734 = vunpack.c.h.b16 %v1019
    %v2735 = vunpack.c.l.b16 %v1020
    %v2736 = vunpack.c.h.b16 %v1020
    %v2737 = vunpack.c.l.b16 %v1021
    %v2738 = vunpack.c.h.b16 %v1021
    %v2739 = vunpack.c.l.b16 %v1022
    %v2740 = vunpack.c.h.b16 %v1022
    %v2741 = vunpack.c.l.b16 %v1023
    %v2742 = vunpack.c.h.b16 %v1023
    %v2743 = vunpack.c.l.b16 %v1024
    %v2744 = vunpack.c.h.b16 %v1024
    %v2745 = vunpack.c.l.b16 %v1025
    %v2746 = vunpack.c.h.b16 %v1025
    %v2747 = vunpack.c.l.b16 %v1026
    %v2748 = vunpack.c.h.b16 %v1026
    %v2749 = vunpack.c.l.b16 %v1027
    %v2750 = vunpack.c.h.b16 %v1027
    %v2751 = vunpack.c.l.b16 %v1028
    %v2752 = vunpack.c.h.b16 %v1028
    %v2753 = vunpack.c.l.b16 %v1029
    %v2754 = vunpack.c.h.b16 %v1029
    %v2755 = vunpack.c.l.b16 %v1030
    %v2756 = vunpack.c.h.b16 %v1030
    %v2757 = vunpack.c.l.b16 %v1031
    %v2758 = vunpack.c.h.b16 %v1031
    %v2759 = vunpack.c.l.b16 %v1032
    %v2760 = vunpack.c.h.b16 %v1032
    %v2761 = vunpack.c.l.b16 %v1033
    %v2762 = vunpack.c.h.b16 %v1033
    %v2763 = vunpack.c.l.b16 %v1034
    %v2764 = vunpack.c.h.b16 %v1034
    %v2765 = vunpack.c.l.b16 %v1035
    %v2766 = vunpack.c.h.b16 %v1035
    %v2767 = vunpack.c.l.b16 %v1036
    %v2768 = vunpack.c.h.b16 %v1036
    %v2769 = vunpack.c.l.b16 %v1037
    %v2770 = vunpack.c.h.b16 %v1037
    %v2771 = vunpack.c.l.b16 %v1038
    %v2772 = vunpack.c.h.b16 %v1038
    %v2773 = vunpack.c.l.b16 %v1039
    %v2774 = vunpack.c.h.b16 %v1039
    %v2775 = vunpack.c.l.b16 %v1040
    %v2776 = vunpack.c.h.b16 %v1040
    %v2777 = vunpack.c.l.b16 %v1041
    %v2778 = vunpack.c.h.b16 %v1041
    %v2779 = vunpack.c.l.b16 %v1042
    %v2780 = vunpack.c.h.b16 %v1042
    %v2781 = vunpack.c.l.b16 %v1043
    %v2782 = vunpack.c.h.b16 %v1043
    %v2783 = vunpack.c.l.b16 %v1044
    %v2784 = vunpack.c.h.b16 %v1044
    %v2785 = vunpack.c.l.b16 %v1045
    %v2786 = vunpack.c.h.b16 %v1045
    %v2787 = vunpack.c.l.b16 %v1046
    %v2788 = vunpack.c.h.b16 %v1046
    %v2789 = vunpack.c.l.b16 %v1047
    %v2790 = vunpack.c.h.b16 %v1047
    %v2791 = vunpack.c.l.b16 %v1048
    %v2792 = vunpack.c.h.b16 %v1048
    %v2793 = vunpack.c.l.b16 %v1049
    %v2794 = vunpack.c.h.b16 %v1049
    %v2795 = vunpack.c.l.b16 %v1050
    %v2796 = vunpack.c.h.b16 %v1050
    %v2797 = vunpack.c.l.b16 %v1051
    %v2798 = vunpack.c.h.b16 %v1051
    %v2799 = vunpack.c.l.b16 %v1052
    %v2800 = vunpack.c.h.b16 %v1052
    %v2801 = vunpack.c.l.b16 %v1053
    %v2802 = vunpack.c.h.b16 %v1053
    %v2803 = vunpack.c.l.b16 %v1054
    %v2804 = vunpack.c.h.b16 %v1054
    %v2805 = vunpack.c.l.b16 %v1055
    %v2806 = vunpack.c.h.b16 %v1055
    %v2807 = vunpack.c.l.b16 %v1056
    %v2808 = vunpack.c.h.b16 %v1056
    %v2809 = vunpack.c.l.b16 %v1057
    %v2810 = vunpack.c.h.b16 %v1057
    %v2811 = vunpack.c.l.b16 %v1058
    %v2812 = vunpack.c.h.b16 %v1058
    %v2813 = vunpack.c.l.b16 %v1059
    %v2814 = vunpack.c.h.b16 %v1059
    %v2815 = vunpack.c.l.b16 %v1060
    %v2816 = vunpack.c.h.b16 %v1060
    %v2817 = vunpack.c.l.b16 %v1061
    %v2818 = vunpack.c.h.b16 %v1061
    %v2819 = vunpack.c.l.b16 %v1062
    %v2820 = vunpack.c.h.b16 %v1062
    %v2821 = vunpack.c.l.b16 %v1063
    %v2822 = vunpack.c.h.b16 %v1063
    %v2823 = vunpack.c.l.b16 %v1064
    %v2824 = vunpack.c.h.b16 %v1064
    %v2825 = vunpack.c.l.b16 %v1065
    %v2826 = vunpack.c.h.b16 %v1065
    %v2827 = vunpack.c.l.b16 %v1066
    %v2828 = vunpack.c.h.b16 %v1066
    %v2829 = vunpack.c.l.b16 %v1067
    %v2830 = vunpack.c.h.b16 %v1067
    %v2831 = vunpack.c.l.b16 %v1068
    %v2832 = vunpack.c.h.b16 %v1068
    %v2833 = vunpack.c.l.b16 %v1069
    %v2834 = vunpack.c.h.b16 %v1069
    %v2835 = vunpack.c.l.b16 %v1070
    %v2836 = vunpack.c.h.b16 %v1070
    %v2837 = vunpack.c.l.b16 %v1071
    %v2838 = vunpack.c.h.b16 %v1071
    %v2839 = vunpack.c.l.b16 %v1072
    %v2840 = vunpack.c.h.b16 %v1072
    %v2841 = vunpack.c.l.b16 %v1073
    %v2842 = vunpack.c.h.b16 %v1073
    %v2843 = vunpack.c.l.b16 %v1074
    %v2844 = vunpack.c.h.b16 %v1074
    %v2845 = vunpack.c.l.b16 %v1075
    %v2846 = vunpack.c.h.b16 %v1075
    %v2847 = vunpack.c.l.b16 %v1076
    %v2848 = vunpack.c.h.b16 %v1076
    %v2849 = vunpack.c.l.b16 %v1077
    %v2850 = vunpack.c.h.b16 %v1077
    %v2851 = vunpack.c.l.b16 %v1078
    %v2852 = vunpack.c.h.b16 %v1078
    %v2853 = vunpack.c.l.b16 %v1079
    %v2854 = vunpack.c.h.b16 %v1079
    %v2855 = vunpack.c.l.b16 %v1080
    %v2856 = vunpack.c.h.b16 %v1080
    %v2857 = vunpack.c.l.b16 %v1081
    %v2858 = vunpack.c.h.b16 %v1081
    %v2859 = vunpack.c.l.b16 %v1082
    %v2860 = vunpack.c.h.b16 %v1082
    %v2861 = vunpack.c.l.b16 %v1083
    %v2862 = vunpack.c.h.b16 %v1083
    %v2863 = vunpack.c.l.b16 %v1084
    %v2864 = vunpack.c.h.b16 %v1084
    %v2865 = vunpack.c.l.b16 %v1085
    %v2866 = vunpack.c.h.b16 %v1085
    %v2867 = vunpack.c.l.b16 %v1086
    %v2868 = vunpack.c.h.b16 %v1086
    %v2869 = vunpack.c.l.b16 %v1087
    %v2870 = vunpack.c.h.b16 %v1087
    %v2871 = vunpack.c.l.b16 %v1088
    %v2872 = vunpack.c.h.b16 %v1088
    %v2873 = vunpack.c.l.b16 %v1089
    %v2874 = vunpack.c.h.b16 %v1089
    %v2875 = vunpack.c.l.b16 %v1090
    %v2876 = vunpack.c.h.b16 %v1090
    %v2877 = vunpack.c.l.b16 %v1091
    %v2878 = vunpack.c.h.b16 %v1091
    %v2879 = vunpack.c.l.b16 %v1092
    %v2880 = vunpack.c.h.b16 %v1092
    %v2881 = vunpack.c.l.b16 %v1093
    %v2882 = vunpack.c.h.b16 %v1093
    %v2883 = vunpack.c.l.b16 %v1094
    %v2884 = vunpack.c.h.b16 %v1094
    %v2885 = vunpack.c.l.b16 %v1095
    %v2886 = vunpack.c.h.b16 %v1095
    %v2887 = vunpack.c.l.b16 %v1096
    %v2888 = vunpack.c.h.b16 %v1096
    %v2889 = vunpack.c.l.b16 %v1097
    %v2890 = vunpack.c.h.b16 %v1097
    %v2891 = vunpack.c.l.b16 %v1098
    %v2892 = vunpack.c.h.b16 %v1098
    %v2893 = vunpack.c.l.b16 %v1099
    %v2894 = vunpack.c.h.b16 %v1099
    %v2895 = vunpack.c.l.b16 %v1100
    %v2896 = vunpack.c.h.b16 %v1100
    %v2897 = vunpack.c.l.b16 %v1101
    %v2898 = vunpack.c.h.b16 %v1101
    %v2899 = vunpack.c.l.b16 %v1102
    %v2900 = vunpack.c.h.b16 %v1102
    %v2901 = vunpack.c.l.b16 %v1103
    %v2902 = vunpack.c.h.b16 %v1103
    %v2903 = vunpack.c.l.b16 %v1104
    %v2904 = vunpack.c.h.b16 %v1104
    %v2905 = vunpack.c.l.b16 %v1105
    %v2906 = vunpack.c.h.b16 %v1105
    %v2907 = vunpack.c.l.b16 %v1106
    %v2908 = vunpack.c.h.b16 %v1106
    %v2909 = vunpack.c.l.b16 %v1107
    %v2910 = vunpack.c.h.b16 %v1107
    %v2911 = vunpack.c.l.b16 %v1108
    %v2912 = vunpack.c.h.b16 %v1108
    %v2913 = vunpack.c.l.b16 %v1109
    %v2914 = vunpack.c.h.b16 %v1109
    %v2915 = vunpack.c.l.b16 %v1110
    %v2916 = vunpack.c.h.b16 %v1110
    %v2917 = vunpack.c.l.b16 %v1111
    %v2918 = vunpack.c.h.b16 %v1111
    %v2919 = vunpack.c.l.b16 %v1112
    %v2920 = vunpack.c.h.b16 %v1112
    %v2921 = vunpack.c.l.b16 %v1113
    %v2922 = vunpack.c.h.b16 %v1113
    %v2923 = vunpack.c.l.b16 %v1114
    %v2924 = vunpack.c.h.b16 %v1114
    %v2925 = vunpack.c.l.b16 %v1115
    %v2926 = vunpack.c.h.b16 %v1115
    %v2927 = vunpack.c.l.b16 %v1116
    %v2928 = vunpack.c.h.b16 %v1116
    %v2929 = vunpack.c.l.b16 %v1117
    %v2930 = vunpack.c.h.b16 %v1117
    %v2931 = vunpack.c.l.b16 %v1118
    %v2932 = vunpack.c.h.b16 %v1118
    %v2933 = vunpack.c.l.b16 %v1119
    %v2934 = vunpack.c.h.b16 %v1119
    %v2935 = vunpack.c.l.b16 %v1120
    %v2936 = vunpack.c.h.b16 %v1120
    %v2937 = vunpack.c.l.b16 %v1121
    %v2938 = vunpack.c.h.b16 %v1121
    %v2939 = vunpack.c.l.b16 %v1122
    %v2940 = vunpack.c.h.b16 %v1122
    %v2941 = vunpack.c.l.b16 %v1123
    %v2942 = vunpack.c.h.b16 %v1123
    %v2943 = vunpack.c.l.b16 %v1124
    %v2944 = vunpack.c.h.b16 %v1124
    %v2945 = vunpack.c.l.b16 %v1125
    %v2946 = vunpack.c.h.b16 %v1125
    %v2947 = vunpack.c.l.b16 %v1126
    %v2948 = vunpack.c.h.b16 %v1126
    %v2949 = vunpack.c.l.b16 %v1127
    %v2950 = vunpack.c.h.b16 %v1127
    %v2951 = vunpack.c.l.b16 %v1128
    %v2952 = vunpack.c.h.b16 %v1128
    %v2953 = vunpack.c.l.b16 %v1129
    %v2954 = vunpack.c.h.b16 %v1129
    %v2955 = vunpack.c.l.b16 %v1130
    %v2956 = vunpack.c.h.b16 %v1130
    %v2957 = vunpack.c.l.b16 %v1131
    %v2958 = vunpack.c.h.b16 %v1131
    %v2959 = vunpack.c.l.b16 %v1132
    %v2960 = vunpack.c.h.b16 %v1132
    %v2961 = vunpack.c.l.b16 %v1133
    %v2962 = vunpack.c.h.b16 %v1133
    %v2963 = vunpack.c.l.b16 %v1134
    %v2964 = vunpack.c.h.b16 %v1134
    %v2965 = vunpack.c.l.b16 %v1135
    %v2966 = vunpack.c.h.b16 %v1135
    %v2967 = vunpack.c.l.b16 %v1136
    %v2968 = vunpack.c.h.b16 %v1136
    %v2969 = vunpack.c.l.b16 %v1137
    %v2970 = vunpack.c.h.b16 %v1137
    %v2971 = vunpack.c.l.b16 %v1138
    %v2972 = vunpack.c.h.b16 %v1138
    %v2973 = vunpack.c.l.b16 %v1139
    %v2974 = vunpack.c.h.b16 %v1139
    %v2975 = vunpack.c.l.b16 %v1140
    %v2976 = vunpack.c.h.b16 %v1140
    %v2977 = vunpack.c.l.b16 %v1141
    %v2978 = vunpack.c.h.b16 %v1141
    %v2979 = vunpack.c.l.b16 %v1142
    %v2980 = vunpack.c.h.b16 %v1142
    %v2981 = vunpack.c.l.b16 %v1143
    %v2982 = vunpack.c.h.b16 %v1143
    %v2983 = vunpack.c.l.b16 %v1144
    %v2984 = vunpack.c.h.b16 %v1144
    %v2985 = vunpack.c.l.b16 %v1145
    %v2986 = vunpack.c.h.b16 %v1145
    %v2987 = vunpack.c.l.b16 %v1146
    %v2988 = vunpack.c.h.b16 %v1146
    %v2989 = vunpack.c.l.b16 %v1147
    %v2990 = vunpack.c.h.b16 %v1147
    %v2991 = vunpack.c.l.b16 %v1148
    %v2992 = vunpack.c.h.b16 %v1148
    %v2993 = vunpack.c.l.b16 %v1149
    %v2994 = vunpack.c.h.b16 %v1149
    %v2995 = vunpack.c.l.b16 %v1150
    %v2996 = vunpack.c.h.b16 %v1150
    %v2997 = vunpack.c.l.b16 %v1151
    %v2998 = vunpack.c.h.b16 %v1151
    %v2999 = vunpack.c.l.b16 %v1152
    %v3000 = vunpack.c.h.b16 %v1152
    %v3001 = vunpack.c.l.b16 %v1153
    %v3002 = vunpack.c.h.b16 %v1153
    %v3003 = vunpack.c.l.b16 %v1154
    %v3004 = vunpack.c.h.b16 %v1154
    %v3005 = vunpack.c.l.b16 %v1155
    %v3006 = vunpack.c.h.b16 %v1155
    %v3007 = vunpack.c.l.b16 %v1156
    %v3008 = vunpack.c.h.b16 %v1156
    %v3009 = vunpack.c.l.b16 %v1157
    %v3010 = vunpack.c.h.b16 %v1157
    %v3011 = vunpack.c.l.b16 %v1158
    %v3012 = vunpack.c.h.b16 %v1158
    %v3013 = vunpack.c.l.b16 %v1159
    %v3014 = vunpack.c.h.b16 %v1159
    %v3015 = vunpack.c.l.b16 %v1160
    %v3016 = vunpack.c.h.b16 %v1160
    %v3017 = vunpack.c.l.b16 %v1161
    %v3018 = vunpack.c.h.b16 %v1161
    %v3019 = vunpack.c.l.b16 %v1162
    %v3020 = vunpack.c.h.b16 %v1162
    %v3021 = vunpack.c.l.b16 %v1163
    %v3022 = vunpack.c.h.b16 %v1163
    %v3023 = vunpack.c.l.b16 %v1164
    %v3024 = vunpack.c.h.b16 %v1164
    %v3025 = vunpack.c.l.b16 %v1165
    %v3026 = vunpack.c.h.b16 %v1165
    %v3027 = vunpack.c.l.b16 %v1166
    %v3028 = vunpack.c.h.b16 %v1166
    %v3029 = vunpack.c.l.b16 %v1167
    %v3030 = vunpack.c.h.b16 %v1167
    %v3031 = vunpack.c.l.b16 %v1168
    %v3032 = vunpack.c.h.b16 %v1168
    %v3033 = vunpack.c.l.b16 %v1169
    %v3034 = vunpack.c.h.b16 %v1169
    %v3035 = vunpack.c.l.b16 %v1170
    %v3036 = vunpack.c.h.b16 %v1170
    %v3037 = vunpack.c.l.b16 %v1171
    %v3038 = vunpack.c.h.b16 %v1171
    %v3039 = vunpack.c.l.b16 %v1172
    %v3040 = vunpack.c.h.b16 %v1172
    %v3041 = vunpack.c.l.b16 %v1173
    %v3042 = vunpack.c.h.b16 %v1173
    %v3043 = vunpack.c.l.b16 %v1174
    %v3044 = vunpack.c.h.b16 %v1174
    %v3045 = vunpack.c.l.b16 %v1175
    %v3046 = vunpack.c.h.b16 %v1175
    %v3047 = vunpack.c.l.b16 %v1176
    %v3048 = vunpack.c.h.b16 %v1176
    %v3049 = vunpack.c.l.b16 %v1177
    %v3050 = vunpack.c.h.b16 %v1177
    %v3051 = vunpack.c.l.b16 %v1178
    %v3052 = vunpack.c.h.b16 %v1178
    %v3053 = vunpack.c.l.b16 %v1179
    %v3054 = vunpack.c.h.b16 %v1179
    %v3055 = vunpack.c.l.b16 %v1180
    %v3056 = vunpack.c.h.b16 %v1180
    %v3057 = vunpack.c.l.b16 %v1181
    %v3058 = vunpack.c.h.b16 %v1181
    %v3059 = vunpack.c.l.b16 %v1182
    %v3060 = vunpack.c.h.b16 %v1182
    %v3061 = vunpack.c.l.b16 %v1183
    %v3062 = vunpack.c.h.b16 %v1183
    %v3063 = vunpack.c.l.b16 %v1184
    %v3064 = vunpack.c.h.b16 %v1184
    %v3065 = vunpack.c.l.b16 %v1185
    %v3066 = vunpack.c.h.b16 %v1185
    %v3067 = vunpack.c.l.b16 %v1186
    %v3068 = vunpack.c.h.b16 %v1186
    %v3069 = vunpack.c.l.b16 %v1187
    %v3070 = vunpack.c.h.b16 %v1187
    %v3071 = vunpack.c.l.b16 %v1188
    %v3072 = vunpack.c.h.b16 %v1188
    %v3073 = vunpack.c.l.b16 %v1189
    %v3074 = vunpack.c.h.b16 %v1189
    %v3075 = vunpack.c.l.b16 %v1190
    %v3076 = vunpack.c.h.b16 %v1190
    %v3077 = vunpack.c.l.b16 %v1191
    %v3078 = vunpack.c.h.b16 %v1191
    %v3079 = vunpack.c.l.b16 %v1192
    %v3080 = vunpack.c.h.b16 %v1192
    %v3081 = vunpack.c.l.b16 %v1193
    %v3082 = vunpack.c.h.b16 %v1193
    %v3083 = vunpack.c.l.b16 %v1194
    %v3084 = vunpack.c.h.b16 %v1194
    %v3085 = vunpack.c.l.b16 %v1195
    %v3086 = vunpack.c.h.b16 %v1195
    %v3087 = vunpack.c.l.b16 %v1196
    %v3088 = vunpack.c.h.b16 %v1196
    %v3089 = vunpack.c.l.b16 %v1197
    %v3090 = vunpack.c.h.b16 %v1197
    %v3091 = vunpack.c.l.b16 %v1198
    %v3092 = vunpack.c.h.b16 %v1198
    %v3093 = vunpack.c.l.b16 %v1199
    %v3094 = vunpack.c.h.b16 %v1199
    %v3095 = vunpack.c.l.b16 %v1200
    %v3096 = vunpack.c.h.b16 %v1200
    %v3097 = vunpack.c.l.b16 %v1201
    %v3098 = vunpack.c.h.b16 %v1201
    %v3099 = vunpack.c.l.b16 %v1202
    %v3100 = vunpack.c.h.b16 %v1202
    %v3101 = vunpack.c.l.b16 %v1203
    %v3102 = vunpack.c.h.b16 %v1203
    %v3103 = vunpack.c.l.b16 %v1204
    %v3104 = vunpack.c.h.b16 %v1204
    %v3105 = vunpack.c.l.b16 %v1205
    %v3106 = vunpack.c.h.b16 %v1205
    %v3107 = vunpack.c.l.b16 %v1206
    %v3108 = vunpack.c.h.b16 %v1206
    %v3109 = vunpack.c.l.b16 %v1207
    %v3110 = vunpack.c.h.b16 %v1207
    %v3111 = vunpack.c.l.b16 %v1208
    %v3112 = vunpack.c.h.b16 %v1208
    %v3113 = vunpack.c.l.b16 %v1209
    %v3114 = vunpack.c.h.b16 %v1209
    %v3115 = vunpack.c.l.b16 %v1210
    %v3116 = vunpack.c.h.b16 %v1210
    %v3117 = vunpack.c.l.b16 %v1211
    %v3118 = vunpack.c.h.b16 %v1211
    %v3119 = vunpack.c.l.b16 %v1212
    %v3120 = vunpack.c.h.b16 %v1212
    %v3121 = vunpack.c.l.b16 %v1213
    %v3122 = vunpack.c.h.b16 %v1213
    %v3123 = vunpack.c.l.b16 %v1214
    %v3124 = vunpack.c.h.b16 %v1214
    %v3125 = vunpack.c.l.b16 %v1215
    %v3126 = vunpack.c.h.b16 %v1215
    %v3127 = vunpack.c.l.b16 %v1216
    %v3128 = vunpack.c.h.b16 %v1216
    %v3129 = vunpack.c.l.b16 %v1217
    %v3130 = vunpack.c.h.b16 %v1217
    %v3131 = vunpack.c.l.b16 %v1218
    %v3132 = vunpack.c.h.b16 %v1218
    %v3133 = vunpack.c.l.b16 %v1219
    %v3134 = vunpack.c.h.b16 %v1219
    %v3135 = vunpack.c.l.b16 %v1220
    %v3136 = vunpack.c.h.b16 %v1220
    %v3137 = vunpack.c.l.b16 %v1221
    %v3138 = vunpack.c.h.b16 %v1221
    %v3139 = vunpack.c.l.b16 %v1222
    %v3140 = vunpack.c.h.b16 %v1222
    %v3141 = vunpack.c.l.b16 %v1223
    %v3142 = vunpack.c.h.b16 %v1223
    %v3143 = vunpack.c.l.b16 %v1224
    %v3144 = vunpack.c.h.b16 %v1224
    %v3145 = vunpack.c.l.b16 %v1225
    %v3146 = vunpack.c.h.b16 %v1225
    %v3147 = vunpack.c.l.b16 %v1226
    %v3148 = vunpack.c.h.b16 %v1226
    %v3149 = vunpack.c.l.b16 %v1227
    %v3150 = vunpack.c.h.b16 %v1227
    %v3151 = vunpack.c.l.b16 %v1228
    %v3152 = vunpack.c.h.b16 %v1228
    %v3153 = vunpack.c.l.b16 %v1229
    %v3154 = vunpack.c.h.b16 %v1229
    %v3155 = vunpack.c.l.b16 %v1230
    %v3156 = vunpack.c.h.b16 %v1230
    %v3157 = vunpack.c.l.b16 %v1231
    %v3158 = vunpack.c.h.b16 %v1231
    %v3159 = vunpack.c.l.b16 %v1232
    %v3160 = vunpack.c.h.b16 %v1232
    %v3161 = vunpack.c.l.b16 %v1233
    %v3162 = vunpack.c.h.b16 %v1233
    %v3163 = vunpack.c.l.b16 %v1234
    %v3164 = vunpack.c.h.b16 %v1234
    %v3165 = vunpack.c.l.b16 %v1235
    %v3166 = vunpack.c.h.b16 %v1235
    %v3167 = vunpack.c.l.b16 %v1236
    %v3168 = vunpack.c.h.b16 %v1236
    %v3169 = vunpack.c.l.b16 %v1237
    %v3170 = vunpack.c.h.b16 %v1237
    %v3171 = vunpack.c.l.b16 %v1238
    %v3172 = vunpack.c.h.b16 %v1238
    %v3173 = vunpack.c.l.b16 %v1239
    %v3174 = vunpack.c.h.b16 %v1239
    %v3175 = vunpack.c.l.b16 %v1240
    %v3176 = vunpack.c.h.b16 %v1240
    %v3177 = vunpack.c.l.b16 %v1241
    %v3178 = vunpack.c.h.b16 %v1241
    %v3179 = vunpack.c.l.b16 %v1242
    %v3180 = vunpack.c.h.b16 %v1242
    %v3181 = vunpack.c.l.b16 %v1243
    %v3182 = vunpack.c.h.b16 %v1243
    %v3183 = vunpack.c.l.b16 %v1244
    %v3184 = vunpack.c.h.b16 %v1244
    %v3185 = vunpack.c.l.b16 %v1245
    %v3186 = vunpack.c.h.b16 %v1245
    %v3187 = vunpack.c.l.b16 %v1246
    %v3188 = vunpack.c.h.b16 %v1246
    %v3189 = vunpack.c.l.b16 %v1247
    %v3190 = vunpack.c.h.b16 %v1247
    %v3191 = vunpack.c.l.b16 %v1248
    %v3192 = vunpack.c.h.b16 %v1248
    %v3193 = vunpack.c.l.b16 %v1249
    %v3194 = vunpack.c.h.b16 %v1249
    %v3195 = vunpack.c.l.b16 %v1250
    %v3196 = vunpack.c.h.b16 %v1250
    %v3197 = vunpack.c.l.b16 %v1251
    %v3198 = vunpack.c.h.b16 %v1251
    %v3199 = vunpack.c.l.b16 %v1252
    %v3200 = vunpack.c.h.b16 %v1252
    %v3201 = vunpack.c.l.b16 %v1253
    %v3202 = vunpack.c.h.b16 %v1253
    %v3203 = vunpack.c.l.b16 %v1254
    %v3204 = vunpack.c.h.b16 %v1254
    %v3205 = vunpack.c.l.b16 %v1255
    %v3206 = vunpack.c.h.b16 %v1255
    %v3207 = vunpack.c.l.b16 %v1256
    %v3208 = vunpack.c.h.b16 %v1256
    %v3209 = vunpack.c.l.b16 %v1257
    %v3210 = vunpack.c.h.b16 %v1257
    %v3211 = vunpack.c.l.b16 %v1258
    %v3212 = vunpack.c.h.b16 %v1258
    %v3213 = vunpack.c.l.b16 %v1259
    %v3214 = vunpack.c.h.b16 %v1259
    %v3215 = vunpack.c.l.b16 %v1260
    %v3216 = vunpack.c.h.b16 %v1260
    %v3217 = vunpack.c.l.b16 %v1261
    %v3218 = vunpack.c.h.b16 %v1261
    %v3219 = vunpack.c.l.b16 %v1262
    %v3220 = vunpack.c.h.b16 %v1262
    %v3221 = vunpack.c.l.b16 %v1263
    %v3222 = vunpack.c.h.b16 %v1263
    %v3223 = vunpack.c.l.b16 %v1264
    %v3224 = vunpack.c.h.b16 %v1264
    %v3225 = vunpack.c.l.b16 %v1265
    %v3226 = vunpack.c.h.b16 %v1265
    %v3227 = vunpack.c.l.b16 %v1266
    %v3228 = vunpack.c.h.b16 %v1266
    %v3229 = vunpack.c.l.b16 %v1267
    %v3230 = vunpack.c.h.b16 %v1267
    %v3231 = vunpack.c.l.b16 %v1268
    %v3232 = vunpack.c.h.b16 %v1268
    %v3233 = vunpack.c.l.b16 %v1269
    %v3234 = vunpack.c.h.b16 %v1269
    %v3235 = vunpack.c.l.b16 %v1270
    %v3236 = vunpack.c.h.b16 %v1270
    %v3237 = vunpack.c.l.b16 %v1271
    %v3238 = vunpack.c.h.b16 %v1271
    %v3239 = vunpack.c.l.b16 %v1272
    %v3240 = vunpack.c.h.b16 %v1272
    %v3241 = vunpack.c.l.b16 %v1273
    %v3242 = vunpack.c.h.b16 %v1273
    %v3243 = vunpack.c.l.b16 %v1274
    %v3244 = vunpack.c.h.b16 %v1274
    %v3245 = vunpack.c.l.b16 %v1275
    %v3246 = vunpack.c.h.b16 %v1275
    %v3247 = vunpack.c.l.b16 %v1276
    %v3248 = vunpack.c.h.b16 %v1276
    %v3249 = vunpack.c.l.b16 %v1277
    %v3250 = vunpack.c.h.b16 %v1277
    %v3251 = vunpack.c.l.b16 %v1278
    %v3252 = vunpack.c.h.b16 %v1278
    %v3253 = vunpack.c.l.b16 %v1279
    %v3254 = vunpack.c.h.b16 %v1279
    %v3255 = vunpack.c.l.b16 %v1280
    %v3256 = vunpack.c.h.b16 %v1280
    %v3257 = vunpack.c.l.b16 %v1281
    %v3258 = vunpack.c.h.b16 %v1281
    %v3259 = vunpack.c.l.b16 %v1282
    %v3260 = vunpack.c.h.b16 %v1282
    %v3261 = vunpack.c.l.b16 %v1283
    %v3262 = vunpack.c.h.b16 %v1283
    %v3263 = vunpack.c.l.b16 %v1284
    %v3264 = vunpack.c.h.b16 %v1284
    %v3265 = vunpack.c.l.b16 %v1285
    %v3266 = vunpack.c.h.b16 %v1285
    %v3267 = vunpack.c.l.b16 %v1286
    %v3268 = vunpack.c.h.b16 %v1286
    %v3269 = vunpack.c.l.b16 %v1287
    %v3270 = vunpack.c.h.b16 %v1287
    %v3271 = vunpack.c.l.b16 %v1288
    %v3272 = vunpack.c.h.b16 %v1288
    %v3273 = vunpack.c.l.b16 %v1289
    %v3274 = vunpack.c.h.b16 %v1289
    %v3275 = vunpack.c.l.b16 %v1290
    %v3276 = vunpack.c.h.b16 %v1290
    %v3277 = vunpack.c.l.b16 %v1291
    %v3278 = vunpack.c.h.b16 %v1291
    %v3279 = vunpack.c.l.b16 %v1292
    %v3280 = vunpack.c.h.b16 %v1292
    %v3281 = vunpack.c.l.b16 %v1293
    %v3282 = vunpack.c.h.b16 %v1293
    %v3283 = vunpack.c.l.b16 %v1294
    %v3284 = vunpack.c.h.b16 %v1294
    %v3285 = vunpack.c.l.b16 %v1295
    %v3286 = vunpack.c.h.b16 %v1295
    %v3287 = vunpack.c.l.b16 %v1296
    %v3288 = vunpack.c.h.b16 %v1296
    %v3289 = vunpack.c.l.b16 %v1297
    %v3290 = vunpack.c.h.b16 %v1297
    %v3291 = vunpack.c.l.b16 %v1298
    %v3292 = vunpack.c.h.b16 %v1298
    %v3293 = vunpack.c.l.b16 %v1299
    %v3294 = vunpack.c.h.b16 %v1299
    %v3295 = vunpack.c.l.b16 %v1300
    %v3296 = vunpack.c.h.b16 %v1300
    %v3297 = vunpack.c.l.b16 %v1301
    %v3298 = vunpack.c.h.b16 %v1301
    %v3299 = vunpack.c.l.b16 %v1302
    %v3300 = vunpack.c.h.b16 %v1302
    %v3301 = vunpack.c.l.b16 %v1303
    %v3302 = vunpack.c.h.b16 %v1303
    %v3303 = vunpack.c.l.b16 %v1304
    %v3304 = vunpack.c.h.b16 %v1304
    %v3305 = vunpack.c.l.b16 %v1305
    %v3306 = vunpack.c.h.b16 %v1305
    %v3307 = vunpack.c.l.b16 %v1306
    %v3308 = vunpack.c.h.b16 %v1306
    %v3309 = vunpack.c.l.b16 %v1307
    %v3310 = vunpack.c.h.b16 %v1307
    %v3311 = vunpack.c.l.b16 %v1308
    %v3312 = vunpack.c.h.b16 %v1308
    %v3313 = vunpack.c.l.b16 %v1309
    %v3314 = vunpack.c.h.b16 %v1309
    %v3315 = vunpack.c.l.b16 %v1310
    %v3316 = vunpack.c.h.b16 %v1310
    %v3317 = vunpack.c.l.b16 %v1311
    %v3318 = vunpack.c.h.b16 %v1311
    %v3319 = vunpack.c.l.b16 %v1312
    %v3320 = vunpack.c.h.b16 %v1312
    %v3321 = vunpack.c.l.b16 %v1313
    %v3322 = vunpack.c.h.b16 %v1313
    %v3323 = vunpack.c.l.b16 %v1314
    %v3324 = vunpack.c.h.b16 %v1314
    %v3325 = vunpack.c.l.b16 %v1315
    %v3326 = vunpack.c.h.b16 %v1315
    %v3327 = vunpack.c.l.b16 %v1316
    %v3328 = vunpack.c.h.b16 %v1316
    %v3329 = vunpack.c.l.b16 %v1317
    %v3330 = vunpack.c.h.b16 %v1317
    %v3331 = vunpack.c.l.b16 %v1318
    %v3332 = vunpack.c.h.b16 %v1318
    %v3333 = vunpack.c.l.b16 %v1319
    %v3334 = vunpack.c.h.b16 %v1319
    %v3335 = vunpack.c.l.b16 %v1320
    %v3336 = vunpack.c.h.b16 %v1320
    %v3337 = vunpack.c.l.b16 %v1321
    %v3338 = vunpack.c.h.b16 %v1321
    %v3339 = vunpack.c.l.b16 %v1322
    %v3340 = vunpack.c.h.b16 %v1322
    %v3341 = vunpack.c.l.b16 %v1323
    %v3342 = vunpack.c.h.b16 %v1323
    %v3343 = vunpack.c.l.b16 %v1324
    %v3344 = vunpack.c.h.b16 %v1324
    %v3345 = vunpack.c.l.b16 %v1325
    %v3346 = vunpack.c.h.b16 %v1325
    %v3347 = vunpack.c.l.b16 %v1326
    %v3348 = vunpack.c.h.b16 %v1326
    %v3349 = vunpack.c.l.b16 %v1327
    %v3350 = vunpack.c.h.b16 %v1327
    %v3351 = vunpack.c.l.b16 %v1328
    %v3352 = vunpack.c.h.b16 %v1328
    %v3353 = vunpack.c.l.b16 %v1329
    %v3354 = vunpack.c.h.b16 %v1329
    %v3355 = vunpack.c.l.b16 %v1330
    %v3356 = vunpack.c.h.b16 %v1330
    %v3357 = vunpack.c.l.b16 %v1331
    %v3358 = vunpack.c.h.b16 %v1331
    %v3359 = vunpack.c.l.b16 %v1332
    %v3360 = vunpack.c.h.b16 %v1332
    %v3361 = vunpack.c.l.b16 %v1333
    %v3362 = vunpack.c.h.b16 %v1333
    %v3363 = vunpack.c.l.b16 %v1334
    %v3364 = vunpack.c.h.b16 %v1334
    %v3365 = vunpack.c.l.b16 %v1335
    %v3366 = vunpack.c.h.b16 %v1335
    %v3367 = vunpack.c.l.b16 %v1336
    %v3368 = vunpack.c.h.b16 %v1336
    %v3369 = vunpack.c.l.b16 %v1337
    %v3370 = vunpack.c.h.b16 %v1337
    %v3371 = vunpack.c.l.b16 %v1338
    %v3372 = vunpack.c.h.b16 %v1338
    %v3373 = vunpack.c.l.b16 %v1339
    %v3374 = vunpack.c.h.b16 %v1339
    %v3375 = vunpack.c.l.b16 %v1340
    %v3376 = vunpack.c.h.b16 %v1340
    %v3377 = vunpack.c.l.b16 %v1341
    %v3378 = vunpack.c.h.b16 %v1341
    %v3379 = vunpack.c.l.b16 %v1342
    %v3380 = vunpack.c.h.b16 %v1342
    %v3381 = vunpack.c.l.b16 %v1343
    %v3382 = vunpack.c.h.b16 %v1343
    %v3383 = vunpack.c.l.b16 %v1344
    %v3384 = vunpack.c.h.b16 %v1344
    %v3385 = vunpack.c.l.b16 %v1345
    %v3386 = vunpack.c.h.b16 %v1345
    %v3387 = vunpack.c.l.b16 %v1346
    %v3388 = vunpack.c.h.b16 %v1346
    %v3389 = vunpack.c.l.b16 %v1347
    %v3390 = vunpack.c.h.b16 %v1347
    %v3391 = vunpack.c.l.b16 %v1348
    %v3392 = vunpack.c.h.b16 %v1348
    %v3393 = vunpack.c.l.b16 %v1349
    %v3394 = vunpack.c.h.b16 %v1349
    %v3395 = vunpack.c.l.b16 %v1350
    %v3396 = vunpack.c.h.b16 %v1350
    %v3397 = vunpack.c.l.b16 %v1351
    %v3398 = vunpack.c.h.b16 %v1351
    %v3399 = vunpack.c.l.b16 %v1352
    %v3400 = vunpack.c.h.b16 %v1352
    %v3401 = vunpack.c.l.b16 %v1353
    %v3402 = vunpack.c.h.b16 %v1353
    %v3403 = vunpack.c.l.b16 %v1354
    %v3404 = vunpack.c.h.b16 %v1354
    %v3405 = vunpack.c.l.b16 %v1355
    %v3406 = vunpack.c.h.b16 %v1355
    %v3407 = vunpack.c.l.b16 %v1356
    %v3408 = vunpack.c.h.b16 %v1356
    %v3409 = vunpack.c.l.b16 %v1357
    %v3410 = vunpack.c.h.b16 %v1357
    %v3411 = vunpack.c.l.b16 %v1358
    %v3412 = vunpack.c.h.b16 %v1358
    %v3413 = vunpack.c.l.b16 %v1359
    %v3414 = vunpack.c.h.b16 %v1359
    %v3415 = vunpack.c.l.b16 %v1360
    %v3416 = vunpack.c.h.b16 %v1360
    %v3417 = vunpack.c.l.b16 %v1361
    %v3418 = vunpack.c.h.b16 %v1361
    %v3419 = vunpack.c.l.b16 %v1362
    %v3420 = vunpack.c.h.b16 %v1362
    %v3421 = vunpack.c.l.b16 %v1363
    %v3422 = vunpack.c.h.b16 %v1363
    %v3423 = vunpack.c.l.b16 %v1364
    %v3424 = vunpack.c.h.b16 %v1364
    %v3425 = vunpack.c.l.b16 %v1365
    %v3426 = vunpack.c.h.b16 %v1365
    %v3427 = vpack.c.b16 %v2419, %v2403
    %v3428 = vpack.c.b16 %v2420, %v2404
    %v3429 = vpack.c.b16 %v2421, %v2405
    %v3430 = vpack.c.b16 %v2422, %v2406
    %v3431 = vpack.c.b16 %v2423, %v2407
    %v3432 = vpack.c.b16 %v2424, %v2408
    %v3433 = vpack.c.b16 %v2425, %v2409
    %v3434 = vpack.c.b16 %v2426, %v2410
    %v3435 = vpack.c.b16 %v2427, %v2411
    %v3436 = vpack.c.b16 %v2428, %v2412
    %v3437 = vpack.c.b16 %v2429, %v2413
    %v3438 = vpack.c.b16 %v2430, %v2414
    %v3439 = vpack.c.b16 %v2431, %v2415
    %v3440 = vpack.c.b16 %v2432, %v2416
    %v3441 = vpack.c.b16 %v2433, %v2417
    %v3442 = vpack.c.b16 %v2434, %v2418
    %v3443 = vpack.c.b16 %v2451, %v2435
    %v3444 = vpack.c.b16 %v2452, %v2436
    %v3445 = vpack.c.b16 %v2453, %v2437
    %v3446 = vpack.c.b16 %v2454, %v2438
    %v3447 = vpack.c.b16 %v2455, %v2439
    %v3448 = vpack.c.b16 %v2456, %v2440
    %v3449 = vpack.c.b16 %v2457, %v2441
    %v3450 = vpack.c.b16 %v2458, %v2442
    %v3451 = vpack.c.b16 %v2459, %v2443
    %v3452 = vpack.c.b16 %v2460, %v2444
    %v3453 = vpack.c.b16 %v2461, %v2445
    %v3454 = vpack.c.b16 %v2462, %v2446
    %v3455 = vpack.c.b16 %v2463, %v2447
    %v3456 = vpack.c.b16 %v2464, %v2448
    %v3457 = vpack.c.b16 %v2465, %v2449
    %v3458 = vpack.c.b16 %v2466, %v2450
    %v3459 = vpack.c.b16 %v2483, %v2467
    %v3460 = vpack.c.b16 %v2484, %v2468
    %v3461 = vpack.c.b16 %v2485, %v2469
    %v3462 = vpack.c.b16 %v2486, %v2470
    %v3463 = vpack.c.b16 %v2487, %v2471
    %v3464 = vpack.c.b16 %v2488, %v2472
    %v3465 = vpack.c.b16 %v2489, %v2473
    %v3466 = vpack.c.b16 %v2490, %v2474
    %v3467 = vpack.c.b16 %v2491, %v2475
    %v3468 = vpack.c.b16 %v2492, %v2476
    %v3469 = vpack.c.b16 %v2493, %v2477
    %v3470 = vpack.c.b16 %v2494, %v2478
    %v3471 = vpack.c.b16 %v2495, %v2479
    %v3472 = vpack.c.b16 %v2496, %v2480
    %v3473 = vpack.c.b16 %v2497, %v2481
    %v3474 = vpack.c.b16 %v2498, %v2482
    %v3475 = vpack.c.b16 %v2515, %v2499
    %v3476 = vpack.c.b16 %v2516, %v2500
    %v3477 = vpack.c.b16 %v2517, %v2501
    %v3478 = vpack.c.b16 %v2518, %v2502
    %v3479 = vpack.c.b16 %v2519, %v2503
    %v3480 = vpack.c.b16 %v2520, %v2504
    %v3481 = vpack.c.b16 %v2521, %v2505
    %v3482 = vpack.c.b16 %v2522, %v2506
    %v3483 = vpack.c.b16 %v2523, %v2507
    %v3484 = vpack.c.b16 %v2524, %v2508
    %v3485 = vpack.c.b16 %v2525, %v2509
    %v3486 = vpack.c.b16 %v2526, %v2510
    %v3487 = vpack.c.b16 %v2527, %v2511
    %v3488 = vpack.c.b16 %v2528, %v2512
    %v3489 = vpack.c.b16 %v2529, %v2513
    %v3490 = vpack.c.b16 %v2530, %v2514
    %v3491 = vpack.c.b16 %v2547, %v2531
    %v3492 = vpack.c.b16 %v2548, %v2532
    %v3493 = vpack.c.b16 %v2549, %v2533
    %v3494 = vpack.c.b16 %v2550, %v2534
    %v3495 = vpack.c.b16 %v2551, %v2535
    %v3496 = vpack.c.b16 %v2552, %v2536
    %v3497 = vpack.c.b16 %v2553, %v2537
    %v3498 = vpack.c.b16 %v2554, %v2538
    %v3499 = vpack.c.b16 %v2555, %v2539
    %v3500 = vpack.c.b16 %v2556, %v2540
    %v3501 = vpack.c.b16 %v2557, %v2541
    %v3502 = vpack.c.b16 %v2558, %v2542
    %v3503 = vpack.c.b16 %v2559, %v2543
    %v3504 = vpack.c.b16 %v2560, %v2544
    %v3505 = vpack.c.b16 %v2561, %v2545
    %v3506 = vpack.c.b16 %v2562, %v2546
    %v3507 = vpack.c.b16 %v2579, %v2563
    %v3508 = vpack.c.b16 %v2580, %v2564
    %v3509 = vpack.c.b16 %v2581, %v2565
    %v3510 = vpack.c.b16 %v2582, %v2566
    %v3511 = vpack.c.b16 %v2583, %v2567
    %v3512 = vpack.c.b16 %v2584, %v2568
    %v3513 = vpack.c.b16 %v2585, %v2569
    %v3514 = vpack.c.b16 %v2586, %v2570
    %v3515 = vpack.c.b16 %v2587, %v2571
    %v3516 = vpack.c.b16 %v2588, %v2572
    %v3517 = vpack.c.b16 %v2589, %v2573
    %v3518 = vpack.c.b16 %v2590, %v2574
    %v3519 = vpack.c.b16 %v2591, %v2575
    %v3520 = vpack.c.b16 %v2592, %v2576
    %v3521 = vpack.c.b16 %v2593, %v2577
    %v3522 = vpack.c.b16 %v2594, %v2578
    %v3523 = vpack.c.b16 %v2611, %v2595
    %v3524 = vpack.c.b16 %v2612, %v2596
    %v3525 = vpack.c.b16 %v2613, %v2597
    %v3526 = vpack.c.b16 %v2614, %v2598
    %v3527 = vpack.c.b16 %v2615, %v2599
    %v3528 = vpack.c.b16 %v2616, %v2600
    %v3529 = vpack.c.b16 %v2617, %v2601
    %v3530 = vpack.c.b16 %v2618, %v2602
    %v3531 = vpack.c.b16 %v2619, %v2603
    %v3532 = vpack.c.b16 %v2620, %v2604
    %v3533 = vpack.c.b16 %v2621, %v2605
    %v3534 = vpack.c.b16 %v2622, %v2606
    %v3535 = vpack.c.b16 %v2623, %v2607
    %v3536 = vpack.c.b16 %v2624, %v2608
    %v3537 = vpack.c.b16 %v2625, %v2609
    %v3538 = vpack.c.b16 %v2626, %v2610
    %v3539 = vpack.c.b16 %v2643, %v2627
    %v3540 = vpack.c.b16 %v2644, %v2628
    %v3541 = vpack.c.b16 %v2645, %v2629
    %v3542 = vpack.c.b16 %v2646, %v2630
    %v3543 = vpack.c.b16 %v2647, %v2631
    %v3544 = vpack.c.b16 %v2648, %v2632
    %v3545 = vpack.c.b16 %v2649, %v2633
    %v3546 = vpack.c.b16 %v2650, %v2634
    %v3547 = vpack.c.b16 %v2651, %v2635
    %v3548 = vpack.c.b16 %v2652, %v2636
    %v3549 = vpack.c.b16 %v2653, %v2637
    %v3550 = vpack.c.b16 %v2654, %v2638
    %v3551 = vpack.c.b16 %v2655, %v2639
    %v3552 = vpack.c.b16 %v2656, %v2640
    %v3553 = vpack.c.b16 %v2657, %v2641
    %v3554 = vpack.c.b16 %v2658, %v2642
    %v3555 = vpack.c.b16 %v2675, %v2659
    %v3556 = vpack.c.b16 %v2676, %v2660
    %v3557 = vpack.c.b16 %v2677, %v2661
    %v3558 = vpack.c.b16 %v2678, %v2662
    %v3559 = vpack.c.b16 %v2679, %v2663
    %v3560 = vpack.c.b16 %v2680, %v2664
    %v3561 = vpack.c.b16 %v2681, %v2665
    %v3562 = vpack.c.b16 %v2682, %v2666
    %v3563 = vpack.c.b16 %v2683, %v2667
    %v3564 = vpack.c.b16 %v2684, %v2668
    %v3565 = vpack.c.b16 %v2685, %v2669
    %v3566 = vpack.c.b16 %v2686, %v2670
    %v3567 = vpack.c.b16 %v2687, %v2671
    %v3568 = vpack.c.b16 %v2688, %v2672
    %v3569 = vpack.c.b16 %v2689, %v2673
    %v3570 = vpack.c.b16 %v2690, %v2674
    %v3571 = vpack.c.b16 %v2707, %v2691
    %v3572 = vpack.c.b16 %v2708, %v2692
    %v3573 = vpack.c.b16 %v2709, %v2693
    %v3574 = vpack.c.b16 %v2710, %v2694
    %v3575 = vpack.c.b16 %v2711, %v2695
    %v3576 = vpack.c.b16 %v2712, %v2696
    %v3577 = vpack.c.b16 %v2713, %v2697
    %v3578 = vpack.c.b16 %v2714, %v2698
    %v3579 = vpack.c.b16 %v2715, %v2699
    %v3580 = vpack.c.b16 %v2716, %v2700
    %v3581 = vpack.c.b16 %v2717, %v2701
    %v3582 = vpack.c.b16 %v2718, %v2702
    %v3583 = vpack.c.b16 %v2719, %v2703
    %v3584 = vpack.c.b16 %v2720, %v2704
    %v3585 = vpack.c.b16 %v2721, %v2705
    %v3586 = vpack.c.b16 %v2722, %v2706
    %v3587 = vpack.c.b16 %v2739, %v2723
    %v3588 = vpack.c.b16 %v2740, %v2724
    %v3589 = vpack.c.b16 %v2741, %v2725
    %v3590 = vpack.c.b16 %v2742, %v2726
    %v3591 = vpack.c.b16 %v2743, %v2727
    %v3592 = vpack.c.b16 %v2744, %v2728
    %v3593 = vpack.c.b16 %v2745, %v2729
    %v3594 = vpack.c.b16 %v2746, %v2730
    %v3595 = vpack.c.b16 %v2747, %v2731
    %v3596 = vpack.c.b16 %v2748, %v2732
    %v3597 = vpack.c.b16 %v2749, %v2733
    %v3598 = vpack.c.b16 %v2750, %v2734
    %v3599 = vpack.c.b16 %v2751, %v2735
    %v3600 = vpack.c.b16 %v2752, %v2736
    %v3601 = vpack.c.b16 %v2753, %v2737
    %v3602 = vpack.c.b16 %v2754, %v2738
    %v3603 = vpack.c.b16 %v2771, %v2755
    %v3604 = vpack.c.b16 %v2772, %v2756
    %v3605 = vpack.c.b16 %v2773, %v2757
    %v3606 = vpack.c.b16 %v2774, %v2758
    %v3607 = vpack.c.b16 %v2775, %v2759
    %v3608 = vpack.c.b16 %v2776, %v2760
    %v3609 = vpack.c.b16 %v2777, %v2761
    %v3610 = vpack.c.b16 %v2778, %v2762
    %v3611 = vpack.c.b16 %v2779, %v2763
    %v3612 = vpack.c.b16 %v2780, %v2764
    %v3613 = vpack.c.b16 %v2781, %v2765
    %v3614 = vpack.c.b16 %v2782, %v2766
    %v3615 = vpack.c.b16 %v2783, %v2767
    %v3616 = vpack.c.b16 %v2784, %v2768
    %v3617 = vpack.c.b16 %v2785, %v2769
    %v3618 = vpack.c.b16 %v2786, %v2770
    %v3619 = vpack.c.b16 %v2803, %v2787
    %v3620 = vpack.c.b16 %v2804, %v2788
    %v3621 = vpack.c.b16 %v2805, %v2789
    %v3622 = vpack.c.b16 %v2806, %v2790
    %v3623 = vpack.c.b16 %v2807, %v2791
    %v3624 = vpack.c.b16 %v2808, %v2792
    %v3625 = vpack.c.b16 %v2809, %v2793
    %v3626 = vpack.c.b16 %v2810, %v2794
    %v3627 = vpack.c.b16 %v2811, %v2795
    %v3628 = vpack.c.b16 %v2812, %v2796
    %v3629 = vpack.c.b16 %v2813, %v2797
    %v3630 = vpack.c.b16 %v2814, %v2798
    %v3631 = vpack.c.b16 %v2815, %v2799
    %v3632 = vpack.c.b16 %v2816, %v2800
    %v3633 = vpack.c.b16 %v2817, %v2801
    %v3634 = vpack.c.b16 %v2818, %v2802
    %v3635 = vpack.c.b16 %v2835, %v2819
    %v3636 = vpack.c.b16 %v2836, %v2820
    %v3637 = vpack.c.b16 %v2837, %v2821
    %v3638 = vpack.c.b16 %v2838, %v2822
    %v3639 = vpack.c.b16 %v2839, %v2823
    %v3640 = vpack.c.b16 %v2840, %v2824
    %v3641 = vpack.c.b16 %v2841, %v2825
    %v3642 = vpack.c.b16 %v2842, %v2826
    %v3643 = vpack.c.b16 %v2843, %v2827
    %v3644 = vpack.c.b16 %v2844, %v2828
    %v3645 = vpack.c.b16 %v2845, %v2829
    %v3646 = vpack.c.b16 %v2846, %v2830
    %v3647 = vpack.c.b16 %v2847, %v2831
    %v3648 = vpack.c.b16 %v2848, %v2832
    %v3649 = vpack.c.b16 %v2849, %v2833
    %v3650 = vpack.c.b16 %v2850, %v2834
    %v3651 = vpack.c.b16 %v2867, %v2851
    %v3652 = vpack.c.b16 %v2868, %v2852
    %v3653 = vpack.c.b16 %v2869, %v2853
    %v3654 = vpack.c.b16 %v2870, %v2854
    %v3655 = vpack.c.b16 %v2871, %v2855
    %v3656 = vpack.c.b16 %v2872, %v2856
    %v3657 = vpack.c.b16 %v2873, %v2857
    %v3658 = vpack.c.b16 %v2874, %v2858
    %v3659 = vpack.c.b16 %v2875, %v2859
    %v3660 = vpack.c.b16 %v2876, %v2860
    %v3661 = vpack.c.b16 %v2877, %v2861
    %v3662 = vpack.c.b16 %v2878, %v2862
    %v3663 = vpack.c.b16 %v2879, %v2863
    %v3664 = vpack.c.b16 %v2880, %v2864
    %v3665 = vpack.c.b16 %v2881, %v2865
    %v3666 = vpack.c.b16 %v2882, %v2866
    %v3667 = vpack.c.b16 %v2899, %v2883
    %v3668 = vpack.c.b16 %v2900, %v2884
    %v3669 = vpack.c.b16 %v2901, %v2885
    %v3670 = vpack.c.b16 %v2902, %v2886
    %v3671 = vpack.c.b16 %v2903, %v2887
    %v3672 = vpack.c.b16 %v2904, %v2888
    %v3673 = vpack.c.b16 %v2905, %v2889
    %v3674 = vpack.c.b16 %v2906, %v2890
    %v3675 = vpack.c.b16 %v2907, %v2891
    %v3676 = vpack.c.b16 %v2908, %v2892
    %v3677 = vpack.c.b16 %v2909, %v2893
    %v3678 = vpack.c.b16 %v2910, %v2894
    %v3679 = vpack.c.b16 %v2911, %v2895
    %v3680 = vpack.c.b16 %v2912, %v2896
    %v3681 = vpack.c.b16 %v2913, %v2897
    %v3682 = vpack.c.b16 %v2914, %v2898
    %v3683 = vpack.c.b16 %v2931, %v2915
    %v3684 = vpack.c.b16 %v2932, %v2916
    %v3685 = vpack.c.b16 %v2933, %v2917
    %v3686 = vpack.c.b16 %v2934, %v2918
    %v3687 = vpack.c.b16 %v2935, %v2919
    %v3688 = vpack.c.b16 %v2936, %v2920
    %v3689 = vpack.c.b16 %v2937, %v2921
    %v3690 = vpack.c.b16 %v2938, %v2922
    %v3691 = vpack.c.b16 %v2939, %v2923
    %v3692 = vpack.c.b16 %v2940, %v2924
    %v3693 = vpack.c.b16 %v2941, %v2925
    %v3694 = vpack.c.b16 %v2942, %v2926
    %v3695 = vpack.c.b16 %v2943, %v2927
    %v3696 = vpack.c.b16 %v2944, %v2928
    %v3697 = vpack.c.b16 %v2945, %v2929
    %v3698 = vpack.c.b16 %v2946, %v2930
    %v3699 = vpack.c.b16 %v2963, %v2947
    %v3700 = vpack.c.b16 %v2964, %v2948
    %v3701 = vpack.c.b16 %v2965, %v2949
    %v3702 = vpack.c.b16 %v2966, %v2950
    %v3703 = vpack.c.b16 %v2967, %v2951
    %v3704 = vpack.c.b16 %v2968, %v2952
    %v3705 = vpack.c.b16 %v2969, %v2953
    %v3706 = vpack.c.b16 %v2970, %v2954
    %v3707 = vpack.c.b16 %v2971, %v2955
    %v3708 = vpack.c.b16 %v2972, %v2956
    %v3709 = vpack.c.b16 %v2973, %v2957
    %v3710 = vpack.c.b16 %v2974, %v2958
    %v3711 = vpack.c.b16 %v2975, %v2959
    %v3712 = vpack.c.b16 %v2976, %v2960
    %v3713 = vpack.c.b16 %v2977, %v2961
    %v3714 = vpack.c.b16 %v2978, %v2962
    %v3715 = vpack.c.b16 %v2995, %v2979
    %v3716 = vpack.c.b16 %v2996, %v2980
    %v3717 = vpack.c.b16 %v2997, %v2981
    %v3718 = vpack.c.b16 %v2998, %v2982
    %v3719 = vpack.c.b16 %v2999, %v2983
    %v3720 = vpack.c.b16 %v3000, %v2984
    %v3721 = vpack.c.b16 %v3001, %v2985
    %v3722 = vpack.c.b16 %v3002, %v2986
    %v3723 = vpack.c.b16 %v3003, %v2987
    %v3724 = vpack.c.b16 %v3004, %v2988
    %v3725 = vpack.c.b16 %v3005, %v2989
    %v3726 = vpack.c.b16 %v3006, %v2990
    %v3727 = vpack.c.b16 %v3007, %v2991
    %v3728 = vpack.c.b16 %v3008, %v2992
    %v3729 = vpack.c.b16 %v3009, %v2993
    %v3730 = vpack.c.b16 %v3010, %v2994
    %v3731 = vpack.c.b16 %v3027, %v3011
    %v3732 = vpack.c.b16 %v3028, %v3012
    %v3733 = vpack.c.b16 %v3029, %v3013
    %v3734 = vpack.c.b16 %v3030, %v3014
    %v3735 = vpack.c.b16 %v3031, %v3015
    %v3736 = vpack.c.b16 %v3032, %v3016
    %v3737 = vpack.c.b16 %v3033, %v3017
    %v3738 = vpack.c.b16 %v3034, %v3018
    %v3739 = vpack.c.b16 %v3035, %v3019
    %v3740 = vpack.c.b16 %v3036, %v3020
    %v3741 = vpack.c.b16 %v3037, %v3021
    %v3742 = vpack.c.b16 %v3038, %v3022
    %v3743 = vpack.c.b16 %v3039, %v3023
    %v3744 = vpack.c.b16 %v3040, %v3024
    %v3745 = vpack.c.b16 %v3041, %v3025
    %v3746 = vpack.c.b16 %v3042, %v3026
    %v3747 = vpack.c.b16 %v3059, %v3043
    %v3748 = vpack.c.b16 %v3060, %v3044
    %v3749 = vpack.c.b16 %v3061, %v3045
    %v3750 = vpack.c.b16 %v3062, %v3046
    %v3751 = vpack.c.b16 %v3063, %v3047
    %v3752 = vpack.c.b16 %v3064, %v3048
    %v3753 = vpack.c.b16 %v3065, %v3049
    %v3754 = vpack.c.b16 %v3066, %v3050
    %v3755 = vpack.c.b16 %v3067, %v3051
    %v3756 = vpack.c.b16 %v3068, %v3052
    %v3757 = vpack.c.b16 %v3069, %v3053
    %v3758 = vpack.c.b16 %v3070, %v3054
    %v3759 = vpack.c.b16 %v3071, %v3055
    %v3760 = vpack.c.b16 %v3072, %v3056
    %v3761 = vpack.c.b16 %v3073, %v3057
    %v3762 = vpack.c.b16 %v3074, %v3058
    %v3763 = vpack.c.b16 %v3091, %v3075
    %v3764 = vpack.c.b16 %v3092, %v3076
    %v3765 = vpack.c.b16 %v3093, %v3077
    %v3766 = vpack.c.b16 %v3094, %v3078
    %v3767 = vpack.c.b16 %v3095, %v3079
    %v3768 = vpack.c.b16 %v3096, %v3080
    %v3769 = vpack.c.b16 %v3097, %v3081
    %v3770 = vpack.c.b16 %v3098, %v3082
    %v3771 = vpack.c.b16 %v3099, %v3083
    %v3772 = vpack.c.b16 %v3100, %v3084
    %v3773 = vpack.c.b16 %v3101, %v3085
    %v3774 = vpack.c.b16 %v3102, %v3086
    %v3775 = vpack.c.b16 %v3103, %v3087
    %v3776 = vpack.c.b16 %v3104, %v3088
    %v3777 = vpack.c.b16 %v3105, %v3089
    %v3778 = vpack.c.b16 %v3106, %v3090
    %v3779 = vpack.c.b16 %v3123, %v3107
    %v3780 = vpack.c.b16 %v3124, %v3108
    %v3781 = vpack.c.b16 %v3125, %v3109
    %v3782 = vpack.c.b16 %v3126, %v3110
    %v3783 = vpack.c.b16 %v3127, %v3111
    %v3784 = vpack.c.b16 %v3128, %v3112
    %v3785 = vpack.c.b16 %v3129, %v3113
    %v3786 = vpack.c.b16 %v3130, %v3114
    %v3787 = vpack.c.b16 %v3131, %v3115
    %v3788 = vpack.c.b16 %v3132, %v3116
    %v3789 = vpack.c.b16 %v3133, %v3117
    %v3790 = vpack.c.b16 %v3134, %v3118
    %v3791 = vpack.c.b16 %v3135, %v3119
    %v3792 = vpack.c.b16 %v3136, %v3120
    %v3793 = vpack.c.b16 %v3137, %v3121
    %v3794 = vpack.c.b16 %v3138, %v3122
    %v3795 = vpack.c.b16 %v3155, %v3139
    %v3796 = vpack.c.b16 %v3156, %v3140
    %v3797 = vpack.c.b16 %v3157, %v3141
    %v3798 = vpack.c.b16 %v3158, %v3142
    %v3799 = vpack.c.b16 %v3159, %v3143
    %v3800 = vpack.c.b16 %v3160, %v3144
    %v3801 = vpack.c.b16 %v3161, %v3145
    %v3802 = vpack.c.b16 %v3162, %v3146
    %v3803 = vpack.c.b16 %v3163, %v3147
    %v3804 = vpack.c.b16 %v3164, %v3148
    %v3805 = vpack.c.b16 %v3165, %v3149
    %v3806 = vpack.c.b16 %v3166, %v3150
    %v3807 = vpack.c.b16 %v3167, %v3151
    %v3808 = vpack.c.b16 %v3168, %v3152
    %v3809 = vpack.c.b16 %v3169, %v3153
    %v3810 = vpack.c.b16 %v3170, %v3154
    %v3811 = vpack.c.b16 %v3187, %v3171
    %v3812 = vpack.c.b16 %v3188, %v3172
    %v3813 = vpack.c.b16 %v3189, %v3173
    %v3814 = vpack.c.b16 %v3190, %v3174
    %v3815 = vpack.c.b16 %v3191, %v3175
    %v3816 = vpack.c.b16 %v3192, %v3176
    %v3817 = vpack.c.b16 %v3193, %v3177
    %v3818 = vpack.c.b16 %v3194, %v3178
    %v3819 = vpack.c.b16 %v3195, %v3179
    %v3820 = vpack.c.b16 %v3196, %v3180
    %v3821 = vpack.c.b16 %v3197, %v3181
    %v3822 = vpack.c.b16 %v3198, %v3182
    %v3823 = vpack.c.b16 %v3199, %v3183
    %v3824 = vpack.c.b16 %v3200, %v3184
    %v3825 = vpack.c.b16 %v3201, %v3185
    %v3826 = vpack.c.b16 %v3202, %v3186
    %v3827 = vpack.c.b16 %v3219, %v3203
    %v3828 = vpack.c.b16 %v3220, %v3204
    %v3829 = vpack.c.b16 %v3221, %v3205
    %v3830 = vpack.c.b16 %v3222, %v3206
    %v3831 = vpack.c.b16 %v3223, %v3207
    %v3832 = vpack.c.b16 %v3224, %v3208
    %v3833 = vpack.c.b16 %v3225, %v3209
    %v3834 = vpack.c.b16 %v3226, %v3210
    %v3835 = vpack.c.b16 %v3227, %v3211
    %v3836 = vpack.c.b16 %v3228, %v3212
    %v3837 = vpack.c.b16 %v3229, %v3213
    %v3838 = vpack.c.b16 %v3230, %v3214
    %v3839 = vpack.c.b16 %v3231, %v3215
    %v3840 = vpack.c.b16 %v3232, %v3216
    %v3841 = vpack.c.b16 %v3233, %v3217
    %v3842 = vpack.c.b16 %v3234, %v3218
    %v3843 = vpack.c.b16 %v3251, %v3235
    %v3844 = vpack.c.b16 %v3252, %v3236
    %v3845 = vpack.c.b16 %v3253, %v3237
    %v3846 = vpack.c.b16 %v3254, %v3238
    %v3847 = vpack.c.b16 %v3255, %v3239
    %v3848 = vpack.c.b16 %v3256, %v3240
    %v3849 = vpack.c.b16 %v3257, %v3241
    %v3850 = vpack.c.b16 %v3258, %v3242
    %v3851 = vpack.c.b16 %v3259, %v3243
    %v3852 = vpack.c.b16 %v3260, %v3244
    %v3853 = vpack.c.b16 %v3261, %v3245
    %v3854 = vpack.c.b16 %v3262, %v3246
    %v3855 = vpack.c.b16 %v3263, %v3247
    %v3856 = vpack.c.b16 %v3264, %v3248
    %v3857 = vpack.c.b16 %v3265, %v3249
    %v3858 = vpack.c.b16 %v3266, %v3250
    %v3859 = vpack.c.b16 %v3283, %v3267
    %v3860 = vpack.c.b16 %v3284, %v3268
    %v3861 = vpack.c.b16 %v3285, %v3269
    %v3862 = vpack.c.b16 %v3286, %v3270
    %v3863 = vpack.c.b16 %v3287, %v3271
    %v3864 = vpack.c.b16 %v3288, %v3272
    %v3865 = vpack.c.b16 %v3289, %v3273
    %v3866 = vpack.c.b16 %v3290, %v3274
    %v3867 = vpack.c.b16 %v3291, %v3275
    %v3868 = vpack.c.b16 %v3292, %v3276
    %v3869 = vpack.c.b16 %v3293, %v3277
    %v3870 = vpack.c.b16 %v3294, %v3278
    %v3871 = vpack.c.b16 %v3295, %v3279
    %v3872 = vpack.c.b16 %v3296, %v3280
    %v3873 = vpack.c.b16 %v3297, %v3281
    %v3874 = vpack.c.b16 %v3298, %v3282
    %v3875 = vpack.c.b16 %v3315, %v3299
    %v3876 = vpack.c.b16 %v3316, %v3300
    %v3877 = vpack.c.b16 %v3317, %v3301
    %v3878 = vpack.c.b16 %v3318, %v3302
    %v3879 = vpack.c.b16 %v3319, %v3303
    %v3880 = vpack.c.b16 %v3320, %v3304
    %v3881 = vpack.c.b16 %v3321, %v3305
    %v3882 = vpack.c.b16 %v3322, %v3306
    %v3883 = vpack.c.b16 %v3323, %v3307
    %v3884 = vpack.c.b16 %v3324, %v3308
    %v3885 = vpack.c.b16 %v3325, %v3309
    %v3886 = vpack.c.b16 %v3326, %v3310
    %v3887 = vpack.c.b16 %v3327, %v3311
    %v3888 = vpack.c.b16 %v3328, %v3312
    %v3889 = vpack.c.b16 %v3329, %v3313
    %v3890 = vpack.c.b16 %v3330, %v3314
    %v3891 = vpack.c.b16 %v3347, %v3331
    %v3892 = vpack.c.b16 %v3348, %v3332
    %v3893 = vpack.c.b16 %v3349, %v3333
    %v3894 = vpack.c.b16 %v3350, %v3334
    %v3895 = vpack.c.b16 %v3351, %v3335
    %v3896 = vpack.c.b16 %v3352, %v3336
    %v3897 = vpack.c.b16 %v3353, %v3337
    %v3898 = vpack.c.b16 %v3354, %v3338
    %v3899 = vpack.c.b16 %v3355, %v3339
    %v3900 = vpack.c.b16 %v3356, %v3340
    %v3901 = vpack.c.b16 %v3357, %v3341
    %v3902 = vpack.c.b16 %v3358, %v3342
    %v3903 = vpack.c.b16 %v3359, %v3343
    %v3904 = vpack.c.b16 %v3360, %v3344
    %v3905 = vpack.c.b16 %v3361, %v3345
    %v3906 = vpack.c.b16 %v3362, %v3346
    %v3907 = vpack.c.b16 %v3379, %v3363
    %v3908 = vpack.c.b16 %v3380, %v3364
    %v3909 = vpack.c.b16 %v3381, %v3365
    %v3910 = vpack.c.b16 %v3382, %v3366
    %v3911 = vpack.c.b16 %v3383, %v3367
    %v3912 = vpack.c.b16 %v3384, %v3368
    %v3913 = vpack.c.b16 %v3385, %v3369
    %v3914 = vpack.c.b16 %v3386, %v3370
    %v3915 = vpack.c.b16 %v3387, %v3371
    %v3916 = vpack.c.b16 %v3388, %v3372
    %v3917 = vpack.c.b16 %v3389, %v3373
    %v3918 = vpack.c.b16 %v3390, %v3374
    %v3919 = vpack.c.b16 %v3391, %v3375
    %v3920 = vpack.c.b16 %v3392, %v3376
    %v3921 = vpack.c.b16 %v3393, %v3377
    %v3922 = vpack.c.b16 %v3394, %v3378
    %v3923 = vpack.c.b16 %v3411, %v3395
    %v3924 = vpack.c.b16 %v3412, %v3396
    %v3925 = vpack.c.b16 %v3413, %v3397
    %v3926 = vpack.c.b16 %v3414, %v3398
    %v3927 = vpack.c.b16 %v3415, %v3399
    %v3928 = vpack.c.b16 %v3416, %v3400
    %v3929 = vpack.c.b16 %v3417, %v3401
    %v3930 = vpack.c.b16 %v3418, %v3402
    %v3931 = vpack.c.b16 %v3419, %v3403
    %v3932 = vpack.c.b16 %v3420, %v3404
    %v3933 = vpack.c.b16 %v3421, %v3405
    %v3934 = vpack.c.b16 %v3422, %v3406
    %v3935 = vpack.c.b16 %v3423, %v3407
    %v3936 = vpack.c.b16 %v3424, %v3408
    %v3937 = vpack.c.b16 %v3425, %v3409
    %v3938 = vpack.c.b16 %v3426, %v3410
    %4451 = vmatprep.subr.bf16.mxu0 %v3540
    %4452 = vmatpush1.bf16.msra.mxu0 %v3539
    %4453 = vmatprep.subr.bf16.mxu0 %v3524
    %4454 = vmatpush1.bf16.msra.mxu0 %v3523
    %4455 = vmatprep.subr.bf16.mxu0 %v3508
    %4456 = vmatpush1.bf16.msra.mxu0 %v3507
    %4457 = vmatprep.subr.bf16.mxu0 %v3492
    %4458 = vmatpush1.bf16.msra.mxu0 %v3491
    %4459 = vmatprep.subr.bf16.mxu0 %v3476
    %4460 = vmatpush1.bf16.msra.mxu0 %v3475
    %4461 = vmatprep.subr.bf16.mxu0 %v3460
    %4462 = vmatpush1.bf16.msra.mxu0 %v3459
    %4463 = vmatprep.subr.bf16.mxu0 %v3444
    %4464 = vmatpush1.bf16.msra.mxu0 %v3443
    %4465 = vmatprep.subr.bf16.mxu0 %v3428
    %4466 = vmatpush1.bf16.msra.mxu0 %v3427
    %4467 = vmatprep.subr.bf16.mxu0 %v3668
    %4468 = vmatpush2.bf16.msra.mxu0 %v3667
    %4469 = vmatprep.subr.bf16.mxu0 %v3652
    %4470 = vmatpush2.bf16.msra.mxu0 %v3651
    %4471 = vmatprep.subr.bf16.mxu0 %v3636
    %4472 = vmatpush2.bf16.msra.mxu0 %v3635
    %4473 = vmatprep.subr.bf16.mxu0 %v3620
    %4474 = vmatpush2.bf16.msra.mxu0 %v3619
    %4475 = vmatprep.subr.bf16.mxu0 %v3604
    %4476 = vmatpush2.bf16.msra.mxu0 %v3603
    %4477 = vmatprep.subr.bf16.mxu0 %v3588
    %4478 = vmatpush2.bf16.msra.mxu0 %v3587
    %4479 = vmatprep.subr.bf16.mxu0 %v3572
    %4480 = vmatpush2.bf16.msra.mxu0 %v3571
    %4481 = vmatprep.subr.bf16.mxu0 %v3556
    %4482 = vmatpush2.bf16.msra.mxu0 %v3555
    %4483 = vmatprep.mubr.bf16.mxu0 %v851
    %4484 = vmatmul.mubr.bf16.gmra.mxu0 %v850
    %v4485 = vpop.f32.mrf.mxu0
    %v4486 = vadd.f32 %v1598, %v4485
    %v4487 = vpop.f32.mrf.mxu0
    %v4488 = vadd.f32 %v1600, %v4487
    %v4489 = vpop.f32.mrf.mxu0
    %v4490 = vpop.f32.mrf.mxu0
    %4491 = vdwg.mxu0
    %4492 = vmatprep.subr.bf16.mxu0 %v3796
    %4493 = vmatpush1.bf16.msra.mxu0 %v3795
    %4494 = vmatprep.subr.bf16.mxu0 %v3780
    %4495 = vmatpush1.bf16.msra.mxu0 %v3779
    %4496 = vmatprep.subr.bf16.mxu0 %v3764
    %4497 = vmatpush1.bf16.msra.mxu0 %v3763
    %4498 = vmatprep.subr.bf16.mxu0 %v3748
    %4499 = vmatpush1.bf16.msra.mxu0 %v3747
    %4500 = vmatprep.subr.bf16.mxu0 %v3732
    %4501 = vmatpush1.bf16.msra.mxu0 %v3731
    %4502 = vmatprep.subr.bf16.mxu0 %v3716
    %4503 = vmatpush1.bf16.msra.mxu0 %v3715
    %4504 = vmatprep.subr.bf16.mxu0 %v3700
    %4505 = vmatpush1.bf16.msra.mxu0 %v3699
    %4506 = vmatprep.subr.bf16.mxu0 %v3684
    %4507 = vmatpush1.bf16.msra.mxu0 %v3683
    %4508 = vmatprep.subr.bf16.mxu0 %v3924
    %4509 = vmatpush2.bf16.msra.mxu0 %v3923
    %4510 = vmatprep.subr.bf16.mxu0 %v3908
    %4511 = vmatpush2.bf16.msra.mxu0 %v3907
    %4512 = vmatprep.subr.bf16.mxu0 %v3892
    %4513 = vmatpush2.bf16.msra.mxu0 %v3891
    %4514 = vmatprep.subr.bf16.mxu0 %v3876
    %4515 = vmatpush2.bf16.msra.mxu0 %v3875
    %4516 = vmatprep.subr.bf16.mxu0 %v3860
    %4517 = vmatpush2.bf16.msra.mxu0 %v3859
    %4518 = vmatprep.subr.bf16.mxu0 %v3844
    %4519 = vmatpush2.bf16.msra.mxu0 %v3843
    %4520 = vmatprep.subr.bf16.mxu0 %v3828
    %4521 = vmatpush2.bf16.msra.mxu0 %v3827
    %4522 = vmatprep.subr.bf16.mxu0 %v3812
    %4523 = vmatpush2.bf16.msra.mxu0 %v3811
    %4524 = vmatprep.mubr.bf16.mxu0 %v853
    %4525 = vmatmul.mubr.bf16.gmra.mxu0 %v852
    %v4526 = vpop.f32.mrf.mxu0
    %v4527 = vadd.f32 %v4486, %v4526
    %v4528 = vpop.f32.mrf.mxu0
    %v4529 = vadd.f32 %v4488, %v4528
    %v4530 = vpop.f32.mrf.mxu0
    %v4531 = vpop.f32.mrf.mxu0
    %4532 = vdwg.mxu0
    %4533 = vmatprep.subr.bf16.mxu0 %v3542
    %4534 = vmatpush1.bf16.msra.mxu0 %v3541
    %4535 = vmatprep.subr.bf16.mxu0 %v3526
    %4536 = vmatpush1.bf16.msra.mxu0 %v3525
    %4537 = vmatprep.subr.bf16.mxu0 %v3510
    %4538 = vmatpush1.bf16.msra.mxu0 %v3509
    %4539 = vmatprep.subr.bf16.mxu0 %v3494
    %4540 = vmatpush1.bf16.msra.mxu0 %v3493
    %4541 = vmatprep.subr.bf16.mxu0 %v3478
    %4542 = vmatpush1.bf16.msra.mxu0 %v3477
    %4543 = vmatprep.subr.bf16.mxu0 %v3462
    %4544 = vmatpush1.bf16.msra.mxu0 %v3461
    %4545 = vmatprep.subr.bf16.mxu0 %v3446
    %4546 = vmatpush1.bf16.msra.mxu0 %v3445
    %4547 = vmatprep.subr.bf16.mxu0 %v3430
    %4548 = vmatpush1.bf16.msra.mxu0 %v3429
    %4549 = vmatprep.subr.bf16.mxu0 %v3670
    %4550 = vmatpush2.bf16.msra.mxu0 %v3669
    %4551 = vmatprep.subr.bf16.mxu0 %v3654
    %4552 = vmatpush2.bf16.msra.mxu0 %v3653
    %4553 = vmatprep.subr.bf16.mxu0 %v3638
    %4554 = vmatpush2.bf16.msra.mxu0 %v3637
    %4555 = vmatprep.subr.bf16.mxu0 %v3622
    %4556 = vmatpush2.bf16.msra.mxu0 %v3621
    %4557 = vmatprep.subr.bf16.mxu0 %v3606
    %4558 = vmatpush2.bf16.msra.mxu0 %v3605
    %4559 = vmatprep.subr.bf16.mxu0 %v3590
    %4560 = vmatpush2.bf16.msra.mxu0 %v3589
    %4561 = vmatprep.subr.bf16.mxu0 %v3574
    %4562 = vmatpush2.bf16.msra.mxu0 %v3573
    %4563 = vmatprep.subr.bf16.mxu0 %v3558
    %4564 = vmatpush2.bf16.msra.mxu0 %v3557
    %4565 = vmatprep.mubr.bf16.mxu0 %v851
    %4566 = vmatmul.mubr.bf16.gmra.mxu0 %v850
    %v4567 = vpop.f32.mrf.mxu0
    %v4568 = vadd.f32 %v1639, %v4567
    %v4569 = vpop.f32.mrf.mxu0
    %v4570 = vadd.f32 %v1641, %v4569
    %v4571 = vpop.f32.mrf.mxu0
    %v4572 = vpop.f32.mrf.mxu0
    %4573 = vdwg.mxu0
    %4574 = vmatprep.subr.bf16.mxu0 %v3798
    %4575 = vmatpush1.bf16.msra.mxu0 %v3797
    %4576 = vmatprep.subr.bf16.mxu0 %v3782
    %4577 = vmatpush1.bf16.msra.mxu0 %v3781
    %4578 = vmatprep.subr.bf16.mxu0 %v3766
    %4579 = vmatpush1.bf16.msra.mxu0 %v3765
    %4580 = vmatprep.subr.bf16.mxu0 %v3750
    %4581 = vmatpush1.bf16.msra.mxu0 %v3749
    %4582 = vmatprep.subr.bf16.mxu0 %v3734
    %4583 = vmatpush1.bf16.msra.mxu0 %v3733
    %4584 = vmatprep.subr.bf16.mxu0 %v3718
    %4585 = vmatpush1.bf16.msra.mxu0 %v3717
    %4586 = vmatprep.subr.bf16.mxu0 %v3702
    %4587 = vmatpush1.bf16.msra.mxu0 %v3701
    %4588 = vmatprep.subr.bf16.mxu0 %v3686
    %4589 = vmatpush1.bf16.msra.mxu0 %v3685
    %4590 = vmatprep.subr.bf16.mxu0 %v3926
    %4591 = vmatpush2.bf16.msra.mxu0 %v3925
    %4592 = vmatprep.subr.bf16.mxu0 %v3910
    %4593 = vmatpush2.bf16.msra.mxu0 %v3909
    %4594 = vmatprep.subr.bf16.mxu0 %v3894
    %4595 = vmatpush2.bf16.msra.mxu0 %v3893
    %4596 = vmatprep.subr.bf16.mxu0 %v3878
    %4597 = vmatpush2.bf16.msra.mxu0 %v3877
    %4598 = vmatprep.subr.bf16.mxu0 %v3862
    %4599 = vmatpush2.bf16.msra.mxu0 %v3861
    %4600 = vmatprep.subr.bf16.mxu0 %v3846
    %4601 = vmatpush2.bf16.msra.mxu0 %v3845
    %4602 = vmatprep.subr.bf16.mxu0 %v3830
    %4603 = vmatpush2.bf16.msra.mxu0 %v3829
    %4604 = vmatprep.subr.bf16.mxu0 %v3814
    %4605 = vmatpush2.bf16.msra.mxu0 %v3813
    %4606 = vmatprep.mubr.bf16.mxu0 %v853
    %4607 = vmatmul.mubr.bf16.gmra.mxu0 %v852
    %v4608 = vpop.f32.mrf.mxu0
    %v4609 = vadd.f32 %v4568, %v4608
    %v4610 = vpop.f32.mrf.mxu0
    %v4611 = vadd.f32 %v4570, %v4610
    %v4612 = vpop.f32.mrf.mxu0
    %v4613 = vpop.f32.mrf.mxu0
    %4614 = vdwg.mxu0
    %4615 = vmatprep.subr.bf16.mxu0 %v3544
    %4616 = vmatpush1.bf16.msra.mxu0 %v3543
    %4617 = vmatprep.subr.bf16.mxu0 %v3528
    %4618 = vmatpush1.bf16.msra.mxu0 %v3527
    %4619 = vmatprep.subr.bf16.mxu0 %v3512
    %4620 = vmatpush1.bf16.msra.mxu0 %v3511
    %4621 = vmatprep.subr.bf16.mxu0 %v3496
    %4622 = vmatpush1.bf16.msra.mxu0 %v3495
    %4623 = vmatprep.subr.bf16.mxu0 %v3480
    %4624 = vmatpush1.bf16.msra.mxu0 %v3479
    %4625 = vmatprep.subr.bf16.mxu0 %v3464
    %4626 = vmatpush1.bf16.msra.mxu0 %v3463
    %4627 = vmatprep.subr.bf16.mxu0 %v3448
    %4628 = vmatpush1.bf16.msra.mxu0 %v3447
    %4629 = vmatprep.subr.bf16.mxu0 %v3432
    %4630 = vmatpush1.bf16.msra.mxu0 %v3431
    %4631 = vmatprep.subr.bf16.mxu0 %v3672
    %4632 = vmatpush2.bf16.msra.mxu0 %v3671
    %4633 = vmatprep.subr.bf16.mxu0 %v3656
    %4634 = vmatpush2.bf16.msra.mxu0 %v3655
    %4635 = vmatprep.subr.bf16.mxu0 %v3640
    %4636 = vmatpush2.bf16.msra.mxu0 %v3639
    %4637 = vmatprep.subr.bf16.mxu0 %v3624
    %4638 = vmatpush2.bf16.msra.mxu0 %v3623
    %4639 = vmatprep.subr.bf16.mxu0 %v3608
    %4640 = vmatpush2.bf16.msra.mxu0 %v3607
    %4641 = vmatprep.subr.bf16.mxu0 %v3592
    %4642 = vmatpush2.bf16.msra.mxu0 %v3591
    %4643 = vmatprep.subr.bf16.mxu0 %v3576
    %4644 = vmatpush2.bf16.msra.mxu0 %v3575
    %4645 = vmatprep.subr.bf16.mxu0 %v3560
    %4646 = vmatpush2.bf16.msra.mxu0 %v3559
    %4647 = vmatprep.mubr.bf16.mxu0 %v851
    %4648 = vmatmul.mubr.bf16.gmra.mxu0 %v850
    %v4649 = vpop.f32.mrf.mxu0
    %v4650 = vadd.f32 %v1680, %v4649
    %v4651 = vpop.f32.mrf.mxu0
    %v4652 = vadd.f32 %v1682, %v4651
    %v4653 = vpop.f32.mrf.mxu0
    %v4654 = vpop.f32.mrf.mxu0
    %4655 = vdwg.mxu0
    %4656 = vmatprep.subr.bf16.mxu0 %v3800
    %4657 = vmatpush1.bf16.msra.mxu0 %v3799
    %4658 = vmatprep.subr.bf16.mxu0 %v3784
    %4659 = vmatpush1.bf16.msra.mxu0 %v3783
    %4660 = vmatprep.subr.bf16.mxu0 %v3768
    %4661 = vmatpush1.bf16.msra.mxu0 %v3767
    %4662 = vmatprep.subr.bf16.mxu0 %v3752
    %4663 = vmatpush1.bf16.msra.mxu0 %v3751
    %4664 = vmatprep.subr.bf16.mxu0 %v3736
    %4665 = vmatpush1.bf16.msra.mxu0 %v3735
    %4666 = vmatprep.subr.bf16.mxu0 %v3720
    %4667 = vmatpush1.bf16.msra.mxu0 %v3719
    %4668 = vmatprep.subr.bf16.mxu0 %v3704
    %4669 = vmatpush1.bf16.msra.mxu0 %v3703
    %4670 = vmatprep.subr.bf16.mxu0 %v3688
    %4671 = vmatpush1.bf16.msra.mxu0 %v3687
    %4672 = vmatprep.subr.bf16.mxu0 %v3928
    %4673 = vmatpush2.bf16.msra.mxu0 %v3927
    %4674 = vmatprep.subr.bf16.mxu0 %v3912
    %4675 = vmatpush2.bf16.msra.mxu0 %v3911
    %4676 = vmatprep.subr.bf16.mxu0 %v3896
    %4677 = vmatpush2.bf16.msra.mxu0 %v3895
    %4678 = vmatprep.subr.bf16.mxu0 %v3880
    %4679 = vmatpush2.bf16.msra.mxu0 %v3879
    %4680 = vmatprep.subr.bf16.mxu0 %v3864
    %4681 = vmatpush2.bf16.msra.mxu0 %v3863
    %4682 = vmatprep.subr.bf16.mxu0 %v3848
    %4683 = vmatpush2.bf16.msra.mxu0 %v3847
    %4684 = vmatprep.subr.bf16.mxu0 %v3832
    %4685 = vmatpush2.bf16.msra.mxu0 %v3831
    %4686 = vmatprep.subr.bf16.mxu0 %v3816
    %4687 = vmatpush2.bf16.msra.mxu0 %v3815
    %4688 = vmatprep.mubr.bf16.mxu0 %v853
    %4689 = vmatmul.mubr.bf16.gmra.mxu0 %v852
    %v4690 = vpop.f32.mrf.mxu0
    %v4691 = vadd.f32 %v4650, %v4690
    %v4692 = vpop.f32.mrf.mxu0
    %v4693 = vadd.f32 %v4652, %v4692
    %v4694 = vpop.f32.mrf.mxu0
    %v4695 = vpop.f32.mrf.mxu0
    %4696 = vdwg.mxu0
    %4697 = vmatprep.subr.bf16.mxu0 %v3546
    %4698 = vmatpush1.bf16.msra.mxu0 %v3545
    %4699 = vmatprep.subr.bf16.mxu0 %v3530
    %4700 = vmatpush1.bf16.msra.mxu0 %v3529
    %4701 = vmatprep.subr.bf16.mxu0 %v3514
    %4702 = vmatpush1.bf16.msra.mxu0 %v3513
    %4703 = vmatprep.subr.bf16.mxu0 %v3498
    %4704 = vmatpush1.bf16.msra.mxu0 %v3497
    %4705 = vmatprep.subr.bf16.mxu0 %v3482
    %4706 = vmatpush1.bf16.msra.mxu0 %v3481
    %4707 = vmatprep.subr.bf16.mxu0 %v3466
    %4708 = vmatpush1.bf16.msra.mxu0 %v3465
    %4709 = vmatprep.subr.bf16.mxu0 %v3450
    %4710 = vmatpush1.bf16.msra.mxu0 %v3449
    %4711 = vmatprep.subr.bf16.mxu0 %v3434
    %4712 = vmatpush1.bf16.msra.mxu0 %v3433
    %4713 = vmatprep.subr.bf16.mxu0 %v3674
    %4714 = vmatpush2.bf16.msra.mxu0 %v3673
    %4715 = vmatprep.subr.bf16.mxu0 %v3658
    %4716 = vmatpush2.bf16.msra.mxu0 %v3657
    %4717 = vmatprep.subr.bf16.mxu0 %v3642
    %4718 = vmatpush2.bf16.msra.mxu0 %v3641
    %4719 = vmatprep.subr.bf16.mxu0 %v3626
    %4720 = vmatpush2.bf16.msra.mxu0 %v3625
    %4721 = vmatprep.subr.bf16.mxu0 %v3610
    %4722 = vmatpush2.bf16.msra.mxu0 %v3609
    %4723 = vmatprep.subr.bf16.mxu0 %v3594
    %4724 = vmatpush2.bf16.msra.mxu0 %v3593
    %4725 = vmatprep.subr.bf16.mxu0 %v3578
    %4726 = vmatpush2.bf16.msra.mxu0 %v3577
    %4727 = vmatprep.subr.bf16.mxu0 %v3562
    %4728 = vmatpush2.bf16.msra.mxu0 %v3561
    %4729 = vmatprep.mubr.bf16.mxu0 %v851
    %4730 = vmatmul.mubr.bf16.gmra.mxu0 %v850
    %v4731 = vpop.f32.mrf.mxu0
    %v4732 = vadd.f32 %v1721, %v4731
    %v4733 = vpop.f32.mrf.mxu0
    %v4734 = vadd.f32 %v1723, %v4733
    %v4735 = vpop.f32.mrf.mxu0
    %v4736 = vpop.f32.mrf.mxu0
    %4737 = vdwg.mxu0
    %4738 = vmatprep.subr.bf16.mxu0 %v3802
    %4739 = vmatpush1.bf16.msra.mxu0 %v3801
    %4740 = vmatprep.subr.bf16.mxu0 %v3786
    %4741 = vmatpush1.bf16.msra.mxu0 %v3785
    %4742 = vmatprep.subr.bf16.mxu0 %v3770
    %4743 = vmatpush1.bf16.msra.mxu0 %v3769
    %4744 = vmatprep.subr.bf16.mxu0 %v3754
    %4745 = vmatpush1.bf16.msra.mxu0 %v3753
    %4746 = vmatprep.subr.bf16.mxu0 %v3738
    %4747 = vmatpush1.bf16.msra.mxu0 %v3737
    %4748 = vmatprep.subr.bf16.mxu0 %v3722
    %4749 = vmatpush1.bf16.msra.mxu0 %v3721
    %4750 = vmatprep.subr.bf16.mxu0 %v3706
    %4751 = vmatpush1.bf16.msra.mxu0 %v3705
    %4752 = vmatprep.subr.bf16.mxu0 %v3690
    %4753 = vmatpush1.bf16.msra.mxu0 %v3689
    %4754 = vmatprep.subr.bf16.mxu0 %v3930
    %4755 = vmatpush2.bf16.msra.mxu0 %v3929
    %4756 = vmatprep.subr.bf16.mxu0 %v3914
    %4757 = vmatpush2.bf16.msra.mxu0 %v3913
    %4758 = vmatprep.subr.bf16.mxu0 %v3898
    %4759 = vmatpush2.bf16.msra.mxu0 %v3897
    %4760 = vmatprep.subr.bf16.mxu0 %v3882
    %4761 = vmatpush2.bf16.msra.mxu0 %v3881
    %4762 = vmatprep.subr.bf16.mxu0 %v3866
    %4763 = vmatpush2.bf16.msra.mxu0 %v3865
    %4764 = vmatprep.subr.bf16.mxu0 %v3850
    %4765 = vmatpush2.bf16.msra.mxu0 %v3849
    %4766 = vmatprep.subr.bf16.mxu0 %v3834
    %4767 = vmatpush2.bf16.msra.mxu0 %v3833
    %4768 = vmatprep.subr.bf16.mxu0 %v3818
    %4769 = vmatpush2.bf16.msra.mxu0 %v3817
    %4770 = vmatprep.mubr.bf16.mxu0 %v853
    %4771 = vmatmul.mubr.bf16.gmra.mxu0 %v852
    %v4772 = vpop.f32.mrf.mxu0
    %v4773 = vadd.f32 %v4732, %v4772
    %v4774 = vpop.f32.mrf.mxu0
    %v4775 = vadd.f32 %v4734, %v4774
    %v4776 = vpop.f32.mrf.mxu0
    %v4777 = vpop.f32.mrf.mxu0
    %4778 = vdwg.mxu0
    %4779 = vmatprep.subr.bf16.mxu0 %v3548
    %4780 = vmatpush1.bf16.msra.mxu0 %v3547
    %4781 = vmatprep.subr.bf16.mxu0 %v3532
    %4782 = vmatpush1.bf16.msra.mxu0 %v3531
    %4783 = vmatprep.subr.bf16.mxu0 %v3516
    %4784 = vmatpush1.bf16.msra.mxu0 %v3515
    %4785 = vmatprep.subr.bf16.mxu0 %v3500
    %4786 = vmatpush1.bf16.msra.mxu0 %v3499
    %4787 = vmatprep.subr.bf16.mxu0 %v3484
    %4788 = vmatpush1.bf16.msra.mxu0 %v3483
    %4789 = vmatprep.subr.bf16.mxu0 %v3468
    %4790 = vmatpush1.bf16.msra.mxu0 %v3467
    %4791 = vmatprep.subr.bf16.mxu0 %v3452
    %4792 = vmatpush1.bf16.msra.mxu0 %v3451
    %4793 = vmatprep.subr.bf16.mxu0 %v3436
    %4794 = vmatpush1.bf16.msra.mxu0 %v3435
    %4795 = vmatprep.subr.bf16.mxu0 %v3676
    %4796 = vmatpush2.bf16.msra.mxu0 %v3675
    %4797 = vmatprep.subr.bf16.mxu0 %v3660
    %4798 = vmatpush2.bf16.msra.mxu0 %v3659
    %4799 = vmatprep.subr.bf16.mxu0 %v3644
    %4800 = vmatpush2.bf16.msra.mxu0 %v3643
    %4801 = vmatprep.subr.bf16.mxu0 %v3628
    %4802 = vmatpush2.bf16.msra.mxu0 %v3627
    %4803 = vmatprep.subr.bf16.mxu0 %v3612
    %4804 = vmatpush2.bf16.msra.mxu0 %v3611
    %4805 = vmatprep.subr.bf16.mxu0 %v3596
    %4806 = vmatpush2.bf16.msra.mxu0 %v3595
    %4807 = vmatprep.subr.bf16.mxu0 %v3580
    %4808 = vmatpush2.bf16.msra.mxu0 %v3579
    %4809 = vmatprep.subr.bf16.mxu0 %v3564
    %4810 = vmatpush2.bf16.msra.mxu0 %v3563
    %4811 = vmatprep.mubr.bf16.mxu0 %v851
    %4812 = vmatmul.mubr.bf16.gmra.mxu0 %v850
    %v4813 = vpop.f32.mrf.mxu0
    %v4814 = vadd.f32 %v1762, %v4813
    %v4815 = vpop.f32.mrf.mxu0
    %v4816 = vadd.f32 %v1764, %v4815
    %v4817 = vpop.f32.mrf.mxu0
    %v4818 = vpop.f32.mrf.mxu0
    %4819 = vdwg.mxu0
    %4820 = vmatprep.subr.bf16.mxu0 %v3804
    %4821 = vmatpush1.bf16.msra.mxu0 %v3803
    %4822 = vmatprep.subr.bf16.mxu0 %v3788
    %4823 = vmatpush1.bf16.msra.mxu0 %v3787
    %4824 = vmatprep.subr.bf16.mxu0 %v3772
    %4825 = vmatpush1.bf16.msra.mxu0 %v3771
    %4826 = vmatprep.subr.bf16.mxu0 %v3756
    %4827 = vmatpush1.bf16.msra.mxu0 %v3755
    %4828 = vmatprep.subr.bf16.mxu0 %v3740
    %4829 = vmatpush1.bf16.msra.mxu0 %v3739
    %4830 = vmatprep.subr.bf16.mxu0 %v3724
    %4831 = vmatpush1.bf16.msra.mxu0 %v3723
    %4832 = vmatprep.subr.bf16.mxu0 %v3708
    %4833 = vmatpush1.bf16.msra.mxu0 %v3707
    %4834 = vmatprep.subr.bf16.mxu0 %v3692
    %4835 = vmatpush1.bf16.msra.mxu0 %v3691
    %4836 = vmatprep.subr.bf16.mxu0 %v3932
    %4837 = vmatpush2.bf16.msra.mxu0 %v3931
    %4838 = vmatprep.subr.bf16.mxu0 %v3916
    %4839 = vmatpush2.bf16.msra.mxu0 %v3915
    %4840 = vmatprep.subr.bf16.mxu0 %v3900
    %4841 = vmatpush2.bf16.msra.mxu0 %v3899
    %4842 = vmatprep.subr.bf16.mxu0 %v3884
    %4843 = vmatpush2.bf16.msra.mxu0 %v3883
    %4844 = vmatprep.subr.bf16.mxu0 %v3868
    %4845 = vmatpush2.bf16.msra.mxu0 %v3867
    %4846 = vmatprep.subr.bf16.mxu0 %v3852
    %4847 = vmatpush2.bf16.msra.mxu0 %v3851
    %4848 = vmatprep.subr.bf16.mxu0 %v3836
    %4849 = vmatpush2.bf16.msra.mxu0 %v3835
    %4850 = vmatprep.subr.bf16.mxu0 %v3820
    %4851 = vmatpush2.bf16.msra.mxu0 %v3819
    %4852 = vmatprep.mubr.bf16.mxu0 %v853
    %4853 = vmatmul.mubr.bf16.gmra.mxu0 %v852
    %v4854 = vpop.f32.mrf.mxu0
    %v4855 = vadd.f32 %v4814, %v4854
    %v4856 = vpop.f32.mrf.mxu0
    %v4857 = vadd.f32 %v4816, %v4856
    %v4858 = vpop.f32.mrf.mxu0
    %v4859 = vpop.f32.mrf.mxu0
    %4860 = vdwg.mxu0
    %4861 = vmatprep.subr.bf16.mxu0 %v3550
    %4862 = vmatpush1.bf16.msra.mxu0 %v3549
    %4863 = vmatprep.subr.bf16.mxu0 %v3534
    %4864 = vmatpush1.bf16.msra.mxu0 %v3533
    %4865 = vmatprep.subr.bf16.mxu0 %v3518
    %4866 = vmatpush1.bf16.msra.mxu0 %v3517
    %4867 = vmatprep.subr.bf16.mxu0 %v3502
    %4868 = vmatpush1.bf16.msra.mxu0 %v3501
    %4869 = vmatprep.subr.bf16.mxu0 %v3486
    %4870 = vmatpush1.bf16.msra.mxu0 %v3485
    %4871 = vmatprep.subr.bf16.mxu0 %v3470
    %4872 = vmatpush1.bf16.msra.mxu0 %v3469
    %4873 = vmatprep.subr.bf16.mxu0 %v3454
    %4874 = vmatpush1.bf16.msra.mxu0 %v3453
    %4875 = vmatprep.subr.bf16.mxu0 %v3438
    %4876 = vmatpush1.bf16.msra.mxu0 %v3437
    %4877 = vmatprep.subr.bf16.mxu0 %v3678
    %4878 = vmatpush2.bf16.msra.mxu0 %v3677
    %4879 = vmatprep.subr.bf16.mxu0 %v3662
    %4880 = vmatpush2.bf16.msra.mxu0 %v3661
    %4881 = vmatprep.subr.bf16.mxu0 %v3646
    %4882 = vmatpush2.bf16.msra.mxu0 %v3645
    %4883 = vmatprep.subr.bf16.mxu0 %v3630
    %4884 = vmatpush2.bf16.msra.mxu0 %v3629
    %4885 = vmatprep.subr.bf16.mxu0 %v3614
    %4886 = vmatpush2.bf16.msra.mxu0 %v3613
    %4887 = vmatprep.subr.bf16.mxu0 %v3598
    %4888 = vmatpush2.bf16.msra.mxu0 %v3597
    %4889 = vmatprep.subr.bf16.mxu0 %v3582
    %4890 = vmatpush2.bf16.msra.mxu0 %v3581
    %4891 = vmatprep.subr.bf16.mxu0 %v3566
    %4892 = vmatpush2.bf16.msra.mxu0 %v3565
    %4893 = vmatprep.mubr.bf16.mxu0 %v851
    %4894 = vmatmul.mubr.bf16.gmra.mxu0 %v850
    %v4895 = vpop.f32.mrf.mxu0
    %v4896 = vadd.f32 %v1803, %v4895
    %v4897 = vpop.f32.mrf.mxu0
    %v4898 = vadd.f32 %v1805, %v4897
    %v4899 = vpop.f32.mrf.mxu0
    %v4900 = vpop.f32.mrf.mxu0
    %4901 = vdwg.mxu0
    %4902 = vmatprep.subr.bf16.mxu0 %v3806
    %4903 = vmatpush1.bf16.msra.mxu0 %v3805
    %4904 = vmatprep.subr.bf16.mxu0 %v3790
    %4905 = vmatpush1.bf16.msra.mxu0 %v3789
    %4906 = vmatprep.subr.bf16.mxu0 %v3774
    %4907 = vmatpush1.bf16.msra.mxu0 %v3773
    %4908 = vmatprep.subr.bf16.mxu0 %v3758
    %4909 = vmatpush1.bf16.msra.mxu0 %v3757
    %4910 = vmatprep.subr.bf16.mxu0 %v3742
    %4911 = vmatpush1.bf16.msra.mxu0 %v3741
    %4912 = vmatprep.subr.bf16.mxu0 %v3726
    %4913 = vmatpush1.bf16.msra.mxu0 %v3725
    %4914 = vmatprep.subr.bf16.mxu0 %v3710
    %4915 = vmatpush1.bf16.msra.mxu0 %v3709
    %4916 = vmatprep.subr.bf16.mxu0 %v3694
    %4917 = vmatpush1.bf16.msra.mxu0 %v3693
    %4918 = vmatprep.subr.bf16.mxu0 %v3934
    %4919 = vmatpush2.bf16.msra.mxu0 %v3933
    %4920 = vmatprep.subr.bf16.mxu0 %v3918
    %4921 = vmatpush2.bf16.msra.mxu0 %v3917
    %4922 = vmatprep.subr.bf16.mxu0 %v3902
    %4923 = vmatpush2.bf16.msra.mxu0 %v3901
    %4924 = vmatprep.subr.bf16.mxu0 %v3886
    %4925 = vmatpush2.bf16.msra.mxu0 %v3885
    %4926 = vmatprep.subr.bf16.mxu0 %v3870
    %4927 = vmatpush2.bf16.msra.mxu0 %v3869
    %4928 = vmatprep.subr.bf16.mxu0 %v3854
    %4929 = vmatpush2.bf16.msra.mxu0 %v3853
    %4930 = vmatprep.subr.bf16.mxu0 %v3838
    %4931 = vmatpush2.bf16.msra.mxu0 %v3837
    %4932 = vmatprep.subr.bf16.mxu0 %v3822
    %4933 = vmatpush2.bf16.msra.mxu0 %v3821
    %4934 = vmatprep.mubr.bf16.mxu0 %v853
    %4935 = vmatmul.mubr.bf16.gmra.mxu0 %v852
    %v4936 = vpop.f32.mrf.mxu0
    %v4937 = vadd.f32 %v4896, %v4936
    %v4938 = vpop.f32.mrf.mxu0
    %v4939 = vadd.f32 %v4898, %v4938
    %v4940 = vpop.f32.mrf.mxu0
    %v4941 = vpop.f32.mrf.mxu0
    %4942 = vdwg.mxu0
    %4943 = vmatprep.subr.bf16.mxu0 %v3552
    %4944 = vmatpush1.bf16.msra.mxu0 %v3551
    %4945 = vmatprep.subr.bf16.mxu0 %v3536
    %4946 = vmatpush1.bf16.msra.mxu0 %v3535
    %4947 = vmatprep.subr.bf16.mxu0 %v3520
    %4948 = vmatpush1.bf16.msra.mxu0 %v3519
    %4949 = vmatprep.subr.bf16.mxu0 %v3504
    %4950 = vmatpush1.bf16.msra.mxu0 %v3503
    %4951 = vmatprep.subr.bf16.mxu0 %v3488
    %4952 = vmatpush1.bf16.msra.mxu0 %v3487
    %4953 = vmatprep.subr.bf16.mxu0 %v3472
    %4954 = vmatpush1.bf16.msra.mxu0 %v3471
    %4955 = vmatprep.subr.bf16.mxu0 %v3456
    %4956 = vmatpush1.bf16.msra.mxu0 %v3455
    %4957 = vmatprep.subr.bf16.mxu0 %v3440
    %4958 = vmatpush1.bf16.msra.mxu0 %v3439
    %4959 = vmatprep.subr.bf16.mxu0 %v3680
    %4960 = vmatpush2.bf16.msra.mxu0 %v3679
    %4961 = vmatprep.subr.bf16.mxu0 %v3664
    %4962 = vmatpush2.bf16.msra.mxu0 %v3663
    %4963 = vmatprep.subr.bf16.mxu0 %v3648
    %4964 = vmatpush2.bf16.msra.mxu0 %v3647
    %4965 = vmatprep.subr.bf16.mxu0 %v3632
    %4966 = vmatpush2.bf16.msra.mxu0 %v3631
    %4967 = vmatprep.subr.bf16.mxu0 %v3616
    %4968 = vmatpush2.bf16.msra.mxu0 %v3615
    %4969 = vmatprep.subr.bf16.mxu0 %v3600
    %4970 = vmatpush2.bf16.msra.mxu0 %v3599
    %4971 = vmatprep.subr.bf16.mxu0 %v3584
    %4972 = vmatpush2.bf16.msra.mxu0 %v3583
    %4973 = vmatprep.subr.bf16.mxu0 %v3568
    %4974 = vmatpush2.bf16.msra.mxu0 %v3567
    %4975 = vmatprep.mubr.bf16.mxu0 %v851
    %4976 = vmatmul.mubr.bf16.gmra.mxu0 %v850
    %v4977 = vpop.f32.mrf.mxu0
    %v4978 = vadd.f32 %v1844, %v4977
    %v4979 = vpop.f32.mrf.mxu0
    %v4980 = vadd.f32 %v1846, %v4979
    %v4981 = vpop.f32.mrf.mxu0
    %v4982 = vpop.f32.mrf.mxu0
    %4983 = vdwg.mxu0
    %4984 = vmatprep.subr.bf16.mxu0 %v3808
    %4985 = vmatpush1.bf16.msra.mxu0 %v3807
    %4986 = vmatprep.subr.bf16.mxu0 %v3792
    %4987 = vmatpush1.bf16.msra.mxu0 %v3791
    %4988 = vmatprep.subr.bf16.mxu0 %v3776
    %4989 = vmatpush1.bf16.msra.mxu0 %v3775
    %4990 = vmatprep.subr.bf16.mxu0 %v3760
    %4991 = vmatpush1.bf16.msra.mxu0 %v3759
    %4992 = vmatprep.subr.bf16.mxu0 %v3744
    %4993 = vmatpush1.bf16.msra.mxu0 %v3743
    %4994 = vmatprep.subr.bf16.mxu0 %v3728
    %4995 = vmatpush1.bf16.msra.mxu0 %v3727
    %4996 = vmatprep.subr.bf16.mxu0 %v3712
    %4997 = vmatpush1.bf16.msra.mxu0 %v3711
    %4998 = vmatprep.subr.bf16.mxu0 %v3696
    %4999 = vmatpush1.bf16.msra.mxu0 %v3695
    %5000 = vmatprep.subr.bf16.mxu0 %v3936
    %5001 = vmatpush2.bf16.msra.mxu0 %v3935
    %5002 = vmatprep.subr.bf16.mxu0 %v3920
    %5003 = vmatpush2.bf16.msra.mxu0 %v3919
    %5004 = vmatprep.subr.bf16.mxu0 %v3904
    %5005 = vmatpush2.bf16.msra.mxu0 %v3903
    %5006 = vmatprep.subr.bf16.mxu0 %v3888
    %5007 = vmatpush2.bf16.msra.mxu0 %v3887
    %5008 = vmatprep.subr.bf16.mxu0 %v3872
    %5009 = vmatpush2.bf16.msra.mxu0 %v3871
    %5010 = vmatprep.subr.bf16.mxu0 %v3856
    %5011 = vmatpush2.bf16.msra.mxu0 %v3855
    %5012 = vmatprep.subr.bf16.mxu0 %v3840
    %5013 = vmatpush2.bf16.msra.mxu0 %v3839
    %5014 = vmatprep.subr.bf16.mxu0 %v3824
    %5015 = vmatpush2.bf16.msra.mxu0 %v3823
    %5016 = vmatprep.mubr.bf16.mxu0 %v853
    %5017 = vmatmul.mubr.bf16.gmra.mxu0 %v852
    %v5018 = vpop.f32.mrf.mxu0
    %v5019 = vadd.f32 %v4978, %v5018
    %v5020 = vpop.f32.mrf.mxu0
    %v5021 = vadd.f32 %v4980, %v5020
    %v5022 = vpop.f32.mrf.mxu0
    %v5023 = vpop.f32.mrf.mxu0
    %5024 = vdwg.mxu0
    %5025 = vmatprep.subr.bf16.mxu0 %v3554
    %5026 = vmatpush1.bf16.msra.mxu0 %v3553
    %5027 = vmatprep.subr.bf16.mxu0 %v3538
    %5028 = vmatpush1.bf16.msra.mxu0 %v3537
    %5029 = vmatprep.subr.bf16.mxu0 %v3522
    %5030 = vmatpush1.bf16.msra.mxu0 %v3521
    %5031 = vmatprep.subr.bf16.mxu0 %v3506
    %5032 = vmatpush1.bf16.msra.mxu0 %v3505
    %5033 = vmatprep.subr.bf16.mxu0 %v3490
    %5034 = vmatpush1.bf16.msra.mxu0 %v3489
    %5035 = vmatprep.subr.bf16.mxu0 %v3474
    %5036 = vmatpush1.bf16.msra.mxu0 %v3473
    %5037 = vmatprep.subr.bf16.mxu0 %v3458
    %5038 = vmatpush1.bf16.msra.mxu0 %v3457
    %5039 = vmatprep.subr.bf16.mxu0 %v3442
    %5040 = vmatpush1.bf16.msra.mxu0 %v3441
    %5041 = vmatprep.subr.bf16.mxu0 %v3682
    %5042 = vmatpush2.bf16.msra.mxu0 %v3681
    %5043 = vmatprep.subr.bf16.mxu0 %v3666
    %5044 = vmatpush2.bf16.msra.mxu0 %v3665
    %5045 = vmatprep.subr.bf16.mxu0 %v3650
    %5046 = vmatpush2.bf16.msra.mxu0 %v3649
    %5047 = vmatprep.subr.bf16.mxu0 %v3634
    %5048 = vmatpush2.bf16.msra.mxu0 %v3633
    %5049 = vmatprep.subr.bf16.mxu0 %v3618
    %5050 = vmatpush2.bf16.msra.mxu0 %v3617
    %5051 = vmatprep.subr.bf16.mxu0 %v3602
    %5052 = vmatpush2.bf16.msra.mxu0 %v3601
    %5053 = vmatprep.subr.bf16.mxu0 %v3586
    %5054 = vmatpush2.bf16.msra.mxu0 %v3585
    %5055 = vmatprep.subr.bf16.mxu0 %v3570
    %5056 = vmatpush2.bf16.msra.mxu0 %v3569
    %5057 = vmatprep.mubr.bf16.mxu0 %v851
    %5058 = vmatmul.mubr.bf16.gmra.mxu0 %v850
    %v5059 = vpop.f32.mrf.mxu0
    %v5060 = vadd.f32 %v1885, %v5059
    %v5061 = vpop.f32.mrf.mxu0
    %v5062 = vadd.f32 %v1887, %v5061
    %v5063 = vpop.f32.mrf.mxu0
    %v5064 = vpop.f32.mrf.mxu0
    %5065 = vdwg.mxu0
    %5066 = vmatprep.subr.bf16.mxu0 %v3810
    %5067 = vmatpush1.bf16.msra.mxu0 %v3809
    %5068 = vmatprep.subr.bf16.mxu0 %v3794
    %5069 = vmatpush1.bf16.msra.mxu0 %v3793
    %5070 = vmatprep.subr.bf16.mxu0 %v3778
    %5071 = vmatpush1.bf16.msra.mxu0 %v3777
    %5072 = vmatprep.subr.bf16.mxu0 %v3762
    %5073 = vmatpush1.bf16.msra.mxu0 %v3761
    %5074 = vmatprep.subr.bf16.mxu0 %v3746
    %5075 = vmatpush1.bf16.msra.mxu0 %v3745
    %5076 = vmatprep.subr.bf16.mxu0 %v3730
    %5077 = vmatpush1.bf16.msra.mxu0 %v3729
    %5078 = vmatprep.subr.bf16.mxu0 %v3714
    %5079 = vmatpush1.bf16.msra.mxu0 %v3713
    %5080 = vmatprep.subr.bf16.mxu0 %v3698
    %5081 = vmatpush1.bf16.msra.mxu0 %v3697
    %5082 = vmatprep.subr.bf16.mxu0 %v3938
    %5083 = vmatpush2.bf16.msra.mxu0 %v3937
    %5084 = vmatprep.subr.bf16.mxu0 %v3922
    %5085 = vmatpush2.bf16.msra.mxu0 %v3921
    %5086 = vmatprep.subr.bf16.mxu0 %v3906
    %5087 = vmatpush2.bf16.msra.mxu0 %v3905
    %5088 = vmatprep.subr.bf16.mxu0 %v3890
    %5089 = vmatpush2.bf16.msra.mxu0 %v3889
    %5090 = vmatprep.subr.bf16.mxu0 %v3874
    %5091 = vmatpush2.bf16.msra.mxu0 %v3873
    %5092 = vmatprep.subr.bf16.mxu0 %v3858
    %5093 = vmatpush2.bf16.msra.mxu0 %v3857
    %5094 = vmatprep.subr.bf16.mxu0 %v3842
    %5095 = vmatpush2.bf16.msra.mxu0 %v3841
    %5096 = vmatprep.subr.bf16.mxu0 %v3826
    %5097 = vmatpush2.bf16.msra.mxu0 %v3825
    %5098 = vmatprep.mubr.bf16.mxu0 %v853
    %5099 = vmatmul.mubr.bf16.gmra.mxu0 %v852
    %v5100 = vpop.f32.mrf.mxu0
    %v5101 = vadd.f32 %v5060, %v5100
    %v5102 = vpop.f32.mrf.mxu0
    %v5103 = vadd.f32 %v5062, %v5102
    %v5104 = vpop.f32.mrf.mxu0
    %v5105 = vpop.f32.mrf.mxu0
    %5106 = vdwg.mxu0
    %v5107 = vld [vmem:[%s8] sm:$0xff]
    %v5109 = vlaneseq
    %v5110 = vshrl.u32 %v5109, 7
    %v5111 = vsub.s32 0, %v5110
    %v5112 = vrot.slane %v5107, %v5111
    %v5113 = vlaneseq
    %v5114 = vshrl.u32 %v5113, 7
    %v5115 = vsub.s32 1, %v5114
    %v5116 = vrot.slane %v5107, %v5115
    %v5117 = vlaneseq
    %v5118 = vshrl.u32 %v5117, 7
    %v5119 = vsub.s32 2, %v5118
    %v5120 = vrot.slane %v5107, %v5119
    %v5121 = vlaneseq
    %v5122 = vshrl.u32 %v5121, 7
    %v5123 = vsub.s32 3, %v5122
    %v5124 = vrot.slane %v5107, %v5123
    %v5125 = vlaneseq
    %v5126 = vshrl.u32 %v5125, 7
    %v5127 = vsub.s32 4, %v5126
    %v5128 = vrot.slane %v5107, %v5127
    %v5129 = vlaneseq
    %v5130 = vshrl.u32 %v5129, 7
    %v5131 = vsub.s32 5, %v5130
    %v5132 = vrot.slane %v5107, %v5131
    %v5133 = vlaneseq
    %v5134 = vshrl.u32 %v5133, 7
    %v5135 = vsub.s32 6, %v5134
    %v5136 = vrot.slane %v5107, %v5135
    %v5137 = vlaneseq
    %v5138 = vshrl.u32 %v5137, 7
    %v5139 = vsub.s32 7, %v5138
    %v5140 = vrot.slane %v5107, %v5139
    %v5149 = vadd.f32 %v4527, %v5112
    %v5150 = vadd.f32 %v4529, %v5116
    %v5151 = vadd.f32 %v4609, %v5120
    %v5152 = vadd.f32 %v4611, %v5124
    %v5153 = vadd.f32 %v4691, %v5128
    %v5154 = vadd.f32 %v4693, %v5132
    %v5155 = vadd.f32 %v4773, %v5136
    %v5156 = vadd.f32 %v4775, %v5140
    %v5157 = vxor.u32 %v5149, 2147483648
    %v5158 = vxor.u32 %v5150, 2147483648
    %v5159 = vmul.f32 %v5157, 1.442695
    %v5160 = vpow.pop %v5159
    %v5161 = vmul.f32 %v5158, 1.442695
    %v5162 = vpow.pop %v5161
    %v5163 = vadd.f32 %v5160, 1.0
    %v5164 = vadd.f32 %v5162, 1.0
    %v5165 = vrcp.pop %v5163
    %v5166 = vmul.f32 1.0, %v5165
    %v5167 = vrcp.pop %v5164
    %v5168 = vmul.f32 1.0, %v5167
    %v5169 = vxor.u32 %v5151, 2147483648
    %v5170 = vxor.u32 %v5152, 2147483648
    %v5171 = vmul.f32 %v5169, 1.442695
    %v5172 = vpow.pop %v5171
    %v5173 = vmul.f32 %v5170, 1.442695
    %v5174 = vpow.pop %v5173
    %v5175 = vadd.f32 %v5172, 1.0
    %v5176 = vadd.f32 %v5174, 1.0
    %v5177 = vrcp.pop %v5175
    %v5178 = vmul.f32 1.0, %v5177
    %v5179 = vrcp.pop %v5176
    %v5180 = vmul.f32 1.0, %v5179
    %v5181 = vtanh.pop %v5153
    %v5182 = vtanh.pop %v5154
    %v5183 = vxor.u32 %v5155, 2147483648
    %v5184 = vxor.u32 %v5156, 2147483648
    %v5185 = vmul.f32 %v5183, 1.442695
    %v5186 = vpow.pop %v5185
    %v5187 = vmul.f32 %v5184, 1.442695
    %v5188 = vpow.pop %v5187
    %v5189 = vadd.f32 %v5186, 1.0
    %v5190 = vadd.f32 %v5188, 1.0
    %v5191 = vrcp.pop %v5189
    %v5192 = vmul.f32 1.0, %v5191
    %v5193 = vrcp.pop %v5190
    %v5194 = vmul.f32 1.0, %v5193
    %v5195 = vlaneseq
    %v5196 = vshrl.u32 %v5195, 7
    %v5197 = vsub.s32 4, %v5196
    %v5198 = vrot.slane %v72, %v5197
    %v5199 = vlaneseq
    %v5200 = vshrl.u32 %v5199, 7
    %v5201 = vsub.s32 5, %v5200
    %v5202 = vrot.slane %v72, %v5201
    %v5205 = vmul.f32 %v5178, %v5198
    %v5206 = vmul.f32 %v5180, %v5202
    %v5207 = vmul.f32 %v5166, %v5181
    %v5208 = vmul.f32 %v5168, %v5182
    %v5209 = vadd.f32 %v5205, %v5207
    %v5210 = vadd.f32 %v5206, %v5208
    %v5211 = vtanh.pop %v5209
    %v5212 = vtanh.pop %v5210
    %v5213 = vmul.f32 %v5192, %v5211
    %v5214 = vmul.f32 %v5194, %v5212
    %v5215 = vpack.c.bf16 %v5213, %v5213
    %v5216 = vpack.c.bf16 %v5214, %v5214
    %v5217 = vld [vmem:[%s11] sm:$0xf]
    %v5218 = vld [vmem:[%s11 + $0x4] sm:$0xf]
    %v5219 = vld [vmem:[%s11 + $0x8] sm:$0xf]
    %v5220 = vld [vmem:[%s11 + $0xc] sm:$0xf]
    %v5221 = vld [vmem:[%s11 + $0x10] sm:$0xf]
    %v5222 = vld [vmem:[%s11 + $0x14] sm:$0xf]
    %v5223 = vld [vmem:[%s11 + $0x18] sm:$0xf]
    %v5224 = vld [vmem:[%s11 + $0x1c] sm:$0xf]
    %v5225 = vld [vmem:[%s11 + $0x20] sm:$0xf]
    %v5226 = vld [vmem:[%s11 + $0x24] sm:$0xf]
    %v5227 = vld [vmem:[%s11 + $0x28] sm:$0xf]
    %v5228 = vld [vmem:[%s11 + $0x2c] sm:$0xf]
    %v5229 = vld [vmem:[%s11 + $0x30] sm:$0xf]
    %v5230 = vld [vmem:[%s11 + $0x34] sm:$0xf]
    %v5231 = vld [vmem:[%s11 + $0x38] sm:$0xf]
    %v5232 = vld [vmem:[%s11 + $0x3c] sm:$0xf]
    %v5233 = vld [vmem:[%s11 + $0x40] sm:$0xf]
    %v5234 = vld [vmem:[%s11 + $0x44] sm:$0xf]
    %v5235 = vld [vmem:[%s11 + $0x48] sm:$0xf]
    %v5236 = vld [vmem:[%s11 + $0x4c] sm:$0xf]
    %v5237 = vld [vmem:[%s11 + $0x50] sm:$0xf]
    %v5238 = vld [vmem:[%s11 + $0x54] sm:$0xf]
    %v5239 = vld [vmem:[%s11 + $0x58] sm:$0xf]
    %v5240 = vld [vmem:[%s11 + $0x5c] sm:$0xf]
    %v5241 = vld [vmem:[%s11 + $0x60] sm:$0xf]
    %v5242 = vld [vmem:[%s11 + $0x64] sm:$0xf]
    %v5243 = vld [vmem:[%s11 + $0x68] sm:$0xf]
    %v5244 = vld [vmem:[%s11 + $0x6c] sm:$0xf]
    %v5245 = vld [vmem:[%s11 + $0x70] sm:$0xf]
    %v5246 = vld [vmem:[%s11 + $0x74] sm:$0xf]
    %v5247 = vld [vmem:[%s11 + $0x78] sm:$0xf]
    %v5248 = vld [vmem:[%s11 + $0x7c] sm:$0xf]
    %v5249 = vld [vmem:[%s12] sm:$0x1]
    %v5282 = vunpack.c.l.b16 %v5217
    %v5283 = vunpack.c.l.b16 %v5218
    %v5284 = vunpack.c.l.b16 %v5219
    %v5285 = vunpack.c.l.b16 %v5220
    %v5286 = vunpack.c.l.b16 %v5221
    %v5287 = vunpack.c.l.b16 %v5222
    %v5288 = vunpack.c.l.b16 %v5223
    %v5289 = vunpack.c.l.b16 %v5224
    %v5290 = vunpack.c.l.b16 %v5225
    %v5291 = vunpack.c.l.b16 %v5226
    %v5292 = vunpack.c.l.b16 %v5227
    %v5293 = vunpack.c.l.b16 %v5228
    %v5294 = vunpack.c.l.b16 %v5229
    %v5295 = vunpack.c.l.b16 %v5230
    %v5296 = vunpack.c.l.b16 %v5231
    %v5297 = vunpack.c.l.b16 %v5232
    %v5298 = vunpack.c.l.b16 %v5233
    %v5299 = vunpack.c.l.b16 %v5234
    %v5300 = vunpack.c.l.b16 %v5235
    %v5301 = vunpack.c.l.b16 %v5236
    %v5302 = vunpack.c.l.b16 %v5237
    %v5303 = vunpack.c.l.b16 %v5238
    %v5304 = vunpack.c.l.b16 %v5239
    %v5305 = vunpack.c.l.b16 %v5240
    %v5306 = vunpack.c.l.b16 %v5241
    %v5307 = vunpack.c.l.b16 %v5242
    %v5308 = vunpack.c.l.b16 %v5243
    %v5309 = vunpack.c.l.b16 %v5244
    %v5310 = vunpack.c.l.b16 %v5245
    %v5311 = vunpack.c.l.b16 %v5246
    %v5312 = vunpack.c.l.b16 %v5247
    %v5313 = vunpack.c.l.b16 %v5248
    %v5314 = vpack.c.b16 %v5283, %v5282
    %v5315 = vpack.c.b16 %v5285, %v5284
    %v5316 = vpack.c.b16 %v5287, %v5286
    %v5317 = vpack.c.b16 %v5289, %v5288
    %v5318 = vpack.c.b16 %v5291, %v5290
    %v5319 = vpack.c.b16 %v5293, %v5292
    %v5320 = vpack.c.b16 %v5295, %v5294
    %v5321 = vpack.c.b16 %v5297, %v5296
    %v5322 = vpack.c.b16 %v5299, %v5298
    %v5323 = vpack.c.b16 %v5301, %v5300
    %v5324 = vpack.c.b16 %v5303, %v5302
    %v5325 = vpack.c.b16 %v5305, %v5304
    %v5326 = vpack.c.b16 %v5307, %v5306
    %v5327 = vpack.c.b16 %v5309, %v5308
    %v5328 = vpack.c.b16 %v5311, %v5310
    %v5329 = vpack.c.b16 %v5313, %v5312
    %5346 = vmatprep.subr.bf16.mxu0 0
    %5347 = vmatpush1.bf16.msra.mxu0 %v5321
    %5348 = vmatprep.subr.bf16.mxu0 0
    %5349 = vmatpush1.bf16.msra.mxu0 %v5320
    %5350 = vmatprep.subr.bf16.mxu0 0
    %5351 = vmatpush1.bf16.msra.mxu0 %v5319
    %5352 = vmatprep.subr.bf16.mxu0 0
    %5353 = vmatpush1.bf16.msra.mxu0 %v5318
    %5354 = vmatprep.subr.bf16.mxu0 0
    %5355 = vmatpush1.bf16.msra.mxu0 %v5317
    %5356 = vmatprep.subr.bf16.mxu0 0
    %5357 = vmatpush1.bf16.msra.mxu0 %v5316
    %5358 = vmatprep.subr.bf16.mxu0 0
    %5359 = vmatpush1.bf16.msra.mxu0 %v5315
    %5360 = vmatprep.subr.bf16.mxu0 0
    %5361 = vmatpush1.bf16.msra.mxu0 %v5314
    %5362 = vmatprep.subr.bf16.mxu0 0
    %5363 = vmatpush2.bf16.msra.mxu0 %v5329
    %5364 = vmatprep.subr.bf16.mxu0 0
    %5365 = vmatpush2.bf16.msra.mxu0 %v5328
    %5366 = vmatprep.subr.bf16.mxu0 0
    %5367 = vmatpush2.bf16.msra.mxu0 %v5327
    %5368 = vmatprep.subr.bf16.mxu0 0
    %5369 = vmatpush2.bf16.msra.mxu0 %v5326
    %5370 = vmatprep.subr.bf16.mxu0 0
    %5371 = vmatpush2.bf16.msra.mxu0 %v5325
    %5372 = vmatprep.subr.bf16.mxu0 0
    %5373 = vmatpush2.bf16.msra.mxu0 %v5324
    %5374 = vmatprep.subr.bf16.mxu0 0
    %5375 = vmatpush2.bf16.msra.mxu0 %v5323
    %5376 = vmatprep.subr.bf16.mxu0 0
    %5377 = vmatpush2.bf16.msra.mxu0 %v5322
    %5378 = vmatprep.mubr.bf16.mxu0 %v5216
    %5379 = vmatmul.mubr.bf16.gmra.mxu0 %v5215
    %v5380 = vpop.f32.mrf.mxu0
    %v5381 = vadd.f32 %v5249, %v5380
    %v5382 = vpop.f32.mrf.mxu0
    %v5383 = vpop.f32.mrf.mxu0
    %v5384 = vpop.f32.mrf.mxu0
    %5385 = vdwg.mxu0
    %vm5386 = vcmask 16392
    %v5387 = vsel %vm5386, %v5381, -inf
    %5388 = vmax.xlane.f32.xlu0 %v5387
    %v5389 = vpop.xlane.xlu0 %5388
    %v5390 = vsub.f32 %v5381, %v5389
    %v5391 = vmul.f32 %v5390, 1.442695
    %v5392 = vpow.pop %v5391
    %5394 = vrot.lane.b32.xlu0 %v5392, 127
    %v5395 = vpop.permute.xlu0 %5394
    %vm5397 = vcmask 8192
    %v5398 = vsel %vm5397, %v5395, 0.0
    %5399 = vadd.xlane.f32.xlu0 %v5398
    %v5400 = vpop.xlane.xlu0 %5399
    %v5401 = vlog2.pop %v5400
    %v5402 = vmul.f32 %v5401, 0.6931472
    %v5403 = vsub.f32 %v5390, %v5402
    %v5404 = vmul.f32 %v5403, 1.442695
    %v5405 = vpow.pop %v5404
    %v5406 = vmul.f32 %v5403, %v5405
    %5408 = vrot.lane.b32.xlu0 %v5406, 127
    %v5409 = vpop.permute.xlu0 %5408
    %v5411 = vsel %vm5397, %v5409, 0.0
    %5412 = vadd.xlane.f32.xlu0 %v5411
    %v5413 = vpop.xlane.xlu0 %5412
    %v5414 = vsub.f32 0.0, %v5413
    %v5415 = vld [vmem:[#allocation2] sm:$0x1]
    %v5418 = vunpack.c.l.s4 1966171168
    %v5419 = vunpack.c.0.s8 %v5418
    %v5420 = vlaneseq
    %v5421 = vshrl.u32 %v5420, 7
    %v5422 = vsub.s32 %v5419, %v5421
    %v5423 = vrot.slane %v5405, %v5422
    %v5425 = vunpack.c.l.s4 1966171168
    %v5426 = vunpack.c.0.s8 %v5425
    %v5427 = vlaneseq
    %v5428 = vshrl.u32 %v5427, 7
    %v5429 = vsub.s32 %v5426, %v5428
    %v5430 = vrot.slane %v5423, %v5429
    %5431 = vrot.lane.b32.xlu0 %v5430, 127
    %v5432 = vpop.permute.xlu0 %5431
    %vm5434 = vcmp.ge.f32.partialorder %v5415, %v5432
    %v5435 = vsel %vm5434, 1, 0
    %vm5436 = vcmp.lt.s32.totalorder %v5435, 1
    %v5437 = vsel %vm5436, %v5435, 1
    %v5438 = vlaneseq
    %v5439 = vand.u32 %v5438, 127
    %5440 = vset.pattern.permute.xlu0 0
    %5441 = vperm.xlu0 %5440, %v5437
    %v5442 = vpop.permute.xlu0 %5441
    %v5443 = vlaneseq
    %v5444 = vshrl.u32 %v5443, 7
    %v5445 = vsub.s32 0, %v5444
    %v5446 = vrot.slane %v5442, %v5445
    %vm5447 = vcmp.eq.s32.totalorder %v5439, %v5446
    %v5448 = vsel %vm5447, 1, 0
    %v5449 = vcvt.s32.f32 %v5448
    %5451 = vrot.lane.b32.xlu0 %v5449, 1
    %v5452 = vpop.permute.xlu0 %5451
    %v5454 = vmul.f32 %v5403, %v5452
    %5456 = vrot.lane.b32.xlu0 %v5454, 127
    %v5457 = vpop.permute.xlu0 %5456
    %v5459 = vsel %vm5397, %v5457, 0.0
    %5460 = vadd.xlane.f32.xlu0 %v5459
    %v5461 = vpop.xlane.xlu0 %5460
    %v5462 = vld [vmem:[%s10] sm:$0xff]
    %v5463 = vld [vmem:[%s10 + $0x8] sm:$0xff]
    %5464 = vset.pattern.permute.xlu0 0
    %5465 = vperm.xlu0 %5464, %v5449
    %v5466 = vpop.permute.xlu0 %5465
    %v5468 = vmul.f32 %v5466, %v5462
    %v5469 = vmul.f32 %v5466, %v5463
    %5470 = vset.pattern.permute.xlu0 1
    %5471 = vperm.xlu0 %5470, %v5449
    %v5472 = vpop.permute.xlu0 %5471
    %v5474 = vmul.f32 %v5472, %v5462
    %v5475 = vmul.f32 %v5472, %v5463
    %v5478 = vrot.slane %v5474, 7
    %v5479 = vrot.slane %v5478, 2
    %v5480 = vrot.slane %v5475, 7
    %v5481 = vrot.slane %v5480, 2
    %v5484 = vadd.f32 %v5468, %v5479
    %v5485 = vadd.f32 %v5469, %v5481
    %v5488 = vlaneseq
    %v5489 = vshrl.u32 %v5488, 7
    %v5490 = vsub.s32 0, %v5489
    %v5491 = vrot.slane %v5484, %v5490
    %v5492 = vlaneseq
    %v5493 = vshrl.u32 %v5492, 7
    %v5494 = vsub.s32 2, %v5493
    %v5495 = vrot.slane %v5484, %v5494
    %v5496 = vlaneseq
    %v5497 = vshrl.u32 %v5496, 7
    %v5498 = vsub.s32 4, %v5497
    %v5499 = vrot.slane %v5484, %v5498
    %v5500 = vlaneseq
    %v5501 = vshrl.u32 %v5500, 7
    %v5502 = vsub.s32 6, %v5501
    %v5503 = vrot.slane %v5484, %v5502
    %v5504 = vlaneseq
    %v5505 = vshrl.u32 %v5504, 7
    %v5506 = vsub.s32 0, %v5505
    %v5507 = vrot.slane %v5485, %v5506
    %v5508 = vlaneseq
    %v5509 = vshrl.u32 %v5508, 7
    %v5510 = vsub.s32 2, %v5509
    %v5511 = vrot.slane %v5485, %v5510
    %v5512 = vlaneseq
    %v5513 = vshrl.u32 %v5512, 7
    %v5514 = vsub.s32 4, %v5513
    %v5515 = vrot.slane %v5485, %v5514
    %v5516 = vlaneseq
    %v5517 = vshrl.u32 %v5516, 7
    %v5518 = vsub.s32 6, %v5517
    %v5519 = vrot.slane %v5485, %v5518
    %v5528 = vadd.f32 %v4855, %v5491
    %v5529 = vadd.f32 %v4857, %v5495
    %v5530 = vadd.f32 %v4937, %v5499
    %v5531 = vadd.f32 %v4939, %v5503
    %v5532 = vadd.f32 %v5019, %v5507
    %v5533 = vadd.f32 %v5021, %v5511
    %v5534 = vadd.f32 %v5101, %v5515
    %v5535 = vadd.f32 %v5103, %v5519
    %v5536 = vld [vmem:[%s9] sm:$0xff]
    %v5538 = vlaneseq
    %v5539 = vshrl.u32 %v5538, 7
    %v5540 = vsub.s32 0, %v5539
    %v5541 = vrot.slane %v5536, %v5540
    %v5542 = vlaneseq
    %v5543 = vshrl.u32 %v5542, 7
    %v5544 = vsub.s32 1, %v5543
    %v5545 = vrot.slane %v5536, %v5544
    %v5546 = vlaneseq
    %v5547 = vshrl.u32 %v5546, 7
    %v5548 = vsub.s32 2, %v5547
    %v5549 = vrot.slane %v5536, %v5548
    %v5550 = vlaneseq
    %v5551 = vshrl.u32 %v5550, 7
    %v5552 = vsub.s32 3, %v5551
    %v5553 = vrot.slane %v5536, %v5552
    %v5554 = vlaneseq
    %v5555 = vshrl.u32 %v5554, 7
    %v5556 = vsub.s32 4, %v5555
    %v5557 = vrot.slane %v5536, %v5556
    %v5558 = vlaneseq
    %v5559 = vshrl.u32 %v5558, 7
    %v5560 = vsub.s32 5, %v5559
    %v5561 = vrot.slane %v5536, %v5560
    %v5562 = vlaneseq
    %v5563 = vshrl.u32 %v5562, 7
    %v5564 = vsub.s32 6, %v5563
    %v5565 = vrot.slane %v5536, %v5564
    %v5566 = vlaneseq
    %v5567 = vshrl.u32 %v5566, 7
    %v5568 = vsub.s32 7, %v5567
    %v5569 = vrot.slane %v5536, %v5568
    %v5578 = vadd.f32 %v5528, %v5541
    %v5579 = vadd.f32 %v5529, %v5545
    %v5580 = vadd.f32 %v5530, %v5549
    %v5581 = vadd.f32 %v5531, %v5553
    %v5582 = vadd.f32 %v5532, %v5557
    %v5583 = vadd.f32 %v5533, %v5561
    %v5584 = vadd.f32 %v5534, %v5565
    %v5585 = vadd.f32 %v5535, %v5569
    %v5586 = vxor.u32 %v5578, 2147483648
    %v5587 = vxor.u32 %v5579, 2147483648
    %v5588 = vmul.f32 %v5586, 1.442695
    %v5589 = vpow.pop %v5588
    %v5590 = vmul.f32 %v5587, 1.442695
    %v5591 = vpow.pop %v5590
    %v5592 = vadd.f32 %v5589, 1.0
    %v5593 = vadd.f32 %v5591, 1.0
    %v5594 = vrcp.pop %v5592
    %v5595 = vmul.f32 1.0, %v5594
    %v5596 = vrcp.pop %v5593
    %v5597 = vmul.f32 1.0, %v5596
    %v5598 = vxor.u32 %v5580, 2147483648
    %v5599 = vxor.u32 %v5581, 2147483648
    %v5600 = vmul.f32 %v5598, 1.442695
    %v5601 = vpow.pop %v5600
    %v5602 = vmul.f32 %v5599, 1.442695
    %v5603 = vpow.pop %v5602
    %v5604 = vadd.f32 %v5601, 1.0
    %v5605 = vadd.f32 %v5603, 1.0
    %v5606 = vrcp.pop %v5604
    %v5607 = vmul.f32 1.0, %v5606
    %v5608 = vrcp.pop %v5605
    %v5609 = vmul.f32 1.0, %v5608
    %v5610 = vtanh.pop %v5582
    %v5611 = vtanh.pop %v5583
    %v5612 = vxor.u32 %v5584, 2147483648
    %v5613 = vxor.u32 %v5585, 2147483648
    %v5614 = vmul.f32 %v5612, 1.442695
    %v5615 = vpow.pop %v5614
    %v5616 = vmul.f32 %v5613, 1.442695
    %v5617 = vpow.pop %v5616
    %v5618 = vadd.f32 %v5615, 1.0
    %v5619 = vadd.f32 %v5617, 1.0
    %v5620 = vrcp.pop %v5618
    %v5621 = vmul.f32 1.0, %v5620
    %v5622 = vrcp.pop %v5619
    %v5623 = vmul.f32 1.0, %v5622
    %v5624 = vlaneseq
    %v5625 = vshrl.u32 %v5624, 7
    %v5626 = vsub.s32 6, %v5625
    %v5627 = vrot.slane %v72, %v5626
    %v5628 = vlaneseq
    %v5629 = vshrl.u32 %v5628, 7
    %v5630 = vsub.s32 7, %v5629
    %v5631 = vrot.slane %v72, %v5630
    %v5634 = vmul.f32 %v5607, %v5627
    %v5635 = vmul.f32 %v5609, %v5631
    %v5636 = vmul.f32 %v5595, %v5610
    %v5637 = vmul.f32 %v5597, %v5611
    %v5638 = vadd.f32 %v5634, %v5636
    %v5639 = vadd.f32 %v5635, %v5637
    %v5640 = vtanh.pop %v5638
    %v5641 = vtanh.pop %v5639
    %v5642 = vmul.f32 %v5621, %v5640
    %v5643 = vmul.f32 %v5623, %v5641
    %v5644 = vpack.c.bf16 %v5642, %v5642
    %v5645 = vpack.c.bf16 %v5643, %v5643
    %v5646 = vld [vmem:[%s13] sm:$0xff]
    %v5647 = vld [vmem:[%s13 + $0x8] sm:$0xff]
    %v5648 = vld [vmem:[%s13 + $0x10] sm:$0xff]
    %v5649 = vld [vmem:[%s13 + $0x18] sm:$0xff]
    %v5650 = vld [vmem:[%s13 + $0x20] sm:$0xff]
    %v5651 = vld [vmem:[%s13 + $0x28] sm:$0xff]
    %v5652 = vld [vmem:[%s13 + $0x30] sm:$0xff]
    %v5653 = vld [vmem:[%s13 + $0x38] sm:$0xff]
    %v5654 = vld [vmem:[%s13 + $0x40] sm:$0xff]
    %v5655 = vld [vmem:[%s13 + $0x48] sm:$0xff]
    %v5656 = vld [vmem:[%s13 + $0x50] sm:$0xff]
    %v5657 = vld [vmem:[%s13 + $0x58] sm:$0xff]
    %v5658 = vld [vmem:[%s13 + $0x60] sm:$0xff]
    %v5659 = vld [vmem:[%s13 + $0x68] sm:$0xff]
    %v5660 = vld [vmem:[%s13 + $0x70] sm:$0xff]
    %v5661 = vld [vmem:[%s13 + $0x78] sm:$0xff]
    %v5662 = vld [vmem:[%s13 + $0x80] sm:$0xff]
    %v5663 = vld [vmem:[%s13 + $0x88] sm:$0xff]
    %v5664 = vld [vmem:[%s13 + $0x90] sm:$0xff]
    %v5665 = vld [vmem:[%s13 + $0x98] sm:$0xff]
    %v5666 = vld [vmem:[%s13 + $0xa0] sm:$0xff]
    %v5667 = vld [vmem:[%s13 + $0xa8] sm:$0xff]
    %v5668 = vld [vmem:[%s13 + $0xb0] sm:$0xff]
    %v5669 = vld [vmem:[%s13 + $0xb8] sm:$0xff]
    %v5670 = vld [vmem:[%s13 + $0xc0] sm:$0xff]
    %v5671 = vld [vmem:[%s13 + $0xc8] sm:$0xff]
    %v5672 = vld [vmem:[%s13 + $0xd0] sm:$0xff]
    %v5673 = vld [vmem:[%s13 + $0xd8] sm:$0xff]
    %v5674 = vld [vmem:[%s13 + $0xe0] sm:$0xff]
    %v5675 = vld [vmem:[%s13 + $0xe8] sm:$0xff]
    %v5676 = vld [vmem:[%s13 + $0xf0] sm:$0xff]
    %v5677 = vld [vmem:[%s13 + $0xf8] sm:$0xff]
    %v5678 = vld [vmem:[%s13 + $0x100] sm:$0xff]
    %v5679 = vld [vmem:[%s13 + $0x108] sm:$0xff]
    %v5680 = vld [vmem:[%s13 + $0x110] sm:$0xff]
    %v5681 = vld [vmem:[%s13 + $0x118] sm:$0xff]
    %v5682 = vld [vmem:[%s13 + $0x120] sm:$0xff]
    %v5683 = vld [vmem:[%s13 + $0x128] sm:$0xff]
    %v5684 = vld [vmem:[%s13 + $0x130] sm:$0xff]
    %v5685 = vld [vmem:[%s13 + $0x138] sm:$0xff]
    %v5686 = vld [vmem:[%s13 + $0x140] sm:$0xff]
    %v5687 = vld [vmem:[%s13 + $0x148] sm:$0xff]
    %v5688 = vld [vmem:[%s13 + $0x150] sm:$0xff]
    %v5689 = vld [vmem:[%s13 + $0x158] sm:$0xff]
    %v5690 = vld [vmem:[%s13 + $0x160] sm:$0xff]
    %v5691 = vld [vmem:[%s13 + $0x168] sm:$0xff]
    %v5692 = vld [vmem:[%s13 + $0x170] sm:$0xff]
    %v5693 = vld [vmem:[%s13 + $0x178] sm:$0xff]
    %v5694 = vld [vmem:[%s13 + $0x180] sm:$0xff]
    %v5695 = vld [vmem:[%s13 + $0x188] sm:$0xff]
    %v5696 = vld [vmem:[%s13 + $0x190] sm:$0xff]
    %v5697 = vld [vmem:[%s13 + $0x198] sm:$0xff]
    %v5698 = vld [vmem:[%s13 + $0x1a0] sm:$0xff]
    %v5699 = vld [vmem:[%s13 + $0x1a8] sm:$0xff]
    %v5700 = vld [vmem:[%s13 + $0x1b0] sm:$0xff]
    %v5701 = vld [vmem:[%s13 + $0x1b8] sm:$0xff]
    %v5702 = vld [vmem:[%s13 + $0x1c0] sm:$0xff]
    %v5703 = vld [vmem:[%s13 + $0x1c8] sm:$0xff]
    %v5704 = vld [vmem:[%s13 + $0x1d0] sm:$0xff]
    %v5705 = vld [vmem:[%s13 + $0x1d8] sm:$0xff]
    %v5706 = vld [vmem:[%s13 + $0x1e0] sm:$0xff]
    %v5707 = vld [vmem:[%s13 + $0x1e8] sm:$0xff]
    %v5708 = vld [vmem:[%s13 + $0x1f0] sm:$0xff]
    %v5709 = vld [vmem:[%s13 + $0x1f8] sm:$0xff]
    %v5710 = vld [vmem:[%s14] sm:$0xf]
    %v5775 = vunpack.c.l.b16 %v5646
    %v5776 = vunpack.c.h.b16 %v5646
    %v5777 = vunpack.c.l.b16 %v5647
    %v5778 = vunpack.c.h.b16 %v5647
    %v5779 = vunpack.c.l.b16 %v5648
    %v5780 = vunpack.c.h.b16 %v5648
    %v5781 = vunpack.c.l.b16 %v5649
    %v5782 = vunpack.c.h.b16 %v5649
    %v5783 = vunpack.c.l.b16 %v5650
    %v5784 = vunpack.c.h.b16 %v5650
    %v5785 = vunpack.c.l.b16 %v5651
    %v5786 = vunpack.c.h.b16 %v5651
    %v5787 = vunpack.c.l.b16 %v5652
    %v5788 = vunpack.c.h.b16 %v5652
    %v5789 = vunpack.c.l.b16 %v5653
    %v5790 = vunpack.c.h.b16 %v5653
    %v5791 = vunpack.c.l.b16 %v5654
    %v5792 = vunpack.c.h.b16 %v5654
    %v5793 = vunpack.c.l.b16 %v5655
    %v5794 = vunpack.c.h.b16 %v5655
    %v5795 = vunpack.c.l.b16 %v5656
    %v5796 = vunpack.c.h.b16 %v5656
    %v5797 = vunpack.c.l.b16 %v5657
    %v5798 = vunpack.c.h.b16 %v5657
    %v5799 = vunpack.c.l.b16 %v5658
    %v5800 = vunpack.c.h.b16 %v5658
    %v5801 = vunpack.c.l.b16 %v5659
    %v5802 = vunpack.c.h.b16 %v5659
    %v5803 = vunpack.c.l.b16 %v5660
    %v5804 = vunpack.c.h.b16 %v5660
    %v5805 = vunpack.c.l.b16 %v5661
    %v5806 = vunpack.c.h.b16 %v5661
    %v5807 = vunpack.c.l.b16 %v5662
    %v5808 = vunpack.c.h.b16 %v5662
    %v5809 = vunpack.c.l.b16 %v5663
    %v5810 = vunpack.c.h.b16 %v5663
    %v5811 = vunpack.c.l.b16 %v5664
    %v5812 = vunpack.c.h.b16 %v5664
    %v5813 = vunpack.c.l.b16 %v5665
    %v5814 = vunpack.c.h.b16 %v5665
    %v5815 = vunpack.c.l.b16 %v5666
    %v5816 = vunpack.c.h.b16 %v5666
    %v5817 = vunpack.c.l.b16 %v5667
    %v5818 = vunpack.c.h.b16 %v5667
    %v5819 = vunpack.c.l.b16 %v5668
    %v5820 = vunpack.c.h.b16 %v5668
    %v5821 = vunpack.c.l.b16 %v5669
    %v5822 = vunpack.c.h.b16 %v5669
    %v5823 = vunpack.c.l.b16 %v5670
    %v5824 = vunpack.c.h.b16 %v5670
    %v5825 = vunpack.c.l.b16 %v5671
    %v5826 = vunpack.c.h.b16 %v5671
    %v5827 = vunpack.c.l.b16 %v5672
    %v5828 = vunpack.c.h.b16 %v5672
    %v5829 = vunpack.c.l.b16 %v5673
    %v5830 = vunpack.c.h.b16 %v5673
    %v5831 = vunpack.c.l.b16 %v5674
    %v5832 = vunpack.c.h.b16 %v5674
    %v5833 = vunpack.c.l.b16 %v5675
    %v5834 = vunpack.c.h.b16 %v5675
    %v5835 = vunpack.c.l.b16 %v5676
    %v5836 = vunpack.c.h.b16 %v5676
    %v5837 = vunpack.c.l.b16 %v5677
    %v5838 = vunpack.c.h.b16 %v5677
    %v5839 = vunpack.c.l.b16 %v5678
    %v5840 = vunpack.c.h.b16 %v5678
    %v5841 = vunpack.c.l.b16 %v5679
    %v5842 = vunpack.c.h.b16 %v5679
    %v5843 = vunpack.c.l.b16 %v5680
    %v5844 = vunpack.c.h.b16 %v5680
    %v5845 = vunpack.c.l.b16 %v5681
    %v5846 = vunpack.c.h.b16 %v5681
    %v5847 = vunpack.c.l.b16 %v5682
    %v5848 = vunpack.c.h.b16 %v5682
    %v5849 = vunpack.c.l.b16 %v5683
    %v5850 = vunpack.c.h.b16 %v5683
    %v5851 = vunpack.c.l.b16 %v5684
    %v5852 = vunpack.c.h.b16 %v5684
    %v5853 = vunpack.c.l.b16 %v5685
    %v5854 = vunpack.c.h.b16 %v5685
    %v5855 = vunpack.c.l.b16 %v5686
    %v5856 = vunpack.c.h.b16 %v5686
    %v5857 = vunpack.c.l.b16 %v5687
    %v5858 = vunpack.c.h.b16 %v5687
    %v5859 = vunpack.c.l.b16 %v5688
    %v5860 = vunpack.c.h.b16 %v5688
    %v5861 = vunpack.c.l.b16 %v5689
    %v5862 = vunpack.c.h.b16 %v5689
    %v5863 = vunpack.c.l.b16 %v5690
    %v5864 = vunpack.c.h.b16 %v5690
    %v5865 = vunpack.c.l.b16 %v5691
    %v5866 = vunpack.c.h.b16 %v5691
    %v5867 = vunpack.c.l.b16 %v5692
    %v5868 = vunpack.c.h.b16 %v5692
    %v5869 = vunpack.c.l.b16 %v5693
    %v5870 = vunpack.c.h.b16 %v5693
    %v5871 = vunpack.c.l.b16 %v5694
    %v5872 = vunpack.c.h.b16 %v5694
    %v5873 = vunpack.c.l.b16 %v5695
    %v5874 = vunpack.c.h.b16 %v5695
    %v5875 = vunpack.c.l.b16 %v5696
    %v5876 = vunpack.c.h.b16 %v5696
    %v5877 = vunpack.c.l.b16 %v5697
    %v5878 = vunpack.c.h.b16 %v5697
    %v5879 = vunpack.c.l.b16 %v5698
    %v5880 = vunpack.c.h.b16 %v5698
    %v5881 = vunpack.c.l.b16 %v5699
    %v5882 = vunpack.c.h.b16 %v5699
    %v5883 = vunpack.c.l.b16 %v5700
    %v5884 = vunpack.c.h.b16 %v5700
    %v5885 = vunpack.c.l.b16 %v5701
    %v5886 = vunpack.c.h.b16 %v5701
    %v5887 = vunpack.c.l.b16 %v5702
    %v5888 = vunpack.c.h.b16 %v5702
    %v5889 = vunpack.c.l.b16 %v5703
    %v5890 = vunpack.c.h.b16 %v5703
    %v5891 = vunpack.c.l.b16 %v5704
    %v5892 = vunpack.c.h.b16 %v5704
    %v5893 = vunpack.c.l.b16 %v5705
    %v5894 = vunpack.c.h.b16 %v5705
    %v5895 = vunpack.c.l.b16 %v5706
    %v5896 = vunpack.c.h.b16 %v5706
    %v5897 = vunpack.c.l.b16 %v5707
    %v5898 = vunpack.c.h.b16 %v5707
    %v5899 = vunpack.c.l.b16 %v5708
    %v5900 = vunpack.c.h.b16 %v5708
    %v5901 = vunpack.c.l.b16 %v5709
    %v5902 = vunpack.c.h.b16 %v5709
    %v5903 = vpack.c.b16 %v5779, %v5775
    %v5904 = vpack.c.b16 %v5780, %v5776
    %v5905 = vpack.c.b16 %v5781, %v5777
    %v5906 = vpack.c.b16 %v5782, %v5778
    %v5907 = vpack.c.b16 %v5787, %v5783
    %v5908 = vpack.c.b16 %v5788, %v5784
    %v5909 = vpack.c.b16 %v5789, %v5785
    %v5910 = vpack.c.b16 %v5790, %v5786
    %v5911 = vpack.c.b16 %v5795, %v5791
    %v5912 = vpack.c.b16 %v5796, %v5792
    %v5913 = vpack.c.b16 %v5797, %v5793
    %v5914 = vpack.c.b16 %v5798, %v5794
    %v5915 = vpack.c.b16 %v5803, %v5799
    %v5916 = vpack.c.b16 %v5804, %v5800
    %v5917 = vpack.c.b16 %v5805, %v5801
    %v5918 = vpack.c.b16 %v5806, %v5802
    %v5919 = vpack.c.b16 %v5811, %v5807
    %v5920 = vpack.c.b16 %v5812, %v5808
    %v5921 = vpack.c.b16 %v5813, %v5809
    %v5922 = vpack.c.b16 %v5814, %v5810
    %v5923 = vpack.c.b16 %v5819, %v5815
    %v5924 = vpack.c.b16 %v5820, %v5816
    %v5925 = vpack.c.b16 %v5821, %v5817
    %v5926 = vpack.c.b16 %v5822, %v5818
    %v5927 = vpack.c.b16 %v5827, %v5823
    %v5928 = vpack.c.b16 %v5828, %v5824
    %v5929 = vpack.c.b16 %v5829, %v5825
    %v5930 = vpack.c.b16 %v5830, %v5826
    %v5931 = vpack.c.b16 %v5835, %v5831
    %v5932 = vpack.c.b16 %v5836, %v5832
    %v5933 = vpack.c.b16 %v5837, %v5833
    %v5934 = vpack.c.b16 %v5838, %v5834
    %v5935 = vpack.c.b16 %v5843, %v5839
    %v5936 = vpack.c.b16 %v5844, %v5840
    %v5937 = vpack.c.b16 %v5845, %v5841
    %v5938 = vpack.c.b16 %v5846, %v5842
    %v5939 = vpack.c.b16 %v5851, %v5847
    %v5940 = vpack.c.b16 %v5852, %v5848
    %v5941 = vpack.c.b16 %v5853, %v5849
    %v5942 = vpack.c.b16 %v5854, %v5850
    %v5943 = vpack.c.b16 %v5859, %v5855
    %v5944 = vpack.c.b16 %v5860, %v5856
    %v5945 = vpack.c.b16 %v5861, %v5857
    %v5946 = vpack.c.b16 %v5862, %v5858
    %v5947 = vpack.c.b16 %v5867, %v5863
    %v5948 = vpack.c.b16 %v5868, %v5864
    %v5949 = vpack.c.b16 %v5869, %v5865
    %v5950 = vpack.c.b16 %v5870, %v5866
    %v5951 = vpack.c.b16 %v5875, %v5871
    %v5952 = vpack.c.b16 %v5876, %v5872
    %v5953 = vpack.c.b16 %v5877, %v5873
    %v5954 = vpack.c.b16 %v5878, %v5874
    %v5955 = vpack.c.b16 %v5883, %v5879
    %v5956 = vpack.c.b16 %v5884, %v5880
    %v5957 = vpack.c.b16 %v5885, %v5881
    %v5958 = vpack.c.b16 %v5886, %v5882
    %v5959 = vpack.c.b16 %v5891, %v5887
    %v5960 = vpack.c.b16 %v5892, %v5888
    %v5961 = vpack.c.b16 %v5893, %v5889
    %v5962 = vpack.c.b16 %v5894, %v5890
    %v5963 = vpack.c.b16 %v5899, %v5895
    %v5964 = vpack.c.b16 %v5900, %v5896
    %v5965 = vpack.c.b16 %v5901, %v5897
    %v5966 = vpack.c.b16 %v5902, %v5898
    %v6032 = vlaneseq
    %v6033 = vshrl.u32 %v6032, 7
    %v6034 = vsub.s32 0, %v6033
    %v6035 = vrot.slane %v5710, %v6034
    %v6036 = vlaneseq
    %v6037 = vshrl.u32 %v6036, 7
    %v6038 = vsub.s32 1, %v6037
    %v6039 = vrot.slane %v5710, %v6038
    %v6040 = vlaneseq
    %v6041 = vshrl.u32 %v6040, 7
    %v6042 = vsub.s32 2, %v6041
    %v6043 = vrot.slane %v5710, %v6042
    %v6044 = vlaneseq
    %v6045 = vshrl.u32 %v6044, 7
    %v6046 = vsub.s32 3, %v6045
    %v6047 = vrot.slane %v5710, %v6046
    %6052 = vmatprep.subr.bf16.mxu0 %v5932
    %6053 = vmatpush1.bf16.msra.mxu0 %v5931
    %6054 = vmatprep.subr.bf16.mxu0 %v5928
    %6055 = vmatpush1.bf16.msra.mxu0 %v5927
    %6056 = vmatprep.subr.bf16.mxu0 %v5924
    %6057 = vmatpush1.bf16.msra.mxu0 %v5923
    %6058 = vmatprep.subr.bf16.mxu0 %v5920
    %6059 = vmatpush1.bf16.msra.mxu0 %v5919
    %6060 = vmatprep.subr.bf16.mxu0 %v5916
    %6061 = vmatpush1.bf16.msra.mxu0 %v5915
    %6062 = vmatprep.subr.bf16.mxu0 %v5912
    %6063 = vmatpush1.bf16.msra.mxu0 %v5911
    %6064 = vmatprep.subr.bf16.mxu0 %v5908
    %6065 = vmatpush1.bf16.msra.mxu0 %v5907
    %6066 = vmatprep.subr.bf16.mxu0 %v5904
    %6067 = vmatpush1.bf16.msra.mxu0 %v5903
    %6068 = vmatprep.subr.bf16.mxu0 %v5964
    %6069 = vmatpush2.bf16.msra.mxu0 %v5963
    %6070 = vmatprep.subr.bf16.mxu0 %v5960
    %6071 = vmatpush2.bf16.msra.mxu0 %v5959
    %6072 = vmatprep.subr.bf16.mxu0 %v5956
    %6073 = vmatpush2.bf16.msra.mxu0 %v5955
    %6074 = vmatprep.subr.bf16.mxu0 %v5952
    %6075 = vmatpush2.bf16.msra.mxu0 %v5951
    %6076 = vmatprep.subr.bf16.mxu0 %v5948
    %6077 = vmatpush2.bf16.msra.mxu0 %v5947
    %6078 = vmatprep.subr.bf16.mxu0 %v5944
    %6079 = vmatpush2.bf16.msra.mxu0 %v5943
    %6080 = vmatprep.subr.bf16.mxu0 %v5940
    %6081 = vmatpush2.bf16.msra.mxu0 %v5939
    %6082 = vmatprep.subr.bf16.mxu0 %v5936
    %6083 = vmatpush2.bf16.msra.mxu0 %v5935
    %6084 = vmatprep.mubr.bf16.mxu0 %v5645
    %6085 = vmatmul.mubr.bf16.gmra.mxu0 %v5644
    %v6086 = vpop.f32.mrf.mxu0
    %v6087 = vadd.f32 %v6035, %v6086
    %v6088 = vpop.f32.mrf.mxu0
    %v6089 = vadd.f32 %v6039, %v6088
    %v6090 = vpop.f32.mrf.mxu0
    %v6091 = vpop.f32.mrf.mxu0
    %6092 = vdwg.mxu0
    %6093 = vmatprep.subr.bf16.mxu0 %v5934
    %6094 = vmatpush1.bf16.msra.mxu0 %v5933
    %6095 = vmatprep.subr.bf16.mxu0 %v5930
    %6096 = vmatpush1.bf16.msra.mxu0 %v5929
    %6097 = vmatprep.subr.bf16.mxu0 %v5926
    %6098 = vmatpush1.bf16.msra.mxu0 %v5925
    %6099 = vmatprep.subr.bf16.mxu0 %v5922
    %6100 = vmatpush1.bf16.msra.mxu0 %v5921
    %6101 = vmatprep.subr.bf16.mxu0 %v5918
    %6102 = vmatpush1.bf16.msra.mxu0 %v5917
    %6103 = vmatprep.subr.bf16.mxu0 %v5914
    %6104 = vmatpush1.bf16.msra.mxu0 %v5913
    %6105 = vmatprep.subr.bf16.mxu0 %v5910
    %6106 = vmatpush1.bf16.msra.mxu0 %v5909
    %6107 = vmatprep.subr.bf16.mxu0 %v5906
    %6108 = vmatpush1.bf16.msra.mxu0 %v5905
    %6109 = vmatprep.subr.bf16.mxu0 %v5966
    %6110 = vmatpush2.bf16.msra.mxu0 %v5965
    %6111 = vmatprep.subr.bf16.mxu0 %v5962
    %6112 = vmatpush2.bf16.msra.mxu0 %v5961
    %6113 = vmatprep.subr.bf16.mxu0 %v5958
    %6114 = vmatpush2.bf16.msra.mxu0 %v5957
    %6115 = vmatprep.subr.bf16.mxu0 %v5954
    %6116 = vmatpush2.bf16.msra.mxu0 %v5953
    %6117 = vmatprep.subr.bf16.mxu0 %v5950
    %6118 = vmatpush2.bf16.msra.mxu0 %v5949
    %6119 = vmatprep.subr.bf16.mxu0 %v5946
    %6120 = vmatpush2.bf16.msra.mxu0 %v5945
    %6121 = vmatprep.subr.bf16.mxu0 %v5942
    %6122 = vmatpush2.bf16.msra.mxu0 %v5941
    %6123 = vmatprep.subr.bf16.mxu0 %v5938
    %6124 = vmatpush2.bf16.msra.mxu0 %v5937
    %6125 = vmatprep.mubr.bf16.mxu0 %v5645
    %6126 = vmatmul.mubr.bf16.gmra.mxu0 %v5644
    %v6127 = vpop.f32.mrf.mxu0
    %v6128 = vadd.f32 %v6043, %v6127
    %v6129 = vpop.f32.mrf.mxu0
    %v6130 = vadd.f32 %v6047, %v6129
    %v6131 = vpop.f32.mrf.mxu0
    %v6132 = vpop.f32.mrf.mxu0
    %6133 = vdwg.mxu0
    %vm6134 = vcmask 253952
    %6135 = vst.msk [vmem:[#allocation3] sm:$0x1] %vm6134, %v800
    %6137 = vrot.lane.b32.xlu0 %v800, 96
    %v6138 = vpop.permute.xlu0 %6137
    %6140 = vst.msk [vmem:[#allocation5] sm:$0x1] %vm6134, %v6138
    %6141 = vst.msk [vmem:[#allocation7] sm:$0x1] %vm6134, %v828
    %v6144 = vcombine.low %v5213, %v5214
    %v6146 = vunpack.c.l.s4 1966171168
    %v6147 = vunpack.c.0.s8 %v6146
    %v6148 = vlaneseq
    %v6149 = vshrl.u32 %v6148, 7
    %v6150 = vsub.s32 %v6147, %v6149
    %v6151 = vrot.slane %v6144, %v6150
    %v6153 = vunpack.c.l.s4 1966171168
    %v6154 = vunpack.c.0.s8 %v6153
    %v6155 = vlaneseq
    %v6156 = vshrl.u32 %v6155, 7
    %v6157 = vsub.s32 %v6154, %v6156
    %v6158 = vrot.slane %v6151, %v6157
    %v6160 = vlaneseq
    %vm6161 = vcmp.ge.s32.totalorder %v6160, 0
    %vm6162 = vcmp.lt.s32.totalorder %v6160, 256
    %vm6163 = vmand %vm6161, %vm6162
    %6164 = vst.msk [vmem:[%s18] sm:$0x3] %vm6163, %v6158
    %v6167 = vcombine.low %v5209, %v5210
    %v6169 = vunpack.c.l.s4 1966171168
    %v6170 = vunpack.c.0.s8 %v6169
    %v6171 = vlaneseq
    %v6172 = vshrl.u32 %v6171, 7
    %v6173 = vsub.s32 %v6170, %v6172
    %v6174 = vrot.slane %v6167, %v6173
    %v6176 = vunpack.c.l.s4 1966171168
    %v6177 = vunpack.c.0.s8 %v6176
    %v6178 = vlaneseq
    %v6179 = vshrl.u32 %v6178, 7
    %v6180 = vsub.s32 %v6177, %v6179
    %v6181 = vrot.slane %v6174, %v6180
    %6183 = vst.msk [vmem:[%s19] sm:$0x3] %vm6163, %v6181
    %v6186 = vcombine.low %v5642, %v5643
    %v6188 = vunpack.c.l.s4 1966171168
    %v6189 = vunpack.c.0.s8 %v6188
    %v6190 = vlaneseq
    %v6191 = vshrl.u32 %v6190, 7
    %v6192 = vsub.s32 %v6189, %v6191
    %v6193 = vrot.slane %v6186, %v6192
    %v6195 = vunpack.c.l.s4 1966171168
    %v6196 = vunpack.c.0.s8 %v6195
    %v6197 = vlaneseq
    %v6198 = vshrl.u32 %v6197, 7
    %v6199 = vsub.s32 %v6196, %v6198
    %v6200 = vrot.slane %v6193, %v6199
    %6202 = vst.msk [vmem:[%s20] sm:$0x3] %vm6163, %v6200
    %v6205 = vcombine.low %v5638, %v5639
    %v6207 = vunpack.c.l.s4 1966171168
    %v6208 = vunpack.c.0.s8 %v6207
    %v6209 = vlaneseq
    %v6210 = vshrl.u32 %v6209, 7
    %v6211 = vsub.s32 %v6208, %v6210
    %v6212 = vrot.slane %v6205, %v6211
    %v6214 = vunpack.c.l.s4 1966171168
    %v6215 = vunpack.c.0.s8 %v6214
    %v6216 = vlaneseq
    %v6217 = vshrl.u32 %v6216, 7
    %v6218 = vsub.s32 %v6215, %v6217
    %v6219 = vrot.slane %v6212, %v6218
    %6221 = vst.msk [vmem:[%s21] sm:$0x3] %vm6163, %v6219
    %vm6222 = vcmask 0
    %6223 = vst.msk [vmem:[#allocation8] sm:$0x1] %vm6222, %v5381
    %6224 = vrot.lane.b32.xlu0 %v5405, 127
    %v6225 = vpop.permute.xlu0 %6224
    %6227 = vst.msk [vmem:[#allocation10] sm:$0x1] %vm5397, %v6225
    %6229 = vrot.lane.b32.xlu0 %v5403, 127
    %v6230 = vpop.permute.xlu0 %6229
    %6232 = vst.msk [vmem:[#allocation11] sm:$0x1] %vm5397, %v6230
    %6233 = vst.msk [vmem:[#allocation13] sm:$0x1] %vm6222, %v5414
    %6234 = vst.msk [vmem:[#allocation14] sm:$0x1] %vm6222, %v5437
    %6235 = vst.msk [vmem:[#allocation16] sm:$0x1] %vm6222, %v5461
    %v6240 = vcombine.low %v6087, %v6089
    %v6241 = vcombine.low %v6128, %v6130
    %v6243 = vunpack.c.l.s4 1966171168
    %v6244 = vunpack.c.0.s8 %v6243
    %v6245 = vlaneseq
    %v6246 = vshrl.u32 %v6245, 7
    %v6247 = vsub.s32 %v6244, %v6246
    %v6248 = vrot.slane %v6240, %v6247
    %v6250 = vunpack.c.l.s4 1966171168
    %v6251 = vunpack.c.0.s8 %v6250
    %v6252 = vlaneseq
    %v6253 = vshrl.u32 %v6252, 7
    %v6254 = vsub.s32 %v6251, %v6253
    %v6255 = vrot.slane %v6241, %v6254
    %v6256 = vcombine.low %v6248, %v6255
    %v6258 = vunpack.c.l.s4 1966171168
    %v6259 = vunpack.c.0.s8 %v6258
    %v6260 = vlaneseq
    %v6261 = vshrl.u32 %v6260, 7
    %v6262 = vsub.s32 %v6259, %v6261
    %v6263 = vrot.slane %v6256, %v6262
    %vm6265 = vcmp.lt.s32.totalorder %v6160, 480
    %vm6266 = vmand %vm6161, %vm6265
    %6267 = vst.msk [vmem:[%s28] sm:$0xf] %vm6266, %v6263
    // Predicated region
    $region62: #{_forward.12} parent=1 // pred_check
      _
    $region63: #{_forward.12} parent=1 // pred_check_branch
      %6269 = sbr.rel (0) target = $region65
    $region64: #{_forward.12} parent=1 // pred_region
      %s6271 = ssub.s32 16, 16
      %6272 = vsyncadd [#allocation4], %s6271
      %s6274 = sshll.u32 [#allocation3], 4
      %s6275 = int_to_ptr.vmem [resolvable:$true] %s6274
      %6277 = dma.vmem_to_hbm [thread:$0]  %s6275, 16, %s15, [#allocation4]
    $region65: #{_forward.12} parent=1 // pred_fallthru
      _
    // Predicated region
    $region66: #{_forward.12} parent=1 // pred_check
      _
    $region67: #{_forward.12} parent=1 // pred_check_branch
      %6279 = sbr.rel (0) target = $region69
    $region68: #{_forward.12} parent=1 // pred_region
      %s6281 = ssub.s32 16, 16
      %6282 = vsyncadd [#allocation6], %s6281
      %s6284 = sshll.u32 [#allocation5], 4
      %s6285 = int_to_ptr.vmem [resolvable:$true] %s6284
      %6287 = dma.vmem_to_hbm [thread:$0]  %s6285, 16, %s16, [#allocation6]
    $region69: #{_forward.12} parent=1 // pred_fallthru
      _
    // Predicated region
    $region70: #{_forward.12} parent=1 // pred_check
      _
    $region71: #{_forward.12} parent=1 // pred_check_branch
      %6289 = sbr.rel (0) target = $region73
    $region72: #{_forward.12} parent=1 // pred_region
      %s6291 = ssub.s32 16, 16
      %6292 = vsyncadd [#allocation6], %s6291
      %s6294 = sshll.u32 [#allocation7], 4
      %s6295 = int_to_ptr.vmem [resolvable:$true] %s6294
      %6297 = dma.vmem_to_hbm [thread:$0]  %s6295, 16, %s17, [#allocation6]
    $region73: #{_forward.12} parent=1 // pred_fallthru
      _
    // Predicated region
    $region74: #{_forward.12} parent=1 // pred_check
      _
    $region75: #{_forward.12} parent=1 // pred_check_branch
      %6299 = sbr.rel (0) target = $region77
    $region76: #{_forward.12} parent=1 // pred_region
      _
    $region77: #{_forward.12} parent=1 // pred_fallthru
      _
    // Predicated region
    $region78: #{_forward.12} parent=1 // pred_check
      _
    $region79: #{_forward.12} parent=1 // pred_check_branch
      %6301 = sbr.rel (0) target = $region81
    $region80: #{_forward.12} parent=1 // pred_region
      _
    $region81: #{_forward.12} parent=1 // pred_fallthru
      _
    // Predicated region
    $region82: #{_forward.12} parent=1 // pred_check
      _
    $region83: #{_forward.12} parent=1 // pred_check_branch
      %6303 = sbr.rel (0) target = $region85
    $region84: #{_forward.12} parent=1 // pred_region
      _
    $region85: #{_forward.12} parent=1 // pred_fallthru
      _
    // Predicated region
    $region86: #{_forward.12} parent=1 // pred_check
      _
    $region87: #{_forward.12} parent=1 // pred_check_branch
      %6305 = sbr.rel (0) target = $region89
    $region88: #{_forward.12} parent=1 // pred_region
      _
    $region89: #{_forward.12} parent=1 // pred_fallthru
      _
    // Predicated region
    $region90: #{_forward.12} parent=1 // pred_check
      _
    $region91: #{_forward.12} parent=1 // pred_check_branch
      %6307 = sbr.rel (0) target = $region93
    $region92: #{_forward.12} parent=1 // pred_region
      %s6309 = ssub.s32 16, 16
      %6310 = vsyncadd [#allocation9], %s6309
      %s6312 = sshll.u32 [#allocation8], 4
      %s6313 = int_to_ptr.vmem [resolvable:$true] %s6312
      %6315 = dma.vmem_to_hbm [thread:$0]  %s6313, 16, %s22, [#allocation9]
    $region93: #{_forward.12} parent=1 // pred_fallthru
      _
    // Predicated region
    $region94: #{_forward.12} parent=1 // pred_check
      _
    $region95: #{_forward.12} parent=1 // pred_check_branch
      %6317 = sbr.rel (0) target = $region97
    $region96: #{_forward.12} parent=1 // pred_region
      %s6319 = ssub.s32 16, 16
      %6320 = vsyncadd [#allocation9], %s6319
      %s6322 = sshll.u32 [#allocation10], 4
      %s6323 = int_to_ptr.vmem [resolvable:$true] %s6322
      %6325 = dma.vmem_to_hbm [thread:$0]  %s6323, 16, %s23, [#allocation9]
    $region97: #{_forward.12} parent=1 // pred_fallthru
      _
    // Predicated region
    $region98: #{_forward.12} parent=1 // pred_check
      _
    $region99: #{_forward.12} parent=1 // pred_check_branch
      %6327 = sbr.rel (0) target = $region101
    $region100: #{_forward.12} parent=1 // pred_region
      %s6329 = ssub.s32 16, 16
      %6330 = vsyncadd [#allocation12], %s6329
      %s6332 = sshll.u32 [#allocation11], 4
      %s6333 = int_to_ptr.vmem [resolvable:$true] %s6332
      %6335 = dma.vmem_to_hbm [thread:$0]  %s6333, 16, %s24, [#allocation12]
    $region101: #{_forward.12} parent=1 // pred_fallthru
      _
    // Predicated region
    $region102: #{_forward.12} parent=1 // pred_check
      _
    $region103: #{_forward.12} parent=1 // pred_check_branch
      %6337 = sbr.rel (0) target = $region105
    $region104: #{_forward.12} parent=1 // pred_region
      %s6339 = ssub.s32 16, 16
      %6340 = vsyncadd [#allocation12], %s6339
      %s6342 = sshll.u32 [#allocation13], 4
      %s6343 = int_to_ptr.vmem [resolvable:$true] %s6342
      %6345 = dma.vmem_to_hbm [thread:$0]  %s6343, 16, %s25, [#allocation12]
    $region105: #{_forward.12} parent=1 // pred_fallthru
      _
    // Predicated region
    $region106: #{_forward.12} parent=1 // pred_check
      _
    $region107: #{_forward.12} parent=1 // pred_check_branch
      %6347 = sbr.rel (0) target = $region109
    $region108: #{_forward.12} parent=1 // pred_region
      %s6349 = ssub.s32 16, 16
      %6350 = vsyncadd [#allocation15], %s6349
      %s6352 = sshll.u32 [#allocation14], 4
      %s6353 = int_to_ptr.vmem [resolvable:$true] %s6352
      %6355 = dma.vmem_to_hbm [thread:$0]  %s6353, 16, %s26, [#allocation15]
    $region109: #{_forward.12} parent=1 // pred_fallthru
      _
    // Predicated region
    $region110: #{_forward.12} parent=1 // pred_check
      _
    $region111: #{_forward.12} parent=1 // pred_check_branch
      %6357 = sbr.rel (0) target = $region113
    $region112: #{_forward.12} parent=1 // pred_region
      %s6359 = ssub.s32 16, 16
      %6360 = vsyncadd [#allocation15], %s6359
      %s6362 = sshll.u32 [#allocation16], 4
      %s6363 = int_to_ptr.vmem [resolvable:$true] %s6362
      %6365 = dma.vmem_to_hbm [thread:$0]  %s6363, 16, %s27, [#allocation15]
    $region113: #{_forward.12} parent=1 // pred_fallthru
      _
    // Predicated region
    $region114: #{_forward.12} parent=1 // pred_check
      _
    $region115: #{_forward.12} parent=1 // pred_check_branch
      %6367 = sbr.rel (0) target = $region117
    $region116: #{_forward.12} parent=1 // pred_region
      _
    $region117: #{_forward.12} parent=1 // pred_fallthru
      _
    // Predicated region
    $region118: #{_forward.12} parent=1 // pred_check
      _
    $region119: #{_forward.12} parent=1 // pred_check_branch
      %6369 = sbr.rel (0) target = $region121
    $region120: #{_forward.12} parent=1 // pred_region
      %6370 = dma.done [#allocation4], 16
    $region121: #{_forward.12} parent=1 // pred_fallthru
      _
    // Predicated region
    $region122: #{_forward.12} parent=1 // pred_check
      _
    $region123: #{_forward.12} parent=1 // pred_check_branch
      %6372 = sbr.rel (0) target = $region125
    $region124: #{_forward.12} parent=1 // pred_region
      %6373 = dma.done [#allocation6], 16
    $region125: #{_forward.12} parent=1 // pred_fallthru
      _
    // Predicated region
    $region126: #{_forward.12} parent=1 // pred_check
      _
    $region127: #{_forward.12} parent=1 // pred_check_branch
      %6375 = sbr.rel (0) target = $region129
    $region128: #{_forward.12} parent=1 // pred_region
      %6376 = dma.done [#allocation6], 16
    $region129: #{_forward.12} parent=1 // pred_fallthru
      _
    // Predicated region
    $region130: #{_forward.12} parent=1 // pred_check
      _
    $region131: #{_forward.12} parent=1 // pred_check_branch
      %6378 = sbr.rel (0) target = $region133
    $region132: #{_forward.12} parent=1 // pred_region
      _
    $region133: #{_forward.12} parent=1 // pred_fallthru
      _
    // Predicated region
    $region134: #{_forward.12} parent=1 // pred_check
      _
    $region135: #{_forward.12} parent=1 // pred_check_branch
      %6380 = sbr.rel (0) target = $region137
    $region136: #{_forward.12} parent=1 // pred_region
      _
    $region137: #{_forward.12} parent=1 // pred_fallthru
      _
    // Predicated region
    $region138: #{_forward.12} parent=1 // pred_check
      _
    $region139: #{_forward.12} parent=1 // pred_check_branch
      %6382 = sbr.rel (0) target = $region141
    $region140: #{_forward.12} parent=1 // pred_region
      _
    $region141: #{_forward.12} parent=1 // pred_fallthru
      _
    // Predicated region
    $region142: #{_forward.12} parent=1 // pred_check
      _
    $region143: #{_forward.12} parent=1 // pred_check_branch
      %6384 = sbr.rel (0) target = $region145
    $region144: #{_forward.12} parent=1 // pred_region
      _
    $region145: #{_forward.12} parent=1 // pred_fallthru
      _
    // Predicated region
    $region146: #{_forward.12} parent=1 // pred_check
      _
    $region147: #{_forward.12} parent=1 // pred_check_branch
      %6386 = sbr.rel (0) target = $region149
    $region148: #{_forward.12} parent=1 // pred_region
      %6387 = dma.done [#allocation9], 16
    $region149: #{_forward.12} parent=1 // pred_fallthru
      _
    // Predicated region
    $region150: #{_forward.12} parent=1 // pred_check
      _
    $region151: #{_forward.12} parent=1 // pred_check_branch
      %6389 = sbr.rel (0) target = $region153
    $region152: #{_forward.12} parent=1 // pred_region
      %6390 = dma.done [#allocation9], 16
    $region153: #{_forward.12} parent=1 // pred_fallthru
      _
    // Predicated region
    $region154: #{_forward.12} parent=1 // pred_check
      _
    $region155: #{_forward.12} parent=1 // pred_check_branch
      %6392 = sbr.rel (0) target = $region157
    $region156: #{_forward.12} parent=1 // pred_region
      %6393 = dma.done [#allocation12], 16
    $region157: #{_forward.12} parent=1 // pred_fallthru
      _
    // Predicated region
    $region158: #{_forward.12} parent=1 // pred_check
      _
    $region159: #{_forward.12} parent=1 // pred_check_branch
      %6395 = sbr.rel (0) target = $region161
    $region160: #{_forward.12} parent=1 // pred_region
      %6396 = dma.done [#allocation12], 16
    $region161: #{_forward.12} parent=1 // pred_fallthru
      _
    // Predicated region
    $region162: #{_forward.12} parent=1 // pred_check
      _
    $region163: #{_forward.12} parent=1 // pred_check_branch
      %6398 = sbr.rel (0) target = $region165
    $region164: #{_forward.12} parent=1 // pred_region
      %6399 = dma.done [#allocation15], 16
    $region165: #{_forward.12} parent=1 // pred_fallthru
      _
    // Predicated region
    $region166: #{_forward.12} parent=1 // pred_check
      _
    $region167: #{_forward.12} parent=1 // pred_check_branch
      %6401 = sbr.rel (0) target = $region169
    $region168: #{_forward.12} parent=1 // pred_region
      %6402 = dma.done [#allocation15], 16
    $region169: #{_forward.12} parent=1 // pred_fallthru
      _
    // Predicated region
    $region170: #{_forward.12} parent=1 // pred_check
      _
    $region171: #{_forward.12} parent=1 // pred_check_branch
      %6404 = sbr.rel (0) target = $region173
    $region172: #{_forward.12} parent=1 // pred_region
      _
    $region173: #{_forward.12} parent=1 // pred_fallthru
      _
    %6405 = vsyncpa [#allocation4], 1
    %6406 = vsyncpa [#allocation6], 1
    %6407 = vsyncpa [#allocation9], 1
    %6408 = vsyncpa [#allocation12], 1
    %6409 = vsyncpa [#allocation15], 1

</llo_original>
